<compile_context>
chip_gen: v7x
topology: tpu7x:2x2x1
jax: 0.10.0
libtpu: 0.0.40
codegen_flags: <defaults>
</compile_context>

<pallas_src>
import functools
import numpy as np
import jax
import jax.numpy as jnp
from jax.experimental import pallas as pl
from jax.experimental.pallas import tpu as pltpu


def _round_up(v, m):
    return ((v + m - 1) // m) * m


def _leaky_relu(v, slope=0.2):
    return jnp.where(v >= 0, v, slope * v)


# ----------------------------------------------------------------------------- #
# Pallas kernel: whole residual block for one batch element.
# ----------------------------------------------------------------------------- #
def _make_kernel(H, W, pad_rows, slope=0.2):
    HW = H * W
    Hh, Wh = H // 2, W // 2

    def kernel(x_ref, ml_ref, mr_ref, w1_ref, b1_ref, w2_ref, b2_ref,
               wsc_ref, bsc_ref, out_ref, a_scr, h_scr, p_scr):
        f32 = jnp.float32
        cdt = x_ref.dtype

        # in-place LeakyReLU -> the 1x1 shortcut also sees the activated input
        a = _leaky_relu(x_ref[0].astype(f32), slope).astype(cdt)   # (HW, Cpi)

        not_left = ml_ref[...]     # 1.0 where x > 0     (dx = -1 tap valid)
        not_right = mr_ref[...]    # 1.0 where x < W - 1 (dx = +1 tap valid)

        def im2col(scr, center, c):
            """Write `center` into the halo'd scratch, return the (HW, 9*c) tap slab."""
            zeros_halo = jnp.zeros((pad_rows, c), cdt)
            scr[pl.ds(0, pad_rows), :] = zeros_halo                 # top halo
            scr[pl.ds(pad_rows + HW, pad_rows), :] = zeros_halo     # bottom halo
            scr[pl.ds(pad_rows, HW), :] = center
            pieces = []
            for dy in (-1, 0, 1):
                for dx in (-1, 0, 1):
                    t = scr[pl.ds(pad_rows + dy * W + dx, HW), :]
                    if dx == -1:
                        t = t * not_left
                    elif dx == 1:
                        t = t * not_right
                    pieces.append(t)
            return jnp.concatenate(pieces, axis=1)                  # (HW, 9*c)

        # conv3x3_1 : single MXU matmul, K = 9*Cpi, f32 accumulation
        slab1 = im2col(a_scr, a, a_scr.shape[1])
        h1 = jnp.dot(slab1, w1_ref[...], preferred_element_type=f32) + b1_ref[...]
        h1 = _leaky_relu(h1, slope)                                  # fused epilogue

        # conv3x3_2 : single MXU matmul, K = 9*Cpo (h1 downcast to compute dtype)
        slab2 = im2col(h_scr, h1.astype(cdt), h_scr.shape[1])
        h2 = jnp.dot(slab2, w2_ref[...], preferred_element_type=f32) + b2_ref[...]

        # conv1x1 shortcut on the (in-place) activated input
        sc = jnp.dot(a, wsc_ref[...], preferred_element_type=f32) + bsc_ref[...]

        # avgpool2x2(h2) + avgpool2x2(sc) == avgpool2x2(h2 + sc)   (VPU only)
        p_scr[...] = h2 + sc
        for yh in range(Hh):
            r0 = 2 * yh * W
            r1 = r0 + W
            blk = (p_scr[pl.ds(r0, Wh, 2), :] + p_scr[pl.ds(r0 + 1, Wh, 2), :] +
                   p_scr[pl.ds(r1, Wh, 2), :] + p_scr[pl.ds(r1 + 1, Wh, 2), :])
            out_ref[0, pl.ds(yh * Wh, Wh), :] = 0.25 * blk

    return kernel


# ----------------------------------------------------------------------------- #
# Wrapper around pallas_call.
# ----------------------------------------------------------------------------- #
def _residual_block_d_impl(x_nchw, params, compute_dtype=jnp.bfloat16):
    B, Cin, H, W = x_nchw.shape
    Cout = params["w1"].shape[0]
    assert H % 2 == 0 and W % 2 == 0 and (H * W) % 8 == 0 and W >= 2

    HW = H * W
    Hh, Wh = H // 2, W // 2
    HWh = Hh * Wh
    Cpi = max(_round_up(Cin, 128), 128)     # lane-dense (multiple of 128)
    Cpo = max(_round_up(Cout, 128), 128)
    pad_rows = _round_up(W + 1, 8)          # sublane-aligned halo
    f32 = jnp.float32

    # NCHW -> flattened NHWC, channels zero-padded to Cpi, cast to bf16
    x_flat = jnp.transpose(x_nchw, (0, 2, 3, 1)).reshape(B, HW, Cin)
    x_flat = jnp.pad(x_flat, ((0, 0), (0, 0), (0, Cpi - Cin))).astype(compute_dtype)

    # tiny column-boundary masks for the dx = -1 / +1 taps
    col = jnp.arange(HW, dtype=jnp.int32) % W
    mask_l = (col != 0).astype(compute_dtype).reshape(HW, 1)
    mask_r = (col != W - 1).astype(compute_dtype).reshape(HW, 1)

    # repack conv weights as (9*Cin_pad, Cout_pad) im2col matrices (bf16 operands)
    def repack3x3(w, cin_p, cout_p):
        co, ci = w.shape[0], w.shape[1]
        wk = jnp.transpose(w, (2, 3, 1, 0)).reshape(9, ci, co)
        wk = jnp.pad(wk, ((0, 0), (0, cin_p - ci), (0, cout_p - co)))
        return wk.reshape(9 * cin_p, cout_p).astype(compute_dtype)

    w1 = repack3x3(params["w1"], Cpi, Cpo)
    w2 = repack3x3(params["w2"], Cpo, Cpo)
    wsc = jnp.pad(jnp.transpose(params["wsc"].reshape(Cout, Cin), (1, 0)),
                  ((0, Cpi - Cin), (0, Cpo - Cout))).astype(compute_dtype)
    b1 = jnp.pad(params["b1"], (0, Cpo - Cout)).reshape(1, Cpo).astype(f32)
    b2 = jnp.pad(params["b2"], (0, Cpo - Cout)).reshape(1, Cpo).astype(f32)
    bsc = jnp.pad(params["bsc"], (0, Cpo - Cout)).reshape(1, Cpo).astype(f32)

    kernel = _make_kernel(H, W, pad_rows)

    # NOTE: the weight / mask BlockSpecs are grid-invariant; if VMEM ever gets
    # tight they can be single-buffered via pipeline_mode=pl.Buffered(1).
    grid_spec = pltpu.PrefetchScalarGridSpec(
        num_scalar_prefetch=0,
        grid=(B,),
        in_specs=[
            pl.BlockSpec((1, HW, Cpi), lambda b: (b, 0, 0)),    # x (per batch)
            pl.BlockSpec((HW, 1), lambda b: (0, 0)),            # mask: x > 0
            pl.BlockSpec((HW, 1), lambda b: (0, 0)),            # mask: x < W-1
            pl.BlockSpec((9 * Cpi, Cpo), lambda b: (0, 0)),     # w1 (im2col)
            pl.BlockSpec((1, Cpo), lambda b: (0, 0)),           # b1
            pl.BlockSpec((9 * Cpo, Cpo), lambda b: (0, 0)),     # w2 (im2col)
            pl.BlockSpec((1, Cpo), lambda b: (0, 0)),           # b2
            pl.BlockSpec((Cpi, Cpo), lambda b: (0, 0)),         # w shortcut
            pl.BlockSpec((1, Cpo), lambda b: (0, 0)),           # b shortcut
        ],
        out_specs=pl.BlockSpec((1, HWh, Cpo), lambda b: (b, 0, 0)),
        scratch_shapes=[
            pltpu.VMEM((HW + 2 * pad_rows, Cpi), compute_dtype),  # halo'd activation
            pltpu.VMEM((HW + 2 * pad_rows, Cpo), compute_dtype),  # halo'd h1
            pltpu.VMEM((HW, Cpo), jnp.float32),                   # pre-pool sum
        ],
    )

    out_flat = pl.pallas_call(
        kernel,
        out_shape=jax.ShapeDtypeStruct((B, HWh, Cpo), jnp.float32),
        grid_spec=grid_spec,
        compiler_params=pltpu.CompilerParams(dimension_semantics=("parallel",)),
    )(x_flat, mask_l, mask_r, w1, b1, w2, b2, wsc, bsc)

    out = out_flat[:, :, :Cout].reshape(B, Hh, Wh, Cout)
    return jnp.transpose(out, (0, 3, 1, 2))                       # back to NCHW


residual_block_d = jax.jit(_residual_block_d_impl, static_argnames="compute_dtype")


# ----------------------------------------------------------------------------- #
# Deterministic parameter setup (orthogonal init + spectral-norm reparam).
# ----------------------------------------------------------------------------- #
def _orthogonal(key, shape):
    rows = shape[0]
    cols = int(np.prod(shape[1:]))
    a = jax.random.normal(key, (max(rows, cols), min(rows, cols)), jnp.float32)
    q, r = jnp.linalg.qr(a)
    d = jnp.diag(r)
    q = q * jnp.where(d >= 0, 1.0, -1.0)
    if rows < cols:
        q = q.T
    return q[:rows, :cols].reshape(shape).astype(jnp.float32)


def _spectral_normalize(w, key, n_iter=1, eps=1e-12):
    w_mat = w.reshape(w.shape[0], -1)
    u = jax.random.normal(key, (w_mat.shape[0],), jnp.float32)
    u = u / (jnp.linalg.norm(u) + eps)
    v = w_mat.T @ u
    for _ in range(n_iter):
        v = w_mat.T @ u
        v = v / (jnp.linalg.norm(v) + eps)
        u = w_mat @ v
        u = u / (jnp.linalg.norm(u) + eps)
    sigma = u @ (w_mat @ v)
    return w / sigma


def init_params(key, in_channels, out_channels):
    ks = jax.random.split(key, 9)
    w1 = _orthogonal(ks[0], (out_channels, in_channels, 3, 3))
    w2 = _orthogonal(ks[1], (out_channels, out_channels, 3, 3))
    wsc = _orthogonal(ks[2], (out_channels, in_channels, 1, 1))
    b1 = 0.1 * jax.random.normal(ks[3], (out_channels,), jnp.float32)
    b2 = 0.1 * jax.random.normal(ks[4], (out_channels,), jnp.float32)
    bsc = 0.1 * jax.random.normal(ks[5], (out_channels,), jnp.float32)
    # fold the spectral-norm reparameterization into the weights (1 power iter)
    w1 = _spectral_normalize(w1, ks[6])
    w2 = _spectral_normalize(w2, ks[7])
    wsc = _spectral_normalize(wsc, ks[8])
    return dict(w1=w1, b1=b1, w2=w2, b2=b2, wsc=wsc, bsc=bsc)


# ----------------------------------------------------------------------------- #
# Pure-JAX f32 reference (for correctness check only).
# ----------------------------------------------------------------------------- #
def reference_forward(x, p):
    def conv(v, w, b, pad):
        y = jax.lax.conv_general_dilated(
            v, w, (1, 1), [(pad, pad), (pad, pad)],
            dimension_numbers=("NCHW", "OIHW", "NCHW"))
        return y + b[None, :, None, None]

    def pool(v):
        s = jax.lax.reduce_window(v, 0.0, jax.lax.add,
                                  (1, 1, 2, 2), (1, 1, 2, 2), "VALID")
        return s / 4.0

    a = _leaky_relu(x)                                  # inplace lrelu mutates input
    h = conv(a, p["w1"], p["b1"], 1)
    h = _leaky_relu(h)
    h = conv(h, p["w2"], p["b2"], 1)
    return pool(h) + pool(conv(a, p["wsc"], p["bsc"], 0))


if __name__ == "__main__":
    B, Cin, Cout, H, W = 2, 4, 8, 16, 16
    key = jax.random.PRNGKey(0)
    kx, kp = jax.random.split(key)
    x = jax.random.normal(kx, (B, Cin, H, W), jnp.float32)
    params = init_params(kp, Cin, Cout)

    out = residual_block_d(x, params)
    out = jax.block_until_ready(out)

    ref = reference_forward(x, params)
    assert out.shape == (B, Cout, H // 2, W // 2), out.shape
    max_err = float(jnp.max(jnp.abs(out - ref)))
    # bf16 operands / f32 accumulation vs. a pure-f32 reference
    assert max_err < 5e-2, f"max abs error too large: {max_err}"
    print("KERNEL_OK")
</pallas_src>

<mosaic_0001>
module attributes {stable_mosaic.version = 11 : i64} {
  func.func @kernel(%arg0: i32, %arg1: memref<1x256x128xbf16, #tpu.memory_space<vmem>>, %arg2: memref<256x1xbf16, #tpu.memory_space<vmem>>, %arg3: memref<256x1xbf16, #tpu.memory_space<vmem>>, %arg4: memref<1152x128xbf16, #tpu.memory_space<vmem>>, %arg5: memref<1x128xf32, #tpu.memory_space<vmem>>, %arg6: memref<1152x128xbf16, #tpu.memory_space<vmem>>, %arg7: memref<1x128xf32, #tpu.memory_space<vmem>>, %arg8: memref<128x128xbf16, #tpu.memory_space<vmem>>, %arg9: memref<1x128xf32, #tpu.memory_space<vmem>>, %arg10: memref<1x64x128xf32, #tpu.memory_space<vmem>>, %arg11: memref<304x128xbf16, #tpu.memory_space<vmem>>, %arg12: memref<304x128xbf16, #tpu.memory_space<vmem>>, %arg13: memref<256x128xf32, #tpu.memory_space<vmem>>) attributes {dimension_semantics = [#tpu.dimension_semantics<parallel>], iteration_bounds = array<i64: 2>, scalar_prefetch = 0 : i64, scratch_operands = 3 : i64, tpu.core_type = #tpu.core_type<tc>, window_params = [{transform_indices = @transform_0, window_bounds = array<i64: 1, 256, 128>}, {pipeline_mode = #tpu.pipeline_mode<synchronous>, transform_indices = @transform_1, window_bounds = array<i64: 256, 1>}, {pipeline_mode = #tpu.pipeline_mode<synchronous>, transform_indices = @transform_2, window_bounds = array<i64: 256, 1>}, {pipeline_mode = #tpu.pipeline_mode<synchronous>, transform_indices = @transform_3, window_bounds = array<i64: 1152, 128>}, {pipeline_mode = #tpu.pipeline_mode<synchronous>, transform_indices = @transform_4, window_bounds = array<i64: 1, 128>}, {pipeline_mode = #tpu.pipeline_mode<synchronous>, transform_indices = @transform_5, window_bounds = array<i64: 1152, 128>}, {pipeline_mode = #tpu.pipeline_mode<synchronous>, transform_indices = @transform_6, window_bounds = array<i64: 1, 128>}, {pipeline_mode = #tpu.pipeline_mode<synchronous>, transform_indices = @transform_7, window_bounds = array<i64: 128, 128>}, {pipeline_mode = #tpu.pipeline_mode<synchronous>, transform_indices = @transform_8, window_bounds = array<i64: 1, 128>}, {transform_indices = @transform_9, window_bounds = array<i64: 1, 64, 128>}]} {
    %c0 = arith.constant 0 : index
    %c0_0 = arith.constant 0 : index
    %c0_1 = arith.constant 0 : index
    %0 = vector.load %arg1[%c0, %c0_0, %c0_1] : memref<1x256x128xbf16, #tpu.memory_space<vmem>>, vector<1x256x128xbf16>
    %1 = vector.shape_cast %0 : vector<1x256x128xbf16> to vector<256x128xbf16>
    %2 = arith.extf %1 : vector<256x128xbf16> to vector<256x128xf32>
    %cst = arith.constant 0.000000e+00 : f32
    %3 = vector.broadcast %cst : f32 to vector<256x128xf32>
    %4 = arith.cmpf oge, %2, %3 : vector<256x128xf32>
    %cst_2 = arith.constant 2.000000e-01 : f32
    %5 = vector.broadcast %cst_2 : f32 to vector<256x128xf32>
    %6 = arith.mulf %5, %2 : vector<256x128xf32>
    %7 = arith.select %4, %2, %6 : vector<256x128xi1>, vector<256x128xf32>
    %8 = arith.truncf %7 : vector<256x128xf32> to vector<256x128xbf16>
    %c0_3 = arith.constant 0 : index
    %c0_4 = arith.constant 0 : index
    %9 = vector.load %arg2[%c0_3, %c0_4] : memref<256x1xbf16, #tpu.memory_space<vmem>>, vector<256x1xbf16>
    %c0_5 = arith.constant 0 : index
    %c0_6 = arith.constant 0 : index
    %10 = vector.load %arg3[%c0_5, %c0_6] : memref<256x1xbf16, #tpu.memory_space<vmem>>, vector<256x1xbf16>
    %cst_7 = arith.constant 0.000000e+00 : bf16
    %11 = vector.broadcast %cst_7 : bf16 to vector<24x128xbf16>
    %c0_8 = arith.constant 0 : index
    %c0_9 = arith.constant 0 : index
    %12 = vector.load %arg11[%c0_8, %c0_9] : memref<304x128xbf16, #tpu.memory_space<vmem>>, vector<24x128xbf16>
    tpu.vector_store %arg11[%c0_8, %c0_9], %11 {strides = array<i32>} : memref<304x128xbf16, #tpu.memory_space<vmem>>, vector<24x128xbf16>,
    %c280 = arith.constant 280 : index
    %c0_10 = arith.constant 0 : index
    %13 = vector.load %arg11[%c280, %c0_10] : memref<304x128xbf16, #tpu.memory_space<vmem>>, vector<24x128xbf16>
    tpu.vector_store %arg11[%c280, %c0_10], %11 {strides = array<i32>} : memref<304x128xbf16, #tpu.memory_space<vmem>>, vector<24x128xbf16>,
    %c24 = arith.constant 24 : index
    %c0_11 = arith.constant 0 : index
    %14 = vector.load %arg11[%c24, %c0_11] : memref<304x128xbf16, #tpu.memory_space<vmem>>, vector<256x128xbf16>
    tpu.vector_store %arg11[%c24, %c0_11], %8 {strides = array<i32>} : memref<304x128xbf16, #tpu.memory_space<vmem>>, vector<256x128xbf16>,
    %c7 = arith.constant 7 : index
    %c0_12 = arith.constant 0 : index
    %15 = vector.load %arg11[%c7, %c0_12] : memref<304x128xbf16, #tpu.memory_space<vmem>>, vector<256x128xbf16>
    %16 = vector.broadcast %9 : vector<256x1xbf16> to vector<256x128xbf16>
    %17 = arith.mulf %15, %16 : vector<256x128xbf16>
    %c8 = arith.constant 8 : index
    %c0_13 = arith.constant 0 : index
    %18 = vector.load %arg11[%c8, %c0_13] : memref<304x128xbf16, #tpu.memory_space<vmem>>, vector<256x128xbf16>
    %c9 = arith.constant 9 : index
    %c0_14 = arith.constant 0 : index
    %19 = vector.load %arg11[%c9, %c0_14] : memref<304x128xbf16, #tpu.memory_space<vmem>>, vector<256x128xbf16>
    %20 = vector.broadcast %10 : vector<256x1xbf16> to vector<256x128xbf16>
    %21 = arith.mulf %19, %20 : vector<256x128xbf16>
    %c23 = arith.constant 23 : index
    %c0_15 = arith.constant 0 : index
    %22 = vector.load %arg11[%c23, %c0_15] : memref<304x128xbf16, #tpu.memory_space<vmem>>, vector<256x128xbf16>
    %23 = vector.broadcast %9 : vector<256x1xbf16> to vector<256x128xbf16>
    %24 = arith.mulf %22, %23 : vector<256x128xbf16>
    %c24_16 = arith.constant 24 : index
    %c0_17 = arith.constant 0 : index
    %25 = vector.load %arg11[%c24_16, %c0_17] : memref<304x128xbf16, #tpu.memory_space<vmem>>, vector<256x128xbf16>
    %c25 = arith.constant 25 : index
    %c0_18 = arith.constant 0 : index
    %26 = vector.load %arg11[%c25, %c0_18] : memref<304x128xbf16, #tpu.memory_space<vmem>>, vector<256x128xbf16>
    %27 = vector.broadcast %10 : vector<256x1xbf16> to vector<256x128xbf16>
    %28 = arith.mulf %26, %27 : vector<256x128xbf16>
    %c39 = arith.constant 39 : index
    %c0_19 = arith.constant 0 : index
    %29 = vector.load %arg11[%c39, %c0_19] : memref<304x128xbf16, #tpu.memory_space<vmem>>, vector<256x128xbf16>
    %30 = vector.broadcast %9 : vector<256x1xbf16> to vector<256x128xbf16>
    %31 = arith.mulf %29, %30 : vector<256x128xbf16>
    %c40 = arith.constant 40 : index
    %c0_20 = arith.constant 0 : index
    %32 = vector.load %arg11[%c40, %c0_20] : memref<304x128xbf16, #tpu.memory_space<vmem>>, vector<256x128xbf16>
    %c41 = arith.constant 41 : index
    %c0_21 = arith.constant 0 : index
    %33 = vector.load %arg11[%c41, %c0_21] : memref<304x128xbf16, #tpu.memory_space<vmem>>, vector<256x128xbf16>
    %34 = vector.broadcast %10 : vector<256x1xbf16> to vector<256x128xbf16>
    %35 = arith.mulf %33, %34 : vector<256x128xbf16>
    %36 = tpu.concatenate %17, %18, %21, %24, %25, %28, %31, %32, %35 in 1 : vector<256x128xbf16>, vector<256x128xbf16>, vector<256x128xbf16>, vector<256x128xbf16>, vector<256x128xbf16>, vector<256x128xbf16>, vector<256x128xbf16>, vector<256x128xbf16>, vector<256x128xbf16> -> vector<256x1152xbf16>
    %c0_22 = arith.constant 0 : index
    %c0_23 = arith.constant 0 : index
    %37 = vector.load %arg4[%c0_22, %c0_23] : memref<1152x128xbf16, #tpu.memory_space<vmem>>, vector<1152x128xbf16>
    %cst_24 = arith.constant dense<0.000000e+00> : vector<256x128xf32>
    %38 = tpu.matmul %36, %37, %cst_24 {dimension_numbers = #tpu.dot_dimension_numbers<[1], [0], [0], [1], [0, 0, 1, 1], [], []>} : vector<256x1152xbf16>, vector<1152x128xbf16>, vector<256x128xf32> -> vector<256x128xf32>
    %c0_25 = arith.constant 0 : index
    %c0_26 = arith.constant 0 : index
    %39 = vector.load %arg5[%c0_25, %c0_26] : memref<1x128xf32, #tpu.memory_space<vmem>>, vector<1x128xf32>
    %40 = vector.broadcast %39 : vector<1x128xf32> to vector<256x128xf32>
    %41 = arith.addf %38, %40 : vector<256x128xf32>
    %cst_27 = arith.constant 0.000000e+00 : f32
    %42 = vector.broadcast %cst_27 : f32 to vector<256x128xf32>
    %43 = arith.cmpf oge, %41, %42 : vector<256x128xf32>
    %cst_28 = arith.constant 2.000000e-01 : f32
    %44 = vector.broadcast %cst_28 : f32 to vector<256x128xf32>
    %45 = arith.mulf %44, %41 : vector<256x128xf32>
    %46 = arith.select %43, %41, %45 : vector<256x128xi1>, vector<256x128xf32>
    %47 = arith.truncf %46 : vector<256x128xf32> to vector<256x128xbf16>
    %cst_29 = arith.constant 0.000000e+00 : bf16
    %48 = vector.broadcast %cst_29 : bf16 to vector<24x128xbf16>
    %c0_30 = arith.constant 0 : index
    %c0_31 = arith.constant 0 : index
    %49 = vector.load %arg12[%c0_30, %c0_31] : memref<304x128xbf16, #tpu.memory_space<vmem>>, vector<24x128xbf16>
    tpu.vector_store %arg12[%c0_30, %c0_31], %48 {strides = array<i32>} : memref<304x128xbf16, #tpu.memory_space<vmem>>, vector<24x128xbf16>,
    %c280_32 = arith.constant 280 : index
    %c0_33 = arith.constant 0 : index
    %50 = vector.load %arg12[%c280_32, %c0_33] : memref<304x128xbf16, #tpu.memory_space<vmem>>, vector<24x128xbf16>
    tpu.vector_store %arg12[%c280_32, %c0_33], %48 {strides = array<i32>} : memref<304x128xbf16, #tpu.memory_space<vmem>>, vector<24x128xbf16>,
    %c24_34 = arith.constant 24 : index
    %c0_35 = arith.constant 0 : index
    %51 = vector.load %arg12[%c24_34, %c0_35] : memref<304x128xbf16, #tpu.memory_space<vmem>>, vector<256x128xbf16>
    tpu.vector_store %arg12[%c24_34, %c0_35], %47 {strides = array<i32>} : memref<304x128xbf16, #tpu.memory_space<vmem>>, vector<256x128xbf16>,
    %c7_36 = arith.constant 7 : index
    %c0_37 = arith.constant 0 : index
    %52 = vector.load %arg12[%c7_36, %c0_37] : memref<304x128xbf16, #tpu.memory_space<vmem>>, vector<256x128xbf16>
    %53 = vector.broadcast %9 : vector<256x1xbf16> to vector<256x128xbf16>
    %54 = arith.mulf %52, %53 : vector<256x128xbf16>
    %c8_38 = arith.constant 8 : index
    %c0_39 = arith.constant 0 : index
    %55 = vector.load %arg12[%c8_38, %c0_39] : memref<304x128xbf16, #tpu.memory_space<vmem>>, vector<256x128xbf16>
    %c9_40 = arith.constant 9 : index
    %c0_41 = arith.constant 0 : index
    %56 = vector.load %arg12[%c9_40, %c0_41] : memref<304x128xbf16, #tpu.memory_space<vmem>>, vector<256x128xbf16>
    %57 = vector.broadcast %10 : vector<256x1xbf16> to vector<256x128xbf16>
    %58 = arith.mulf %56, %57 : vector<256x128xbf16>
    %c23_42 = arith.constant 23 : index
    %c0_43 = arith.constant 0 : index
    %59 = vector.load %arg12[%c23_42, %c0_43] : memref<304x128xbf16, #tpu.memory_space<vmem>>, vector<256x128xbf16>
    %60 = vector.broadcast %9 : vector<256x1xbf16> to vector<256x128xbf16>
    %61 = arith.mulf %59, %60 : vector<256x128xbf16>
    %c24_44 = arith.constant 24 : index
    %c0_45 = arith.constant 0 : index
    %62 = vector.load %arg12[%c24_44, %c0_45] : memref<304x128xbf16, #tpu.memory_space<vmem>>, vector<256x128xbf16>
    %c25_46 = arith.constant 25 : index
    %c0_47 = arith.constant 0 : index
    %63 = vector.load %arg12[%c25_46, %c0_47] : memref<304x128xbf16, #tpu.memory_space<vmem>>, vector<256x128xbf16>
    %64 = vector.broadcast %10 : vector<256x1xbf16> to vector<256x128xbf16>
    %65 = arith.mulf %63, %64 : vector<256x128xbf16>
    %c39_48 = arith.constant 39 : index
    %c0_49 = arith.constant 0 : index
    %66 = vector.load %arg12[%c39_48, %c0_49] : memref<304x128xbf16, #tpu.memory_space<vmem>>, vector<256x128xbf16>
    %67 = vector.broadcast %9 : vector<256x1xbf16> to vector<256x128xbf16>
    %68 = arith.mulf %66, %67 : vector<256x128xbf16>
    %c40_50 = arith.constant 40 : index
    %c0_51 = arith.constant 0 : index
    %69 = vector.load %arg12[%c40_50, %c0_51] : memref<304x128xbf16, #tpu.memory_space<vmem>>, vector<256x128xbf16>
    %c41_52 = arith.constant 41 : index
    %c0_53 = arith.constant 0 : index
    %70 = vector.load %arg12[%c41_52, %c0_53] : memref<304x128xbf16, #tpu.memory_space<vmem>>, vector<256x128xbf16>
    %71 = vector.broadcast %10 : vector<256x1xbf16> to vector<256x128xbf16>
    %72 = arith.mulf %70, %71 : vector<256x128xbf16>
    %73 = tpu.concatenate %54, %55, %58, %61, %62, %65, %68, %69, %72 in 1 : vector<256x128xbf16>, vector<256x128xbf16>, vector<256x128xbf16>, vector<256x128xbf16>, vector<256x128xbf16>, vector<256x128xbf16>, vector<256x128xbf16>, vector<256x128xbf16>, vector<256x128xbf16> -> vector<256x1152xbf16>
    %c0_54 = arith.constant 0 : index
    %c0_55 = arith.constant 0 : index
    %74 = vector.load %arg6[%c0_54, %c0_55] : memref<1152x128xbf16, #tpu.memory_space<vmem>>, vector<1152x128xbf16>
    %cst_56 = arith.constant dense<0.000000e+00> : vector<256x128xf32>
    %75 = tpu.matmul %73, %74, %cst_56 {dimension_numbers = #tpu.dot_dimension_numbers<[1], [0], [0], [1], [0, 0, 1, 1], [], []>} : vector<256x1152xbf16>, vector<1152x128xbf16>, vector<256x128xf32> -> vector<256x128xf32>
    %c0_57 = arith.constant 0 : index
    %c0_58 = arith.constant 0 : index
    %76 = vector.load %arg7[%c0_57, %c0_58] : memref<1x128xf32, #tpu.memory_space<vmem>>, vector<1x128xf32>
    %77 = vector.broadcast %76 : vector<1x128xf32> to vector<256x128xf32>
    %78 = arith.addf %75, %77 : vector<256x128xf32>
    %c0_59 = arith.constant 0 : index
    %c0_60 = arith.constant 0 : index
    %79 = vector.load %arg8[%c0_59, %c0_60] : memref<128x128xbf16, #tpu.memory_space<vmem>>, vector<128x128xbf16>
    %cst_61 = arith.constant dense<0.000000e+00> : vector<256x128xf32>
    %80 = tpu.matmul %8, %79, %cst_61 {dimension_numbers = #tpu.dot_dimension_numbers<[1], [0], [0], [1], [0, 0, 1, 1], [], []>} : vector<256x128xbf16>, vector<128x128xbf16>, vector<256x128xf32> -> vector<256x128xf32>
    %c0_62 = arith.constant 0 : index
    %c0_63 = arith.constant 0 : index
    %81 = vector.load %arg9[%c0_62, %c0_63] : memref<1x128xf32, #tpu.memory_space<vmem>>, vector<1x128xf32>
    %82 = vector.broadcast %81 : vector<1x128xf32> to vector<256x128xf32>
    %83 = arith.addf %80, %82 : vector<256x128xf32>
    %84 = arith.addf %78, %83 : vector<256x128xf32>
    %c0_64 = arith.constant 0 : index
    %c0_65 = arith.constant 0 : index
    %85 = vector.load %arg13[%c0_64, %c0_65] : memref<256x128xf32, #tpu.memory_space<vmem>>, vector<256x128xf32>
    tpu.vector_store %arg13[%c0_64, %c0_65], %84 {strides = array<i32>} : memref<256x128xf32, #tpu.memory_space<vmem>>, vector<256x128xf32>,
    %c0_66 = arith.constant 0 : index
    %c0_67 = arith.constant 0 : index
    %86 = tpu.strided_load %arg13[%c0_66, %c0_67] {strides = array<i32: 2, 1>} : memref<256x128xf32, #tpu.memory_space<vmem>>, vector<8x128xf32>
    %c1 = arith.constant 1 : index
    %c0_68 = arith.constant 0 : index
    %87 = tpu.strided_load %arg13[%c1, %c0_68] {strides = array<i32: 2, 1>} : memref<256x128xf32, #tpu.memory_space<vmem>>, vector<8x128xf32>
    %88 = arith.addf %86, %87 : vector<8x128xf32>
    %c16 = arith.constant 16 : index
    %c0_69 = arith.constant 0 : index
    %89 = tpu.strided_load %arg13[%c16, %c0_69] {strides = array<i32: 2, 1>} : memref<256x128xf32, #tpu.memory_space<vmem>>, vector<8x128xf32>
    %90 = arith.addf %88, %89 : vector<8x128xf32>
    %c17 = arith.constant 17 : index
    %c0_70 = arith.constant 0 : index
    %91 = tpu.strided_load %arg13[%c17, %c0_70] {strides = array<i32: 2, 1>} : memref<256x128xf32, #tpu.memory_space<vmem>>, vector<8x128xf32>
    %92 = arith.addf %90, %91 : vector<8x128xf32>
    %cst_71 = arith.constant 2.500000e-01 : f32
    %93 = vector.broadcast %cst_71 : f32 to vector<8x128xf32>
    %94 = arith.mulf %93, %92 : vector<8x128xf32>
    %c0_72 = arith.constant 0 : index
    %c0_73 = arith.constant 0 : index
    %c0_74 = arith.constant 0 : index
    %95 = vector.load %arg10[%c0_72, %c0_73, %c0_74] : memref<1x64x128xf32, #tpu.memory_space<vmem>>, vector<1x8x128xf32>
    %96 = vector.shape_cast %95 : vector<1x8x128xf32> to vector<8x128xf32>
    %97 = vector.shape_cast %94 : vector<8x128xf32> to vector<1x8x128xf32>
    tpu.vector_store %arg10[%c0_72, %c0_73, %c0_74], %97 {strides = array<i32>} : memref<1x64x128xf32, #tpu.memory_space<vmem>>, vector<1x8x128xf32>,
    %c32 = arith.constant 32 : index
    %c0_75 = arith.constant 0 : index
    %98 = tpu.strided_load %arg13[%c32, %c0_75] {strides = array<i32: 2, 1>} : memref<256x128xf32, #tpu.memory_space<vmem>>, vector<8x128xf32>
    %c33 = arith.constant 33 : index
    %c0_76 = arith.constant 0 : index
    %99 = tpu.strided_load %arg13[%c33, %c0_76] {strides = array<i32: 2, 1>} : memref<256x128xf32, #tpu.memory_space<vmem>>, vector<8x128xf32>
    %100 = arith.addf %98, %99 : vector<8x128xf32>
    %c48 = arith.constant 48 : index
    %c0_77 = arith.constant 0 : index
    %101 = tpu.strided_load %arg13[%c48, %c0_77] {strides = array<i32: 2, 1>} : memref<256x128xf32, #tpu.memory_space<vmem>>, vector<8x128xf32>
    %102 = arith.addf %100, %101 : vector<8x128xf32>
    %c49 = arith.constant 49 : index
    %c0_78 = arith.constant 0 : index
    %103 = tpu.strided_load %arg13[%c49, %c0_78] {strides = array<i32: 2, 1>} : memref<256x128xf32, #tpu.memory_space<vmem>>, vector<8x128xf32>
    %104 = arith.addf %102, %103 : vector<8x128xf32>
    %cst_79 = arith.constant 2.500000e-01 : f32
    %105 = vector.broadcast %cst_79 : f32 to vector<8x128xf32>
    %106 = arith.mulf %105, %104 : vector<8x128xf32>
    %c0_80 = arith.constant 0 : index
    %c8_81 = arith.constant 8 : index
    %c0_82 = arith.constant 0 : index
    %107 = vector.load %arg10[%c0_80, %c8_81, %c0_82] : memref<1x64x128xf32, #tpu.memory_space<vmem>>, vector<1x8x128xf32>
    %108 = vector.shape_cast %107 : vector<1x8x128xf32> to vector<8x128xf32>
    %109 = vector.shape_cast %106 : vector<8x128xf32> to vector<1x8x128xf32>
    tpu.vector_store %arg10[%c0_80, %c8_81, %c0_82], %109 {strides = array<i32>} : memref<1x64x128xf32, #tpu.memory_space<vmem>>, vector<1x8x128xf32>,
    %c64 = arith.constant 64 : index
    %c0_83 = arith.constant 0 : index
    %110 = tpu.strided_load %arg13[%c64, %c0_83] {strides = array<i32: 2, 1>} : memref<256x128xf32, #tpu.memory_space<vmem>>, vector<8x128xf32>
    %c65 = arith.constant 65 : index
    %c0_84 = arith.constant 0 : index
    %111 = tpu.strided_load %arg13[%c65, %c0_84] {strides = array<i32: 2, 1>} : memref<256x128xf32, #tpu.memory_space<vmem>>, vector<8x128xf32>
    %112 = arith.addf %110, %111 : vector<8x128xf32>
    %c80 = arith.constant 80 : index
    %c0_85 = arith.constant 0 : index
    %113 = tpu.strided_load %arg13[%c80, %c0_85] {strides = array<i32: 2, 1>} : memref<256x128xf32, #tpu.memory_space<vmem>>, vector<8x128xf32>
    %114 = arith.addf %112, %113 : vector<8x128xf32>
    %c81 = arith.constant 81 : index
    %c0_86 = arith.constant 0 : index
    %115 = tpu.strided_load %arg13[%c81, %c0_86] {strides = array<i32: 2, 1>} : memref<256x128xf32, #tpu.memory_space<vmem>>, vector<8x128xf32>
    %116 = arith.addf %114, %115 : vector<8x128xf32>
    %cst_87 = arith.constant 2.500000e-01 : f32
    %117 = vector.broadcast %cst_87 : f32 to vector<8x128xf32>
    %118 = arith.mulf %117, %116 : vector<8x128xf32>
    %c0_88 = arith.constant 0 : index
    %c16_89 = arith.constant 16 : index
    %c0_90 = arith.constant 0 : index
    %119 = vector.load %arg10[%c0_88, %c16_89, %c0_90] : memref<1x64x128xf32, #tpu.memory_space<vmem>>, vector<1x8x128xf32>
    %120 = vector.shape_cast %119 : vector<1x8x128xf32> to vector<8x128xf32>
    %121 = vector.shape_cast %118 : vector<8x128xf32> to vector<1x8x128xf32>
    tpu.vector_store %arg10[%c0_88, %c16_89, %c0_90], %121 {strides = array<i32>} : memref<1x64x128xf32, #tpu.memory_space<vmem>>, vector<1x8x128xf32>,
    %c96 = arith.constant 96 : index
    %c0_91 = arith.constant 0 : index
    %122 = tpu.strided_load %arg13[%c96, %c0_91] {strides = array<i32: 2, 1>} : memref<256x128xf32, #tpu.memory_space<vmem>>, vector<8x128xf32>
    %c97 = arith.constant 97 : index
    %c0_92 = arith.constant 0 : index
    %123 = tpu.strided_load %arg13[%c97, %c0_92] {strides = array<i32: 2, 1>} : memref<256x128xf32, #tpu.memory_space<vmem>>, vector<8x128xf32>
    %124 = arith.addf %122, %123 : vector<8x128xf32>
    %c112 = arith.constant 112 : index
    %c0_93 = arith.constant 0 : index
    %125 = tpu.strided_load %arg13[%c112, %c0_93] {strides = array<i32: 2, 1>} : memref<256x128xf32, #tpu.memory_space<vmem>>, vector<8x128xf32>
    %126 = arith.addf %124, %125 : vector<8x128xf32>
    %c113 = arith.constant 113 : index
    %c0_94 = arith.constant 0 : index
    %127 = tpu.strided_load %arg13[%c113, %c0_94] {strides = array<i32: 2, 1>} : memref<256x128xf32, #tpu.memory_space<vmem>>, vector<8x128xf32>
    %128 = arith.addf %126, %127 : vector<8x128xf32>
    %cst_95 = arith.constant 2.500000e-01 : f32
    %129 = vector.broadcast %cst_95 : f32 to vector<8x128xf32>
    %130 = arith.mulf %129, %128 : vector<8x128xf32>
    %c0_96 = arith.constant 0 : index
    %c24_97 = arith.constant 24 : index
    %c0_98 = arith.constant 0 : index
    %131 = vector.load %arg10[%c0_96, %c24_97, %c0_98] : memref<1x64x128xf32, #tpu.memory_space<vmem>>, vector<1x8x128xf32>
    %132 = vector.shape_cast %131 : vector<1x8x128xf32> to vector<8x128xf32>
    %133 = vector.shape_cast %130 : vector<8x128xf32> to vector<1x8x128xf32>
    tpu.vector_store %arg10[%c0_96, %c24_97, %c0_98], %133 {strides = array<i32>} : memref<1x64x128xf32, #tpu.memory_space<vmem>>, vector<1x8x128xf32>,
    %c128 = arith.constant 128 : index
    %c0_99 = arith.constant 0 : index
    %134 = tpu.strided_load %arg13[%c128, %c0_99] {strides = array<i32: 2, 1>} : memref<256x128xf32, #tpu.memory_space<vmem>>, vector<8x128xf32>
    %c129 = arith.constant 129 : index
    %c0_100 = arith.constant 0 : index
    %135 = tpu.strided_load %arg13[%c129, %c0_100] {strides = array<i32: 2, 1>} : memref<256x128xf32, #tpu.memory_space<vmem>>, vector<8x128xf32>
    %136 = arith.addf %134, %135 : vector<8x128xf32>
    %c144 = arith.constant 144 : index
    %c0_101 = arith.constant 0 : index
    %137 = tpu.strided_load %arg13[%c144, %c0_101] {strides = array<i32: 2, 1>} : memref<256x128xf32, #tpu.memory_space<vmem>>, vector<8x128xf32>
    %138 = arith.addf %136, %137 : vector<8x128xf32>
    %c145 = arith.constant 145 : index
    %c0_102 = arith.constant 0 : index
    %139 = tpu.strided_load %arg13[%c145, %c0_102] {strides = array<i32: 2, 1>} : memref<256x128xf32, #tpu.memory_space<vmem>>, vector<8x128xf32>
    %140 = arith.addf %138, %139 : vector<8x128xf32>
    %cst_103 = arith.constant 2.500000e-01 : f32
    %141 = vector.broadcast %cst_103 : f32 to vector<8x128xf32>
    %142 = arith.mulf %141, %140 : vector<8x128xf32>
    %c0_104 = arith.constant 0 : index
    %c32_105 = arith.constant 32 : index
    %c0_106 = arith.constant 0 : index
    %143 = vector.load %arg10[%c0_104, %c32_105, %c0_106] : memref<1x64x128xf32, #tpu.memory_space<vmem>>, vector<1x8x128xf32>
    %144 = vector.shape_cast %143 : vector<1x8x128xf32> to vector<8x128xf32>
    %145 = vector.shape_cast %142 : vector<8x128xf32> to vector<1x8x128xf32>
    tpu.vector_store %arg10[%c0_104, %c32_105, %c0_106], %145 {strides = array<i32>} : memref<1x64x128xf32, #tpu.memory_space<vmem>>, vector<1x8x128xf32>,
    %c160 = arith.constant 160 : index
    %c0_107 = arith.constant 0 : index
    %146 = tpu.strided_load %arg13[%c160, %c0_107] {strides = array<i32: 2, 1>} : memref<256x128xf32, #tpu.memory_space<vmem>>, vector<8x128xf32>
    %c161 = arith.constant 161 : index
    %c0_108 = arith.constant 0 : index
    %147 = tpu.strided_load %arg13[%c161, %c0_108] {strides = array<i32: 2, 1>} : memref<256x128xf32, #tpu.memory_space<vmem>>, vector<8x128xf32>
    %148 = arith.addf %146, %147 : vector<8x128xf32>
    %c176 = arith.constant 176 : index
    %c0_109 = arith.constant 0 : index
    %149 = tpu.strided_load %arg13[%c176, %c0_109] {strides = array<i32: 2, 1>} : memref<256x128xf32, #tpu.memory_space<vmem>>, vector<8x128xf32>
    %150 = arith.addf %148, %149 : vector<8x128xf32>
    %c177 = arith.constant 177 : index
    %c0_110 = arith.constant 0 : index
    %151 = tpu.strided_load %arg13[%c177, %c0_110] {strides = array<i32: 2, 1>} : memref<256x128xf32, #tpu.memory_space<vmem>>, vector<8x128xf32>
    %152 = arith.addf %150, %151 : vector<8x128xf32>
    %cst_111 = arith.constant 2.500000e-01 : f32
    %153 = vector.broadcast %cst_111 : f32 to vector<8x128xf32>
    %154 = arith.mulf %153, %152 : vector<8x128xf32>
    %c0_112 = arith.constant 0 : index
    %c40_113 = arith.constant 40 : index
    %c0_114 = arith.constant 0 : index
    %155 = vector.load %arg10[%c0_112, %c40_113, %c0_114] : memref<1x64x128xf32, #tpu.memory_space<vmem>>, vector<1x8x128xf32>
    %156 = vector.shape_cast %155 : vector<1x8x128xf32> to vector<8x128xf32>
    %157 = vector.shape_cast %154 : vector<8x128xf32> to vector<1x8x128xf32>
    tpu.vector_store %arg10[%c0_112, %c40_113, %c0_114], %157 {strides = array<i32>} : memref<1x64x128xf32, #tpu.memory_space<vmem>>, vector<1x8x128xf32>,
    %c192 = arith.constant 192 : index
    %c0_115 = arith.constant 0 : index
    %158 = tpu.strided_load %arg13[%c192, %c0_115] {strides = array<i32: 2, 1>} : memref<256x128xf32, #tpu.memory_space<vmem>>, vector<8x128xf32>
    %c193 = arith.constant 193 : index
    %c0_116 = arith.constant 0 : index
    %159 = tpu.strided_load %arg13[%c193, %c0_116] {strides = array<i32: 2, 1>} : memref<256x128xf32, #tpu.memory_space<vmem>>, vector<8x128xf32>
    %160 = arith.addf %158, %159 : vector<8x128xf32>
    %c208 = arith.constant 208 : index
    %c0_117 = arith.constant 0 : index
    %161 = tpu.strided_load %arg13[%c208, %c0_117] {strides = array<i32: 2, 1>} : memref<256x128xf32, #tpu.memory_space<vmem>>, vector<8x128xf32>
    %162 = arith.addf %160, %161 : vector<8x128xf32>
    %c209 = arith.constant 209 : index
    %c0_118 = arith.constant 0 : index
    %163 = tpu.strided_load %arg13[%c209, %c0_118] {strides = array<i32: 2, 1>} : memref<256x128xf32, #tpu.memory_space<vmem>>, vector<8x128xf32>
    %164 = arith.addf %162, %163 : vector<8x128xf32>
    %cst_119 = arith.constant 2.500000e-01 : f32
    %165 = vector.broadcast %cst_119 : f32 to vector<8x128xf32>
    %166 = arith.mulf %165, %164 : vector<8x128xf32>
    %c0_120 = arith.constant 0 : index
    %c48_121 = arith.constant 48 : index
    %c0_122 = arith.constant 0 : index
    %167 = vector.load %arg10[%c0_120, %c48_121, %c0_122] : memref<1x64x128xf32, #tpu.memory_space<vmem>>, vector<1x8x128xf32>
    %168 = vector.shape_cast %167 : vector<1x8x128xf32> to vector<8x128xf32>
    %169 = vector.shape_cast %166 : vector<8x128xf32> to vector<1x8x128xf32>
    tpu.vector_store %arg10[%c0_120, %c48_121, %c0_122], %169 {strides = array<i32>} : memref<1x64x128xf32, #tpu.memory_space<vmem>>, vector<1x8x128xf32>,
    %c224 = arith.constant 224 : index
    %c0_123 = arith.constant 0 : index
    %170 = tpu.strided_load %arg13[%c224, %c0_123] {strides = array<i32: 2, 1>} : memref<256x128xf32, #tpu.memory_space<vmem>>, vector<8x128xf32>
    %c225 = arith.constant 225 : index
    %c0_124 = arith.constant 0 : index
    %171 = tpu.strided_load %arg13[%c225, %c0_124] {strides = array<i32: 2, 1>} : memref<256x128xf32, #tpu.memory_space<vmem>>, vector<8x128xf32>
    %172 = arith.addf %170, %171 : vector<8x128xf32>
    %c240 = arith.constant 240 : index
    %c0_125 = arith.constant 0 : index
    %173 = tpu.strided_load %arg13[%c240, %c0_125] {strides = array<i32: 2, 1>} : memref<256x128xf32, #tpu.memory_space<vmem>>, vector<8x128xf32>
    %174 = arith.addf %172, %173 : vector<8x128xf32>
    %c241 = arith.constant 241 : index
    %c0_126 = arith.constant 0 : index
    %175 = tpu.strided_load %arg13[%c241, %c0_126] {strides = array<i32: 2, 1>} : memref<256x128xf32, #tpu.memory_space<vmem>>, vector<8x128xf32>
    %176 = arith.addf %174, %175 : vector<8x128xf32>
    %cst_127 = arith.constant 2.500000e-01 : f32
    %177 = vector.broadcast %cst_127 : f32 to vector<8x128xf32>
    %178 = arith.mulf %177, %176 : vector<8x128xf32>
    %c0_128 = arith.constant 0 : index
    %c56 = arith.constant 56 : index
    %c0_129 = arith.constant 0 : index
    %179 = vector.load %arg10[%c0_128, %c56, %c0_129] : memref<1x64x128xf32, #tpu.memory_space<vmem>>, vector<1x8x128xf32>
    %180 = vector.shape_cast %179 : vector<1x8x128xf32> to vector<8x128xf32>
    %181 = vector.shape_cast %178 : vector<8x128xf32> to vector<1x8x128xf32>
    tpu.vector_store %arg10[%c0_128, %c56, %c0_129], %181 {strides = array<i32>} : memref<1x64x128xf32, #tpu.memory_space<vmem>>, vector<1x8x128xf32>,
    return
  }
  func.func @transform_0(%arg0: i32) -> (i32, i32, i32) {
    %c0_i32 = arith.constant 0 : i32
    %c0_i32_0 = arith.constant 0 : i32
    %c0_i32_1 = arith.constant 0 : i32
    return %arg0, %c0_i32, %c0_i32_0 : i32, i32, i32
  }
  func.func @transform_1(%arg0: i32) -> (i32, i32) {
    %c0_i32 = arith.constant 0 : i32
    %c0_i32_0 = arith.constant 0 : i32
    %c0_i32_1 = arith.constant 0 : i32
    return %c0_i32, %c0_i32_0 : i32, i32
  }
  func.func @transform_2(%arg0: i32) -> (i32, i32) {
    %c0_i32 = arith.constant 0 : i32
    %c0_i32_0 = arith.constant 0 : i32
    %c0_i32_1 = arith.constant 0 : i32
    return %c0_i32, %c0_i32_0 : i32, i32
  }
  func.func @transform_3(%arg0: i32) -> (i32, i32) {
    %c0_i32 = arith.constant 0 : i32
    %c0_i32_0 = arith.constant 0 : i32
    %c0_i32_1 = arith.constant 0 : i32
    return %c0_i32, %c0_i32_0 : i32, i32
  }
  func.func @transform_4(%arg0: i32) -> (i32, i32) {
    %c0_i32 = arith.constant 0 : i32
    %c0_i32_0 = arith.constant 0 : i32
    %c0_i32_1 = arith.constant 0 : i32
    return %c0_i32, %c0_i32_0 : i32, i32
  }
  func.func @transform_5(%arg0: i32) -> (i32, i32) {
    %c0_i32 = arith.constant 0 : i32
    %c0_i32_0 = arith.constant 0 : i32
    %c0_i32_1 = arith.constant 0 : i32
    return %c0_i32, %c0_i32_0 : i32, i32
  }
  func.func @transform_6(%arg0: i32) -> (i32, i32) {
    %c0_i32 = arith.constant 0 : i32
    %c0_i32_0 = arith.constant 0 : i32
    %c0_i32_1 = arith.constant 0 : i32
    return %c0_i32, %c0_i32_0 : i32, i32
  }
  func.func @transform_7(%arg0: i32) -> (i32, i32) {
    %c0_i32 = arith.constant 0 : i32
    %c0_i32_0 = arith.constant 0 : i32
    %c0_i32_1 = arith.constant 0 : i32
    return %c0_i32, %c0_i32_0 : i32, i32
  }
  func.func @transform_8(%arg0: i32) -> (i32, i32) {
    %c0_i32 = arith.constant 0 : i32
    %c0_i32_0 = arith.constant 0 : i32
    %c0_i32_1 = arith.constant 0 : i32
    return %c0_i32, %c0_i32_0 : i32, i32
  }
  func.func @transform_9(%arg0: i32) -> (i32, i32, i32) {
    %c0_i32 = arith.constant 0 : i32
    %c0_i32_0 = arith.constant 0 : i32
    %c0_i32_1 = arith.constant 0 : i32
    return %arg0, %c0_i32, %c0_i32_0 : i32, i32, i32
  }
}

</mosaic_0001>

<llo_original>
// kernel: _residual_block_d_impl.1
$region0: #{_residual_block_d_impl.1}
  #allocation0 [shape = 'u32[]', space=smem, size = 0x4, offset = 0x4, fixed_abs, tag = 'smem constant byte address 0x4 - core index']
  #allocation1 [shape = 'u32[144,128]{1,0:T(1,128)}', space=vmem, size = 0x12000, scoped, tag = 'internal scratch']
  #allocation2 [shape = 'bf16[304,128]{1,0:T(16,128)(2,1)}', space=vmem, size = 0x13000, scoped, tag = 'scratch operand']
  #allocation3 [shape = 'bf16[304,128]{1,0:T(16,128)(2,1)}', space=vmem, size = 0x13000, scoped, tag = 'scratch operand']
  #allocation4 [shape = 'f32[256,128]{1,0:T(8,128)}', space=vmem, size = 0x20000, scoped, tag = 'scratch operand']
  %s0 = inlined_call_operand.vmem [shape: bf16[2,256,128], index: 0, kind: input, shape index: {}]
  %s1 = inlined_call_operand.vmem [shape: bf16[256,1], index: 1, kind: input, shape index: {}]
  %s2 = inlined_call_operand.vmem [shape: bf16[256,1], index: 2, kind: input, shape index: {}]
  %s3 = inlined_call_operand.vmem [shape: bf16[1152,128], index: 3, kind: input, shape index: {}]
  %s4 = inlined_call_operand.vmem [shape: f32[1,128], index: 4, kind: input, shape index: {}]
  %s5 = inlined_call_operand.vmem [shape: bf16[1152,128], index: 5, kind: input, shape index: {}]
  %s6 = inlined_call_operand.vmem [shape: f32[1,128], index: 6, kind: input, shape index: {}]
  %s7 = inlined_call_operand.vmem [shape: bf16[128,128], index: 7, kind: input, shape index: {}]
  %s8 = inlined_call_operand.vmem [shape: f32[1,128], index: 8, kind: input, shape index: {}]
  %s9 = inlined_call_operand.vmem [shape: f32[2,64,128], index: 9, kind: output, shape index: {}]
  %s10 = sld [smem:[#allocation0]]
  $region69: #{_residual_block_d_impl.1} parent=0
    _
  %s12 = ssub.s32 1, %s10
  %s13 = scalar_select 0, %s12, %s10
  loop: start=0, step=1, limit=4
  $region2: #{_residual_block_d_impl.1} parent=0 // loop_pre_header
    _
  $region3: #{_residual_block_d_impl.1} parent=0 // loop_header
    %s15 = sphi 0, %s19
    %p16 = scmp.ge.s32.totalorder %s15, 4
    %s25 = sphi 0, %s27
    %s28 = sphi 0, %s25
    %s29 = sphi 0, %s28
    %s45 = sphi 0, %s29
    %s49 = sphi 0, %s49
    %s51 = sphi 0, %s49
    %s52 = sphi 0, %s51
    %s66 = sphi 0, %s52
    %s70 = sphi 0, %s70
    %s72 = sphi 0, %s70
    %s73 = sphi 0, %s72
    %s87 = sphi 0, %s73
    %s91 = sphi 0, %s91
    %s93 = sphi 0, %s91
    %s94 = sphi 0, %s93
    %s108 = sphi 0, %s94
    %s112 = sphi 0, %s112
    %s114 = sphi 0, %s112
    %s115 = sphi 0, %s114
    %s129 = sphi 0, %s115
    %s133 = sphi 0, %s133
    %s135 = sphi 0, %s133
    %s136 = sphi 0, %s135
    %s150 = sphi 0, %s136
    %s154 = sphi 0, %s154
    %s156 = sphi 0, %s154
    %s157 = sphi 0, %s156
    %s171 = sphi 0, %s157
    %s175 = sphi 0, %s175
    %s177 = sphi 0, %s175
    %s178 = sphi 0, %s177
    %s192 = sphi 0, %s178
    %s196 = sphi 0, %s196
    %s198 = sphi 0, %s196
    %s199 = sphi 0, %s198
    %s213 = sphi 0, %s199
    %s219 = sphi 0, %s221
    %s222 = sphi 0, %s219
    %s223 = sphi 0, %s222
    %s239 = sphi 0, %s223
  $region4: #{_residual_block_d_impl.1} parent=0 // loop_header_branch
    %18 = sbr.rel (%p16) target = $region8
  $region5: #{_residual_block_d_impl.1} parent=0 // loop_body
    %s20 = ssub.s32 %s15, 1
    %s21 = ssub.s32 %s15, 2
    %s22 = sadd.s32 %s15, 1
    %s23 = ssub.s32 %s15, %s22
    %p24 = scmp.eq.s32.totalorder %s23, 0
    %s26 = sadd.s32 %s25, 1
    %s27 = scalar_select %p24, %s25, %s26
    %p30 = pneg %p24
    %p31 = scmp.eq.s32.totalorder %s15, 1
    %p32 = por %p30, %p31
    %p33 = scmp.ne.s32.totalorder %s25, %s28
    %p34 = scmp.eq.s32.totalorder %s15, 0
    %p35 = por %p33, %p34
    %p36 = scmp.ne.s32.totalorder %s25, %s28
    %p37 = scmp.eq.s32.totalorder %s20, 1
    %p38 = por %p36, %p37
    %p39 = scmp.ne.s32.totalorder %s28, %s29
    %p40 = scmp.eq.s32.totalorder %s20, 0
    %p41 = por %p39, %p40
    %p42 = scmp.ne.s32.totalorder %s28, %s29
    %p43 = scmp.eq.s32.totalorder %s21, 1
    %p44 = por %p42, %p43
    %p46 = scmp.ne.s32.totalorder %s29, %s45
    %p47 = scmp.eq.s32.totalorder %s21, 0
    %p48 = por %p46, %p47
    %s50 = sadd.s32 %s49, 1
    %p53 = scmp.eq.s32.totalorder %s15, 1
    %p54 = scmp.ne.s32.totalorder %s49, %s51
    %p55 = scmp.eq.s32.totalorder %s15, 0
    %p56 = por %p54, %p55
    %p57 = scmp.ne.s32.totalorder %s49, %s51
    %p58 = scmp.eq.s32.totalorder %s20, 1
    %p59 = por %p57, %p58
    %p60 = scmp.ne.s32.totalorder %s51, %s52
    %p61 = scmp.eq.s32.totalorder %s20, 0
    %p62 = por %p60, %p61
    %p63 = scmp.ne.s32.totalorder %s51, %s52
    %p64 = scmp.eq.s32.totalorder %s21, 1
    %p65 = por %p63, %p64
    %p67 = scmp.ne.s32.totalorder %s52, %s66
    %p68 = scmp.eq.s32.totalorder %s21, 0
    %p69 = por %p67, %p68
    %s71 = sadd.s32 %s70, 1
    %p74 = scmp.eq.s32.totalorder %s15, 1
    %p75 = scmp.ne.s32.totalorder %s70, %s72
    %p76 = scmp.eq.s32.totalorder %s15, 0
    %p77 = por %p75, %p76
    %p78 = scmp.ne.s32.totalorder %s70, %s72
    %p79 = scmp.eq.s32.totalorder %s20, 1
    %p80 = por %p78, %p79
    %p81 = scmp.ne.s32.totalorder %s72, %s73
    %p82 = scmp.eq.s32.totalorder %s20, 0
    %p83 = por %p81, %p82
    %p84 = scmp.ne.s32.totalorder %s72, %s73
    %p85 = scmp.eq.s32.totalorder %s21, 1
    %p86 = por %p84, %p85
    %p88 = scmp.ne.s32.totalorder %s73, %s87
    %p89 = scmp.eq.s32.totalorder %s21, 0
    %p90 = por %p88, %p89
    %s92 = sadd.s32 %s91, 1
    %p95 = scmp.eq.s32.totalorder %s15, 1
    %p96 = scmp.ne.s32.totalorder %s91, %s93
    %p97 = scmp.eq.s32.totalorder %s15, 0
    %p98 = por %p96, %p97
    %p99 = scmp.ne.s32.totalorder %s91, %s93
    %p100 = scmp.eq.s32.totalorder %s20, 1
    %p101 = por %p99, %p100
    %p102 = scmp.ne.s32.totalorder %s93, %s94
    %p103 = scmp.eq.s32.totalorder %s20, 0
    %p104 = por %p102, %p103
    %p105 = scmp.ne.s32.totalorder %s93, %s94
    %p106 = scmp.eq.s32.totalorder %s21, 1
    %p107 = por %p105, %p106
    %p109 = scmp.ne.s32.totalorder %s94, %s108
    %p110 = scmp.eq.s32.totalorder %s21, 0
    %p111 = por %p109, %p110
    %s113 = sadd.s32 %s112, 1
    %p116 = scmp.eq.s32.totalorder %s15, 1
    %p117 = scmp.ne.s32.totalorder %s112, %s114
    %p118 = scmp.eq.s32.totalorder %s15, 0
    %p119 = por %p117, %p118
    %p120 = scmp.ne.s32.totalorder %s112, %s114
    %p121 = scmp.eq.s32.totalorder %s20, 1
    %p122 = por %p120, %p121
    %p123 = scmp.ne.s32.totalorder %s114, %s115
    %p124 = scmp.eq.s32.totalorder %s20, 0
    %p125 = por %p123, %p124
    %p126 = scmp.ne.s32.totalorder %s114, %s115
    %p127 = scmp.eq.s32.totalorder %s21, 1
    %p128 = por %p126, %p127
    %p130 = scmp.ne.s32.totalorder %s115, %s129
    %p131 = scmp.eq.s32.totalorder %s21, 0
    %p132 = por %p130, %p131
    %s134 = sadd.s32 %s133, 1
    %p137 = scmp.eq.s32.totalorder %s15, 1
    %p138 = scmp.ne.s32.totalorder %s133, %s135
    %p139 = scmp.eq.s32.totalorder %s15, 0
    %p140 = por %p138, %p139
    %p141 = scmp.ne.s32.totalorder %s133, %s135
    %p142 = scmp.eq.s32.totalorder %s20, 1
    %p143 = por %p141, %p142
    %p144 = scmp.ne.s32.totalorder %s135, %s136
    %p145 = scmp.eq.s32.totalorder %s20, 0
    %p146 = por %p144, %p145
    %p147 = scmp.ne.s32.totalorder %s135, %s136
    %p148 = scmp.eq.s32.totalorder %s21, 1
    %p149 = por %p147, %p148
    %p151 = scmp.ne.s32.totalorder %s136, %s150
    %p152 = scmp.eq.s32.totalorder %s21, 0
    %p153 = por %p151, %p152
    %s155 = sadd.s32 %s154, 1
    %p158 = scmp.eq.s32.totalorder %s15, 1
    %p159 = scmp.ne.s32.totalorder %s154, %s156
    %p160 = scmp.eq.s32.totalorder %s15, 0
    %p161 = por %p159, %p160
    %p162 = scmp.ne.s32.totalorder %s154, %s156
    %p163 = scmp.eq.s32.totalorder %s20, 1
    %p164 = por %p162, %p163
    %p165 = scmp.ne.s32.totalorder %s156, %s157
    %p166 = scmp.eq.s32.totalorder %s20, 0
    %p167 = por %p165, %p166
    %p168 = scmp.ne.s32.totalorder %s156, %s157
    %p169 = scmp.eq.s32.totalorder %s21, 1
    %p170 = por %p168, %p169
    %p172 = scmp.ne.s32.totalorder %s157, %s171
    %p173 = scmp.eq.s32.totalorder %s21, 0
    %p174 = por %p172, %p173
    %s176 = sadd.s32 %s175, 1
    %p179 = scmp.eq.s32.totalorder %s15, 1
    %p180 = scmp.ne.s32.totalorder %s175, %s177
    %p181 = scmp.eq.s32.totalorder %s15, 0
    %p182 = por %p180, %p181
    %p183 = scmp.ne.s32.totalorder %s175, %s177
    %p184 = scmp.eq.s32.totalorder %s20, 1
    %p185 = por %p183, %p184
    %p186 = scmp.ne.s32.totalorder %s177, %s178
    %p187 = scmp.eq.s32.totalorder %s20, 0
    %p188 = por %p186, %p187
    %p189 = scmp.ne.s32.totalorder %s177, %s178
    %p190 = scmp.eq.s32.totalorder %s21, 1
    %p191 = por %p189, %p190
    %p193 = scmp.ne.s32.totalorder %s178, %s192
    %p194 = scmp.eq.s32.totalorder %s21, 0
    %p195 = por %p193, %p194
    %s197 = sadd.s32 %s196, 1
    %p200 = scmp.eq.s32.totalorder %s15, 1
    %p201 = scmp.ne.s32.totalorder %s196, %s198
    %p202 = scmp.eq.s32.totalorder %s15, 0
    %p203 = por %p201, %p202
    %p204 = scmp.ne.s32.totalorder %s196, %s198
    %p205 = scmp.eq.s32.totalorder %s20, 1
    %p206 = por %p204, %p205
    %p207 = scmp.ne.s32.totalorder %s198, %s199
    %p208 = scmp.eq.s32.totalorder %s20, 0
    %p209 = por %p207, %p208
    %p210 = scmp.ne.s32.totalorder %s198, %s199
    %p211 = scmp.eq.s32.totalorder %s21, 1
    %p212 = por %p210, %p211
    %p214 = scmp.ne.s32.totalorder %s199, %s213
    %p215 = scmp.eq.s32.totalorder %s21, 0
    %p216 = por %p214, %p215
    %s217 = ssub.s32 %s15, %s22
    %p218 = scmp.eq.s32.totalorder %s217, 0
    %s220 = sadd.s32 %s219, 1
    %s221 = scalar_select %p218, %s219, %s220
    %p224 = pneg %p218
    %p225 = scmp.eq.s32.totalorder %s15, 1
    %p226 = por %p224, %p225
    %p227 = scmp.ne.s32.totalorder %s219, %s222
    %p228 = scmp.eq.s32.totalorder %s15, 0
    %p229 = por %p227, %p228
    %p230 = scmp.ne.s32.totalorder %s219, %s222
    %p231 = scmp.eq.s32.totalorder %s20, 1
    %p232 = por %p230, %p231
    %p233 = scmp.ne.s32.totalorder %s222, %s223
    %p234 = scmp.eq.s32.totalorder %s20, 0
    %p235 = por %p233, %p234
    %p236 = scmp.ne.s32.totalorder %s222, %s223
    %p237 = scmp.eq.s32.totalorder %s21, 1
    %p238 = por %p236, %p237
    %p240 = scmp.ne.s32.totalorder %s223, %s239
    %p241 = scmp.eq.s32.totalorder %s21, 0
    %p242 = por %p240, %p241
    %p243 = scmp.le.s32.totalorder 1, %s15
    %p244 = scmp.lt.s32.totalorder %s15, 3
    %p245 = pnand %p243, %p244
    %p246 = pneg %p245
    // Predicated region
    $region9: #{_residual_block_d_impl.1} parent=5 // pred_check
      _
    $region10: #{_residual_block_d_impl.1} parent=5 // pred_check_branch
      %248 = sbr.rel (%p245) target = $region12
    $region11: #{_residual_block_d_impl.1} parent=5 // pred_region
      %s249 = ssub.s32 %s15, 1
      // Predicated region
      $region13: #{_residual_block_d_impl.1} parent=11 // pred_check
        %p250 = pneg %p62
      $region14: #{_residual_block_d_impl.1} parent=11 // pred_check_branch
        %252 = sbr.rel (%p250) target = $region16
      $region15: #{_residual_block_d_impl.1} parent=11 // pred_region
        _
      $region16: #{_residual_block_d_impl.1} parent=11 // pred_fallthru
        _
      // Predicated region
      $region17: #{_residual_block_d_impl.1} parent=11 // pred_check
        %p253 = pneg %p83
      $region18: #{_residual_block_d_impl.1} parent=11 // pred_check_branch
        %255 = sbr.rel (%p253) target = $region20
      $region19: #{_residual_block_d_impl.1} parent=11 // pred_region
        _
      $region20: #{_residual_block_d_impl.1} parent=11 // pred_fallthru
        _
      // Predicated region
      $region21: #{_residual_block_d_impl.1} parent=11 // pred_check
        %p256 = pneg %p104
      $region22: #{_residual_block_d_impl.1} parent=11 // pred_check_branch
        %258 = sbr.rel (%p256) target = $region24
      $region23: #{_residual_block_d_impl.1} parent=11 // pred_region
        _
      $region24: #{_residual_block_d_impl.1} parent=11 // pred_fallthru
        _
      // Predicated region
      $region25: #{_residual_block_d_impl.1} parent=11 // pred_check
        %p259 = pneg %p125
      $region26: #{_residual_block_d_impl.1} parent=11 // pred_check_branch
        %261 = sbr.rel (%p259) target = $region28
      $region27: #{_residual_block_d_impl.1} parent=11 // pred_region
        _
      $region28: #{_residual_block_d_impl.1} parent=11 // pred_fallthru
        _
      // Predicated region
      $region29: #{_residual_block_d_impl.1} parent=11 // pred_check
        %p262 = pneg %p146
      $region30: #{_residual_block_d_impl.1} parent=11 // pred_check_branch
        %264 = sbr.rel (%p262) target = $region32
      $region31: #{_residual_block_d_impl.1} parent=11 // pred_region
        _
      $region32: #{_residual_block_d_impl.1} parent=11 // pred_fallthru
        _
      // Predicated region
      $region33: #{_residual_block_d_impl.1} parent=11 // pred_check
        %p265 = pneg %p167
      $region34: #{_residual_block_d_impl.1} parent=11 // pred_check_branch
        %267 = sbr.rel (%p265) target = $region36
      $region35: #{_residual_block_d_impl.1} parent=11 // pred_region
        _
      $region36: #{_residual_block_d_impl.1} parent=11 // pred_fallthru
        _
      // Predicated region
      $region37: #{_residual_block_d_impl.1} parent=11 // pred_check
        %p268 = pneg %p188
      $region38: #{_residual_block_d_impl.1} parent=11 // pred_check_branch
        %270 = sbr.rel (%p268) target = $region40
      $region39: #{_residual_block_d_impl.1} parent=11 // pred_region
        _
      $region40: #{_residual_block_d_impl.1} parent=11 // pred_fallthru
        _
      // Predicated region
      $region41: #{_residual_block_d_impl.1} parent=11 // pred_check
        %p271 = pneg %p209
      $region42: #{_residual_block_d_impl.1} parent=11 // pred_check_branch
        %273 = sbr.rel (%p271) target = $region44
      $region43: #{_residual_block_d_impl.1} parent=11 // pred_region
        _
      $region44: #{_residual_block_d_impl.1} parent=11 // pred_fallthru
        _
    $region12: #{_residual_block_d_impl.1} parent=5 // pred_fallthru
      _
    %p274 = scmp.lt.s32.totalorder %s15, 2
    // Predicated region
    $region45: #{_residual_block_d_impl.1} parent=5 // pred_check
      %p275 = pneg %p274
    $region46: #{_residual_block_d_impl.1} parent=5 // pred_check_branch
      %277 = sbr.rel (%p275) target = $region48
    $region47: #{_residual_block_d_impl.1} parent=5 // pred_region
      // Predicated region
      $region49: #{_residual_block_d_impl.1} parent=47 // pred_check
        %p278 = pneg %p35
      $region50: #{_residual_block_d_impl.1} parent=47 // pred_check_branch
        %280 = sbr.rel (%p278) target = $region52
      $region51: #{_residual_block_d_impl.1} parent=47 // pred_region
        %p281 = scmp.lt.s32.totalorder %s15, 1
        %s282 = scalar_select %p281, %s15, 1
        %s283 = smul.addr %s282, 32
        %s284 = smul.addr %s283, 4
        %s285 = scalar_lea.vmem %s0, %s284
      $region52: #{_residual_block_d_impl.1} parent=47 // pred_fallthru
        _
    $region48: #{_residual_block_d_impl.1} parent=5 // pred_fallthru
      _
    %p286 = scmp.le.s32.totalorder 1, %s15
    %p287 = scmp.lt.s32.totalorder %s15, 3
    %p288 = pnand %p286, %p287
    %p289 = pneg %p288
    // Predicated region
    $region53: #{_residual_block_d_impl.1} parent=5 // pred_check
      _
    $region54: #{_residual_block_d_impl.1} parent=5 // pred_check_branch
      %291 = sbr.rel (%p288) target = $region56
    $region55: #{_residual_block_d_impl.1} parent=5 // pred_region
      %s292 = ssub.s32 %s15, 1
      %p293 = scmp.lt.s32.totalorder %s20, 1
      %s294 = scalar_select %p293, %s20, 1
      %s295 = smul.addr %s294, 32
      %s296 = smul.addr %s295, 4
      %s297 = scalar_lea.vmem %s0, %s296
      %p298 = pneg %p41
      %p299 = pneg %p38
      %p300 = pneg %p62
      %p301 = pneg %p59
      %p302 = pneg %p83
      %p303 = pneg %p80
      %p304 = pneg %p104
      %p305 = pneg %p101
      %p306 = pneg %p125
      %p307 = pneg %p122
      %p308 = pneg %p146
      %p309 = pneg %p143
      %p310 = pneg %p167
      %p311 = pneg %p164
      %p312 = pneg %p188
      %p313 = pneg %p185
      %p314 = pneg %p209
      %p315 = pneg %p206
      %p316 = pneg %p235
      %p317 = pneg %p232
      %p318 = scmp.lt.s32.totalorder %s20, 1
      %s319 = scalar_select %p318, %s20, 1
      %s320 = smul.addr %s319, 8
      %s321 = smul.addr %s320, 8
      %s322 = scalar_lea.vmem %s9, %s321
      %p323 = scmp.lt.s32.totalorder %s20, 1
      %s324 = scalar_select %p323, %s20, 1
      %s325 = smul.addr %s324, 32
      %s326 = smul.addr %s325, 4
      %s327 = scalar_lea.vmem %s0, %s326
      %p328 = scmp.lt.s32.totalorder %s20, 1
      %s329 = scalar_select %p328, %s20, 1
      %s330 = smul.addr %s329, 8
      %s331 = smul.addr %s330, 8
      %s332 = scalar_lea.vmem %s9, %s331
      %v334 = vld [vmem:[%s327] sm:$0xf]
      %v335 = vld [vmem:[%s327 + $0x4] sm:$0xf]
      %v336 = vld [vmem:[%s327 + $0x8] sm:$0xf]
      %v337 = vld [vmem:[%s327 + $0xc] sm:$0xf]
      %v338 = vld [vmem:[%s327 + $0x10] sm:$0xf]
      %v339 = vld [vmem:[%s327 + $0x14] sm:$0xf]
      %v340 = vld [vmem:[%s327 + $0x18] sm:$0xf]
      %v341 = vld [vmem:[%s327 + $0x1c] sm:$0xf]
      %v342 = vld [vmem:[%s327 + $0x20] sm:$0xf]
      %v343 = vld [vmem:[%s327 + $0x24] sm:$0xf]
      %v344 = vld [vmem:[%s327 + $0x28] sm:$0xf]
      %v345 = vld [vmem:[%s327 + $0x2c] sm:$0xf]
      %v346 = vld [vmem:[%s327 + $0x30] sm:$0xf]
      %v347 = vld [vmem:[%s327 + $0x34] sm:$0xf]
      %v348 = vld [vmem:[%s327 + $0x38] sm:$0xf]
      %v349 = vld [vmem:[%s327 + $0x3c] sm:$0xf]
      %v350 = vld [vmem:[%s327 + $0x40] sm:$0xf]
      %v351 = vld [vmem:[%s327 + $0x44] sm:$0xf]
      %v352 = vld [vmem:[%s327 + $0x48] sm:$0xf]
      %v353 = vld [vmem:[%s327 + $0x4c] sm:$0xf]
      %v354 = vld [vmem:[%s327 + $0x50] sm:$0xf]
      %v355 = vld [vmem:[%s327 + $0x54] sm:$0xf]
      %v356 = vld [vmem:[%s327 + $0x58] sm:$0xf]
      %v357 = vld [vmem:[%s327 + $0x5c] sm:$0xf]
      %v358 = vld [vmem:[%s327 + $0x60] sm:$0xf]
      %v359 = vld [vmem:[%s327 + $0x64] sm:$0xf]
      %v360 = vld [vmem:[%s327 + $0x68] sm:$0xf]
      %v361 = vld [vmem:[%s327 + $0x6c] sm:$0xf]
      %v362 = vld [vmem:[%s327 + $0x70] sm:$0xf]
      %v363 = vld [vmem:[%s327 + $0x74] sm:$0xf]
      %v364 = vld [vmem:[%s327 + $0x78] sm:$0xf]
      %v365 = vld [vmem:[%s327 + $0x7c] sm:$0xf]
      %v366 = vunpack.c.l.bf16 %v334
      %v367 = vunpack.c.l.bf16 %v335
      %v368 = vunpack.c.l.bf16 %v336
      %v369 = vunpack.c.l.bf16 %v337
      %v370 = vunpack.c.l.bf16 %v338
      %v371 = vunpack.c.l.bf16 %v339
      %v372 = vunpack.c.l.bf16 %v340
      %v373 = vunpack.c.l.bf16 %v341
      %v374 = vunpack.c.l.bf16 %v342
      %v375 = vunpack.c.l.bf16 %v343
      %v376 = vunpack.c.l.bf16 %v344
      %v377 = vunpack.c.l.bf16 %v345
      %v378 = vunpack.c.l.bf16 %v346
      %v379 = vunpack.c.l.bf16 %v347
      %v380 = vunpack.c.l.bf16 %v348
      %v381 = vunpack.c.l.bf16 %v349
      %v382 = vunpack.c.l.bf16 %v350
      %v383 = vunpack.c.l.bf16 %v351
      %v384 = vunpack.c.l.bf16 %v352
      %v385 = vunpack.c.l.bf16 %v353
      %v386 = vunpack.c.l.bf16 %v354
      %v387 = vunpack.c.l.bf16 %v355
      %v388 = vunpack.c.l.bf16 %v356
      %v389 = vunpack.c.l.bf16 %v357
      %v390 = vunpack.c.l.bf16 %v358
      %v391 = vunpack.c.l.bf16 %v359
      %v392 = vunpack.c.l.bf16 %v360
      %v393 = vunpack.c.l.bf16 %v361
      %v394 = vunpack.c.l.bf16 %v362
      %v395 = vunpack.c.l.bf16 %v363
      %v396 = vunpack.c.l.bf16 %v364
      %v397 = vunpack.c.l.bf16 %v365
      %vm398 = vcmp.ge.f32.partialorder %v366, 0.0
      %vm399 = vcmp.ge.f32.partialorder %v367, 0.0
      %vm400 = vcmp.ge.f32.partialorder %v368, 0.0
      %vm401 = vcmp.ge.f32.partialorder %v369, 0.0
      %vm402 = vcmp.ge.f32.partialorder %v370, 0.0
      %vm403 = vcmp.ge.f32.partialorder %v371, 0.0
      %vm404 = vcmp.ge.f32.partialorder %v372, 0.0
      %vm405 = vcmp.ge.f32.partialorder %v373, 0.0
      %vm406 = vcmp.ge.f32.partialorder %v374, 0.0
      %vm407 = vcmp.ge.f32.partialorder %v375, 0.0
      %vm408 = vcmp.ge.f32.partialorder %v376, 0.0
      %vm409 = vcmp.ge.f32.partialorder %v377, 0.0
      %vm410 = vcmp.ge.f32.partialorder %v378, 0.0
      %vm411 = vcmp.ge.f32.partialorder %v379, 0.0
      %vm412 = vcmp.ge.f32.partialorder %v380, 0.0
      %vm413 = vcmp.ge.f32.partialorder %v381, 0.0
      %vm414 = vcmp.ge.f32.partialorder %v382, 0.0
      %vm415 = vcmp.ge.f32.partialorder %v383, 0.0
      %vm416 = vcmp.ge.f32.partialorder %v384, 0.0
      %vm417 = vcmp.ge.f32.partialorder %v385, 0.0
      %vm418 = vcmp.ge.f32.partialorder %v386, 0.0
      %vm419 = vcmp.ge.f32.partialorder %v387, 0.0
      %vm420 = vcmp.ge.f32.partialorder %v388, 0.0
      %vm421 = vcmp.ge.f32.partialorder %v389, 0.0
      %vm422 = vcmp.ge.f32.partialorder %v390, 0.0
      %vm423 = vcmp.ge.f32.partialorder %v391, 0.0
      %vm424 = vcmp.ge.f32.partialorder %v392, 0.0
      %vm425 = vcmp.ge.f32.partialorder %v393, 0.0
      %vm426 = vcmp.ge.f32.partialorder %v394, 0.0
      %vm427 = vcmp.ge.f32.partialorder %v395, 0.0
      %vm428 = vcmp.ge.f32.partialorder %v396, 0.0
      %vm429 = vcmp.ge.f32.partialorder %v397, 0.0
      %v430 = vmul.f32 %v366, 0.2
      %v431 = vmul.f32 %v367, 0.2
      %v432 = vmul.f32 %v368, 0.2
      %v433 = vmul.f32 %v369, 0.2
      %v434 = vmul.f32 %v370, 0.2
      %v435 = vmul.f32 %v371, 0.2
      %v436 = vmul.f32 %v372, 0.2
      %v437 = vmul.f32 %v373, 0.2
      %v438 = vmul.f32 %v374, 0.2
      %v439 = vmul.f32 %v375, 0.2
      %v440 = vmul.f32 %v376, 0.2
      %v441 = vmul.f32 %v377, 0.2
      %v442 = vmul.f32 %v378, 0.2
      %v443 = vmul.f32 %v379, 0.2
      %v444 = vmul.f32 %v380, 0.2
      %v445 = vmul.f32 %v381, 0.2
      %v446 = vmul.f32 %v382, 0.2
      %v447 = vmul.f32 %v383, 0.2
      %v448 = vmul.f32 %v384, 0.2
      %v449 = vmul.f32 %v385, 0.2
      %v450 = vmul.f32 %v386, 0.2
      %v451 = vmul.f32 %v387, 0.2
      %v452 = vmul.f32 %v388, 0.2
      %v453 = vmul.f32 %v389, 0.2
      %v454 = vmul.f32 %v390, 0.2
      %v455 = vmul.f32 %v391, 0.2
      %v456 = vmul.f32 %v392, 0.2
      %v457 = vmul.f32 %v393, 0.2
      %v458 = vmul.f32 %v394, 0.2
      %v459 = vmul.f32 %v395, 0.2
      %v460 = vmul.f32 %v396, 0.2
      %v461 = vmul.f32 %v397, 0.2
      %v462 = vsel %vm398, %v366, %v430
      %v463 = vsel %vm399, %v367, %v431
      %v464 = vsel %vm400, %v368, %v432
      %v465 = vsel %vm401, %v369, %v433
      %v466 = vsel %vm402, %v370, %v434
      %v467 = vsel %vm403, %v371, %v435
      %v468 = vsel %vm404, %v372, %v436
      %v469 = vsel %vm405, %v373, %v437
      %v470 = vsel %vm406, %v374, %v438
      %v471 = vsel %vm407, %v375, %v439
      %v472 = vsel %vm408, %v376, %v440
      %v473 = vsel %vm409, %v377, %v441
      %v474 = vsel %vm410, %v378, %v442
      %v475 = vsel %vm411, %v379, %v443
      %v476 = vsel %vm412, %v380, %v444
      %v477 = vsel %vm413, %v381, %v445
      %v478 = vsel %vm414, %v382, %v446
      %v479 = vsel %vm415, %v383, %v447
      %v480 = vsel %vm416, %v384, %v448
      %v481 = vsel %vm417, %v385, %v449
      %v482 = vsel %vm418, %v386, %v450
      %v483 = vsel %vm419, %v387, %v451
      %v484 = vsel %vm420, %v388, %v452
      %v485 = vsel %vm421, %v389, %v453
      %v486 = vsel %vm422, %v390, %v454
      %v487 = vsel %vm423, %v391, %v455
      %v488 = vsel %vm424, %v392, %v456
      %v489 = vsel %vm425, %v393, %v457
      %v490 = vsel %vm426, %v394, %v458
      %v491 = vsel %vm427, %v395, %v459
      %v492 = vsel %vm428, %v396, %v460
      %v493 = vsel %vm429, %v397, %v461
      %v494 = vpack.c.bf16 %v463, %v462
      %v495 = vpack.c.bf16 %v465, %v464
      %v496 = vpack.c.bf16 %v467, %v466
      %v497 = vpack.c.bf16 %v469, %v468
      %v498 = vpack.c.bf16 %v471, %v470
      %v499 = vpack.c.bf16 %v473, %v472
      %v500 = vpack.c.bf16 %v475, %v474
      %v501 = vpack.c.bf16 %v477, %v476
      %v502 = vpack.c.bf16 %v479, %v478
      %v503 = vpack.c.bf16 %v481, %v480
      %v504 = vpack.c.bf16 %v483, %v482
      %v505 = vpack.c.bf16 %v485, %v484
      %v506 = vpack.c.bf16 %v487, %v486
      %v507 = vpack.c.bf16 %v489, %v488
      %v508 = vpack.c.bf16 %v491, %v490
      %v509 = vpack.c.bf16 %v493, %v492
      %v510 = vld [vmem:[%s1] sm:$0xf]
      %v511 = vld [vmem:[%s1 + $0x4] sm:$0xf]
      %v512 = vld [vmem:[%s1 + $0x8] sm:$0xf]
      %v513 = vld [vmem:[%s1 + $0xc] sm:$0xf]
      %v514 = vld [vmem:[%s1 + $0x10] sm:$0xf]
      %v515 = vld [vmem:[%s1 + $0x14] sm:$0xf]
      %v516 = vld [vmem:[%s1 + $0x18] sm:$0xf]
      %v517 = vld [vmem:[%s1 + $0x1c] sm:$0xf]
      %v518 = vld [vmem:[%s1 + $0x20] sm:$0xf]
      %v519 = vld [vmem:[%s1 + $0x24] sm:$0xf]
      %v520 = vld [vmem:[%s1 + $0x28] sm:$0xf]
      %v521 = vld [vmem:[%s1 + $0x2c] sm:$0xf]
      %v522 = vld [vmem:[%s1 + $0x30] sm:$0xf]
      %v523 = vld [vmem:[%s1 + $0x34] sm:$0xf]
      %v524 = vld [vmem:[%s1 + $0x38] sm:$0xf]
      %v525 = vld [vmem:[%s1 + $0x3c] sm:$0xf]
      %v526 = vld [vmem:[%s1 + $0x40] sm:$0xf]
      %v527 = vld [vmem:[%s1 + $0x44] sm:$0xf]
      %v528 = vld [vmem:[%s1 + $0x48] sm:$0xf]
      %v529 = vld [vmem:[%s1 + $0x4c] sm:$0xf]
      %v530 = vld [vmem:[%s1 + $0x50] sm:$0xf]
      %v531 = vld [vmem:[%s1 + $0x54] sm:$0xf]
      %v532 = vld [vmem:[%s1 + $0x58] sm:$0xf]
      %v533 = vld [vmem:[%s1 + $0x5c] sm:$0xf]
      %v534 = vld [vmem:[%s1 + $0x60] sm:$0xf]
      %v535 = vld [vmem:[%s1 + $0x64] sm:$0xf]
      %v536 = vld [vmem:[%s1 + $0x68] sm:$0xf]
      %v537 = vld [vmem:[%s1 + $0x6c] sm:$0xf]
      %v538 = vld [vmem:[%s1 + $0x70] sm:$0xf]
      %v539 = vld [vmem:[%s1 + $0x74] sm:$0xf]
      %v540 = vld [vmem:[%s1 + $0x78] sm:$0xf]
      %v541 = vld [vmem:[%s1 + $0x7c] sm:$0xf]
      %v542 = vld [vmem:[%s2] sm:$0xf]
      %v543 = vld [vmem:[%s2 + $0x4] sm:$0xf]
      %v544 = vld [vmem:[%s2 + $0x8] sm:$0xf]
      %v545 = vld [vmem:[%s2 + $0xc] sm:$0xf]
      %v546 = vld [vmem:[%s2 + $0x10] sm:$0xf]
      %v547 = vld [vmem:[%s2 + $0x14] sm:$0xf]
      %v548 = vld [vmem:[%s2 + $0x18] sm:$0xf]
      %v549 = vld [vmem:[%s2 + $0x1c] sm:$0xf]
      %v550 = vld [vmem:[%s2 + $0x20] sm:$0xf]
      %v551 = vld [vmem:[%s2 + $0x24] sm:$0xf]
      %v552 = vld [vmem:[%s2 + $0x28] sm:$0xf]
      %v553 = vld [vmem:[%s2 + $0x2c] sm:$0xf]
      %v554 = vld [vmem:[%s2 + $0x30] sm:$0xf]
      %v555 = vld [vmem:[%s2 + $0x34] sm:$0xf]
      %v556 = vld [vmem:[%s2 + $0x38] sm:$0xf]
      %v557 = vld [vmem:[%s2 + $0x3c] sm:$0xf]
      %v558 = vld [vmem:[%s2 + $0x40] sm:$0xf]
      %v559 = vld [vmem:[%s2 + $0x44] sm:$0xf]
      %v560 = vld [vmem:[%s2 + $0x48] sm:$0xf]
      %v561 = vld [vmem:[%s2 + $0x4c] sm:$0xf]
      %v562 = vld [vmem:[%s2 + $0x50] sm:$0xf]
      %v563 = vld [vmem:[%s2 + $0x54] sm:$0xf]
      %v564 = vld [vmem:[%s2 + $0x58] sm:$0xf]
      %v565 = vld [vmem:[%s2 + $0x5c] sm:$0xf]
      %v566 = vld [vmem:[%s2 + $0x60] sm:$0xf]
      %v567 = vld [vmem:[%s2 + $0x64] sm:$0xf]
      %v568 = vld [vmem:[%s2 + $0x68] sm:$0xf]
      %v569 = vld [vmem:[%s2 + $0x6c] sm:$0xf]
      %v570 = vld [vmem:[%s2 + $0x70] sm:$0xf]
      %v571 = vld [vmem:[%s2 + $0x74] sm:$0xf]
      %v572 = vld [vmem:[%s2 + $0x78] sm:$0xf]
      %v573 = vld [vmem:[%s2 + $0x7c] sm:$0xf]
      %574 = vst [vmem:[#allocation2] sm:$0xff] 0
      %575 = vst [vmem:[#allocation2 + $0x8] sm:$0xf] 0
      %576 = vst [vmem:[#allocation2 + $0x88] sm:$0xf0] 0
      %577 = vst [vmem:[#allocation2 + $0x90] sm:$0xff] 0
      %vm594 = vcmask 1043456
      %v595 = vrot.slane %v494, 4
      %v596 = vrot.slane %v495, 4
      %v597 = vsel %vm594, %v595, %v596
      %v598 = vrot.slane %v496, 4
      %v599 = vsel %vm594, %v596, %v598
      %v600 = vrot.slane %v497, 4
      %v601 = vsel %vm594, %v598, %v600
      %v602 = vrot.slane %v498, 4
      %v603 = vsel %vm594, %v600, %v602
      %v604 = vrot.slane %v499, 4
      %v605 = vsel %vm594, %v602, %v604
      %v606 = vrot.slane %v500, 4
      %v607 = vsel %vm594, %v604, %v606
      %v608 = vrot.slane %v501, 4
      %v609 = vsel %vm594, %v606, %v608
      %v610 = vrot.slane %v502, 4
      %v611 = vsel %vm594, %v608, %v610
      %v612 = vrot.slane %v503, 4
      %v613 = vsel %vm594, %v610, %v612
      %v614 = vrot.slane %v504, 4
      %v615 = vsel %vm594, %v612, %v614
      %v616 = vrot.slane %v505, 4
      %v617 = vsel %vm594, %v614, %v616
      %v618 = vrot.slane %v506, 4
      %v619 = vsel %vm594, %v616, %v618
      %v620 = vrot.slane %v507, 4
      %v621 = vsel %vm594, %v618, %v620
      %v622 = vrot.slane %v508, 4
      %v623 = vsel %vm594, %v620, %v622
      %v624 = vrot.slane %v509, 4
      %v625 = vsel %vm594, %v622, %v624
      %643 = vst [vmem:[#allocation2 + $0x8] sm:$0xf0] %v595
      %644 = vst [vmem:[#allocation2 + $0x10] sm:$0xff] %v597
      %645 = vst [vmem:[#allocation2 + $0x18] sm:$0xff] %v599
      %646 = vst [vmem:[#allocation2 + $0x20] sm:$0xff] %v601
      %647 = vst [vmem:[#allocation2 + $0x28] sm:$0xff] %v603
      %648 = vst [vmem:[#allocation2 + $0x30] sm:$0xff] %v605
      %649 = vst [vmem:[#allocation2 + $0x38] sm:$0xff] %v607
      %650 = vst [vmem:[#allocation2 + $0x40] sm:$0xff] %v609
      %651 = vst [vmem:[#allocation2 + $0x48] sm:$0xff] %v611
      %652 = vst [vmem:[#allocation2 + $0x50] sm:$0xff] %v613
      %653 = vst [vmem:[#allocation2 + $0x58] sm:$0xff] %v615
      %654 = vst [vmem:[#allocation2 + $0x60] sm:$0xff] %v617
      %655 = vst [vmem:[#allocation2 + $0x68] sm:$0xff] %v619
      %656 = vst [vmem:[#allocation2 + $0x70] sm:$0xff] %v621
      %657 = vst [vmem:[#allocation2 + $0x78] sm:$0xff] %v623
      %658 = vst [vmem:[#allocation2 + $0x80] sm:$0xff] %v625
      %659 = vst [vmem:[#allocation2 + $0x88] sm:$0xf] %v624
      %v660 = vld [vmem:[#allocation2] sm:$0xf8]
      %v661 = vld [vmem:[#allocation2 + $0x8] sm:$0xff]
      %v662 = vld [vmem:[#allocation2 + $0x10] sm:$0xff]
      %v663 = vld [vmem:[#allocation2 + $0x18] sm:$0xff]
      %v664 = vld [vmem:[#allocation2 + $0x20] sm:$0xff]
      %v665 = vld [vmem:[#allocation2 + $0x28] sm:$0xff]
      %v666 = vld [vmem:[#allocation2 + $0x30] sm:$0xff]
      %v667 = vld [vmem:[#allocation2 + $0x38] sm:$0xff]
      %v668 = vld [vmem:[#allocation2 + $0x40] sm:$0xff]
      %v669 = vld [vmem:[#allocation2 + $0x48] sm:$0xff]
      %v670 = vld [vmem:[#allocation2 + $0x50] sm:$0xff]
      %v671 = vld [vmem:[#allocation2 + $0x58] sm:$0xff]
      %v672 = vld [vmem:[#allocation2 + $0x60] sm:$0xff]
      %v673 = vld [vmem:[#allocation2 + $0x68] sm:$0xff]
      %v674 = vld [vmem:[#allocation2 + $0x70] sm:$0xff]
      %v675 = vld [vmem:[#allocation2 + $0x78] sm:$0xff]
      %v676 = vld [vmem:[#allocation2 + $0x80] sm:$0xf]
      %678 = vset.pattern.permute.xlu0 0
      %679 = vperm.xlu0 %678, %v510
      %v680 = vpop.permute.xlu0 %679
      %v683 = vunpack.c.l.s4 839922192
      %v684 = vunpack.c.0.s8 %v683
      %v685 = vlaneseq
      %v686 = vshrl.u32 %v685, 7
      %v687 = vsub.s32 %v684, %v686
      %v688 = vrot.slane %v680, %v687
      %690 = vset.pattern.permute.xlu0 0
      %691 = vperm.xlu0 %690, %v511
      %v692 = vpop.permute.xlu0 %691
      %v695 = vunpack.c.l.s4 839922192
      %v696 = vunpack.c.0.s8 %v695
      %v697 = vlaneseq
      %v698 = vshrl.u32 %v697, 7
      %v699 = vsub.s32 %v696, %v698
      %v700 = vrot.slane %v692, %v699
      %702 = vset.pattern.permute.xlu0 0
      %703 = vperm.xlu0 %702, %v512
      %v704 = vpop.permute.xlu0 %703
      %v707 = vunpack.c.l.s4 839922192
      %v708 = vunpack.c.0.s8 %v707
      %v709 = vlaneseq
      %v710 = vshrl.u32 %v709, 7
      %v711 = vsub.s32 %v708, %v710
      %v712 = vrot.slane %v704, %v711
      %714 = vset.pattern.permute.xlu0 0
      %715 = vperm.xlu0 %714, %v513
      %v716 = vpop.permute.xlu0 %715
      %v719 = vunpack.c.l.s4 839922192
      %v720 = vunpack.c.0.s8 %v719
      %v721 = vlaneseq
      %v722 = vshrl.u32 %v721, 7
      %v723 = vsub.s32 %v720, %v722
      %v724 = vrot.slane %v716, %v723
      %726 = vset.pattern.permute.xlu0 0
      %727 = vperm.xlu0 %726, %v514
      %v728 = vpop.permute.xlu0 %727
      %v731 = vunpack.c.l.s4 839922192
      %v732 = vunpack.c.0.s8 %v731
      %v733 = vlaneseq
      %v734 = vshrl.u32 %v733, 7
      %v735 = vsub.s32 %v732, %v734
      %v736 = vrot.slane %v728, %v735
      %738 = vset.pattern.permute.xlu0 0
      %739 = vperm.xlu0 %738, %v515
      %v740 = vpop.permute.xlu0 %739
      %v743 = vunpack.c.l.s4 839922192
      %v744 = vunpack.c.0.s8 %v743
      %v745 = vlaneseq
      %v746 = vshrl.u32 %v745, 7
      %v747 = vsub.s32 %v744, %v746
      %v748 = vrot.slane %v740, %v747
      %750 = vset.pattern.permute.xlu0 0
      %751 = vperm.xlu0 %750, %v516
      %v752 = vpop.permute.xlu0 %751
      %v755 = vunpack.c.l.s4 839922192
      %v756 = vunpack.c.0.s8 %v755
      %v757 = vlaneseq
      %v758 = vshrl.u32 %v757, 7
      %v759 = vsub.s32 %v756, %v758
      %v760 = vrot.slane %v752, %v759
      %762 = vset.pattern.permute.xlu0 0
      %763 = vperm.xlu0 %762, %v517
      %v764 = vpop.permute.xlu0 %763
      %v767 = vunpack.c.l.s4 839922192
      %v768 = vunpack.c.0.s8 %v767
      %v769 = vlaneseq
      %v770 = vshrl.u32 %v769, 7
      %v771 = vsub.s32 %v768, %v770
      %v772 = vrot.slane %v764, %v771
      %774 = vset.pattern.permute.xlu0 0
      %775 = vperm.xlu0 %774, %v518
      %v776 = vpop.permute.xlu0 %775
      %v779 = vunpack.c.l.s4 839922192
      %v780 = vunpack.c.0.s8 %v779
      %v781 = vlaneseq
      %v782 = vshrl.u32 %v781, 7
      %v783 = vsub.s32 %v780, %v782
      %v784 = vrot.slane %v776, %v783
      %786 = vset.pattern.permute.xlu0 0
      %787 = vperm.xlu0 %786, %v519
      %v788 = vpop.permute.xlu0 %787
      %v791 = vunpack.c.l.s4 839922192
      %v792 = vunpack.c.0.s8 %v791
      %v793 = vlaneseq
      %v794 = vshrl.u32 %v793, 7
      %v795 = vsub.s32 %v792, %v794
      %v796 = vrot.slane %v788, %v795
      %798 = vset.pattern.permute.xlu0 0
      %799 = vperm.xlu0 %798, %v520
      %v800 = vpop.permute.xlu0 %799
      %v803 = vunpack.c.l.s4 839922192
      %v804 = vunpack.c.0.s8 %v803
      %v805 = vlaneseq
      %v806 = vshrl.u32 %v805, 7
      %v807 = vsub.s32 %v804, %v806
      %v808 = vrot.slane %v800, %v807
      %810 = vset.pattern.permute.xlu0 0
      %811 = vperm.xlu0 %810, %v521
      %v812 = vpop.permute.xlu0 %811
      %v815 = vunpack.c.l.s4 839922192
      %v816 = vunpack.c.0.s8 %v815
      %v817 = vlaneseq
      %v818 = vshrl.u32 %v817, 7
      %v819 = vsub.s32 %v816, %v818
      %v820 = vrot.slane %v812, %v819
      %822 = vset.pattern.permute.xlu0 0
      %823 = vperm.xlu0 %822, %v522
      %v824 = vpop.permute.xlu0 %823
      %v827 = vunpack.c.l.s4 839922192
      %v828 = vunpack.c.0.s8 %v827
      %v829 = vlaneseq
      %v830 = vshrl.u32 %v829, 7
      %v831 = vsub.s32 %v828, %v830
      %v832 = vrot.slane %v824, %v831
      %834 = vset.pattern.permute.xlu0 0
      %835 = vperm.xlu0 %834, %v523
      %v836 = vpop.permute.xlu0 %835
      %v839 = vunpack.c.l.s4 839922192
      %v840 = vunpack.c.0.s8 %v839
      %v841 = vlaneseq
      %v842 = vshrl.u32 %v841, 7
      %v843 = vsub.s32 %v840, %v842
      %v844 = vrot.slane %v836, %v843
      %846 = vset.pattern.permute.xlu0 0
      %847 = vperm.xlu0 %846, %v524
      %v848 = vpop.permute.xlu0 %847
      %v851 = vunpack.c.l.s4 839922192
      %v852 = vunpack.c.0.s8 %v851
      %v853 = vlaneseq
      %v854 = vshrl.u32 %v853, 7
      %v855 = vsub.s32 %v852, %v854
      %v856 = vrot.slane %v848, %v855
      %858 = vset.pattern.permute.xlu0 0
      %859 = vperm.xlu0 %858, %v525
      %v860 = vpop.permute.xlu0 %859
      %v863 = vunpack.c.l.s4 839922192
      %v864 = vunpack.c.0.s8 %v863
      %v865 = vlaneseq
      %v866 = vshrl.u32 %v865, 7
      %v867 = vsub.s32 %v864, %v866
      %v868 = vrot.slane %v860, %v867
      %870 = vset.pattern.permute.xlu0 0
      %871 = vperm.xlu0 %870, %v526
      %v872 = vpop.permute.xlu0 %871
      %v875 = vunpack.c.l.s4 839922192
      %v876 = vunpack.c.0.s8 %v875
      %v877 = vlaneseq
      %v878 = vshrl.u32 %v877, 7
      %v879 = vsub.s32 %v876, %v878
      %v880 = vrot.slane %v872, %v879
      %882 = vset.pattern.permute.xlu0 0
      %883 = vperm.xlu0 %882, %v527
      %v884 = vpop.permute.xlu0 %883
      %v887 = vunpack.c.l.s4 839922192
      %v888 = vunpack.c.0.s8 %v887
      %v889 = vlaneseq
      %v890 = vshrl.u32 %v889, 7
      %v891 = vsub.s32 %v888, %v890
      %v892 = vrot.slane %v884, %v891
      %894 = vset.pattern.permute.xlu0 0
      %895 = vperm.xlu0 %894, %v528
      %v896 = vpop.permute.xlu0 %895
      %v899 = vunpack.c.l.s4 839922192
      %v900 = vunpack.c.0.s8 %v899
      %v901 = vlaneseq
      %v902 = vshrl.u32 %v901, 7
      %v903 = vsub.s32 %v900, %v902
      %v904 = vrot.slane %v896, %v903
      %906 = vset.pattern.permute.xlu0 0
      %907 = vperm.xlu0 %906, %v529
      %v908 = vpop.permute.xlu0 %907
      %v911 = vunpack.c.l.s4 839922192
      %v912 = vunpack.c.0.s8 %v911
      %v913 = vlaneseq
      %v914 = vshrl.u32 %v913, 7
      %v915 = vsub.s32 %v912, %v914
      %v916 = vrot.slane %v908, %v915
      %918 = vset.pattern.permute.xlu0 0
      %919 = vperm.xlu0 %918, %v530
      %v920 = vpop.permute.xlu0 %919
      %v923 = vunpack.c.l.s4 839922192
      %v924 = vunpack.c.0.s8 %v923
      %v925 = vlaneseq
      %v926 = vshrl.u32 %v925, 7
      %v927 = vsub.s32 %v924, %v926
      %v928 = vrot.slane %v920, %v927
      %930 = vset.pattern.permute.xlu0 0
      %931 = vperm.xlu0 %930, %v531
      %v932 = vpop.permute.xlu0 %931
      %v935 = vunpack.c.l.s4 839922192
      %v936 = vunpack.c.0.s8 %v935
      %v937 = vlaneseq
      %v938 = vshrl.u32 %v937, 7
      %v939 = vsub.s32 %v936, %v938
      %v940 = vrot.slane %v932, %v939
      %942 = vset.pattern.permute.xlu0 0
      %943 = vperm.xlu0 %942, %v532
      %v944 = vpop.permute.xlu0 %943
      %v947 = vunpack.c.l.s4 839922192
      %v948 = vunpack.c.0.s8 %v947
      %v949 = vlaneseq
      %v950 = vshrl.u32 %v949, 7
      %v951 = vsub.s32 %v948, %v950
      %v952 = vrot.slane %v944, %v951
      %954 = vset.pattern.permute.xlu0 0
      %955 = vperm.xlu0 %954, %v533
      %v956 = vpop.permute.xlu0 %955
      %v959 = vunpack.c.l.s4 839922192
      %v960 = vunpack.c.0.s8 %v959
      %v961 = vlaneseq
      %v962 = vshrl.u32 %v961, 7
      %v963 = vsub.s32 %v960, %v962
      %v964 = vrot.slane %v956, %v963
      %966 = vset.pattern.permute.xlu0 0
      %967 = vperm.xlu0 %966, %v534
      %v968 = vpop.permute.xlu0 %967
      %v971 = vunpack.c.l.s4 839922192
      %v972 = vunpack.c.0.s8 %v971
      %v973 = vlaneseq
      %v974 = vshrl.u32 %v973, 7
      %v975 = vsub.s32 %v972, %v974
      %v976 = vrot.slane %v968, %v975
      %978 = vset.pattern.permute.xlu0 0
      %979 = vperm.xlu0 %978, %v535
      %v980 = vpop.permute.xlu0 %979
      %v983 = vunpack.c.l.s4 839922192
      %v984 = vunpack.c.0.s8 %v983
      %v985 = vlaneseq
      %v986 = vshrl.u32 %v985, 7
      %v987 = vsub.s32 %v984, %v986
      %v988 = vrot.slane %v980, %v987
      %990 = vset.pattern.permute.xlu0 0
      %991 = vperm.xlu0 %990, %v536
      %v992 = vpop.permute.xlu0 %991
      %v995 = vunpack.c.l.s4 839922192
      %v996 = vunpack.c.0.s8 %v995
      %v997 = vlaneseq
      %v998 = vshrl.u32 %v997, 7
      %v999 = vsub.s32 %v996, %v998
      %v1000 = vrot.slane %v992, %v999
      %1002 = vset.pattern.permute.xlu0 0
      %1003 = vperm.xlu0 %1002, %v537
      %v1004 = vpop.permute.xlu0 %1003
      %v1007 = vunpack.c.l.s4 839922192
      %v1008 = vunpack.c.0.s8 %v1007
      %v1009 = vlaneseq
      %v1010 = vshrl.u32 %v1009, 7
      %v1011 = vsub.s32 %v1008, %v1010
      %v1012 = vrot.slane %v1004, %v1011
      %1014 = vset.pattern.permute.xlu0 0
      %1015 = vperm.xlu0 %1014, %v538
      %v1016 = vpop.permute.xlu0 %1015
      %v1019 = vunpack.c.l.s4 839922192
      %v1020 = vunpack.c.0.s8 %v1019
      %v1021 = vlaneseq
      %v1022 = vshrl.u32 %v1021, 7
      %v1023 = vsub.s32 %v1020, %v1022
      %v1024 = vrot.slane %v1016, %v1023
      %1026 = vset.pattern.permute.xlu0 0
      %1027 = vperm.xlu0 %1026, %v539
      %v1028 = vpop.permute.xlu0 %1027
      %v1031 = vunpack.c.l.s4 839922192
      %v1032 = vunpack.c.0.s8 %v1031
      %v1033 = vlaneseq
      %v1034 = vshrl.u32 %v1033, 7
      %v1035 = vsub.s32 %v1032, %v1034
      %v1036 = vrot.slane %v1028, %v1035
      %1038 = vset.pattern.permute.xlu0 0
      %1039 = vperm.xlu0 %1038, %v540
      %v1040 = vpop.permute.xlu0 %1039
      %v1043 = vunpack.c.l.s4 839922192
      %v1044 = vunpack.c.0.s8 %v1043
      %v1045 = vlaneseq
      %v1046 = vshrl.u32 %v1045, 7
      %v1047 = vsub.s32 %v1044, %v1046
      %v1048 = vrot.slane %v1040, %v1047
      %1050 = vset.pattern.permute.xlu0 0
      %1051 = vperm.xlu0 %1050, %v541
      %v1052 = vpop.permute.xlu0 %1051
      %v1055 = vunpack.c.l.s4 839922192
      %v1056 = vunpack.c.0.s8 %v1055
      %v1057 = vlaneseq
      %v1058 = vshrl.u32 %v1057, 7
      %v1059 = vsub.s32 %v1056, %v1058
      %v1060 = vrot.slane %v1052, %v1059
      %v1093 = vunpack.c.l.b16 %v688
      %v1094 = vunpack.c.l.b16 %v700
      %v1095 = vunpack.c.l.b16 %v712
      %v1096 = vunpack.c.l.b16 %v724
      %v1097 = vunpack.c.l.b16 %v736
      %v1098 = vunpack.c.l.b16 %v748
      %v1099 = vunpack.c.l.b16 %v760
      %v1100 = vunpack.c.l.b16 %v772
      %v1101 = vunpack.c.l.b16 %v784
      %v1102 = vunpack.c.l.b16 %v796
      %v1103 = vunpack.c.l.b16 %v808
      %v1104 = vunpack.c.l.b16 %v820
      %v1105 = vunpack.c.l.b16 %v832
      %v1106 = vunpack.c.l.b16 %v844
      %v1107 = vunpack.c.l.b16 %v856
      %v1108 = vunpack.c.l.b16 %v868
      %v1109 = vunpack.c.l.b16 %v880
      %v1110 = vunpack.c.l.b16 %v892
      %v1111 = vunpack.c.l.b16 %v904
      %v1112 = vunpack.c.l.b16 %v916
      %v1113 = vunpack.c.l.b16 %v928
      %v1114 = vunpack.c.l.b16 %v940
      %v1115 = vunpack.c.l.b16 %v952
      %v1116 = vunpack.c.l.b16 %v964
      %v1117 = vunpack.c.l.b16 %v976
      %v1118 = vunpack.c.l.b16 %v988
      %v1119 = vunpack.c.l.b16 %v1000
      %v1120 = vunpack.c.l.b16 %v1012
      %v1121 = vunpack.c.l.b16 %v1024
      %v1122 = vunpack.c.l.b16 %v1036
      %v1123 = vunpack.c.l.b16 %v1048
      %v1124 = vunpack.c.l.b16 %v1060
      %v1125 = vpack.c.b16 %v1094, %v1093
      %v1126 = vpack.c.b16 %v1096, %v1095
      %v1127 = vpack.c.b16 %v1098, %v1097
      %v1128 = vpack.c.b16 %v1100, %v1099
      %v1129 = vpack.c.b16 %v1102, %v1101
      %v1130 = vpack.c.b16 %v1104, %v1103
      %v1131 = vpack.c.b16 %v1106, %v1105
      %v1132 = vpack.c.b16 %v1108, %v1107
      %v1133 = vpack.c.b16 %v1110, %v1109
      %v1134 = vpack.c.b16 %v1112, %v1111
      %v1135 = vpack.c.b16 %v1114, %v1113
      %v1136 = vpack.c.b16 %v1116, %v1115
      %v1137 = vpack.c.b16 %v1118, %v1117
      %v1138 = vpack.c.b16 %v1120, %v1119
      %v1139 = vpack.c.b16 %v1122, %v1121
      %v1140 = vpack.c.b16 %v1124, %v1123
      %vm1141 = vsmask.f32 3328
      %v1143 = vshrl.u32 %v1125, 16
      %v1145 = vrot.slane %v1143, 4
      %v1146 = vshll.u32 %v1125, 16
      %v1148 = vrot.slane %v1146, 5
      %v1149 = vor.u32 %v1145, %v1148
      %v1151 = vshrl.u32 %v1126, 16
      %v1153 = vrot.slane %v1151, 4
      %v1154 = vshll.u32 %v1126, 16
      %v1156 = vrot.slane %v1154, 5
      %v1157 = vor.u32 %v1153, %v1156
      %v1158 = vsel %vm1141, %v1149, %v1157
      %v1160 = vshrl.u32 %v1127, 16
      %v1162 = vrot.slane %v1160, 4
      %v1163 = vshll.u32 %v1127, 16
      %v1165 = vrot.slane %v1163, 5
      %v1166 = vor.u32 %v1162, %v1165
      %v1167 = vsel %vm1141, %v1157, %v1166
      %v1169 = vshrl.u32 %v1128, 16
      %v1171 = vrot.slane %v1169, 4
      %v1172 = vshll.u32 %v1128, 16
      %v1174 = vrot.slane %v1172, 5
      %v1175 = vor.u32 %v1171, %v1174
      %v1176 = vsel %vm1141, %v1166, %v1175
      %v1178 = vshrl.u32 %v1129, 16
      %v1180 = vrot.slane %v1178, 4
      %v1181 = vshll.u32 %v1129, 16
      %v1183 = vrot.slane %v1181, 5
      %v1184 = vor.u32 %v1180, %v1183
      %v1185 = vsel %vm1141, %v1175, %v1184
      %v1187 = vshrl.u32 %v1130, 16
      %v1189 = vrot.slane %v1187, 4
      %v1190 = vshll.u32 %v1130, 16
      %v1192 = vrot.slane %v1190, 5
      %v1193 = vor.u32 %v1189, %v1192
      %v1194 = vsel %vm1141, %v1184, %v1193
      %v1196 = vshrl.u32 %v1131, 16
      %v1198 = vrot.slane %v1196, 4
      %v1199 = vshll.u32 %v1131, 16
      %v1201 = vrot.slane %v1199, 5
      %v1202 = vor.u32 %v1198, %v1201
      %v1203 = vsel %vm1141, %v1193, %v1202
      %v1205 = vshrl.u32 %v1132, 16
      %v1207 = vrot.slane %v1205, 4
      %v1208 = vshll.u32 %v1132, 16
      %v1210 = vrot.slane %v1208, 5
      %v1211 = vor.u32 %v1207, %v1210
      %v1212 = vsel %vm1141, %v1202, %v1211
      %v1214 = vshrl.u32 %v1133, 16
      %v1216 = vrot.slane %v1214, 4
      %v1217 = vshll.u32 %v1133, 16
      %v1219 = vrot.slane %v1217, 5
      %v1220 = vor.u32 %v1216, %v1219
      %v1221 = vsel %vm1141, %v1211, %v1220
      %v1223 = vshrl.u32 %v1134, 16
      %v1225 = vrot.slane %v1223, 4
      %v1226 = vshll.u32 %v1134, 16
      %v1228 = vrot.slane %v1226, 5
      %v1229 = vor.u32 %v1225, %v1228
      %v1230 = vsel %vm1141, %v1220, %v1229
      %v1232 = vshrl.u32 %v1135, 16
      %v1234 = vrot.slane %v1232, 4
      %v1235 = vshll.u32 %v1135, 16
      %v1237 = vrot.slane %v1235, 5
      %v1238 = vor.u32 %v1234, %v1237
      %v1239 = vsel %vm1141, %v1229, %v1238
      %v1241 = vshrl.u32 %v1136, 16
      %v1243 = vrot.slane %v1241, 4
      %v1244 = vshll.u32 %v1136, 16
      %v1246 = vrot.slane %v1244, 5
      %v1247 = vor.u32 %v1243, %v1246
      %v1248 = vsel %vm1141, %v1238, %v1247
      %v1250 = vshrl.u32 %v1137, 16
      %v1252 = vrot.slane %v1250, 4
      %v1253 = vshll.u32 %v1137, 16
      %v1255 = vrot.slane %v1253, 5
      %v1256 = vor.u32 %v1252, %v1255
      %v1257 = vsel %vm1141, %v1247, %v1256
      %v1259 = vshrl.u32 %v1138, 16
      %v1261 = vrot.slane %v1259, 4
      %v1262 = vshll.u32 %v1138, 16
      %v1264 = vrot.slane %v1262, 5
      %v1265 = vor.u32 %v1261, %v1264
      %v1266 = vsel %vm1141, %v1256, %v1265
      %v1268 = vshrl.u32 %v1139, 16
      %v1270 = vrot.slane %v1268, 4
      %v1271 = vshll.u32 %v1139, 16
      %v1273 = vrot.slane %v1271, 5
      %v1274 = vor.u32 %v1270, %v1273
      %v1275 = vsel %vm1141, %v1265, %v1274
      %v1277 = vshrl.u32 %v1140, 16
      %v1279 = vrot.slane %v1277, 4
      %v1280 = vshll.u32 %v1140, 16
      %v1282 = vrot.slane %v1280, 5
      %v1283 = vor.u32 %v1279, %v1282
      %v1284 = vsel %vm1141, %v1274, %v1283
      %v1302 = vmul.bf16 %v660, %v1149
      %v1303 = vmul.bf16 %v661, %v1158
      %v1304 = vmul.bf16 %v662, %v1167
      %v1305 = vmul.bf16 %v663, %v1176
      %v1306 = vmul.bf16 %v664, %v1185
      %v1307 = vmul.bf16 %v665, %v1194
      %v1308 = vmul.bf16 %v666, %v1203
      %v1309 = vmul.bf16 %v667, %v1212
      %v1310 = vmul.bf16 %v668, %v1221
      %v1311 = vmul.bf16 %v669, %v1230
      %v1312 = vmul.bf16 %v670, %v1239
      %v1313 = vmul.bf16 %v671, %v1248
      %v1314 = vmul.bf16 %v672, %v1257
      %v1315 = vmul.bf16 %v673, %v1266
      %v1316 = vmul.bf16 %v674, %v1275
      %v1317 = vmul.bf16 %v675, %v1284
      %v1318 = vmul.bf16 %v676, %v1283
      %v1319 = vld [vmem:[#allocation2] sm:$0xf0]
      %v1320 = vld [vmem:[#allocation2 + $0x80] sm:$0x1f]
      %1322 = vset.pattern.permute.xlu0 0
      %1323 = vperm.xlu0 %1322, %v542
      %v1324 = vpop.permute.xlu0 %1323
      %v1327 = vunpack.c.l.s4 839922192
      %v1328 = vunpack.c.0.s8 %v1327
      %v1329 = vlaneseq
      %v1330 = vshrl.u32 %v1329, 7
      %v1331 = vsub.s32 %v1328, %v1330
      %v1332 = vrot.slane %v1324, %v1331
      %1334 = vset.pattern.permute.xlu0 0
      %1335 = vperm.xlu0 %1334, %v543
      %v1336 = vpop.permute.xlu0 %1335
      %v1339 = vunpack.c.l.s4 839922192
      %v1340 = vunpack.c.0.s8 %v1339
      %v1341 = vlaneseq
      %v1342 = vshrl.u32 %v1341, 7
      %v1343 = vsub.s32 %v1340, %v1342
      %v1344 = vrot.slane %v1336, %v1343
      %1346 = vset.pattern.permute.xlu0 0
      %1347 = vperm.xlu0 %1346, %v544
      %v1348 = vpop.permute.xlu0 %1347
      %v1351 = vunpack.c.l.s4 839922192
      %v1352 = vunpack.c.0.s8 %v1351
      %v1353 = vlaneseq
      %v1354 = vshrl.u32 %v1353, 7
      %v1355 = vsub.s32 %v1352, %v1354
      %v1356 = vrot.slane %v1348, %v1355
      %1358 = vset.pattern.permute.xlu0 0
      %1359 = vperm.xlu0 %1358, %v545
      %v1360 = vpop.permute.xlu0 %1359
      %v1363 = vunpack.c.l.s4 839922192
      %v1364 = vunpack.c.0.s8 %v1363
      %v1365 = vlaneseq
      %v1366 = vshrl.u32 %v1365, 7
      %v1367 = vsub.s32 %v1364, %v1366
      %v1368 = vrot.slane %v1360, %v1367
      %1370 = vset.pattern.permute.xlu0 0
      %1371 = vperm.xlu0 %1370, %v546
      %v1372 = vpop.permute.xlu0 %1371
      %v1375 = vunpack.c.l.s4 839922192
      %v1376 = vunpack.c.0.s8 %v1375
      %v1377 = vlaneseq
      %v1378 = vshrl.u32 %v1377, 7
      %v1379 = vsub.s32 %v1376, %v1378
      %v1380 = vrot.slane %v1372, %v1379
      %1382 = vset.pattern.permute.xlu0 0
      %1383 = vperm.xlu0 %1382, %v547
      %v1384 = vpop.permute.xlu0 %1383
      %v1387 = vunpack.c.l.s4 839922192
      %v1388 = vunpack.c.0.s8 %v1387
      %v1389 = vlaneseq
      %v1390 = vshrl.u32 %v1389, 7
      %v1391 = vsub.s32 %v1388, %v1390
      %v1392 = vrot.slane %v1384, %v1391
      %1394 = vset.pattern.permute.xlu0 0
      %1395 = vperm.xlu0 %1394, %v548
      %v1396 = vpop.permute.xlu0 %1395
      %v1399 = vunpack.c.l.s4 839922192
      %v1400 = vunpack.c.0.s8 %v1399
      %v1401 = vlaneseq
      %v1402 = vshrl.u32 %v1401, 7
      %v1403 = vsub.s32 %v1400, %v1402
      %v1404 = vrot.slane %v1396, %v1403
      %1406 = vset.pattern.permute.xlu0 0
      %1407 = vperm.xlu0 %1406, %v549
      %v1408 = vpop.permute.xlu0 %1407
      %v1411 = vunpack.c.l.s4 839922192
      %v1412 = vunpack.c.0.s8 %v1411
      %v1413 = vlaneseq
      %v1414 = vshrl.u32 %v1413, 7
      %v1415 = vsub.s32 %v1412, %v1414
      %v1416 = vrot.slane %v1408, %v1415
      %1418 = vset.pattern.permute.xlu0 0
      %1419 = vperm.xlu0 %1418, %v550
      %v1420 = vpop.permute.xlu0 %1419
      %v1423 = vunpack.c.l.s4 839922192
      %v1424 = vunpack.c.0.s8 %v1423
      %v1425 = vlaneseq
      %v1426 = vshrl.u32 %v1425, 7
      %v1427 = vsub.s32 %v1424, %v1426
      %v1428 = vrot.slane %v1420, %v1427
      %1430 = vset.pattern.permute.xlu0 0
      %1431 = vperm.xlu0 %1430, %v551
      %v1432 = vpop.permute.xlu0 %1431
      %v1435 = vunpack.c.l.s4 839922192
      %v1436 = vunpack.c.0.s8 %v1435
      %v1437 = vlaneseq
      %v1438 = vshrl.u32 %v1437, 7
      %v1439 = vsub.s32 %v1436, %v1438
      %v1440 = vrot.slane %v1432, %v1439
      %1442 = vset.pattern.permute.xlu0 0
      %1443 = vperm.xlu0 %1442, %v552
      %v1444 = vpop.permute.xlu0 %1443
      %v1447 = vunpack.c.l.s4 839922192
      %v1448 = vunpack.c.0.s8 %v1447
      %v1449 = vlaneseq
      %v1450 = vshrl.u32 %v1449, 7
      %v1451 = vsub.s32 %v1448, %v1450
      %v1452 = vrot.slane %v1444, %v1451
      %1454 = vset.pattern.permute.xlu0 0
      %1455 = vperm.xlu0 %1454, %v553
      %v1456 = vpop.permute.xlu0 %1455
      %v1459 = vunpack.c.l.s4 839922192
      %v1460 = vunpack.c.0.s8 %v1459
      %v1461 = vlaneseq
      %v1462 = vshrl.u32 %v1461, 7
      %v1463 = vsub.s32 %v1460, %v1462
      %v1464 = vrot.slane %v1456, %v1463
      %1466 = vset.pattern.permute.xlu0 0
      %1467 = vperm.xlu0 %1466, %v554
      %v1468 = vpop.permute.xlu0 %1467
      %v1471 = vunpack.c.l.s4 839922192
      %v1472 = vunpack.c.0.s8 %v1471
      %v1473 = vlaneseq
      %v1474 = vshrl.u32 %v1473, 7
      %v1475 = vsub.s32 %v1472, %v1474
      %v1476 = vrot.slane %v1468, %v1475
      %1478 = vset.pattern.permute.xlu0 0
      %1479 = vperm.xlu0 %1478, %v555
      %v1480 = vpop.permute.xlu0 %1479
      %v1483 = vunpack.c.l.s4 839922192
      %v1484 = vunpack.c.0.s8 %v1483
      %v1485 = vlaneseq
      %v1486 = vshrl.u32 %v1485, 7
      %v1487 = vsub.s32 %v1484, %v1486
      %v1488 = vrot.slane %v1480, %v1487
      %1490 = vset.pattern.permute.xlu0 0
      %1491 = vperm.xlu0 %1490, %v556
      %v1492 = vpop.permute.xlu0 %1491
      %v1495 = vunpack.c.l.s4 839922192
      %v1496 = vunpack.c.0.s8 %v1495
      %v1497 = vlaneseq
      %v1498 = vshrl.u32 %v1497, 7
      %v1499 = vsub.s32 %v1496, %v1498
      %v1500 = vrot.slane %v1492, %v1499
      %1502 = vset.pattern.permute.xlu0 0
      %1503 = vperm.xlu0 %1502, %v557
      %v1504 = vpop.permute.xlu0 %1503
      %v1507 = vunpack.c.l.s4 839922192
      %v1508 = vunpack.c.0.s8 %v1507
      %v1509 = vlaneseq
      %v1510 = vshrl.u32 %v1509, 7
      %v1511 = vsub.s32 %v1508, %v1510
      %v1512 = vrot.slane %v1504, %v1511
      %1514 = vset.pattern.permute.xlu0 0
      %1515 = vperm.xlu0 %1514, %v558
      %v1516 = vpop.permute.xlu0 %1515
      %v1519 = vunpack.c.l.s4 839922192
      %v1520 = vunpack.c.0.s8 %v1519
      %v1521 = vlaneseq
      %v1522 = vshrl.u32 %v1521, 7
      %v1523 = vsub.s32 %v1520, %v1522
      %v1524 = vrot.slane %v1516, %v1523
      %1526 = vset.pattern.permute.xlu0 0
      %1527 = vperm.xlu0 %1526, %v559
      %v1528 = vpop.permute.xlu0 %1527
      %v1531 = vunpack.c.l.s4 839922192
      %v1532 = vunpack.c.0.s8 %v1531
      %v1533 = vlaneseq
      %v1534 = vshrl.u32 %v1533, 7
      %v1535 = vsub.s32 %v1532, %v1534
      %v1536 = vrot.slane %v1528, %v1535
      %1538 = vset.pattern.permute.xlu0 0
      %1539 = vperm.xlu0 %1538, %v560
      %v1540 = vpop.permute.xlu0 %1539
      %v1543 = vunpack.c.l.s4 839922192
      %v1544 = vunpack.c.0.s8 %v1543
      %v1545 = vlaneseq
      %v1546 = vshrl.u32 %v1545, 7
      %v1547 = vsub.s32 %v1544, %v1546
      %v1548 = vrot.slane %v1540, %v1547
      %1550 = vset.pattern.permute.xlu0 0
      %1551 = vperm.xlu0 %1550, %v561
      %v1552 = vpop.permute.xlu0 %1551
      %v1555 = vunpack.c.l.s4 839922192
      %v1556 = vunpack.c.0.s8 %v1555
      %v1557 = vlaneseq
      %v1558 = vshrl.u32 %v1557, 7
      %v1559 = vsub.s32 %v1556, %v1558
      %v1560 = vrot.slane %v1552, %v1559
      %1562 = vset.pattern.permute.xlu0 0
      %1563 = vperm.xlu0 %1562, %v562
      %v1564 = vpop.permute.xlu0 %1563
      %v1567 = vunpack.c.l.s4 839922192
      %v1568 = vunpack.c.0.s8 %v1567
      %v1569 = vlaneseq
      %v1570 = vshrl.u32 %v1569, 7
      %v1571 = vsub.s32 %v1568, %v1570
      %v1572 = vrot.slane %v1564, %v1571
      %1574 = vset.pattern.permute.xlu0 0
      %1575 = vperm.xlu0 %1574, %v563
      %v1576 = vpop.permute.xlu0 %1575
      %v1579 = vunpack.c.l.s4 839922192
      %v1580 = vunpack.c.0.s8 %v1579
      %v1581 = vlaneseq
      %v1582 = vshrl.u32 %v1581, 7
      %v1583 = vsub.s32 %v1580, %v1582
      %v1584 = vrot.slane %v1576, %v1583
      %1586 = vset.pattern.permute.xlu0 0
      %1587 = vperm.xlu0 %1586, %v564
      %v1588 = vpop.permute.xlu0 %1587
      %v1591 = vunpack.c.l.s4 839922192
      %v1592 = vunpack.c.0.s8 %v1591
      %v1593 = vlaneseq
      %v1594 = vshrl.u32 %v1593, 7
      %v1595 = vsub.s32 %v1592, %v1594
      %v1596 = vrot.slane %v1588, %v1595
      %1598 = vset.pattern.permute.xlu0 0
      %1599 = vperm.xlu0 %1598, %v565
      %v1600 = vpop.permute.xlu0 %1599
      %v1603 = vunpack.c.l.s4 839922192
      %v1604 = vunpack.c.0.s8 %v1603
      %v1605 = vlaneseq
      %v1606 = vshrl.u32 %v1605, 7
      %v1607 = vsub.s32 %v1604, %v1606
      %v1608 = vrot.slane %v1600, %v1607
      %1610 = vset.pattern.permute.xlu0 0
      %1611 = vperm.xlu0 %1610, %v566
      %v1612 = vpop.permute.xlu0 %1611
      %v1615 = vunpack.c.l.s4 839922192
      %v1616 = vunpack.c.0.s8 %v1615
      %v1617 = vlaneseq
      %v1618 = vshrl.u32 %v1617, 7
      %v1619 = vsub.s32 %v1616, %v1618
      %v1620 = vrot.slane %v1612, %v1619
      %1622 = vset.pattern.permute.xlu0 0
      %1623 = vperm.xlu0 %1622, %v567
      %v1624 = vpop.permute.xlu0 %1623
      %v1627 = vunpack.c.l.s4 839922192
      %v1628 = vunpack.c.0.s8 %v1627
      %v1629 = vlaneseq
      %v1630 = vshrl.u32 %v1629, 7
      %v1631 = vsub.s32 %v1628, %v1630
      %v1632 = vrot.slane %v1624, %v1631
      %1634 = vset.pattern.permute.xlu0 0
      %1635 = vperm.xlu0 %1634, %v568
      %v1636 = vpop.permute.xlu0 %1635
      %v1639 = vunpack.c.l.s4 839922192
      %v1640 = vunpack.c.0.s8 %v1639
      %v1641 = vlaneseq
      %v1642 = vshrl.u32 %v1641, 7
      %v1643 = vsub.s32 %v1640, %v1642
      %v1644 = vrot.slane %v1636, %v1643
      %1646 = vset.pattern.permute.xlu0 0
      %1647 = vperm.xlu0 %1646, %v569
      %v1648 = vpop.permute.xlu0 %1647
      %v1651 = vunpack.c.l.s4 839922192
      %v1652 = vunpack.c.0.s8 %v1651
      %v1653 = vlaneseq
      %v1654 = vshrl.u32 %v1653, 7
      %v1655 = vsub.s32 %v1652, %v1654
      %v1656 = vrot.slane %v1648, %v1655
      %1658 = vset.pattern.permute.xlu0 0
      %1659 = vperm.xlu0 %1658, %v570
      %v1660 = vpop.permute.xlu0 %1659
      %v1663 = vunpack.c.l.s4 839922192
      %v1664 = vunpack.c.0.s8 %v1663
      %v1665 = vlaneseq
      %v1666 = vshrl.u32 %v1665, 7
      %v1667 = vsub.s32 %v1664, %v1666
      %v1668 = vrot.slane %v1660, %v1667
      %1670 = vset.pattern.permute.xlu0 0
      %1671 = vperm.xlu0 %1670, %v571
      %v1672 = vpop.permute.xlu0 %1671
      %v1675 = vunpack.c.l.s4 839922192
      %v1676 = vunpack.c.0.s8 %v1675
      %v1677 = vlaneseq
      %v1678 = vshrl.u32 %v1677, 7
      %v1679 = vsub.s32 %v1676, %v1678
      %v1680 = vrot.slane %v1672, %v1679
      %1682 = vset.pattern.permute.xlu0 0
      %1683 = vperm.xlu0 %1682, %v572
      %v1684 = vpop.permute.xlu0 %1683
      %v1687 = vunpack.c.l.s4 839922192
      %v1688 = vunpack.c.0.s8 %v1687
      %v1689 = vlaneseq
      %v1690 = vshrl.u32 %v1689, 7
      %v1691 = vsub.s32 %v1688, %v1690
      %v1692 = vrot.slane %v1684, %v1691
      %1694 = vset.pattern.permute.xlu0 0
      %1695 = vperm.xlu0 %1694, %v573
      %v1696 = vpop.permute.xlu0 %1695
      %v1699 = vunpack.c.l.s4 839922192
      %v1700 = vunpack.c.0.s8 %v1699
      %v1701 = vlaneseq
      %v1702 = vshrl.u32 %v1701, 7
      %v1703 = vsub.s32 %v1700, %v1702
      %v1704 = vrot.slane %v1696, %v1703
      %v1737 = vunpack.c.l.b16 %v1332
      %v1738 = vunpack.c.l.b16 %v1344
      %v1739 = vunpack.c.l.b16 %v1356
      %v1740 = vunpack.c.l.b16 %v1368
      %v1741 = vunpack.c.l.b16 %v1380
      %v1742 = vunpack.c.l.b16 %v1392
      %v1743 = vunpack.c.l.b16 %v1404
      %v1744 = vunpack.c.l.b16 %v1416
      %v1745 = vunpack.c.l.b16 %v1428
      %v1746 = vunpack.c.l.b16 %v1440
      %v1747 = vunpack.c.l.b16 %v1452
      %v1748 = vunpack.c.l.b16 %v1464
      %v1749 = vunpack.c.l.b16 %v1476
      %v1750 = vunpack.c.l.b16 %v1488
      %v1751 = vunpack.c.l.b16 %v1500
      %v1752 = vunpack.c.l.b16 %v1512
      %v1753 = vunpack.c.l.b16 %v1524
      %v1754 = vunpack.c.l.b16 %v1536
      %v1755 = vunpack.c.l.b16 %v1548
      %v1756 = vunpack.c.l.b16 %v1560
      %v1757 = vunpack.c.l.b16 %v1572
      %v1758 = vunpack.c.l.b16 %v1584
      %v1759 = vunpack.c.l.b16 %v1596
      %v1760 = vunpack.c.l.b16 %v1608
      %v1761 = vunpack.c.l.b16 %v1620
      %v1762 = vunpack.c.l.b16 %v1632
      %v1763 = vunpack.c.l.b16 %v1644
      %v1764 = vunpack.c.l.b16 %v1656
      %v1765 = vunpack.c.l.b16 %v1668
      %v1766 = vunpack.c.l.b16 %v1680
      %v1767 = vunpack.c.l.b16 %v1692
      %v1768 = vunpack.c.l.b16 %v1704
      %v1769 = vpack.c.b16 %v1738, %v1737
      %v1770 = vpack.c.b16 %v1740, %v1739
      %v1771 = vpack.c.b16 %v1742, %v1741
      %v1772 = vpack.c.b16 %v1744, %v1743
      %v1773 = vpack.c.b16 %v1746, %v1745
      %v1774 = vpack.c.b16 %v1748, %v1747
      %v1775 = vpack.c.b16 %v1750, %v1749
      %v1776 = vpack.c.b16 %v1752, %v1751
      %v1777 = vpack.c.b16 %v1754, %v1753
      %v1778 = vpack.c.b16 %v1756, %v1755
      %v1779 = vpack.c.b16 %v1758, %v1757
      %v1780 = vpack.c.b16 %v1760, %v1759
      %v1781 = vpack.c.b16 %v1762, %v1761
      %v1782 = vpack.c.b16 %v1764, %v1763
      %v1783 = vpack.c.b16 %v1766, %v1765
      %v1784 = vpack.c.b16 %v1768, %v1767
      %vm1785 = vsmask.f32 4352
      %v1787 = vshrl.u32 %v1769, 16
      %v1789 = vrot.slane %v1787, 3
      %v1790 = vshll.u32 %v1769, 16
      %v1792 = vrot.slane %v1790, 4
      %v1793 = vor.u32 %v1789, %v1792
      %v1795 = vshrl.u32 %v1770, 16
      %v1797 = vrot.slane %v1795, 3
      %v1798 = vshll.u32 %v1770, 16
      %v1800 = vrot.slane %v1798, 4
      %v1801 = vor.u32 %v1797, %v1800
      %v1802 = vsel %vm1785, %v1793, %v1801
      %v1804 = vshrl.u32 %v1771, 16
      %v1806 = vrot.slane %v1804, 3
      %v1807 = vshll.u32 %v1771, 16
      %v1809 = vrot.slane %v1807, 4
      %v1810 = vor.u32 %v1806, %v1809
      %v1811 = vsel %vm1785, %v1801, %v1810
      %v1813 = vshrl.u32 %v1772, 16
      %v1815 = vrot.slane %v1813, 3
      %v1816 = vshll.u32 %v1772, 16
      %v1818 = vrot.slane %v1816, 4
      %v1819 = vor.u32 %v1815, %v1818
      %v1820 = vsel %vm1785, %v1810, %v1819
      %v1822 = vshrl.u32 %v1773, 16
      %v1824 = vrot.slane %v1822, 3
      %v1825 = vshll.u32 %v1773, 16
      %v1827 = vrot.slane %v1825, 4
      %v1828 = vor.u32 %v1824, %v1827
      %v1829 = vsel %vm1785, %v1819, %v1828
      %v1831 = vshrl.u32 %v1774, 16
      %v1833 = vrot.slane %v1831, 3
      %v1834 = vshll.u32 %v1774, 16
      %v1836 = vrot.slane %v1834, 4
      %v1837 = vor.u32 %v1833, %v1836
      %v1838 = vsel %vm1785, %v1828, %v1837
      %v1840 = vshrl.u32 %v1775, 16
      %v1842 = vrot.slane %v1840, 3
      %v1843 = vshll.u32 %v1775, 16
      %v1845 = vrot.slane %v1843, 4
      %v1846 = vor.u32 %v1842, %v1845
      %v1847 = vsel %vm1785, %v1837, %v1846
      %v1849 = vshrl.u32 %v1776, 16
      %v1851 = vrot.slane %v1849, 3
      %v1852 = vshll.u32 %v1776, 16
      %v1854 = vrot.slane %v1852, 4
      %v1855 = vor.u32 %v1851, %v1854
      %v1856 = vsel %vm1785, %v1846, %v1855
      %v1858 = vshrl.u32 %v1777, 16
      %v1860 = vrot.slane %v1858, 3
      %v1861 = vshll.u32 %v1777, 16
      %v1863 = vrot.slane %v1861, 4
      %v1864 = vor.u32 %v1860, %v1863
      %v1865 = vsel %vm1785, %v1855, %v1864
      %v1867 = vshrl.u32 %v1778, 16
      %v1869 = vrot.slane %v1867, 3
      %v1870 = vshll.u32 %v1778, 16
      %v1872 = vrot.slane %v1870, 4
      %v1873 = vor.u32 %v1869, %v1872
      %v1874 = vsel %vm1785, %v1864, %v1873
      %v1876 = vshrl.u32 %v1779, 16
      %v1878 = vrot.slane %v1876, 3
      %v1879 = vshll.u32 %v1779, 16
      %v1881 = vrot.slane %v1879, 4
      %v1882 = vor.u32 %v1878, %v1881
      %v1883 = vsel %vm1785, %v1873, %v1882
      %v1885 = vshrl.u32 %v1780, 16
      %v1887 = vrot.slane %v1885, 3
      %v1888 = vshll.u32 %v1780, 16
      %v1890 = vrot.slane %v1888, 4
      %v1891 = vor.u32 %v1887, %v1890
      %v1892 = vsel %vm1785, %v1882, %v1891
      %v1894 = vshrl.u32 %v1781, 16
      %v1896 = vrot.slane %v1894, 3
      %v1897 = vshll.u32 %v1781, 16
      %v1899 = vrot.slane %v1897, 4
      %v1900 = vor.u32 %v1896, %v1899
      %v1901 = vsel %vm1785, %v1891, %v1900
      %v1903 = vshrl.u32 %v1782, 16
      %v1905 = vrot.slane %v1903, 3
      %v1906 = vshll.u32 %v1782, 16
      %v1908 = vrot.slane %v1906, 4
      %v1909 = vor.u32 %v1905, %v1908
      %v1910 = vsel %vm1785, %v1900, %v1909
      %v1912 = vshrl.u32 %v1783, 16
      %v1914 = vrot.slane %v1912, 3
      %v1915 = vshll.u32 %v1783, 16
      %v1917 = vrot.slane %v1915, 4
      %v1918 = vor.u32 %v1914, %v1917
      %v1919 = vsel %vm1785, %v1909, %v1918
      %v1921 = vshrl.u32 %v1784, 16
      %v1923 = vrot.slane %v1921, 3
      %v1924 = vshll.u32 %v1784, 16
      %v1926 = vrot.slane %v1924, 4
      %v1927 = vor.u32 %v1923, %v1926
      %v1928 = vsel %vm1785, %v1918, %v1927
      %v1946 = vmul.bf16 %v1319, %v1793
      %v1947 = vmul.bf16 %v661, %v1802
      %v1948 = vmul.bf16 %v662, %v1811
      %v1949 = vmul.bf16 %v663, %v1820
      %v1950 = vmul.bf16 %v664, %v1829
      %v1951 = vmul.bf16 %v665, %v1838
      %v1952 = vmul.bf16 %v666, %v1847
      %v1953 = vmul.bf16 %v667, %v1856
      %v1954 = vmul.bf16 %v668, %v1865
      %v1955 = vmul.bf16 %v669, %v1874
      %v1956 = vmul.bf16 %v670, %v1883
      %v1957 = vmul.bf16 %v671, %v1892
      %v1958 = vmul.bf16 %v672, %v1901
      %v1959 = vmul.bf16 %v673, %v1910
      %v1960 = vmul.bf16 %v674, %v1919
      %v1961 = vmul.bf16 %v675, %v1928
      %v1962 = vmul.bf16 %v1320, %v1927
      %v1963 = vld [vmem:[#allocation2 + $0x8] sm:$0xf8]
      %v1964 = vld [vmem:[#allocation2 + $0x10] sm:$0xff]
      %v1965 = vld [vmem:[#allocation2 + $0x18] sm:$0xff]
      %v1966 = vld [vmem:[#allocation2 + $0x20] sm:$0xff]
      %v1967 = vld [vmem:[#allocation2 + $0x28] sm:$0xff]
      %v1968 = vld [vmem:[#allocation2 + $0x30] sm:$0xff]
      %v1969 = vld [vmem:[#allocation2 + $0x38] sm:$0xff]
      %v1970 = vld [vmem:[#allocation2 + $0x40] sm:$0xff]
      %v1971 = vld [vmem:[#allocation2 + $0x48] sm:$0xff]
      %v1972 = vld [vmem:[#allocation2 + $0x50] sm:$0xff]
      %v1973 = vld [vmem:[#allocation2 + $0x58] sm:$0xff]
      %v1974 = vld [vmem:[#allocation2 + $0x60] sm:$0xff]
      %v1975 = vld [vmem:[#allocation2 + $0x68] sm:$0xff]
      %v1976 = vld [vmem:[#allocation2 + $0x70] sm:$0xff]
      %v1977 = vld [vmem:[#allocation2 + $0x78] sm:$0xff]
      %v1978 = vld [vmem:[#allocation2 + $0x80] sm:$0xff]
      %v1979 = vld [vmem:[#allocation2 + $0x88] sm:$0xf]
      %v1980 = vmul.bf16 %v1963, %v1149
      %v1981 = vmul.bf16 %v1964, %v1158
      %v1982 = vmul.bf16 %v1965, %v1167
      %v1983 = vmul.bf16 %v1966, %v1176
      %v1984 = vmul.bf16 %v1967, %v1185
      %v1985 = vmul.bf16 %v1968, %v1194
      %v1986 = vmul.bf16 %v1969, %v1203
      %v1987 = vmul.bf16 %v1970, %v1212
      %v1988 = vmul.bf16 %v1971, %v1221
      %v1989 = vmul.bf16 %v1972, %v1230
      %v1990 = vmul.bf16 %v1973, %v1239
      %v1991 = vmul.bf16 %v1974, %v1248
      %v1992 = vmul.bf16 %v1975, %v1257
      %v1993 = vmul.bf16 %v1976, %v1266
      %v1994 = vmul.bf16 %v1977, %v1275
      %v1995 = vmul.bf16 %v1978, %v1284
      %v1996 = vmul.bf16 %v1979, %v1283
      %v1997 = vld [vmem:[#allocation2 + $0x8] sm:$0xf0]
      %v1998 = vld [vmem:[#allocation2 + $0x88] sm:$0x1f]
      %v1999 = vmul.bf16 %v1997, %v1793
      %v2000 = vmul.bf16 %v1964, %v1802
      %v2001 = vmul.bf16 %v1965, %v1811
      %v2002 = vmul.bf16 %v1966, %v1820
      %v2003 = vmul.bf16 %v1967, %v1829
      %v2004 = vmul.bf16 %v1968, %v1838
      %v2005 = vmul.bf16 %v1969, %v1847
      %v2006 = vmul.bf16 %v1970, %v1856
      %v2007 = vmul.bf16 %v1971, %v1865
      %v2008 = vmul.bf16 %v1972, %v1874
      %v2009 = vmul.bf16 %v1973, %v1883
      %v2010 = vmul.bf16 %v1974, %v1892
      %v2011 = vmul.bf16 %v1975, %v1901
      %v2012 = vmul.bf16 %v1976, %v1910
      %v2013 = vmul.bf16 %v1977, %v1919
      %v2014 = vmul.bf16 %v1978, %v1928
      %v2015 = vmul.bf16 %v1998, %v1927
      %v2016 = vld [vmem:[#allocation2 + $0x10] sm:$0xf8]
      %v2017 = vld [vmem:[#allocation2 + $0x18] sm:$0xff]
      %v2018 = vld [vmem:[#allocation2 + $0x20] sm:$0xff]
      %v2019 = vld [vmem:[#allocation2 + $0x28] sm:$0xff]
      %v2020 = vld [vmem:[#allocation2 + $0x30] sm:$0xff]
      %v2021 = vld [vmem:[#allocation2 + $0x38] sm:$0xff]
      %v2022 = vld [vmem:[#allocation2 + $0x40] sm:$0xff]
      %v2023 = vld [vmem:[#allocation2 + $0x48] sm:$0xff]
      %v2024 = vld [vmem:[#allocation2 + $0x50] sm:$0xff]
      %v2025 = vld [vmem:[#allocation2 + $0x58] sm:$0xff]
      %v2026 = vld [vmem:[#allocation2 + $0x60] sm:$0xff]
      %v2027 = vld [vmem:[#allocation2 + $0x68] sm:$0xff]
      %v2028 = vld [vmem:[#allocation2 + $0x70] sm:$0xff]
      %v2029 = vld [vmem:[#allocation2 + $0x78] sm:$0xff]
      %v2030 = vld [vmem:[#allocation2 + $0x80] sm:$0xff]
      %v2031 = vld [vmem:[#allocation2 + $0x88] sm:$0xff]
      %v2032 = vld [vmem:[#allocation2 + $0x90] sm:$0xf]
      %v2033 = vmul.bf16 %v2016, %v1149
      %v2034 = vmul.bf16 %v2017, %v1158
      %v2035 = vmul.bf16 %v2018, %v1167
      %v2036 = vmul.bf16 %v2019, %v1176
      %v2037 = vmul.bf16 %v2020, %v1185
      %v2038 = vmul.bf16 %v2021, %v1194
      %v2039 = vmul.bf16 %v2022, %v1203
      %v2040 = vmul.bf16 %v2023, %v1212
      %v2041 = vmul.bf16 %v2024, %v1221
      %v2042 = vmul.bf16 %v2025, %v1230
      %v2043 = vmul.bf16 %v2026, %v1239
      %v2044 = vmul.bf16 %v2027, %v1248
      %v2045 = vmul.bf16 %v2028, %v1257
      %v2046 = vmul.bf16 %v2029, %v1266
      %v2047 = vmul.bf16 %v2030, %v1275
      %v2048 = vmul.bf16 %v2031, %v1284
      %v2049 = vmul.bf16 %v2032, %v1283
      %v2050 = vld [vmem:[#allocation2 + $0x10] sm:$0xf0]
      %v2051 = vld [vmem:[#allocation2 + $0x90] sm:$0x1f]
      %v2052 = vmul.bf16 %v2050, %v1793
      %v2053 = vmul.bf16 %v2017, %v1802
      %v2054 = vmul.bf16 %v2018, %v1811
      %v2055 = vmul.bf16 %v2019, %v1820
      %v2056 = vmul.bf16 %v2020, %v1829
      %v2057 = vmul.bf16 %v2021, %v1838
      %v2058 = vmul.bf16 %v2022, %v1847
      %v2059 = vmul.bf16 %v2023, %v1856
      %v2060 = vmul.bf16 %v2024, %v1865
      %v2061 = vmul.bf16 %v2025, %v1874
      %v2062 = vmul.bf16 %v2026, %v1883
      %v2063 = vmul.bf16 %v2027, %v1892
      %v2064 = vmul.bf16 %v2028, %v1901
      %v2065 = vmul.bf16 %v2029, %v1910
      %v2066 = vmul.bf16 %v2030, %v1919
      %v2067 = vmul.bf16 %v2031, %v1928
      %v2068 = vmul.bf16 %v2051, %v1927
      %vm2069 = vsmask.f32 7424
      %v2071 = vshrl.u32 %v1319, 16
      %v2073 = vshll.u32 %v1319, 16
      %v2075 = vrot.slane %v2073, 1
      %v2076 = vor.u32 %v2071, %v2075
      %v2078 = vshll.u32 %v661, 16
      %v2080 = vrot.slane %v2078, 1
      %v2081 = vsel %vm2069, %v2076, %v2080
      %v2082 = vshrl.u32 %v661, 16
      %v2084 = vor.u32 %v2082, %v2080
      %v2086 = vshll.u32 %v662, 16
      %v2088 = vrot.slane %v2086, 1
      %v2089 = vsel %vm2069, %v2084, %v2088
      %v2090 = vshrl.u32 %v662, 16
      %v2092 = vor.u32 %v2090, %v2088
      %v2094 = vshll.u32 %v663, 16
      %v2096 = vrot.slane %v2094, 1
      %v2097 = vsel %vm2069, %v2092, %v2096
      %v2098 = vshrl.u32 %v663, 16
      %v2100 = vor.u32 %v2098, %v2096
      %v2102 = vshll.u32 %v664, 16
      %v2104 = vrot.slane %v2102, 1
      %v2105 = vsel %vm2069, %v2100, %v2104
      %v2106 = vshrl.u32 %v664, 16
      %v2108 = vor.u32 %v2106, %v2104
      %v2110 = vshll.u32 %v665, 16
      %v2112 = vrot.slane %v2110, 1
      %v2113 = vsel %vm2069, %v2108, %v2112
      %v2114 = vshrl.u32 %v665, 16
      %v2116 = vor.u32 %v2114, %v2112
      %v2118 = vshll.u32 %v666, 16
      %v2120 = vrot.slane %v2118, 1
      %v2121 = vsel %vm2069, %v2116, %v2120
      %v2122 = vshrl.u32 %v666, 16
      %v2124 = vor.u32 %v2122, %v2120
      %v2126 = vshll.u32 %v667, 16
      %v2128 = vrot.slane %v2126, 1
      %v2129 = vsel %vm2069, %v2124, %v2128
      %v2130 = vshrl.u32 %v667, 16
      %v2132 = vor.u32 %v2130, %v2128
      %v2134 = vshll.u32 %v668, 16
      %v2136 = vrot.slane %v2134, 1
      %v2137 = vsel %vm2069, %v2132, %v2136
      %v2138 = vshrl.u32 %v668, 16
      %v2140 = vor.u32 %v2138, %v2136
      %v2142 = vshll.u32 %v669, 16
      %v2144 = vrot.slane %v2142, 1
      %v2145 = vsel %vm2069, %v2140, %v2144
      %v2146 = vshrl.u32 %v669, 16
      %v2148 = vor.u32 %v2146, %v2144
      %v2150 = vshll.u32 %v670, 16
      %v2152 = vrot.slane %v2150, 1
      %v2153 = vsel %vm2069, %v2148, %v2152
      %v2154 = vshrl.u32 %v670, 16
      %v2156 = vor.u32 %v2154, %v2152
      %v2158 = vshll.u32 %v671, 16
      %v2160 = vrot.slane %v2158, 1
      %v2161 = vsel %vm2069, %v2156, %v2160
      %v2162 = vshrl.u32 %v671, 16
      %v2164 = vor.u32 %v2162, %v2160
      %v2166 = vshll.u32 %v672, 16
      %v2168 = vrot.slane %v2166, 1
      %v2169 = vsel %vm2069, %v2164, %v2168
      %v2170 = vshrl.u32 %v672, 16
      %v2172 = vor.u32 %v2170, %v2168
      %v2174 = vshll.u32 %v673, 16
      %v2176 = vrot.slane %v2174, 1
      %v2177 = vsel %vm2069, %v2172, %v2176
      %v2178 = vshrl.u32 %v673, 16
      %v2180 = vor.u32 %v2178, %v2176
      %v2182 = vshll.u32 %v674, 16
      %v2184 = vrot.slane %v2182, 1
      %v2185 = vsel %vm2069, %v2180, %v2184
      %v2186 = vshrl.u32 %v674, 16
      %v2188 = vor.u32 %v2186, %v2184
      %v2190 = vshll.u32 %v675, 16
      %v2192 = vrot.slane %v2190, 1
      %v2193 = vsel %vm2069, %v2188, %v2192
      %v2194 = vshrl.u32 %v675, 16
      %v2196 = vor.u32 %v2194, %v2192
      %v2198 = vshll.u32 %v676, 16
      %v2200 = vrot.slane %v2198, 1
      %v2201 = vsel %vm2069, %v2196, %v2200
      %v2202 = vshrl.u32 %v676, 16
      %v2204 = vor.u32 %v2202, %v2200
      %vm2222 = vcmask 1046528
      %v2223 = vrot.slane %v1946, 1
      %v2224 = vrot.slane %v1947, 1
      %v2225 = vsel %vm2222, %v2223, %v2224
      %v2226 = vrot.slane %v1948, 1
      %v2227 = vsel %vm2222, %v2224, %v2226
      %v2228 = vrot.slane %v1949, 1
      %v2229 = vsel %vm2222, %v2226, %v2228
      %v2230 = vrot.slane %v1950, 1
      %v2231 = vsel %vm2222, %v2228, %v2230
      %v2232 = vrot.slane %v1951, 1
      %v2233 = vsel %vm2222, %v2230, %v2232
      %v2234 = vrot.slane %v1952, 1
      %v2235 = vsel %vm2222, %v2232, %v2234
      %v2236 = vrot.slane %v1953, 1
      %v2237 = vsel %vm2222, %v2234, %v2236
      %v2238 = vrot.slane %v1954, 1
      %v2239 = vsel %vm2222, %v2236, %v2238
      %v2240 = vrot.slane %v1955, 1
      %v2241 = vsel %vm2222, %v2238, %v2240
      %v2242 = vrot.slane %v1956, 1
      %v2243 = vsel %vm2222, %v2240, %v2242
      %v2244 = vrot.slane %v1957, 1
      %v2245 = vsel %vm2222, %v2242, %v2244
      %v2246 = vrot.slane %v1958, 1
      %v2247 = vsel %vm2222, %v2244, %v2246
      %v2248 = vrot.slane %v1959, 1
      %v2249 = vsel %vm2222, %v2246, %v2248
      %v2250 = vrot.slane %v1960, 1
      %v2251 = vsel %vm2222, %v2248, %v2250
      %v2252 = vrot.slane %v1961, 1
      %v2253 = vsel %vm2222, %v2250, %v2252
      %v2254 = vrot.slane %v1962, 1
      %v2255 = vsel %vm2222, %v2252, %v2254
      %v2257 = vshrl.u32 %v1997, 16
      %v2259 = vshll.u32 %v1997, 16
      %v2261 = vrot.slane %v2259, 1
      %v2262 = vor.u32 %v2257, %v2261
      %v2264 = vshll.u32 %v1964, 16
      %v2266 = vrot.slane %v2264, 1
      %v2267 = vsel %vm2069, %v2262, %v2266
      %v2268 = vshrl.u32 %v1964, 16
      %v2270 = vor.u32 %v2268, %v2266
      %v2272 = vshll.u32 %v1965, 16
      %v2274 = vrot.slane %v2272, 1
      %v2275 = vsel %vm2069, %v2270, %v2274
      %v2276 = vshrl.u32 %v1965, 16
      %v2278 = vor.u32 %v2276, %v2274
      %v2280 = vshll.u32 %v1966, 16
      %v2282 = vrot.slane %v2280, 1
      %v2283 = vsel %vm2069, %v2278, %v2282
      %v2284 = vshrl.u32 %v1966, 16
      %v2286 = vor.u32 %v2284, %v2282
      %v2288 = vshll.u32 %v1967, 16
      %v2290 = vrot.slane %v2288, 1
      %v2291 = vsel %vm2069, %v2286, %v2290
      %v2292 = vshrl.u32 %v1967, 16
      %v2294 = vor.u32 %v2292, %v2290
      %v2296 = vshll.u32 %v1968, 16
      %v2298 = vrot.slane %v2296, 1
      %v2299 = vsel %vm2069, %v2294, %v2298
      %v2300 = vshrl.u32 %v1968, 16
      %v2302 = vor.u32 %v2300, %v2298
      %v2304 = vshll.u32 %v1969, 16
      %v2306 = vrot.slane %v2304, 1
      %v2307 = vsel %vm2069, %v2302, %v2306
      %v2308 = vshrl.u32 %v1969, 16
      %v2310 = vor.u32 %v2308, %v2306
      %v2312 = vshll.u32 %v1970, 16
      %v2314 = vrot.slane %v2312, 1
      %v2315 = vsel %vm2069, %v2310, %v2314
      %v2316 = vshrl.u32 %v1970, 16
      %v2318 = vor.u32 %v2316, %v2314
      %v2320 = vshll.u32 %v1971, 16
      %v2322 = vrot.slane %v2320, 1
      %v2323 = vsel %vm2069, %v2318, %v2322
      %v2324 = vshrl.u32 %v1971, 16
      %v2326 = vor.u32 %v2324, %v2322
      %v2328 = vshll.u32 %v1972, 16
      %v2330 = vrot.slane %v2328, 1
      %v2331 = vsel %vm2069, %v2326, %v2330
      %v2332 = vshrl.u32 %v1972, 16
      %v2334 = vor.u32 %v2332, %v2330
      %v2336 = vshll.u32 %v1973, 16
      %v2338 = vrot.slane %v2336, 1
      %v2339 = vsel %vm2069, %v2334, %v2338
      %v2340 = vshrl.u32 %v1973, 16
      %v2342 = vor.u32 %v2340, %v2338
      %v2344 = vshll.u32 %v1974, 16
      %v2346 = vrot.slane %v2344, 1
      %v2347 = vsel %vm2069, %v2342, %v2346
      %v2348 = vshrl.u32 %v1974, 16
      %v2350 = vor.u32 %v2348, %v2346
      %v2352 = vshll.u32 %v1975, 16
      %v2354 = vrot.slane %v2352, 1
      %v2355 = vsel %vm2069, %v2350, %v2354
      %v2356 = vshrl.u32 %v1975, 16
      %v2358 = vor.u32 %v2356, %v2354
      %v2360 = vshll.u32 %v1976, 16
      %v2362 = vrot.slane %v2360, 1
      %v2363 = vsel %vm2069, %v2358, %v2362
      %v2364 = vshrl.u32 %v1976, 16
      %v2366 = vor.u32 %v2364, %v2362
      %v2368 = vshll.u32 %v1977, 16
      %v2370 = vrot.slane %v2368, 1
      %v2371 = vsel %vm2069, %v2366, %v2370
      %v2372 = vshrl.u32 %v1977, 16
      %v2374 = vor.u32 %v2372, %v2370
      %v2376 = vshll.u32 %v1978, 16
      %v2378 = vrot.slane %v2376, 1
      %v2379 = vsel %vm2069, %v2374, %v2378
      %v2380 = vshrl.u32 %v1978, 16
      %v2382 = vor.u32 %v2380, %v2378
      %v2384 = vshll.u32 %v1979, 16
      %v2386 = vrot.slane %v2384, 1
      %v2387 = vsel %vm2069, %v2382, %v2386
      %v2388 = vshrl.u32 %v1979, 16
      %v2390 = vor.u32 %v2388, %v2386
      %v2408 = vrot.slane %v1999, 1
      %v2409 = vrot.slane %v2000, 1
      %v2410 = vsel %vm2222, %v2408, %v2409
      %v2411 = vrot.slane %v2001, 1
      %v2412 = vsel %vm2222, %v2409, %v2411
      %v2413 = vrot.slane %v2002, 1
      %v2414 = vsel %vm2222, %v2411, %v2413
      %v2415 = vrot.slane %v2003, 1
      %v2416 = vsel %vm2222, %v2413, %v2415
      %v2417 = vrot.slane %v2004, 1
      %v2418 = vsel %vm2222, %v2415, %v2417
      %v2419 = vrot.slane %v2005, 1
      %v2420 = vsel %vm2222, %v2417, %v2419
      %v2421 = vrot.slane %v2006, 1
      %v2422 = vsel %vm2222, %v2419, %v2421
      %v2423 = vrot.slane %v2007, 1
      %v2424 = vsel %vm2222, %v2421, %v2423
      %v2425 = vrot.slane %v2008, 1
      %v2426 = vsel %vm2222, %v2423, %v2425
      %v2427 = vrot.slane %v2009, 1
      %v2428 = vsel %vm2222, %v2425, %v2427
      %v2429 = vrot.slane %v2010, 1
      %v2430 = vsel %vm2222, %v2427, %v2429
      %v2431 = vrot.slane %v2011, 1
      %v2432 = vsel %vm2222, %v2429, %v2431
      %v2433 = vrot.slane %v2012, 1
      %v2434 = vsel %vm2222, %v2431, %v2433
      %v2435 = vrot.slane %v2013, 1
      %v2436 = vsel %vm2222, %v2433, %v2435
      %v2437 = vrot.slane %v2014, 1
      %v2438 = vsel %vm2222, %v2435, %v2437
      %v2439 = vrot.slane %v2015, 1
      %v2440 = vsel %vm2222, %v2437, %v2439
      %v2442 = vshrl.u32 %v2050, 16
      %v2444 = vshll.u32 %v2050, 16
      %v2446 = vrot.slane %v2444, 1
      %v2447 = vor.u32 %v2442, %v2446
      %v2449 = vshll.u32 %v2017, 16
      %v2451 = vrot.slane %v2449, 1
      %v2452 = vsel %vm2069, %v2447, %v2451
      %v2453 = vshrl.u32 %v2017, 16
      %v2455 = vor.u32 %v2453, %v2451
      %v2457 = vshll.u32 %v2018, 16
      %v2459 = vrot.slane %v2457, 1
      %v2460 = vsel %vm2069, %v2455, %v2459
      %v2461 = vshrl.u32 %v2018, 16
      %v2463 = vor.u32 %v2461, %v2459
      %v2465 = vshll.u32 %v2019, 16
      %v2467 = vrot.slane %v2465, 1
      %v2468 = vsel %vm2069, %v2463, %v2467
      %v2469 = vshrl.u32 %v2019, 16
      %v2471 = vor.u32 %v2469, %v2467
      %v2473 = vshll.u32 %v2020, 16
      %v2475 = vrot.slane %v2473, 1
      %v2476 = vsel %vm2069, %v2471, %v2475
      %v2477 = vshrl.u32 %v2020, 16
      %v2479 = vor.u32 %v2477, %v2475
      %v2481 = vshll.u32 %v2021, 16
      %v2483 = vrot.slane %v2481, 1
      %v2484 = vsel %vm2069, %v2479, %v2483
      %v2485 = vshrl.u32 %v2021, 16
      %v2487 = vor.u32 %v2485, %v2483
      %v2489 = vshll.u32 %v2022, 16
      %v2491 = vrot.slane %v2489, 1
      %v2492 = vsel %vm2069, %v2487, %v2491
      %v2493 = vshrl.u32 %v2022, 16
      %v2495 = vor.u32 %v2493, %v2491
      %v2497 = vshll.u32 %v2023, 16
      %v2499 = vrot.slane %v2497, 1
      %v2500 = vsel %vm2069, %v2495, %v2499
      %v2501 = vshrl.u32 %v2023, 16
      %v2503 = vor.u32 %v2501, %v2499
      %v2505 = vshll.u32 %v2024, 16
      %v2507 = vrot.slane %v2505, 1
      %v2508 = vsel %vm2069, %v2503, %v2507
      %v2509 = vshrl.u32 %v2024, 16
      %v2511 = vor.u32 %v2509, %v2507
      %v2513 = vshll.u32 %v2025, 16
      %v2515 = vrot.slane %v2513, 1
      %v2516 = vsel %vm2069, %v2511, %v2515
      %v2517 = vshrl.u32 %v2025, 16
      %v2519 = vor.u32 %v2517, %v2515
      %v2521 = vshll.u32 %v2026, 16
      %v2523 = vrot.slane %v2521, 1
      %v2524 = vsel %vm2069, %v2519, %v2523
      %v2525 = vshrl.u32 %v2026, 16
      %v2527 = vor.u32 %v2525, %v2523
      %v2529 = vshll.u32 %v2027, 16
      %v2531 = vrot.slane %v2529, 1
      %v2532 = vsel %vm2069, %v2527, %v2531
      %v2533 = vshrl.u32 %v2027, 16
      %v2535 = vor.u32 %v2533, %v2531
      %v2537 = vshll.u32 %v2028, 16
      %v2539 = vrot.slane %v2537, 1
      %v2540 = vsel %vm2069, %v2535, %v2539
      %v2541 = vshrl.u32 %v2028, 16
      %v2543 = vor.u32 %v2541, %v2539
      %v2545 = vshll.u32 %v2029, 16
      %v2547 = vrot.slane %v2545, 1
      %v2548 = vsel %vm2069, %v2543, %v2547
      %v2549 = vshrl.u32 %v2029, 16
      %v2551 = vor.u32 %v2549, %v2547
      %v2553 = vshll.u32 %v2030, 16
      %v2555 = vrot.slane %v2553, 1
      %v2556 = vsel %vm2069, %v2551, %v2555
      %v2557 = vshrl.u32 %v2030, 16
      %v2559 = vor.u32 %v2557, %v2555
      %v2561 = vshll.u32 %v2031, 16
      %v2563 = vrot.slane %v2561, 1
      %v2564 = vsel %vm2069, %v2559, %v2563
      %v2565 = vshrl.u32 %v2031, 16
      %v2567 = vor.u32 %v2565, %v2563
      %v2569 = vshll.u32 %v2032, 16
      %v2571 = vrot.slane %v2569, 1
      %v2572 = vsel %vm2069, %v2567, %v2571
      %v2573 = vshrl.u32 %v2032, 16
      %v2575 = vor.u32 %v2573, %v2571
      %v2593 = vrot.slane %v2052, 1
      %v2594 = vrot.slane %v2053, 1
      %v2595 = vsel %vm2222, %v2593, %v2594
      %v2596 = vrot.slane %v2054, 1
      %v2597 = vsel %vm2222, %v2594, %v2596
      %v2598 = vrot.slane %v2055, 1
      %v2599 = vsel %vm2222, %v2596, %v2598
      %v2600 = vrot.slane %v2056, 1
      %v2601 = vsel %vm2222, %v2598, %v2600
      %v2602 = vrot.slane %v2057, 1
      %v2603 = vsel %vm2222, %v2600, %v2602
      %v2604 = vrot.slane %v2058, 1
      %v2605 = vsel %vm2222, %v2602, %v2604
      %v2606 = vrot.slane %v2059, 1
      %v2607 = vsel %vm2222, %v2604, %v2606
      %v2608 = vrot.slane %v2060, 1
      %v2609 = vsel %vm2222, %v2606, %v2608
      %v2610 = vrot.slane %v2061, 1
      %v2611 = vsel %vm2222, %v2608, %v2610
      %v2612 = vrot.slane %v2062, 1
      %v2613 = vsel %vm2222, %v2610, %v2612
      %v2614 = vrot.slane %v2063, 1
      %v2615 = vsel %vm2222, %v2612, %v2614
      %v2616 = vrot.slane %v2064, 1
      %v2617 = vsel %vm2222, %v2614, %v2616
      %v2618 = vrot.slane %v2065, 1
      %v2619 = vsel %vm2222, %v2616, %v2618
      %v2620 = vrot.slane %v2066, 1
      %v2621 = vsel %vm2222, %v2618, %v2620
      %v2622 = vrot.slane %v2067, 1
      %v2623 = vsel %vm2222, %v2620, %v2622
      %v2624 = vrot.slane %v2068, 1
      %v2625 = vsel %vm2222, %v2622, %v2624
      %v2626 = vld [vmem:[%s3] sm:$0xf]
      %v2627 = vld [vmem:[%s3 + $0x4] sm:$0xf]
      %v2628 = vld [vmem:[%s3 + $0x8] sm:$0xf]
      %v2629 = vld [vmem:[%s3 + $0xc] sm:$0xf]
      %v2630 = vld [vmem:[%s3 + $0x10] sm:$0xf]
      %v2631 = vld [vmem:[%s3 + $0x14] sm:$0xf]
      %v2632 = vld [vmem:[%s3 + $0x18] sm:$0xf]
      %v2633 = vld [vmem:[%s3 + $0x1c] sm:$0xf]
      %v2634 = vld [vmem:[%s3 + $0x20] sm:$0xf]
      %v2635 = vld [vmem:[%s3 + $0x24] sm:$0xf]
      %v2636 = vld [vmem:[%s3 + $0x28] sm:$0xf]
      %v2637 = vld [vmem:[%s3 + $0x2c] sm:$0xf]
      %v2638 = vld [vmem:[%s3 + $0x30] sm:$0xf]
      %v2639 = vld [vmem:[%s3 + $0x34] sm:$0xf]
      %v2640 = vld [vmem:[%s3 + $0x38] sm:$0xf]
      %v2641 = vld [vmem:[%s3 + $0x3c] sm:$0xf]
      %v2642 = vld [vmem:[%s3 + $0x40] sm:$0xf]
      %v2643 = vld [vmem:[%s3 + $0x44] sm:$0xf]
      %v2644 = vld [vmem:[%s3 + $0x48] sm:$0xf]
      %v2645 = vld [vmem:[%s3 + $0x4c] sm:$0xf]
      %v2646 = vld [vmem:[%s3 + $0x50] sm:$0xf]
      %v2647 = vld [vmem:[%s3 + $0x54] sm:$0xf]
      %v2648 = vld [vmem:[%s3 + $0x58] sm:$0xf]
      %v2649 = vld [vmem:[%s3 + $0x5c] sm:$0xf]
      %v2650 = vld [vmem:[%s3 + $0x60] sm:$0xf]
      %v2651 = vld [vmem:[%s3 + $0x64] sm:$0xf]
      %v2652 = vld [vmem:[%s3 + $0x68] sm:$0xf]
      %v2653 = vld [vmem:[%s3 + $0x6c] sm:$0xf]
      %v2654 = vld [vmem:[%s3 + $0x70] sm:$0xf]
      %v2655 = vld [vmem:[%s3 + $0x74] sm:$0xf]
      %v2656 = vld [vmem:[%s3 + $0x78] sm:$0xf]
      %v2657 = vld [vmem:[%s3 + $0x7c] sm:$0xf]
      %v2658 = vld [vmem:[%s3 + $0x80] sm:$0xf]
      %v2659 = vld [vmem:[%s3 + $0x84] sm:$0xf]
      %v2660 = vld [vmem:[%s3 + $0x88] sm:$0xf]
      %v2661 = vld [vmem:[%s3 + $0x8c] sm:$0xf]
      %v2662 = vld [vmem:[%s3 + $0x90] sm:$0xf]
      %v2663 = vld [vmem:[%s3 + $0x94] sm:$0xf]
      %v2664 = vld [vmem:[%s3 + $0x98] sm:$0xf]
      %v2665 = vld [vmem:[%s3 + $0x9c] sm:$0xf]
      %v2666 = vld [vmem:[%s3 + $0xa0] sm:$0xf]
      %v2667 = vld [vmem:[%s3 + $0xa4] sm:$0xf]
      %v2668 = vld [vmem:[%s3 + $0xa8] sm:$0xf]
      %v2669 = vld [vmem:[%s3 + $0xac] sm:$0xf]
      %v2670 = vld [vmem:[%s3 + $0xb0] sm:$0xf]
      %v2671 = vld [vmem:[%s3 + $0xb4] sm:$0xf]
      %v2672 = vld [vmem:[%s3 + $0xb8] sm:$0xf]
      %v2673 = vld [vmem:[%s3 + $0xbc] sm:$0xf]
      %v2674 = vld [vmem:[%s3 + $0xc0] sm:$0xf]
      %v2675 = vld [vmem:[%s3 + $0xc4] sm:$0xf]
      %v2676 = vld [vmem:[%s3 + $0xc8] sm:$0xf]
      %v2677 = vld [vmem:[%s3 + $0xcc] sm:$0xf]
      %v2678 = vld [vmem:[%s3 + $0xd0] sm:$0xf]
      %v2679 = vld [vmem:[%s3 + $0xd4] sm:$0xf]
      %v2680 = vld [vmem:[%s3 + $0xd8] sm:$0xf]
      %v2681 = vld [vmem:[%s3 + $0xdc] sm:$0xf]
      %v2682 = vld [vmem:[%s3 + $0xe0] sm:$0xf]
      %v2683 = vld [vmem:[%s3 + $0xe4] sm:$0xf]
      %v2684 = vld [vmem:[%s3 + $0xe8] sm:$0xf]
      %v2685 = vld [vmem:[%s3 + $0xec] sm:$0xf]
      %v2686 = vld [vmem:[%s3 + $0xf0] sm:$0xf]
      %v2687 = vld [vmem:[%s3 + $0xf4] sm:$0xf]
      %v2688 = vld [vmem:[%s3 + $0xf8] sm:$0xf]
      %v2689 = vld [vmem:[%s3 + $0xfc] sm:$0xf]
      %v2690 = vld [vmem:[%s3 + $0x100] sm:$0xf]
      %v2691 = vld [vmem:[%s3 + $0x104] sm:$0xf]
      %v2692 = vld [vmem:[%s3 + $0x108] sm:$0xf]
      %v2693 = vld [vmem:[%s3 + $0x10c] sm:$0xf]
      %v2694 = vld [vmem:[%s3 + $0x110] sm:$0xf]
      %v2695 = vld [vmem:[%s3 + $0x114] sm:$0xf]
      %v2696 = vld [vmem:[%s3 + $0x118] sm:$0xf]
      %v2697 = vld [vmem:[%s3 + $0x11c] sm:$0xf]
      %v2698 = vld [vmem:[%s3 + $0x120] sm:$0xf]
      %v2699 = vld [vmem:[%s3 + $0x124] sm:$0xf]
      %v2700 = vld [vmem:[%s3 + $0x128] sm:$0xf]
      %v2701 = vld [vmem:[%s3 + $0x12c] sm:$0xf]
      %v2702 = vld [vmem:[%s3 + $0x130] sm:$0xf]
      %v2703 = vld [vmem:[%s3 + $0x134] sm:$0xf]
      %v2704 = vld [vmem:[%s3 + $0x138] sm:$0xf]
      %v2705 = vld [vmem:[%s3 + $0x13c] sm:$0xf]
      %v2706 = vld [vmem:[%s3 + $0x140] sm:$0xf]
      %v2707 = vld [vmem:[%s3 + $0x144] sm:$0xf]
      %v2708 = vld [vmem:[%s3 + $0x148] sm:$0xf]
      %v2709 = vld [vmem:[%s3 + $0x14c] sm:$0xf]
      %v2710 = vld [vmem:[%s3 + $0x150] sm:$0xf]
      %v2711 = vld [vmem:[%s3 + $0x154] sm:$0xf]
      %v2712 = vld [vmem:[%s3 + $0x158] sm:$0xf]
      %v2713 = vld [vmem:[%s3 + $0x15c] sm:$0xf]
      %v2714 = vld [vmem:[%s3 + $0x160] sm:$0xf]
      %v2715 = vld [vmem:[%s3 + $0x164] sm:$0xf]
      %v2716 = vld [vmem:[%s3 + $0x168] sm:$0xf]
      %v2717 = vld [vmem:[%s3 + $0x16c] sm:$0xf]
      %v2718 = vld [vmem:[%s3 + $0x170] sm:$0xf]
      %v2719 = vld [vmem:[%s3 + $0x174] sm:$0xf]
      %v2720 = vld [vmem:[%s3 + $0x178] sm:$0xf]
      %v2721 = vld [vmem:[%s3 + $0x17c] sm:$0xf]
      %v2722 = vld [vmem:[%s3 + $0x180] sm:$0xf]
      %v2723 = vld [vmem:[%s3 + $0x184] sm:$0xf]
      %v2724 = vld [vmem:[%s3 + $0x188] sm:$0xf]
      %v2725 = vld [vmem:[%s3 + $0x18c] sm:$0xf]
      %v2726 = vld [vmem:[%s3 + $0x190] sm:$0xf]
      %v2727 = vld [vmem:[%s3 + $0x194] sm:$0xf]
      %v2728 = vld [vmem:[%s3 + $0x198] sm:$0xf]
      %v2729 = vld [vmem:[%s3 + $0x19c] sm:$0xf]
      %v2730 = vld [vmem:[%s3 + $0x1a0] sm:$0xf]
      %v2731 = vld [vmem:[%s3 + $0x1a4] sm:$0xf]
      %v2732 = vld [vmem:[%s3 + $0x1a8] sm:$0xf]
      %v2733 = vld [vmem:[%s3 + $0x1ac] sm:$0xf]
      %v2734 = vld [vmem:[%s3 + $0x1b0] sm:$0xf]
      %v2735 = vld [vmem:[%s3 + $0x1b4] sm:$0xf]
      %v2736 = vld [vmem:[%s3 + $0x1b8] sm:$0xf]
      %v2737 = vld [vmem:[%s3 + $0x1bc] sm:$0xf]
      %v2738 = vld [vmem:[%s3 + $0x1c0] sm:$0xf]
      %v2739 = vld [vmem:[%s3 + $0x1c4] sm:$0xf]
      %v2740 = vld [vmem:[%s3 + $0x1c8] sm:$0xf]
      %v2741 = vld [vmem:[%s3 + $0x1cc] sm:$0xf]
      %v2742 = vld [vmem:[%s3 + $0x1d0] sm:$0xf]
      %v2743 = vld [vmem:[%s3 + $0x1d4] sm:$0xf]
      %v2744 = vld [vmem:[%s3 + $0x1d8] sm:$0xf]
      %v2745 = vld [vmem:[%s3 + $0x1dc] sm:$0xf]
      %v2746 = vld [vmem:[%s3 + $0x1e0] sm:$0xf]
      %v2747 = vld [vmem:[%s3 + $0x1e4] sm:$0xf]
      %v2748 = vld [vmem:[%s3 + $0x1e8] sm:$0xf]
      %v2749 = vld [vmem:[%s3 + $0x1ec] sm:$0xf]
      %v2750 = vld [vmem:[%s3 + $0x1f0] sm:$0xf]
      %v2751 = vld [vmem:[%s3 + $0x1f4] sm:$0xf]
      %v2752 = vld [vmem:[%s3 + $0x1f8] sm:$0xf]
      %v2753 = vld [vmem:[%s3 + $0x1fc] sm:$0xf]
      %v2754 = vld [vmem:[%s3 + $0x200] sm:$0xf]
      %v2755 = vld [vmem:[%s3 + $0x204] sm:$0xf]
      %v2756 = vld [vmem:[%s3 + $0x208] sm:$0xf]
      %v2757 = vld [vmem:[%s3 + $0x20c] sm:$0xf]
      %v2758 = vld [vmem:[%s3 + $0x210] sm:$0xf]
      %v2759 = vld [vmem:[%s3 + $0x214] sm:$0xf]
      %v2760 = vld [vmem:[%s3 + $0x218] sm:$0xf]
      %v2761 = vld [vmem:[%s3 + $0x21c] sm:$0xf]
      %v2762 = vld [vmem:[%s3 + $0x220] sm:$0xf]
      %v2763 = vld [vmem:[%s3 + $0x224] sm:$0xf]
      %v2764 = vld [vmem:[%s3 + $0x228] sm:$0xf]
      %v2765 = vld [vmem:[%s3 + $0x22c] sm:$0xf]
      %v2766 = vld [vmem:[%s3 + $0x230] sm:$0xf]
      %v2767 = vld [vmem:[%s3 + $0x234] sm:$0xf]
      %v2768 = vld [vmem:[%s3 + $0x238] sm:$0xf]
      %v2769 = vld [vmem:[%s3 + $0x23c] sm:$0xf]
      %v2770 = vld [vmem:[%s4] sm:$0x1]
      %v2772 = vlaneseq
      %v2773 = vshrl.u32 %v2772, 7
      %v2774 = vsub.s32 0, %v2773
      %v2775 = vrot.slane %v2770, %v2774
      %v2778 = vshrl.u32 %v1302, 16
      %v2780 = vrot.slane %v2778, 3
      %v2781 = vshll.u32 %v1302, 16
      %v2783 = vrot.slane %v2781, 4
      %v2784 = vor.u32 %v2780, %v2783
      %v2786 = vshrl.u32 %v1303, 16
      %v2788 = vrot.slane %v2786, 3
      %v2789 = vshll.u32 %v1303, 16
      %v2791 = vrot.slane %v2789, 4
      %v2792 = vor.u32 %v2788, %v2791
      %v2793 = vsel %vm1785, %v2784, %v2792
      %v2795 = vshrl.u32 %v2081, 16
      %v2797 = vrot.slane %v2795, 3
      %v2798 = vshll.u32 %v2081, 16
      %v2800 = vrot.slane %v2798, 4
      %v2801 = vor.u32 %v2797, %v2800
      %v2803 = vshrl.u32 %v2089, 16
      %v2805 = vrot.slane %v2803, 3
      %v2806 = vshll.u32 %v2089, 16
      %v2808 = vrot.slane %v2806, 4
      %v2809 = vor.u32 %v2805, %v2808
      %v2810 = vsel %vm1785, %v2801, %v2809
      %v2812 = vshrl.u32 %v2225, 16
      %v2814 = vrot.slane %v2812, 3
      %v2815 = vshll.u32 %v2225, 16
      %v2817 = vrot.slane %v2815, 4
      %v2818 = vor.u32 %v2814, %v2817
      %v2820 = vshrl.u32 %v2227, 16
      %v2822 = vrot.slane %v2820, 3
      %v2823 = vshll.u32 %v2227, 16
      %v2825 = vrot.slane %v2823, 4
      %v2826 = vor.u32 %v2822, %v2825
      %v2827 = vsel %vm1785, %v2818, %v2826
      %v2829 = vshrl.u32 %v1980, 16
      %v2831 = vrot.slane %v2829, 3
      %v2832 = vshll.u32 %v1980, 16
      %v2834 = vrot.slane %v2832, 4
      %v2835 = vor.u32 %v2831, %v2834
      %v2837 = vshrl.u32 %v1981, 16
      %v2839 = vrot.slane %v2837, 3
      %v2840 = vshll.u32 %v1981, 16
      %v2842 = vrot.slane %v2840, 4
      %v2843 = vor.u32 %v2839, %v2842
      %v2844 = vsel %vm1785, %v2835, %v2843
      %v2846 = vshrl.u32 %v2267, 16
      %v2848 = vrot.slane %v2846, 3
      %v2849 = vshll.u32 %v2267, 16
      %v2851 = vrot.slane %v2849, 4
      %v2852 = vor.u32 %v2848, %v2851
      %v2854 = vshrl.u32 %v2275, 16
      %v2856 = vrot.slane %v2854, 3
      %v2857 = vshll.u32 %v2275, 16
      %v2859 = vrot.slane %v2857, 4
      %v2860 = vor.u32 %v2856, %v2859
      %v2861 = vsel %vm1785, %v2852, %v2860
      %v2863 = vshrl.u32 %v2410, 16
      %v2865 = vrot.slane %v2863, 3
      %v2866 = vshll.u32 %v2410, 16
      %v2868 = vrot.slane %v2866, 4
      %v2869 = vor.u32 %v2865, %v2868
      %v2871 = vshrl.u32 %v2412, 16
      %v2873 = vrot.slane %v2871, 3
      %v2874 = vshll.u32 %v2412, 16
      %v2876 = vrot.slane %v2874, 4
      %v2877 = vor.u32 %v2873, %v2876
      %v2878 = vsel %vm1785, %v2869, %v2877
      %v2880 = vshrl.u32 %v2033, 16
      %v2882 = vrot.slane %v2880, 3
      %v2883 = vshll.u32 %v2033, 16
      %v2885 = vrot.slane %v2883, 4
      %v2886 = vor.u32 %v2882, %v2885
      %v2888 = vshrl.u32 %v2034, 16
      %v2890 = vrot.slane %v2888, 3
      %v2891 = vshll.u32 %v2034, 16
      %v2893 = vrot.slane %v2891, 4
      %v2894 = vor.u32 %v2890, %v2893
      %v2895 = vsel %vm1785, %v2886, %v2894
      %v2897 = vshrl.u32 %v2452, 16
      %v2899 = vrot.slane %v2897, 3
      %v2900 = vshll.u32 %v2452, 16
      %v2902 = vrot.slane %v2900, 4
      %v2903 = vor.u32 %v2899, %v2902
      %v2905 = vshrl.u32 %v2460, 16
      %v2907 = vrot.slane %v2905, 3
      %v2908 = vshll.u32 %v2460, 16
      %v2910 = vrot.slane %v2908, 4
      %v2911 = vor.u32 %v2907, %v2910
      %v2912 = vsel %vm1785, %v2903, %v2911
      %v2914 = vshrl.u32 %v2595, 16
      %v2916 = vrot.slane %v2914, 3
      %v2917 = vshll.u32 %v2595, 16
      %v2919 = vrot.slane %v2917, 4
      %v2920 = vor.u32 %v2916, %v2919
      %v2922 = vshrl.u32 %v2597, 16
      %v2924 = vrot.slane %v2922, 3
      %v2925 = vshll.u32 %v2597, 16
      %v2927 = vrot.slane %v2925, 4
      %v2928 = vor.u32 %v2924, %v2927
      %v2929 = vsel %vm1785, %v2920, %v2928
      %v2931 = vshrl.u32 %v1304, 16
      %v2933 = vrot.slane %v2931, 3
      %v2934 = vshll.u32 %v1304, 16
      %v2936 = vrot.slane %v2934, 4
      %v2937 = vor.u32 %v2933, %v2936
      %v2938 = vsel %vm1785, %v2792, %v2937
      %v2940 = vshrl.u32 %v2097, 16
      %v2942 = vrot.slane %v2940, 3
      %v2943 = vshll.u32 %v2097, 16
      %v2945 = vrot.slane %v2943, 4
      %v2946 = vor.u32 %v2942, %v2945
      %v2947 = vsel %vm1785, %v2809, %v2946
      %v2949 = vshrl.u32 %v2229, 16
      %v2951 = vrot.slane %v2949, 3
      %v2952 = vshll.u32 %v2229, 16
      %v2954 = vrot.slane %v2952, 4
      %v2955 = vor.u32 %v2951, %v2954
      %v2956 = vsel %vm1785, %v2826, %v2955
      %v2958 = vshrl.u32 %v1982, 16
      %v2960 = vrot.slane %v2958, 3
      %v2961 = vshll.u32 %v1982, 16
      %v2963 = vrot.slane %v2961, 4
      %v2964 = vor.u32 %v2960, %v2963
      %v2965 = vsel %vm1785, %v2843, %v2964
      %v2967 = vshrl.u32 %v2283, 16
      %v2969 = vrot.slane %v2967, 3
      %v2970 = vshll.u32 %v2283, 16
      %v2972 = vrot.slane %v2970, 4
      %v2973 = vor.u32 %v2969, %v2972
      %v2974 = vsel %vm1785, %v2860, %v2973
      %v2976 = vshrl.u32 %v2414, 16
      %v2978 = vrot.slane %v2976, 3
      %v2979 = vshll.u32 %v2414, 16
      %v2981 = vrot.slane %v2979, 4
      %v2982 = vor.u32 %v2978, %v2981
      %v2983 = vsel %vm1785, %v2877, %v2982
      %v2985 = vshrl.u32 %v2035, 16
      %v2987 = vrot.slane %v2985, 3
      %v2988 = vshll.u32 %v2035, 16
      %v2990 = vrot.slane %v2988, 4
      %v2991 = vor.u32 %v2987, %v2990
      %v2992 = vsel %vm1785, %v2894, %v2991
      %v2994 = vshrl.u32 %v2468, 16
      %v2996 = vrot.slane %v2994, 3
      %v2997 = vshll.u32 %v2468, 16
      %v2999 = vrot.slane %v2997, 4
      %v3000 = vor.u32 %v2996, %v2999
      %v3001 = vsel %vm1785, %v2911, %v3000
      %v3003 = vshrl.u32 %v2599, 16
      %v3005 = vrot.slane %v3003, 3
      %v3006 = vshll.u32 %v2599, 16
      %v3008 = vrot.slane %v3006, 4
      %v3009 = vor.u32 %v3005, %v3008
      %v3010 = vsel %vm1785, %v2928, %v3009
      %v3012 = vshrl.u32 %v1305, 16
      %v3014 = vrot.slane %v3012, 3
      %v3015 = vshll.u32 %v1305, 16
      %v3017 = vrot.slane %v3015, 4
      %v3018 = vor.u32 %v3014, %v3017
      %v3019 = vsel %vm1785, %v2937, %v3018
      %v3021 = vshrl.u32 %v2105, 16
      %v3023 = vrot.slane %v3021, 3
      %v3024 = vshll.u32 %v2105, 16
      %v3026 = vrot.slane %v3024, 4
      %v3027 = vor.u32 %v3023, %v3026
      %v3028 = vsel %vm1785, %v2946, %v3027
      %v3030 = vshrl.u32 %v2231, 16
      %v3032 = vrot.slane %v3030, 3
      %v3033 = vshll.u32 %v2231, 16
      %v3035 = vrot.slane %v3033, 4
      %v3036 = vor.u32 %v3032, %v3035
      %v3037 = vsel %vm1785, %v2955, %v3036
      %v3039 = vshrl.u32 %v1983, 16
      %v3041 = vrot.slane %v3039, 3
      %v3042 = vshll.u32 %v1983, 16
      %v3044 = vrot.slane %v3042, 4
      %v3045 = vor.u32 %v3041, %v3044
      %v3046 = vsel %vm1785, %v2964, %v3045
      %v3048 = vshrl.u32 %v2291, 16
      %v3050 = vrot.slane %v3048, 3
      %v3051 = vshll.u32 %v2291, 16
      %v3053 = vrot.slane %v3051, 4
      %v3054 = vor.u32 %v3050, %v3053
      %v3055 = vsel %vm1785, %v2973, %v3054
      %v3057 = vshrl.u32 %v2416, 16
      %v3059 = vrot.slane %v3057, 3
      %v3060 = vshll.u32 %v2416, 16
      %v3062 = vrot.slane %v3060, 4
      %v3063 = vor.u32 %v3059, %v3062
      %v3064 = vsel %vm1785, %v2982, %v3063
      %v3066 = vshrl.u32 %v2036, 16
      %v3068 = vrot.slane %v3066, 3
      %v3069 = vshll.u32 %v2036, 16
      %v3071 = vrot.slane %v3069, 4
      %v3072 = vor.u32 %v3068, %v3071
      %v3073 = vsel %vm1785, %v2991, %v3072
      %v3075 = vshrl.u32 %v2476, 16
      %v3077 = vrot.slane %v3075, 3
      %v3078 = vshll.u32 %v2476, 16
      %v3080 = vrot.slane %v3078, 4
      %v3081 = vor.u32 %v3077, %v3080
      %v3082 = vsel %vm1785, %v3000, %v3081
      %v3084 = vshrl.u32 %v2601, 16
      %v3086 = vrot.slane %v3084, 3
      %v3087 = vshll.u32 %v2601, 16
      %v3089 = vrot.slane %v3087, 4
      %v3090 = vor.u32 %v3086, %v3089
      %v3091 = vsel %vm1785, %v3009, %v3090
      %v3093 = vshrl.u32 %v1306, 16
      %v3095 = vrot.slane %v3093, 3
      %v3096 = vshll.u32 %v1306, 16
      %v3098 = vrot.slane %v3096, 4
      %v3099 = vor.u32 %v3095, %v3098
      %v3100 = vsel %vm1785, %v3018, %v3099
      %v3102 = vshrl.u32 %v2113, 16
      %v3104 = vrot.slane %v3102, 3
      %v3105 = vshll.u32 %v2113, 16
      %v3107 = vrot.slane %v3105, 4
      %v3108 = vor.u32 %v3104, %v3107
      %v3109 = vsel %vm1785, %v3027, %v3108
      %v3111 = vshrl.u32 %v2233, 16
      %v3113 = vrot.slane %v3111, 3
      %v3114 = vshll.u32 %v2233, 16
      %v3116 = vrot.slane %v3114, 4
      %v3117 = vor.u32 %v3113, %v3116
      %v3118 = vsel %vm1785, %v3036, %v3117
      %v3120 = vshrl.u32 %v1984, 16
      %v3122 = vrot.slane %v3120, 3
      %v3123 = vshll.u32 %v1984, 16
      %v3125 = vrot.slane %v3123, 4
      %v3126 = vor.u32 %v3122, %v3125
      %v3127 = vsel %vm1785, %v3045, %v3126
      %v3129 = vshrl.u32 %v2299, 16
      %v3131 = vrot.slane %v3129, 3
      %v3132 = vshll.u32 %v2299, 16
      %v3134 = vrot.slane %v3132, 4
      %v3135 = vor.u32 %v3131, %v3134
      %v3136 = vsel %vm1785, %v3054, %v3135
      %v3138 = vshrl.u32 %v2418, 16
      %v3140 = vrot.slane %v3138, 3
      %v3141 = vshll.u32 %v2418, 16
      %v3143 = vrot.slane %v3141, 4
      %v3144 = vor.u32 %v3140, %v3143
      %v3145 = vsel %vm1785, %v3063, %v3144
      %v3147 = vshrl.u32 %v2037, 16
      %v3149 = vrot.slane %v3147, 3
      %v3150 = vshll.u32 %v2037, 16
      %v3152 = vrot.slane %v3150, 4
      %v3153 = vor.u32 %v3149, %v3152
      %v3154 = vsel %vm1785, %v3072, %v3153
      %v3156 = vshrl.u32 %v2484, 16
      %v3158 = vrot.slane %v3156, 3
      %v3159 = vshll.u32 %v2484, 16
      %v3161 = vrot.slane %v3159, 4
      %v3162 = vor.u32 %v3158, %v3161
      %v3163 = vsel %vm1785, %v3081, %v3162
      %v3165 = vshrl.u32 %v2603, 16
      %v3167 = vrot.slane %v3165, 3
      %v3168 = vshll.u32 %v2603, 16
      %v3170 = vrot.slane %v3168, 4
      %v3171 = vor.u32 %v3167, %v3170
      %v3172 = vsel %vm1785, %v3090, %v3171
      %v3174 = vshrl.u32 %v1307, 16
      %v3176 = vrot.slane %v3174, 3
      %v3177 = vshll.u32 %v1307, 16
      %v3179 = vrot.slane %v3177, 4
      %v3180 = vor.u32 %v3176, %v3179
      %v3181 = vsel %vm1785, %v3099, %v3180
      %v3183 = vshrl.u32 %v2121, 16
      %v3185 = vrot.slane %v3183, 3
      %v3186 = vshll.u32 %v2121, 16
      %v3188 = vrot.slane %v3186, 4
      %v3189 = vor.u32 %v3185, %v3188
      %v3190 = vsel %vm1785, %v3108, %v3189
      %v3192 = vshrl.u32 %v2235, 16
      %v3194 = vrot.slane %v3192, 3
      %v3195 = vshll.u32 %v2235, 16
      %v3197 = vrot.slane %v3195, 4
      %v3198 = vor.u32 %v3194, %v3197
      %v3199 = vsel %vm1785, %v3117, %v3198
      %v3201 = vshrl.u32 %v1985, 16
      %v3203 = vrot.slane %v3201, 3
      %v3204 = vshll.u32 %v1985, 16
      %v3206 = vrot.slane %v3204, 4
      %v3207 = vor.u32 %v3203, %v3206
      %v3208 = vsel %vm1785, %v3126, %v3207
      %v3210 = vshrl.u32 %v2307, 16
      %v3212 = vrot.slane %v3210, 3
      %v3213 = vshll.u32 %v2307, 16
      %v3215 = vrot.slane %v3213, 4
      %v3216 = vor.u32 %v3212, %v3215
      %v3217 = vsel %vm1785, %v3135, %v3216
      %v3219 = vshrl.u32 %v2420, 16
      %v3221 = vrot.slane %v3219, 3
      %v3222 = vshll.u32 %v2420, 16
      %v3224 = vrot.slane %v3222, 4
      %v3225 = vor.u32 %v3221, %v3224
      %v3226 = vsel %vm1785, %v3144, %v3225
      %v3228 = vshrl.u32 %v2038, 16
      %v3230 = vrot.slane %v3228, 3
      %v3231 = vshll.u32 %v2038, 16
      %v3233 = vrot.slane %v3231, 4
      %v3234 = vor.u32 %v3230, %v3233
      %v3235 = vsel %vm1785, %v3153, %v3234
      %v3237 = vshrl.u32 %v2492, 16
      %v3239 = vrot.slane %v3237, 3
      %v3240 = vshll.u32 %v2492, 16
      %v3242 = vrot.slane %v3240, 4
      %v3243 = vor.u32 %v3239, %v3242
      %v3244 = vsel %vm1785, %v3162, %v3243
      %v3246 = vshrl.u32 %v2605, 16
      %v3248 = vrot.slane %v3246, 3
      %v3249 = vshll.u32 %v2605, 16
      %v3251 = vrot.slane %v3249, 4
      %v3252 = vor.u32 %v3248, %v3251
      %v3253 = vsel %vm1785, %v3171, %v3252
      %v3255 = vshrl.u32 %v1308, 16
      %v3257 = vrot.slane %v3255, 3
      %v3258 = vshll.u32 %v1308, 16
      %v3260 = vrot.slane %v3258, 4
      %v3261 = vor.u32 %v3257, %v3260
      %v3262 = vsel %vm1785, %v3180, %v3261
      %v3264 = vshrl.u32 %v2129, 16
      %v3266 = vrot.slane %v3264, 3
      %v3267 = vshll.u32 %v2129, 16
      %v3269 = vrot.slane %v3267, 4
      %v3270 = vor.u32 %v3266, %v3269
      %v3271 = vsel %vm1785, %v3189, %v3270
      %v3273 = vshrl.u32 %v2237, 16
      %v3275 = vrot.slane %v3273, 3
      %v3276 = vshll.u32 %v2237, 16
      %v3278 = vrot.slane %v3276, 4
      %v3279 = vor.u32 %v3275, %v3278
      %v3280 = vsel %vm1785, %v3198, %v3279
      %v3282 = vshrl.u32 %v1986, 16
      %v3284 = vrot.slane %v3282, 3
      %v3285 = vshll.u32 %v1986, 16
      %v3287 = vrot.slane %v3285, 4
      %v3288 = vor.u32 %v3284, %v3287
      %v3289 = vsel %vm1785, %v3207, %v3288
      %v3291 = vshrl.u32 %v2315, 16
      %v3293 = vrot.slane %v3291, 3
      %v3294 = vshll.u32 %v2315, 16
      %v3296 = vrot.slane %v3294, 4
      %v3297 = vor.u32 %v3293, %v3296
      %v3298 = vsel %vm1785, %v3216, %v3297
      %v3300 = vshrl.u32 %v2422, 16
      %v3302 = vrot.slane %v3300, 3
      %v3303 = vshll.u32 %v2422, 16
      %v3305 = vrot.slane %v3303, 4
      %v3306 = vor.u32 %v3302, %v3305
      %v3307 = vsel %vm1785, %v3225, %v3306
      %v3309 = vshrl.u32 %v2039, 16
      %v3311 = vrot.slane %v3309, 3
      %v3312 = vshll.u32 %v2039, 16
      %v3314 = vrot.slane %v3312, 4
      %v3315 = vor.u32 %v3311, %v3314
      %v3316 = vsel %vm1785, %v3234, %v3315
      %v3318 = vshrl.u32 %v2500, 16
      %v3320 = vrot.slane %v3318, 3
      %v3321 = vshll.u32 %v2500, 16
      %v3323 = vrot.slane %v3321, 4
      %v3324 = vor.u32 %v3320, %v3323
      %v3325 = vsel %vm1785, %v3243, %v3324
      %v3327 = vshrl.u32 %v2607, 16
      %v3329 = vrot.slane %v3327, 3
      %v3330 = vshll.u32 %v2607, 16
      %v3332 = vrot.slane %v3330, 4
      %v3333 = vor.u32 %v3329, %v3332
      %v3334 = vsel %vm1785, %v3252, %v3333
      %v3336 = vshrl.u32 %v1309, 16
      %v3338 = vrot.slane %v3336, 3
      %v3339 = vshll.u32 %v1309, 16
      %v3341 = vrot.slane %v3339, 4
      %v3342 = vor.u32 %v3338, %v3341
      %v3343 = vsel %vm1785, %v3261, %v3342
      %v3345 = vshrl.u32 %v2137, 16
      %v3347 = vrot.slane %v3345, 3
      %v3348 = vshll.u32 %v2137, 16
      %v3350 = vrot.slane %v3348, 4
      %v3351 = vor.u32 %v3347, %v3350
      %v3352 = vsel %vm1785, %v3270, %v3351
      %v3354 = vshrl.u32 %v2239, 16
      %v3356 = vrot.slane %v3354, 3
      %v3357 = vshll.u32 %v2239, 16
      %v3359 = vrot.slane %v3357, 4
      %v3360 = vor.u32 %v3356, %v3359
      %v3361 = vsel %vm1785, %v3279, %v3360
      %v3363 = vshrl.u32 %v1987, 16
      %v3365 = vrot.slane %v3363, 3
      %v3366 = vshll.u32 %v1987, 16
      %v3368 = vrot.slane %v3366, 4
      %v3369 = vor.u32 %v3365, %v3368
      %v3370 = vsel %vm1785, %v3288, %v3369
      %v3372 = vshrl.u32 %v2323, 16
      %v3374 = vrot.slane %v3372, 3
      %v3375 = vshll.u32 %v2323, 16
      %v3377 = vrot.slane %v3375, 4
      %v3378 = vor.u32 %v3374, %v3377
      %v3379 = vsel %vm1785, %v3297, %v3378
      %v3381 = vshrl.u32 %v2424, 16
      %v3383 = vrot.slane %v3381, 3
      %v3384 = vshll.u32 %v2424, 16
      %v3386 = vrot.slane %v3384, 4
      %v3387 = vor.u32 %v3383, %v3386
      %v3388 = vsel %vm1785, %v3306, %v3387
      %v3390 = vshrl.u32 %v2040, 16
      %v3392 = vrot.slane %v3390, 3
      %v3393 = vshll.u32 %v2040, 16
      %v3395 = vrot.slane %v3393, 4
      %v3396 = vor.u32 %v3392, %v3395
      %v3397 = vsel %vm1785, %v3315, %v3396
      %v3399 = vshrl.u32 %v2508, 16
      %v3401 = vrot.slane %v3399, 3
      %v3402 = vshll.u32 %v2508, 16
      %v3404 = vrot.slane %v3402, 4
      %v3405 = vor.u32 %v3401, %v3404
      %v3406 = vsel %vm1785, %v3324, %v3405
      %v3408 = vshrl.u32 %v2609, 16
      %v3410 = vrot.slane %v3408, 3
      %v3411 = vshll.u32 %v2609, 16
      %v3413 = vrot.slane %v3411, 4
      %v3414 = vor.u32 %v3410, %v3413
      %v3415 = vsel %vm1785, %v3333, %v3414
      %v3417 = vshrl.u32 %v1310, 16
      %v3419 = vrot.slane %v3417, 3
      %v3420 = vshll.u32 %v1310, 16
      %v3422 = vrot.slane %v3420, 4
      %v3423 = vor.u32 %v3419, %v3422
      %v3424 = vsel %vm1785, %v3342, %v3423
      %v3426 = vshrl.u32 %v2145, 16
      %v3428 = vrot.slane %v3426, 3
      %v3429 = vshll.u32 %v2145, 16
      %v3431 = vrot.slane %v3429, 4
      %v3432 = vor.u32 %v3428, %v3431
      %v3433 = vsel %vm1785, %v3351, %v3432
      %v3435 = vshrl.u32 %v2241, 16
      %v3437 = vrot.slane %v3435, 3
      %v3438 = vshll.u32 %v2241, 16
      %v3440 = vrot.slane %v3438, 4
      %v3441 = vor.u32 %v3437, %v3440
      %v3442 = vsel %vm1785, %v3360, %v3441
      %v3444 = vshrl.u32 %v1988, 16
      %v3446 = vrot.slane %v3444, 3
      %v3447 = vshll.u32 %v1988, 16
      %v3449 = vrot.slane %v3447, 4
      %v3450 = vor.u32 %v3446, %v3449
      %v3451 = vsel %vm1785, %v3369, %v3450
      %v3453 = vshrl.u32 %v2331, 16
      %v3455 = vrot.slane %v3453, 3
      %v3456 = vshll.u32 %v2331, 16
      %v3458 = vrot.slane %v3456, 4
      %v3459 = vor.u32 %v3455, %v3458
      %v3460 = vsel %vm1785, %v3378, %v3459
      %v3462 = vshrl.u32 %v2426, 16
      %v3464 = vrot.slane %v3462, 3
      %v3465 = vshll.u32 %v2426, 16
      %v3467 = vrot.slane %v3465, 4
      %v3468 = vor.u32 %v3464, %v3467
      %v3469 = vsel %vm1785, %v3387, %v3468
      %v3471 = vshrl.u32 %v2041, 16
      %v3473 = vrot.slane %v3471, 3
      %v3474 = vshll.u32 %v2041, 16
      %v3476 = vrot.slane %v3474, 4
      %v3477 = vor.u32 %v3473, %v3476
      %v3478 = vsel %vm1785, %v3396, %v3477
      %v3480 = vshrl.u32 %v2516, 16
      %v3482 = vrot.slane %v3480, 3
      %v3483 = vshll.u32 %v2516, 16
      %v3485 = vrot.slane %v3483, 4
      %v3486 = vor.u32 %v3482, %v3485
      %v3487 = vsel %vm1785, %v3405, %v3486
      %v3489 = vshrl.u32 %v2611, 16
      %v3491 = vrot.slane %v3489, 3
      %v3492 = vshll.u32 %v2611, 16
      %v3494 = vrot.slane %v3492, 4
      %v3495 = vor.u32 %v3491, %v3494
      %v3496 = vsel %vm1785, %v3414, %v3495
      %v3498 = vshrl.u32 %v1311, 16
      %v3500 = vrot.slane %v3498, 3
      %v3501 = vshll.u32 %v1311, 16
      %v3503 = vrot.slane %v3501, 4
      %v3504 = vor.u32 %v3500, %v3503
      %v3505 = vsel %vm1785, %v3423, %v3504
      %v3507 = vshrl.u32 %v2153, 16
      %v3509 = vrot.slane %v3507, 3
      %v3510 = vshll.u32 %v2153, 16
      %v3512 = vrot.slane %v3510, 4
      %v3513 = vor.u32 %v3509, %v3512
      %v3514 = vsel %vm1785, %v3432, %v3513
      %v3516 = vshrl.u32 %v2243, 16
      %v3518 = vrot.slane %v3516, 3
      %v3519 = vshll.u32 %v2243, 16
      %v3521 = vrot.slane %v3519, 4
      %v3522 = vor.u32 %v3518, %v3521
      %v3523 = vsel %vm1785, %v3441, %v3522
      %v3525 = vshrl.u32 %v1989, 16
      %v3527 = vrot.slane %v3525, 3
      %v3528 = vshll.u32 %v1989, 16
      %v3530 = vrot.slane %v3528, 4
      %v3531 = vor.u32 %v3527, %v3530
      %v3532 = vsel %vm1785, %v3450, %v3531
      %v3534 = vshrl.u32 %v2339, 16
      %v3536 = vrot.slane %v3534, 3
      %v3537 = vshll.u32 %v2339, 16
      %v3539 = vrot.slane %v3537, 4
      %v3540 = vor.u32 %v3536, %v3539
      %v3541 = vsel %vm1785, %v3459, %v3540
      %v3543 = vshrl.u32 %v2428, 16
      %v3545 = vrot.slane %v3543, 3
      %v3546 = vshll.u32 %v2428, 16
      %v3548 = vrot.slane %v3546, 4
      %v3549 = vor.u32 %v3545, %v3548
      %v3550 = vsel %vm1785, %v3468, %v3549
      %v3552 = vshrl.u32 %v2042, 16
      %v3554 = vrot.slane %v3552, 3
      %v3555 = vshll.u32 %v2042, 16
      %v3557 = vrot.slane %v3555, 4
      %v3558 = vor.u32 %v3554, %v3557
      %v3559 = vsel %vm1785, %v3477, %v3558
      %v3561 = vshrl.u32 %v2524, 16
      %v3563 = vrot.slane %v3561, 3
      %v3564 = vshll.u32 %v2524, 16
      %v3566 = vrot.slane %v3564, 4
      %v3567 = vor.u32 %v3563, %v3566
      %v3568 = vsel %vm1785, %v3486, %v3567
      %v3570 = vshrl.u32 %v2613, 16
      %v3572 = vrot.slane %v3570, 3
      %v3573 = vshll.u32 %v2613, 16
      %v3575 = vrot.slane %v3573, 4
      %v3576 = vor.u32 %v3572, %v3575
      %v3577 = vsel %vm1785, %v3495, %v3576
      %v3579 = vshrl.u32 %v1312, 16
      %v3581 = vrot.slane %v3579, 3
      %v3582 = vshll.u32 %v1312, 16
      %v3584 = vrot.slane %v3582, 4
      %v3585 = vor.u32 %v3581, %v3584
      %v3586 = vsel %vm1785, %v3504, %v3585
      %v3588 = vshrl.u32 %v2161, 16
      %v3590 = vrot.slane %v3588, 3
      %v3591 = vshll.u32 %v2161, 16
      %v3593 = vrot.slane %v3591, 4
      %v3594 = vor.u32 %v3590, %v3593
      %v3595 = vsel %vm1785, %v3513, %v3594
      %v3597 = vshrl.u32 %v2245, 16
      %v3599 = vrot.slane %v3597, 3
      %v3600 = vshll.u32 %v2245, 16
      %v3602 = vrot.slane %v3600, 4
      %v3603 = vor.u32 %v3599, %v3602
      %v3604 = vsel %vm1785, %v3522, %v3603
      %v3606 = vshrl.u32 %v1990, 16
      %v3608 = vrot.slane %v3606, 3
      %v3609 = vshll.u32 %v1990, 16
      %v3611 = vrot.slane %v3609, 4
      %v3612 = vor.u32 %v3608, %v3611
      %v3613 = vsel %vm1785, %v3531, %v3612
      %v3615 = vshrl.u32 %v2347, 16
      %v3617 = vrot.slane %v3615, 3
      %v3618 = vshll.u32 %v2347, 16
      %v3620 = vrot.slane %v3618, 4
      %v3621 = vor.u32 %v3617, %v3620
      %v3622 = vsel %vm1785, %v3540, %v3621
      %v3624 = vshrl.u32 %v2430, 16
      %v3626 = vrot.slane %v3624, 3
      %v3627 = vshll.u32 %v2430, 16
      %v3629 = vrot.slane %v3627, 4
      %v3630 = vor.u32 %v3626, %v3629
      %v3631 = vsel %vm1785, %v3549, %v3630
      %v3633 = vshrl.u32 %v2043, 16
      %v3635 = vrot.slane %v3633, 3
      %v3636 = vshll.u32 %v2043, 16
      %v3638 = vrot.slane %v3636, 4
      %v3639 = vor.u32 %v3635, %v3638
      %v3640 = vsel %vm1785, %v3558, %v3639
      %v3642 = vshrl.u32 %v2532, 16
      %v3644 = vrot.slane %v3642, 3
      %v3645 = vshll.u32 %v2532, 16
      %v3647 = vrot.slane %v3645, 4
      %v3648 = vor.u32 %v3644, %v3647
      %v3649 = vsel %vm1785, %v3567, %v3648
      %v3651 = vshrl.u32 %v2615, 16
      %v3653 = vrot.slane %v3651, 3
      %v3654 = vshll.u32 %v2615, 16
      %v3656 = vrot.slane %v3654, 4
      %v3657 = vor.u32 %v3653, %v3656
      %v3658 = vsel %vm1785, %v3576, %v3657
      %v3660 = vshrl.u32 %v1313, 16
      %v3662 = vrot.slane %v3660, 3
      %v3663 = vshll.u32 %v1313, 16
      %v3665 = vrot.slane %v3663, 4
      %v3666 = vor.u32 %v3662, %v3665
      %v3667 = vsel %vm1785, %v3585, %v3666
      %v3669 = vshrl.u32 %v2169, 16
      %v3671 = vrot.slane %v3669, 3
      %v3672 = vshll.u32 %v2169, 16
      %v3674 = vrot.slane %v3672, 4
      %v3675 = vor.u32 %v3671, %v3674
      %v3676 = vsel %vm1785, %v3594, %v3675
      %v3678 = vshrl.u32 %v2247, 16
      %v3680 = vrot.slane %v3678, 3
      %v3681 = vshll.u32 %v2247, 16
      %v3683 = vrot.slane %v3681, 4
      %v3684 = vor.u32 %v3680, %v3683
      %v3685 = vsel %vm1785, %v3603, %v3684
      %v3687 = vshrl.u32 %v1991, 16
      %v3689 = vrot.slane %v3687, 3
      %v3690 = vshll.u32 %v1991, 16
      %v3692 = vrot.slane %v3690, 4
      %v3693 = vor.u32 %v3689, %v3692
      %v3694 = vsel %vm1785, %v3612, %v3693
      %v3696 = vshrl.u32 %v2355, 16
      %v3698 = vrot.slane %v3696, 3
      %v3699 = vshll.u32 %v2355, 16
      %v3701 = vrot.slane %v3699, 4
      %v3702 = vor.u32 %v3698, %v3701
      %v3703 = vsel %vm1785, %v3621, %v3702
      %v3705 = vshrl.u32 %v2432, 16
      %v3707 = vrot.slane %v3705, 3
      %v3708 = vshll.u32 %v2432, 16
      %v3710 = vrot.slane %v3708, 4
      %v3711 = vor.u32 %v3707, %v3710
      %v3712 = vsel %vm1785, %v3630, %v3711
      %v3714 = vshrl.u32 %v2044, 16
      %v3716 = vrot.slane %v3714, 3
      %v3717 = vshll.u32 %v2044, 16
      %v3719 = vrot.slane %v3717, 4
      %v3720 = vor.u32 %v3716, %v3719
      %v3721 = vsel %vm1785, %v3639, %v3720
      %v3723 = vshrl.u32 %v2540, 16
      %v3725 = vrot.slane %v3723, 3
      %v3726 = vshll.u32 %v2540, 16
      %v3728 = vrot.slane %v3726, 4
      %v3729 = vor.u32 %v3725, %v3728
      %v3730 = vsel %vm1785, %v3648, %v3729
      %v3732 = vshrl.u32 %v2617, 16
      %v3734 = vrot.slane %v3732, 3
      %v3735 = vshll.u32 %v2617, 16
      %v3737 = vrot.slane %v3735, 4
      %v3738 = vor.u32 %v3734, %v3737
      %v3739 = vsel %vm1785, %v3657, %v3738
      %v3741 = vshrl.u32 %v1314, 16
      %v3743 = vrot.slane %v3741, 3
      %v3744 = vshll.u32 %v1314, 16
      %v3746 = vrot.slane %v3744, 4
      %v3747 = vor.u32 %v3743, %v3746
      %v3748 = vsel %vm1785, %v3666, %v3747
      %v3750 = vshrl.u32 %v2177, 16
      %v3752 = vrot.slane %v3750, 3
      %v3753 = vshll.u32 %v2177, 16
      %v3755 = vrot.slane %v3753, 4
      %v3756 = vor.u32 %v3752, %v3755
      %v3757 = vsel %vm1785, %v3675, %v3756
      %v3759 = vshrl.u32 %v2249, 16
      %v3761 = vrot.slane %v3759, 3
      %v3762 = vshll.u32 %v2249, 16
      %v3764 = vrot.slane %v3762, 4
      %v3765 = vor.u32 %v3761, %v3764
      %v3766 = vsel %vm1785, %v3684, %v3765
      %v3768 = vshrl.u32 %v1992, 16
      %v3770 = vrot.slane %v3768, 3
      %v3771 = vshll.u32 %v1992, 16
      %v3773 = vrot.slane %v3771, 4
      %v3774 = vor.u32 %v3770, %v3773
      %v3775 = vsel %vm1785, %v3693, %v3774
      %v3777 = vshrl.u32 %v2363, 16
      %v3779 = vrot.slane %v3777, 3
      %v3780 = vshll.u32 %v2363, 16
      %v3782 = vrot.slane %v3780, 4
      %v3783 = vor.u32 %v3779, %v3782
      %v3784 = vsel %vm1785, %v3702, %v3783
      %v3786 = vshrl.u32 %v2434, 16
      %v3788 = vrot.slane %v3786, 3
      %v3789 = vshll.u32 %v2434, 16
      %v3791 = vrot.slane %v3789, 4
      %v3792 = vor.u32 %v3788, %v3791
      %v3793 = vsel %vm1785, %v3711, %v3792
      %v3795 = vshrl.u32 %v2045, 16
      %v3797 = vrot.slane %v3795, 3
      %v3798 = vshll.u32 %v2045, 16
      %v3800 = vrot.slane %v3798, 4
      %v3801 = vor.u32 %v3797, %v3800
      %v3802 = vsel %vm1785, %v3720, %v3801
      %v3804 = vshrl.u32 %v2548, 16
      %v3806 = vrot.slane %v3804, 3
      %v3807 = vshll.u32 %v2548, 16
      %v3809 = vrot.slane %v3807, 4
      %v3810 = vor.u32 %v3806, %v3809
      %v3811 = vsel %vm1785, %v3729, %v3810
      %v3813 = vshrl.u32 %v2619, 16
      %v3815 = vrot.slane %v3813, 3
      %v3816 = vshll.u32 %v2619, 16
      %v3818 = vrot.slane %v3816, 4
      %v3819 = vor.u32 %v3815, %v3818
      %v3820 = vsel %vm1785, %v3738, %v3819
      %v3822 = vshrl.u32 %v1315, 16
      %v3824 = vrot.slane %v3822, 3
      %v3825 = vshll.u32 %v1315, 16
      %v3827 = vrot.slane %v3825, 4
      %v3828 = vor.u32 %v3824, %v3827
      %v3829 = vsel %vm1785, %v3747, %v3828
      %v3831 = vshrl.u32 %v2185, 16
      %v3833 = vrot.slane %v3831, 3
      %v3834 = vshll.u32 %v2185, 16
      %v3836 = vrot.slane %v3834, 4
      %v3837 = vor.u32 %v3833, %v3836
      %v3838 = vsel %vm1785, %v3756, %v3837
      %v3840 = vshrl.u32 %v2251, 16
      %v3842 = vrot.slane %v3840, 3
      %v3843 = vshll.u32 %v2251, 16
      %v3845 = vrot.slane %v3843, 4
      %v3846 = vor.u32 %v3842, %v3845
      %v3847 = vsel %vm1785, %v3765, %v3846
      %v3849 = vshrl.u32 %v1993, 16
      %v3851 = vrot.slane %v3849, 3
      %v3852 = vshll.u32 %v1993, 16
      %v3854 = vrot.slane %v3852, 4
      %v3855 = vor.u32 %v3851, %v3854
      %v3856 = vsel %vm1785, %v3774, %v3855
      %v3858 = vshrl.u32 %v2371, 16
      %v3860 = vrot.slane %v3858, 3
      %v3861 = vshll.u32 %v2371, 16
      %v3863 = vrot.slane %v3861, 4
      %v3864 = vor.u32 %v3860, %v3863
      %v3865 = vsel %vm1785, %v3783, %v3864
      %v3867 = vshrl.u32 %v2436, 16
      %v3869 = vrot.slane %v3867, 3
      %v3870 = vshll.u32 %v2436, 16
      %v3872 = vrot.slane %v3870, 4
      %v3873 = vor.u32 %v3869, %v3872
      %v3874 = vsel %vm1785, %v3792, %v3873
      %v3876 = vshrl.u32 %v2046, 16
      %v3878 = vrot.slane %v3876, 3
      %v3879 = vshll.u32 %v2046, 16
      %v3881 = vrot.slane %v3879, 4
      %v3882 = vor.u32 %v3878, %v3881
      %v3883 = vsel %vm1785, %v3801, %v3882
      %v3885 = vshrl.u32 %v2556, 16
      %v3887 = vrot.slane %v3885, 3
      %v3888 = vshll.u32 %v2556, 16
      %v3890 = vrot.slane %v3888, 4
      %v3891 = vor.u32 %v3887, %v3890
      %v3892 = vsel %vm1785, %v3810, %v3891
      %v3894 = vshrl.u32 %v2621, 16
      %v3896 = vrot.slane %v3894, 3
      %v3897 = vshll.u32 %v2621, 16
      %v3899 = vrot.slane %v3897, 4
      %v3900 = vor.u32 %v3896, %v3899
      %v3901 = vsel %vm1785, %v3819, %v3900
      %v3903 = vshrl.u32 %v1316, 16
      %v3905 = vrot.slane %v3903, 3
      %v3906 = vshll.u32 %v1316, 16
      %v3908 = vrot.slane %v3906, 4
      %v3909 = vor.u32 %v3905, %v3908
      %v3910 = vsel %vm1785, %v3828, %v3909
      %v3912 = vshrl.u32 %v2193, 16
      %v3914 = vrot.slane %v3912, 3
      %v3915 = vshll.u32 %v2193, 16
      %v3917 = vrot.slane %v3915, 4
      %v3918 = vor.u32 %v3914, %v3917
      %v3919 = vsel %vm1785, %v3837, %v3918
      %v3921 = vshrl.u32 %v2253, 16
      %v3923 = vrot.slane %v3921, 3
      %v3924 = vshll.u32 %v2253, 16
      %v3926 = vrot.slane %v3924, 4
      %v3927 = vor.u32 %v3923, %v3926
      %v3928 = vsel %vm1785, %v3846, %v3927
      %v3930 = vshrl.u32 %v1994, 16
      %v3932 = vrot.slane %v3930, 3
      %v3933 = vshll.u32 %v1994, 16
      %v3935 = vrot.slane %v3933, 4
      %v3936 = vor.u32 %v3932, %v3935
      %v3937 = vsel %vm1785, %v3855, %v3936
      %v3939 = vshrl.u32 %v2379, 16
      %v3941 = vrot.slane %v3939, 3
      %v3942 = vshll.u32 %v2379, 16
      %v3944 = vrot.slane %v3942, 4
      %v3945 = vor.u32 %v3941, %v3944
      %v3946 = vsel %vm1785, %v3864, %v3945
      %v3948 = vshrl.u32 %v2438, 16
      %v3950 = vrot.slane %v3948, 3
      %v3951 = vshll.u32 %v2438, 16
      %v3953 = vrot.slane %v3951, 4
      %v3954 = vor.u32 %v3950, %v3953
      %v3955 = vsel %vm1785, %v3873, %v3954
      %v3957 = vshrl.u32 %v2047, 16
      %v3959 = vrot.slane %v3957, 3
      %v3960 = vshll.u32 %v2047, 16
      %v3962 = vrot.slane %v3960, 4
      %v3963 = vor.u32 %v3959, %v3962
      %v3964 = vsel %vm1785, %v3882, %v3963
      %v3966 = vshrl.u32 %v2564, 16
      %v3968 = vrot.slane %v3966, 3
      %v3969 = vshll.u32 %v2564, 16
      %v3971 = vrot.slane %v3969, 4
      %v3972 = vor.u32 %v3968, %v3971
      %v3973 = vsel %vm1785, %v3891, %v3972
      %v3975 = vshrl.u32 %v2623, 16
      %v3977 = vrot.slane %v3975, 3
      %v3978 = vshll.u32 %v2623, 16
      %v3980 = vrot.slane %v3978, 4
      %v3981 = vor.u32 %v3977, %v3980
      %v3982 = vsel %vm1785, %v3900, %v3981
      %v3984 = vshrl.u32 %v1317, 16
      %v3986 = vrot.slane %v3984, 3
      %v3987 = vshll.u32 %v1317, 16
      %v3989 = vrot.slane %v3987, 4
      %v3990 = vor.u32 %v3986, %v3989
      %v3991 = vsel %vm1785, %v3909, %v3990
      %v3993 = vshrl.u32 %v2201, 16
      %v3995 = vrot.slane %v3993, 3
      %v3996 = vshll.u32 %v2201, 16
      %v3998 = vrot.slane %v3996, 4
      %v3999 = vor.u32 %v3995, %v3998
      %v4000 = vsel %vm1785, %v3918, %v3999
      %v4002 = vshrl.u32 %v2255, 16
      %v4004 = vrot.slane %v4002, 3
      %v4005 = vshll.u32 %v2255, 16
      %v4007 = vrot.slane %v4005, 4
      %v4008 = vor.u32 %v4004, %v4007
      %v4009 = vsel %vm1785, %v3927, %v4008
      %v4011 = vshrl.u32 %v1995, 16
      %v4013 = vrot.slane %v4011, 3
      %v4014 = vshll.u32 %v1995, 16
      %v4016 = vrot.slane %v4014, 4
      %v4017 = vor.u32 %v4013, %v4016
      %v4018 = vsel %vm1785, %v3936, %v4017
      %v4020 = vshrl.u32 %v2387, 16
      %v4022 = vrot.slane %v4020, 3
      %v4023 = vshll.u32 %v2387, 16
      %v4025 = vrot.slane %v4023, 4
      %v4026 = vor.u32 %v4022, %v4025
      %v4027 = vsel %vm1785, %v3945, %v4026
      %v4029 = vshrl.u32 %v2440, 16
      %v4031 = vrot.slane %v4029, 3
      %v4032 = vshll.u32 %v2440, 16
      %v4034 = vrot.slane %v4032, 4
      %v4035 = vor.u32 %v4031, %v4034
      %v4036 = vsel %vm1785, %v3954, %v4035
      %v4038 = vshrl.u32 %v2048, 16
      %v4040 = vrot.slane %v4038, 3
      %v4041 = vshll.u32 %v2048, 16
      %v4043 = vrot.slane %v4041, 4
      %v4044 = vor.u32 %v4040, %v4043
      %v4045 = vsel %vm1785, %v3963, %v4044
      %v4047 = vshrl.u32 %v2572, 16
      %v4049 = vrot.slane %v4047, 3
      %v4050 = vshll.u32 %v2572, 16
      %v4052 = vrot.slane %v4050, 4
      %v4053 = vor.u32 %v4049, %v4052
      %v4054 = vsel %vm1785, %v3972, %v4053
      %v4056 = vshrl.u32 %v2625, 16
      %v4058 = vrot.slane %v4056, 3
      %v4059 = vshll.u32 %v2625, 16
      %v4061 = vrot.slane %v4059, 4
      %v4062 = vor.u32 %v4058, %v4061
      %v4063 = vsel %vm1785, %v3981, %v4062
      %v4065 = vshrl.u32 %v1318, 16
      %v4067 = vrot.slane %v4065, 3
      %v4068 = vshll.u32 %v1318, 16
      %v4070 = vrot.slane %v4068, 4
      %v4071 = vor.u32 %v4067, %v4070
      %v4072 = vsel %vm1785, %v3990, %v4071
      %v4074 = vshrl.u32 %v2204, 16
      %v4076 = vrot.slane %v4074, 3
      %v4077 = vshll.u32 %v2204, 16
      %v4079 = vrot.slane %v4077, 4
      %v4080 = vor.u32 %v4076, %v4079
      %v4081 = vsel %vm1785, %v3999, %v4080
      %v4083 = vshrl.u32 %v2254, 16
      %v4085 = vrot.slane %v4083, 3
      %v4086 = vshll.u32 %v2254, 16
      %v4088 = vrot.slane %v4086, 4
      %v4089 = vor.u32 %v4085, %v4088
      %v4090 = vsel %vm1785, %v4008, %v4089
      %v4092 = vshrl.u32 %v1996, 16
      %v4094 = vrot.slane %v4092, 3
      %v4095 = vshll.u32 %v1996, 16
      %v4097 = vrot.slane %v4095, 4
      %v4098 = vor.u32 %v4094, %v4097
      %v4099 = vsel %vm1785, %v4017, %v4098
      %v4101 = vshrl.u32 %v2390, 16
      %v4103 = vrot.slane %v4101, 3
      %v4104 = vshll.u32 %v2390, 16
      %v4106 = vrot.slane %v4104, 4
      %v4107 = vor.u32 %v4103, %v4106
      %v4108 = vsel %vm1785, %v4026, %v4107
      %v4110 = vshrl.u32 %v2439, 16
      %v4112 = vrot.slane %v4110, 3
      %v4113 = vshll.u32 %v2439, 16
      %v4115 = vrot.slane %v4113, 4
      %v4116 = vor.u32 %v4112, %v4115
      %v4117 = vsel %vm1785, %v4035, %v4116
      %v4119 = vshrl.u32 %v2049, 16
      %v4121 = vrot.slane %v4119, 3
      %v4122 = vshll.u32 %v2049, 16
      %v4124 = vrot.slane %v4122, 4
      %v4125 = vor.u32 %v4121, %v4124
      %v4126 = vsel %vm1785, %v4044, %v4125
      %v4128 = vshrl.u32 %v2575, 16
      %v4130 = vrot.slane %v4128, 3
      %v4131 = vshll.u32 %v2575, 16
      %v4133 = vrot.slane %v4131, 4
      %v4134 = vor.u32 %v4130, %v4133
      %v4135 = vsel %vm1785, %v4053, %v4134
      %v4137 = vshrl.u32 %v2624, 16
      %v4139 = vrot.slane %v4137, 3
      %v4140 = vshll.u32 %v2624, 16
      %v4142 = vrot.slane %v4140, 4
      %v4143 = vor.u32 %v4139, %v4142
      %v4144 = vsel %vm1785, %v4062, %v4143
      %v4433 = vunpack.c.l.b16 %v2626
      %v4434 = vunpack.c.l.b16 %v2627
      %v4435 = vunpack.c.l.b16 %v2628
      %v4436 = vunpack.c.l.b16 %v2629
      %v4437 = vunpack.c.l.b16 %v2630
      %v4438 = vunpack.c.l.b16 %v2631
      %v4439 = vunpack.c.l.b16 %v2632
      %v4440 = vunpack.c.l.b16 %v2633
      %v4441 = vunpack.c.l.b16 %v2634
      %v4442 = vunpack.c.l.b16 %v2635
      %v4443 = vunpack.c.l.b16 %v2636
      %v4444 = vunpack.c.l.b16 %v2637
      %v4445 = vunpack.c.l.b16 %v2638
      %v4446 = vunpack.c.l.b16 %v2639
      %v4447 = vunpack.c.l.b16 %v2640
      %v4448 = vunpack.c.l.b16 %v2641
      %v4449 = vunpack.c.l.b16 %v2642
      %v4450 = vunpack.c.l.b16 %v2643
      %v4451 = vunpack.c.l.b16 %v2644
      %v4452 = vunpack.c.l.b16 %v2645
      %v4453 = vunpack.c.l.b16 %v2646
      %v4454 = vunpack.c.l.b16 %v2647
      %v4455 = vunpack.c.l.b16 %v2648
      %v4456 = vunpack.c.l.b16 %v2649
      %v4457 = vunpack.c.l.b16 %v2650
      %v4458 = vunpack.c.l.b16 %v2651
      %v4459 = vunpack.c.l.b16 %v2652
      %v4460 = vunpack.c.l.b16 %v2653
      %v4461 = vunpack.c.l.b16 %v2654
      %v4462 = vunpack.c.l.b16 %v2655
      %v4463 = vunpack.c.l.b16 %v2656
      %v4464 = vunpack.c.l.b16 %v2657
      %v4465 = vunpack.c.l.b16 %v2658
      %v4466 = vunpack.c.l.b16 %v2659
      %v4467 = vunpack.c.l.b16 %v2660
      %v4468 = vunpack.c.l.b16 %v2661
      %v4469 = vunpack.c.l.b16 %v2662
      %v4470 = vunpack.c.l.b16 %v2663
      %v4471 = vunpack.c.l.b16 %v2664
      %v4472 = vunpack.c.l.b16 %v2665
      %v4473 = vunpack.c.l.b16 %v2666
      %v4474 = vunpack.c.l.b16 %v2667
      %v4475 = vunpack.c.l.b16 %v2668
      %v4476 = vunpack.c.l.b16 %v2669
      %v4477 = vunpack.c.l.b16 %v2670
      %v4478 = vunpack.c.l.b16 %v2671
      %v4479 = vunpack.c.l.b16 %v2672
      %v4480 = vunpack.c.l.b16 %v2673
      %v4481 = vunpack.c.l.b16 %v2674
      %v4482 = vunpack.c.l.b16 %v2675
      %v4483 = vunpack.c.l.b16 %v2676
      %v4484 = vunpack.c.l.b16 %v2677
      %v4485 = vunpack.c.l.b16 %v2678
      %v4486 = vunpack.c.l.b16 %v2679
      %v4487 = vunpack.c.l.b16 %v2680
      %v4488 = vunpack.c.l.b16 %v2681
      %v4489 = vunpack.c.l.b16 %v2682
      %v4490 = vunpack.c.l.b16 %v2683
      %v4491 = vunpack.c.l.b16 %v2684
      %v4492 = vunpack.c.l.b16 %v2685
      %v4493 = vunpack.c.l.b16 %v2686
      %v4494 = vunpack.c.l.b16 %v2687
      %v4495 = vunpack.c.l.b16 %v2688
      %v4496 = vunpack.c.l.b16 %v2689
      %v4497 = vunpack.c.l.b16 %v2690
      %v4498 = vunpack.c.l.b16 %v2691
      %v4499 = vunpack.c.l.b16 %v2692
      %v4500 = vunpack.c.l.b16 %v2693
      %v4501 = vunpack.c.l.b16 %v2694
      %v4502 = vunpack.c.l.b16 %v2695
      %v4503 = vunpack.c.l.b16 %v2696
      %v4504 = vunpack.c.l.b16 %v2697
      %v4505 = vunpack.c.l.b16 %v2698
      %v4506 = vunpack.c.l.b16 %v2699
      %v4507 = vunpack.c.l.b16 %v2700
      %v4508 = vunpack.c.l.b16 %v2701
      %v4509 = vunpack.c.l.b16 %v2702
      %v4510 = vunpack.c.l.b16 %v2703
      %v4511 = vunpack.c.l.b16 %v2704
      %v4512 = vunpack.c.l.b16 %v2705
      %v4513 = vunpack.c.l.b16 %v2706
      %v4514 = vunpack.c.l.b16 %v2707
      %v4515 = vunpack.c.l.b16 %v2708
      %v4516 = vunpack.c.l.b16 %v2709
      %v4517 = vunpack.c.l.b16 %v2710
      %v4518 = vunpack.c.l.b16 %v2711
      %v4519 = vunpack.c.l.b16 %v2712
      %v4520 = vunpack.c.l.b16 %v2713
      %v4521 = vunpack.c.l.b16 %v2714
      %v4522 = vunpack.c.l.b16 %v2715
      %v4523 = vunpack.c.l.b16 %v2716
      %v4524 = vunpack.c.l.b16 %v2717
      %v4525 = vunpack.c.l.b16 %v2718
      %v4526 = vunpack.c.l.b16 %v2719
      %v4527 = vunpack.c.l.b16 %v2720
      %v4528 = vunpack.c.l.b16 %v2721
      %v4529 = vunpack.c.l.b16 %v2722
      %v4530 = vunpack.c.l.b16 %v2723
      %v4531 = vunpack.c.l.b16 %v2724
      %v4532 = vunpack.c.l.b16 %v2725
      %v4533 = vunpack.c.l.b16 %v2726
      %v4534 = vunpack.c.l.b16 %v2727
      %v4535 = vunpack.c.l.b16 %v2728
      %v4536 = vunpack.c.l.b16 %v2729
      %v4537 = vunpack.c.l.b16 %v2730
      %v4538 = vunpack.c.l.b16 %v2731
      %v4539 = vunpack.c.l.b16 %v2732
      %v4540 = vunpack.c.l.b16 %v2733
      %v4541 = vunpack.c.l.b16 %v2734
      %v4542 = vunpack.c.l.b16 %v2735
      %v4543 = vunpack.c.l.b16 %v2736
      %v4544 = vunpack.c.l.b16 %v2737
      %v4545 = vunpack.c.l.b16 %v2738
      %v4546 = vunpack.c.l.b16 %v2739
      %v4547 = vunpack.c.l.b16 %v2740
      %v4548 = vunpack.c.l.b16 %v2741
      %v4549 = vunpack.c.l.b16 %v2742
      %v4550 = vunpack.c.l.b16 %v2743
      %v4551 = vunpack.c.l.b16 %v2744
      %v4552 = vunpack.c.l.b16 %v2745
      %v4553 = vunpack.c.l.b16 %v2746
      %v4554 = vunpack.c.l.b16 %v2747
      %v4555 = vunpack.c.l.b16 %v2748
      %v4556 = vunpack.c.l.b16 %v2749
      %v4557 = vunpack.c.l.b16 %v2750
      %v4558 = vunpack.c.l.b16 %v2751
      %v4559 = vunpack.c.l.b16 %v2752
      %v4560 = vunpack.c.l.b16 %v2753
      %v4561 = vunpack.c.l.b16 %v2754
      %v4562 = vunpack.c.l.b16 %v2755
      %v4563 = vunpack.c.l.b16 %v2756
      %v4564 = vunpack.c.l.b16 %v2757
      %v4565 = vunpack.c.l.b16 %v2758
      %v4566 = vunpack.c.l.b16 %v2759
      %v4567 = vunpack.c.l.b16 %v2760
      %v4568 = vunpack.c.l.b16 %v2761
      %v4569 = vunpack.c.l.b16 %v2762
      %v4570 = vunpack.c.l.b16 %v2763
      %v4571 = vunpack.c.l.b16 %v2764
      %v4572 = vunpack.c.l.b16 %v2765
      %v4573 = vunpack.c.l.b16 %v2766
      %v4574 = vunpack.c.l.b16 %v2767
      %v4575 = vunpack.c.l.b16 %v2768
      %v4576 = vunpack.c.l.b16 %v2769
      %v4577 = vpack.c.b16 %v4434, %v4433
      %v4578 = vpack.c.b16 %v4436, %v4435
      %v4579 = vpack.c.b16 %v4438, %v4437
      %v4580 = vpack.c.b16 %v4440, %v4439
      %v4581 = vpack.c.b16 %v4442, %v4441
      %v4582 = vpack.c.b16 %v4444, %v4443
      %v4583 = vpack.c.b16 %v4446, %v4445
      %v4584 = vpack.c.b16 %v4448, %v4447
      %v4585 = vpack.c.b16 %v4450, %v4449
      %v4586 = vpack.c.b16 %v4452, %v4451
      %v4587 = vpack.c.b16 %v4454, %v4453
      %v4588 = vpack.c.b16 %v4456, %v4455
      %v4589 = vpack.c.b16 %v4458, %v4457
      %v4590 = vpack.c.b16 %v4460, %v4459
      %v4591 = vpack.c.b16 %v4462, %v4461
      %v4592 = vpack.c.b16 %v4464, %v4463
      %v4593 = vpack.c.b16 %v4466, %v4465
      %v4594 = vpack.c.b16 %v4468, %v4467
      %v4595 = vpack.c.b16 %v4470, %v4469
      %v4596 = vpack.c.b16 %v4472, %v4471
      %v4597 = vpack.c.b16 %v4474, %v4473
      %v4598 = vpack.c.b16 %v4476, %v4475
      %v4599 = vpack.c.b16 %v4478, %v4477
      %v4600 = vpack.c.b16 %v4480, %v4479
      %v4601 = vpack.c.b16 %v4482, %v4481
      %v4602 = vpack.c.b16 %v4484, %v4483
      %v4603 = vpack.c.b16 %v4486, %v4485
      %v4604 = vpack.c.b16 %v4488, %v4487
      %v4605 = vpack.c.b16 %v4490, %v4489
      %v4606 = vpack.c.b16 %v4492, %v4491
      %v4607 = vpack.c.b16 %v4494, %v4493
      %v4608 = vpack.c.b16 %v4496, %v4495
      %v4609 = vpack.c.b16 %v4498, %v4497
      %v4610 = vpack.c.b16 %v4500, %v4499
      %v4611 = vpack.c.b16 %v4502, %v4501
      %v4612 = vpack.c.b16 %v4504, %v4503
      %v4613 = vpack.c.b16 %v4506, %v4505
      %v4614 = vpack.c.b16 %v4508, %v4507
      %v4615 = vpack.c.b16 %v4510, %v4509
      %v4616 = vpack.c.b16 %v4512, %v4511
      %v4617 = vpack.c.b16 %v4514, %v4513
      %v4618 = vpack.c.b16 %v4516, %v4515
      %v4619 = vpack.c.b16 %v4518, %v4517
      %v4620 = vpack.c.b16 %v4520, %v4519
      %v4621 = vpack.c.b16 %v4522, %v4521
      %v4622 = vpack.c.b16 %v4524, %v4523
      %v4623 = vpack.c.b16 %v4526, %v4525
      %v4624 = vpack.c.b16 %v4528, %v4527
      %v4625 = vpack.c.b16 %v4530, %v4529
      %v4626 = vpack.c.b16 %v4532, %v4531
      %v4627 = vpack.c.b16 %v4534, %v4533
      %v4628 = vpack.c.b16 %v4536, %v4535
      %v4629 = vpack.c.b16 %v4538, %v4537
      %v4630 = vpack.c.b16 %v4540, %v4539
      %v4631 = vpack.c.b16 %v4542, %v4541
      %v4632 = vpack.c.b16 %v4544, %v4543
      %v4633 = vpack.c.b16 %v4546, %v4545
      %v4634 = vpack.c.b16 %v4548, %v4547
      %v4635 = vpack.c.b16 %v4550, %v4549
      %v4636 = vpack.c.b16 %v4552, %v4551
      %v4637 = vpack.c.b16 %v4554, %v4553
      %v4638 = vpack.c.b16 %v4556, %v4555
      %v4639 = vpack.c.b16 %v4558, %v4557
      %v4640 = vpack.c.b16 %v4560, %v4559
      %v4641 = vpack.c.b16 %v4562, %v4561
      %v4642 = vpack.c.b16 %v4564, %v4563
      %v4643 = vpack.c.b16 %v4566, %v4565
      %v4644 = vpack.c.b16 %v4568, %v4567
      %v4645 = vpack.c.b16 %v4570, %v4569
      %v4646 = vpack.c.b16 %v4572, %v4571
      %v4647 = vpack.c.b16 %v4574, %v4573
      %v4648 = vpack.c.b16 %v4576, %v4575
      %4721 = vmatprep.subr.bf16.mxu0 0
      %4722 = vmatpush1.bf16.msra.mxu0 %v4577
      %4723 = vmatprep.subr.bf16.mxu0 0
      %4724 = vmatpush1.bf16.msra.mxu0 %v4578
      %4725 = vmatprep.subr.bf16.mxu0 0
      %4726 = vmatpush1.bf16.msra.mxu0 %v4579
      %4727 = vmatprep.subr.bf16.mxu0 0
      %4728 = vmatpush1.bf16.msra.mxu0 %v4580
      %4729 = vmatprep.subr.bf16.mxu0 0
      %4730 = vmatpush1.bf16.msra.mxu0 %v4581
      %4731 = vmatprep.subr.bf16.mxu0 0
      %4732 = vmatpush1.bf16.msra.mxu0 %v4582
      %4733 = vmatprep.subr.bf16.mxu0 0
      %4734 = vmatpush1.bf16.msra.mxu0 %v4583
      %4735 = vmatprep.subr.bf16.mxu0 0
      %4736 = vmatpush1.bf16.msra.mxu0 %v4584
      %4737 = vmatprep.subr.bf16.mxu0 0
      %4738 = vmatpush1.bf16.msra.mxu0 %v4585
      %4739 = vmatprep.subr.bf16.mxu0 0
      %4740 = vmatpush1.bf16.msra.mxu0 %v4586
      %4741 = vmatprep.subr.bf16.mxu0 0
      %4742 = vmatpush1.bf16.msra.mxu0 %v4587
      %4743 = vmatprep.subr.bf16.mxu0 0
      %4744 = vmatpush1.bf16.msra.mxu0 %v4588
      %4745 = vmatprep.subr.bf16.mxu0 0
      %4746 = vmatpush1.bf16.msra.mxu0 %v4589
      %4747 = vmatprep.subr.bf16.mxu0 0
      %4748 = vmatpush1.bf16.msra.mxu0 %v4590
      %4749 = vmatprep.subr.bf16.mxu0 0
      %4750 = vmatpush1.bf16.msra.mxu0 %v4591
      %4751 = vmatprep.subr.bf16.mxu0 0
      %4752 = vmatpush1.bf16.msra.mxu0 %v4592
      %4753 = vmatprep.mubr.bf16.mxu0 %v2810
      %4754 = vmatmul.mubr.bf16.gmra.mrb[0].mxu0 %v2793
      %v4755 = vpop.f32.mrb[0].mxu0
      %v4756 = vadd.f32 %v2775, %v4755
      %v4757 = vpop.f32.mrb[0].mxu0
      %v4758 = vpop.f32.mrb[0].mxu0
      %v4759 = vadd.f32 %v2775, %v4758
      %v4760 = vpop.f32.mrb[0].mxu0
      %4761 = vmatprep.mubr.bf16.mxu0 %v2947
      %4762 = vmatmul.mubr.bf16.gmra.mrb[0].mxu0 %v2938
      %v4763 = vpop.f32.mrb[0].mxu0
      %v4764 = vadd.f32 %v2775, %v4763
      %v4765 = vpop.f32.mrb[0].mxu0
      %v4766 = vpop.f32.mrb[0].mxu0
      %v4767 = vadd.f32 %v2775, %v4766
      %v4768 = vpop.f32.mrb[0].mxu0
      %4769 = vmatprep.mubr.bf16.mxu0 %v3028
      %4770 = vmatmul.mubr.bf16.gmra.mrb[0].mxu0 %v3019
      %v4771 = vpop.f32.mrb[0].mxu0
      %v4772 = vadd.f32 %v2775, %v4771
      %v4773 = vpop.f32.mrb[0].mxu0
      %v4774 = vpop.f32.mrb[0].mxu0
      %v4775 = vadd.f32 %v2775, %v4774
      %v4776 = vpop.f32.mrb[0].mxu0
      %4777 = vmatprep.mubr.bf16.mxu0 %v3109
      %4778 = vmatmul.mubr.bf16.gmra.mrb[0].mxu0 %v3100
      %v4779 = vpop.f32.mrb[0].mxu0
      %v4780 = vadd.f32 %v2775, %v4779
      %v4781 = vpop.f32.mrb[0].mxu0
      %v4782 = vpop.f32.mrb[0].mxu0
      %v4783 = vadd.f32 %v2775, %v4782
      %v4784 = vpop.f32.mrb[0].mxu0
      %4785 = vmatprep.mubr.bf16.mxu0 %v3190
      %4786 = vmatmul.mubr.bf16.gmra.mrb[0].mxu0 %v3181
      %v4787 = vpop.f32.mrb[0].mxu0
      %v4788 = vadd.f32 %v2775, %v4787
      %v4789 = vpop.f32.mrb[0].mxu0
      %v4790 = vpop.f32.mrb[0].mxu0
      %v4791 = vadd.f32 %v2775, %v4790
      %v4792 = vpop.f32.mrb[0].mxu0
      %4793 = vmatprep.mubr.bf16.mxu0 %v3271
      %4794 = vmatmul.mubr.bf16.gmra.mrb[0].mxu0 %v3262
      %v4795 = vpop.f32.mrb[0].mxu0
      %v4796 = vadd.f32 %v2775, %v4795
      %v4797 = vpop.f32.mrb[0].mxu0
      %v4798 = vpop.f32.mrb[0].mxu0
      %v4799 = vadd.f32 %v2775, %v4798
      %v4800 = vpop.f32.mrb[0].mxu0
      %4801 = vmatprep.mubr.bf16.mxu0 %v3352
      %4802 = vmatmul.mubr.bf16.gmra.mrb[0].mxu0 %v3343
      %v4803 = vpop.f32.mrb[0].mxu0
      %v4804 = vadd.f32 %v2775, %v4803
      %v4805 = vpop.f32.mrb[0].mxu0
      %v4806 = vpop.f32.mrb[0].mxu0
      %v4807 = vadd.f32 %v2775, %v4806
      %v4808 = vpop.f32.mrb[0].mxu0
      %4809 = vmatprep.mubr.bf16.mxu0 %v3433
      %4810 = vmatmul.mubr.bf16.gmra.mrb[0].mxu0 %v3424
      %v4811 = vpop.f32.mrb[0].mxu0
      %v4812 = vadd.f32 %v2775, %v4811
      %v4813 = vpop.f32.mrb[0].mxu0
      %v4814 = vpop.f32.mrb[0].mxu0
      %v4815 = vadd.f32 %v2775, %v4814
      %v4816 = vpop.f32.mrb[0].mxu0
      %4817 = vmatprep.mubr.bf16.mxu0 %v3514
      %4818 = vmatmul.mubr.bf16.gmra.mrb[0].mxu0 %v3505
      %v4819 = vpop.f32.mrb[0].mxu0
      %v4820 = vadd.f32 %v2775, %v4819
      %v4821 = vpop.f32.mrb[0].mxu0
      %v4822 = vpop.f32.mrb[0].mxu0
      %v4823 = vadd.f32 %v2775, %v4822
      %v4824 = vpop.f32.mrb[0].mxu0
      %4825 = vmatprep.mubr.bf16.mxu0 %v3595
      %4826 = vmatmul.mubr.bf16.gmra.mrb[0].mxu0 %v3586
      %v4827 = vpop.f32.mrb[0].mxu0
      %v4828 = vadd.f32 %v2775, %v4827
      %v4829 = vpop.f32.mrb[0].mxu0
      %v4830 = vpop.f32.mrb[0].mxu0
      %v4831 = vadd.f32 %v2775, %v4830
      %v4832 = vpop.f32.mrb[0].mxu0
      %4833 = vmatprep.mubr.bf16.mxu0 %v3676
      %4834 = vmatmul.mubr.bf16.gmra.mrb[0].mxu0 %v3667
      %v4835 = vpop.f32.mrb[0].mxu0
      %v4836 = vadd.f32 %v2775, %v4835
      %v4837 = vpop.f32.mrb[0].mxu0
      %v4838 = vpop.f32.mrb[0].mxu0
      %v4839 = vadd.f32 %v2775, %v4838
      %v4840 = vpop.f32.mrb[0].mxu0
      %4841 = vmatprep.mubr.bf16.mxu0 %v3757
      %4842 = vmatmul.mubr.bf16.gmra.mrb[0].mxu0 %v3748
      %v4843 = vpop.f32.mrb[0].mxu0
      %v4844 = vadd.f32 %v2775, %v4843
      %v4845 = vpop.f32.mrb[0].mxu0
      %v4846 = vpop.f32.mrb[0].mxu0
      %v4847 = vadd.f32 %v2775, %v4846
      %v4848 = vpop.f32.mrb[0].mxu0
      %4849 = vmatprep.mubr.bf16.mxu0 %v3838
      %4850 = vmatmul.mubr.bf16.gmra.mrb[0].mxu0 %v3829
      %v4851 = vpop.f32.mrb[0].mxu0
      %v4852 = vadd.f32 %v2775, %v4851
      %v4853 = vpop.f32.mrb[0].mxu0
      %v4854 = vpop.f32.mrb[0].mxu0
      %v4855 = vadd.f32 %v2775, %v4854
      %v4856 = vpop.f32.mrb[0].mxu0
      %4857 = vmatprep.mubr.bf16.mxu0 %v3919
      %4858 = vmatmul.mubr.bf16.gmra.mrb[0].mxu0 %v3910
      %v4859 = vpop.f32.mrb[0].mxu0
      %v4860 = vadd.f32 %v2775, %v4859
      %v4861 = vpop.f32.mrb[0].mxu0
      %v4862 = vpop.f32.mrb[0].mxu0
      %v4863 = vadd.f32 %v2775, %v4862
      %v4864 = vpop.f32.mrb[0].mxu0
      %4865 = vmatprep.mubr.bf16.mxu0 %v4000
      %4866 = vmatmul.mubr.bf16.gmra.mrb[0].mxu0 %v3991
      %v4867 = vpop.f32.mrb[0].mxu0
      %v4868 = vadd.f32 %v2775, %v4867
      %v4869 = vpop.f32.mrb[0].mxu0
      %v4870 = vpop.f32.mrb[0].mxu0
      %v4871 = vadd.f32 %v2775, %v4870
      %v4872 = vpop.f32.mrb[0].mxu0
      %4873 = vmatprep.mubr.bf16.mxu0 %v4081
      %4874 = vmatmul.mubr.bf16.gmra.mrb[0].mxu0 %v4072
      %v4875 = vpop.f32.mrb[0].mxu0
      %v4876 = vadd.f32 %v2775, %v4875
      %v4877 = vpop.f32.mrb[0].mxu0
      %v4878 = vpop.f32.mrb[0].mxu0
      %v4879 = vadd.f32 %v2775, %v4878
      %v4880 = vpop.f32.mrb[0].mxu0
      %4881 = vdwg.mxu0
      %4882 = vmatprep.subr.bf16.mxu0 0
      %4883 = vmatpush1.bf16.msra.mxu0 %v4593
      %4884 = vmatprep.subr.bf16.mxu0 0
      %4885 = vmatpush1.bf16.msra.mxu0 %v4594
      %4886 = vmatprep.subr.bf16.mxu0 0
      %4887 = vmatpush1.bf16.msra.mxu0 %v4595
      %4888 = vmatprep.subr.bf16.mxu0 0
      %4889 = vmatpush1.bf16.msra.mxu0 %v4596
      %4890 = vmatprep.subr.bf16.mxu0 0
      %4891 = vmatpush1.bf16.msra.mxu0 %v4597
      %4892 = vmatprep.subr.bf16.mxu0 0
      %4893 = vmatpush1.bf16.msra.mxu0 %v4598
      %4894 = vmatprep.subr.bf16.mxu0 0
      %4895 = vmatpush1.bf16.msra.mxu0 %v4599
      %4896 = vmatprep.subr.bf16.mxu0 0
      %4897 = vmatpush1.bf16.msra.mxu0 %v4600
      %4898 = vmatprep.subr.bf16.mxu0 0
      %4899 = vmatpush1.bf16.msra.mxu0 %v4601
      %4900 = vmatprep.subr.bf16.mxu0 0
      %4901 = vmatpush1.bf16.msra.mxu0 %v4602
      %4902 = vmatprep.subr.bf16.mxu0 0
      %4903 = vmatpush1.bf16.msra.mxu0 %v4603
      %4904 = vmatprep.subr.bf16.mxu0 0
      %4905 = vmatpush1.bf16.msra.mxu0 %v4604
      %4906 = vmatprep.subr.bf16.mxu0 0
      %4907 = vmatpush1.bf16.msra.mxu0 %v4605
      %4908 = vmatprep.subr.bf16.mxu0 0
      %4909 = vmatpush1.bf16.msra.mxu0 %v4606
      %4910 = vmatprep.subr.bf16.mxu0 0
      %4911 = vmatpush1.bf16.msra.mxu0 %v4607
      %4912 = vmatprep.subr.bf16.mxu0 0
      %4913 = vmatpush1.bf16.msra.mxu0 %v4608
      %4914 = vmatprep.mubr.bf16.mxu0 %v2844
      %4915 = vmatmul.mubr.bf16.gmra.mrb[0].mxu0 %v2827
      %v4916 = vpop.f32.mrb[0].mxu0
      %v4917 = vadd.f32 %v4756, %v4916
      %v4918 = vpop.f32.mrb[0].mxu0
      %v4919 = vpop.f32.mrb[0].mxu0
      %v4920 = vadd.f32 %v4759, %v4919
      %v4921 = vpop.f32.mrb[0].mxu0
      %4922 = vmatprep.mubr.bf16.mxu0 %v2965
      %4923 = vmatmul.mubr.bf16.gmra.mrb[0].mxu0 %v2956
      %v4924 = vpop.f32.mrb[0].mxu0
      %v4925 = vadd.f32 %v4764, %v4924
      %v4926 = vpop.f32.mrb[0].mxu0
      %v4927 = vpop.f32.mrb[0].mxu0
      %v4928 = vadd.f32 %v4767, %v4927
      %v4929 = vpop.f32.mrb[0].mxu0
      %4930 = vmatprep.mubr.bf16.mxu0 %v3046
      %4931 = vmatmul.mubr.bf16.gmra.mrb[0].mxu0 %v3037
      %v4932 = vpop.f32.mrb[0].mxu0
      %v4933 = vadd.f32 %v4772, %v4932
      %v4934 = vpop.f32.mrb[0].mxu0
      %v4935 = vpop.f32.mrb[0].mxu0
      %v4936 = vadd.f32 %v4775, %v4935
      %v4937 = vpop.f32.mrb[0].mxu0
      %4938 = vmatprep.mubr.bf16.mxu0 %v3127
      %4939 = vmatmul.mubr.bf16.gmra.mrb[0].mxu0 %v3118
      %v4940 = vpop.f32.mrb[0].mxu0
      %v4941 = vadd.f32 %v4780, %v4940
      %v4942 = vpop.f32.mrb[0].mxu0
      %v4943 = vpop.f32.mrb[0].mxu0
      %v4944 = vadd.f32 %v4783, %v4943
      %v4945 = vpop.f32.mrb[0].mxu0
      %4946 = vmatprep.mubr.bf16.mxu0 %v3208
      %4947 = vmatmul.mubr.bf16.gmra.mrb[0].mxu0 %v3199
      %v4948 = vpop.f32.mrb[0].mxu0
      %v4949 = vadd.f32 %v4788, %v4948
      %v4950 = vpop.f32.mrb[0].mxu0
      %v4951 = vpop.f32.mrb[0].mxu0
      %v4952 = vadd.f32 %v4791, %v4951
      %v4953 = vpop.f32.mrb[0].mxu0
      %4954 = vmatprep.mubr.bf16.mxu0 %v3289
      %4955 = vmatmul.mubr.bf16.gmra.mrb[0].mxu0 %v3280
      %v4956 = vpop.f32.mrb[0].mxu0
      %v4957 = vadd.f32 %v4796, %v4956
      %v4958 = vpop.f32.mrb[0].mxu0
      %v4959 = vpop.f32.mrb[0].mxu0
      %v4960 = vadd.f32 %v4799, %v4959
      %v4961 = vpop.f32.mrb[0].mxu0
      %4962 = vmatprep.mubr.bf16.mxu0 %v3370
      %4963 = vmatmul.mubr.bf16.gmra.mrb[0].mxu0 %v3361
      %v4964 = vpop.f32.mrb[0].mxu0
      %v4965 = vadd.f32 %v4804, %v4964
      %v4966 = vpop.f32.mrb[0].mxu0
      %v4967 = vpop.f32.mrb[0].mxu0
      %v4968 = vadd.f32 %v4807, %v4967
      %v4969 = vpop.f32.mrb[0].mxu0
      %4970 = vmatprep.mubr.bf16.mxu0 %v3451
      %4971 = vmatmul.mubr.bf16.gmra.mrb[0].mxu0 %v3442
      %v4972 = vpop.f32.mrb[0].mxu0
      %v4973 = vadd.f32 %v4812, %v4972
      %v4974 = vpop.f32.mrb[0].mxu0
      %v4975 = vpop.f32.mrb[0].mxu0
      %v4976 = vadd.f32 %v4815, %v4975
      %v4977 = vpop.f32.mrb[0].mxu0
      %4978 = vmatprep.mubr.bf16.mxu0 %v3532
      %4979 = vmatmul.mubr.bf16.gmra.mrb[0].mxu0 %v3523
      %v4980 = vpop.f32.mrb[0].mxu0
      %v4981 = vadd.f32 %v4820, %v4980
      %v4982 = vpop.f32.mrb[0].mxu0
      %v4983 = vpop.f32.mrb[0].mxu0
      %v4984 = vadd.f32 %v4823, %v4983
      %v4985 = vpop.f32.mrb[0].mxu0
      %4986 = vmatprep.mubr.bf16.mxu0 %v3613
      %4987 = vmatmul.mubr.bf16.gmra.mrb[0].mxu0 %v3604
      %v4988 = vpop.f32.mrb[0].mxu0
      %v4989 = vadd.f32 %v4828, %v4988
      %v4990 = vpop.f32.mrb[0].mxu0
      %v4991 = vpop.f32.mrb[0].mxu0
      %v4992 = vadd.f32 %v4831, %v4991
      %v4993 = vpop.f32.mrb[0].mxu0
      %4994 = vmatprep.mubr.bf16.mxu0 %v3694
      %4995 = vmatmul.mubr.bf16.gmra.mrb[0].mxu0 %v3685
      %v4996 = vpop.f32.mrb[0].mxu0
      %v4997 = vadd.f32 %v4836, %v4996
      %v4998 = vpop.f32.mrb[0].mxu0
      %v4999 = vpop.f32.mrb[0].mxu0
      %v5000 = vadd.f32 %v4839, %v4999
      %v5001 = vpop.f32.mrb[0].mxu0
      %5002 = vmatprep.mubr.bf16.mxu0 %v3775
      %5003 = vmatmul.mubr.bf16.gmra.mrb[0].mxu0 %v3766
      %v5004 = vpop.f32.mrb[0].mxu0
      %v5005 = vadd.f32 %v4844, %v5004
      %v5006 = vpop.f32.mrb[0].mxu0
      %v5007 = vpop.f32.mrb[0].mxu0
      %v5008 = vadd.f32 %v4847, %v5007
      %v5009 = vpop.f32.mrb[0].mxu0
      %5010 = vmatprep.mubr.bf16.mxu0 %v3856
      %5011 = vmatmul.mubr.bf16.gmra.mrb[0].mxu0 %v3847
      %v5012 = vpop.f32.mrb[0].mxu0
      %v5013 = vadd.f32 %v4852, %v5012
      %v5014 = vpop.f32.mrb[0].mxu0
      %v5015 = vpop.f32.mrb[0].mxu0
      %v5016 = vadd.f32 %v4855, %v5015
      %v5017 = vpop.f32.mrb[0].mxu0
      %5018 = vmatprep.mubr.bf16.mxu0 %v3937
      %5019 = vmatmul.mubr.bf16.gmra.mrb[0].mxu0 %v3928
      %v5020 = vpop.f32.mrb[0].mxu0
      %v5021 = vadd.f32 %v4860, %v5020
      %v5022 = vpop.f32.mrb[0].mxu0
      %v5023 = vpop.f32.mrb[0].mxu0
      %v5024 = vadd.f32 %v4863, %v5023
      %v5025 = vpop.f32.mrb[0].mxu0
      %5026 = vmatprep.mubr.bf16.mxu0 %v4018
      %5027 = vmatmul.mubr.bf16.gmra.mrb[0].mxu0 %v4009
      %v5028 = vpop.f32.mrb[0].mxu0
      %v5029 = vadd.f32 %v4868, %v5028
      %v5030 = vpop.f32.mrb[0].mxu0
      %v5031 = vpop.f32.mrb[0].mxu0
      %v5032 = vadd.f32 %v4871, %v5031
      %v5033 = vpop.f32.mrb[0].mxu0
      %5034 = vmatprep.mubr.bf16.mxu0 %v4099
      %5035 = vmatmul.mubr.bf16.gmra.mrb[0].mxu0 %v4090
      %v5036 = vpop.f32.mrb[0].mxu0
      %v5037 = vadd.f32 %v4876, %v5036
      %v5038 = vpop.f32.mrb[0].mxu0
      %v5039 = vpop.f32.mrb[0].mxu0
      %v5040 = vadd.f32 %v4879, %v5039
      %v5041 = vpop.f32.mrb[0].mxu0
      %5042 = vdwg.mxu0
      %5043 = vmatprep.subr.bf16.mxu0 0
      %5044 = vmatpush1.bf16.msra.mxu0 %v4609
      %5045 = vmatprep.subr.bf16.mxu0 0
      %5046 = vmatpush1.bf16.msra.mxu0 %v4610
      %5047 = vmatprep.subr.bf16.mxu0 0
      %5048 = vmatpush1.bf16.msra.mxu0 %v4611
      %5049 = vmatprep.subr.bf16.mxu0 0
      %5050 = vmatpush1.bf16.msra.mxu0 %v4612
      %5051 = vmatprep.subr.bf16.mxu0 0
      %5052 = vmatpush1.bf16.msra.mxu0 %v4613
      %5053 = vmatprep.subr.bf16.mxu0 0
      %5054 = vmatpush1.bf16.msra.mxu0 %v4614
      %5055 = vmatprep.subr.bf16.mxu0 0
      %5056 = vmatpush1.bf16.msra.mxu0 %v4615
      %5057 = vmatprep.subr.bf16.mxu0 0
      %5058 = vmatpush1.bf16.msra.mxu0 %v4616
      %5059 = vmatprep.subr.bf16.mxu0 0
      %5060 = vmatpush1.bf16.msra.mxu0 %v4617
      %5061 = vmatprep.subr.bf16.mxu0 0
      %5062 = vmatpush1.bf16.msra.mxu0 %v4618
      %5063 = vmatprep.subr.bf16.mxu0 0
      %5064 = vmatpush1.bf16.msra.mxu0 %v4619
      %5065 = vmatprep.subr.bf16.mxu0 0
      %5066 = vmatpush1.bf16.msra.mxu0 %v4620
      %5067 = vmatprep.subr.bf16.mxu0 0
      %5068 = vmatpush1.bf16.msra.mxu0 %v4621
      %5069 = vmatprep.subr.bf16.mxu0 0
      %5070 = vmatpush1.bf16.msra.mxu0 %v4622
      %5071 = vmatprep.subr.bf16.mxu0 0
      %5072 = vmatpush1.bf16.msra.mxu0 %v4623
      %5073 = vmatprep.subr.bf16.mxu0 0
      %5074 = vmatpush1.bf16.msra.mxu0 %v4624
      %5075 = vmatprep.mubr.bf16.mxu0 %v2878
      %5076 = vmatmul.mubr.bf16.gmra.mrb[0].mxu0 %v2861
      %v5077 = vpop.f32.mrb[0].mxu0
      %v5078 = vadd.f32 %v4917, %v5077
      %v5079 = vpop.f32.mrb[0].mxu0
      %v5080 = vpop.f32.mrb[0].mxu0
      %v5081 = vadd.f32 %v4920, %v5080
      %v5082 = vpop.f32.mrb[0].mxu0
      %5083 = vmatprep.mubr.bf16.mxu0 %v2983
      %5084 = vmatmul.mubr.bf16.gmra.mrb[0].mxu0 %v2974
      %v5085 = vpop.f32.mrb[0].mxu0
      %v5086 = vadd.f32 %v4925, %v5085
      %v5087 = vpop.f32.mrb[0].mxu0
      %v5088 = vpop.f32.mrb[0].mxu0
      %v5089 = vadd.f32 %v4928, %v5088
      %v5090 = vpop.f32.mrb[0].mxu0
      %5091 = vmatprep.mubr.bf16.mxu0 %v3064
      %5092 = vmatmul.mubr.bf16.gmra.mrb[0].mxu0 %v3055
      %v5093 = vpop.f32.mrb[0].mxu0
      %v5094 = vadd.f32 %v4933, %v5093
      %v5095 = vpop.f32.mrb[0].mxu0
      %v5096 = vpop.f32.mrb[0].mxu0
      %v5097 = vadd.f32 %v4936, %v5096
      %v5098 = vpop.f32.mrb[0].mxu0
      %5099 = vmatprep.mubr.bf16.mxu0 %v3145
      %5100 = vmatmul.mubr.bf16.gmra.mrb[0].mxu0 %v3136
      %v5101 = vpop.f32.mrb[0].mxu0
      %v5102 = vadd.f32 %v4941, %v5101
      %v5103 = vpop.f32.mrb[0].mxu0
      %v5104 = vpop.f32.mrb[0].mxu0
      %v5105 = vadd.f32 %v4944, %v5104
      %v5106 = vpop.f32.mrb[0].mxu0
      %5107 = vmatprep.mubr.bf16.mxu0 %v3226
      %5108 = vmatmul.mubr.bf16.gmra.mrb[0].mxu0 %v3217
      %v5109 = vpop.f32.mrb[0].mxu0
      %v5110 = vadd.f32 %v4949, %v5109
      %v5111 = vpop.f32.mrb[0].mxu0
      %v5112 = vpop.f32.mrb[0].mxu0
      %v5113 = vadd.f32 %v4952, %v5112
      %v5114 = vpop.f32.mrb[0].mxu0
      %5115 = vmatprep.mubr.bf16.mxu0 %v3307
      %5116 = vmatmul.mubr.bf16.gmra.mrb[0].mxu0 %v3298
      %v5117 = vpop.f32.mrb[0].mxu0
      %v5118 = vadd.f32 %v4957, %v5117
      %v5119 = vpop.f32.mrb[0].mxu0
      %v5120 = vpop.f32.mrb[0].mxu0
      %v5121 = vadd.f32 %v4960, %v5120
      %v5122 = vpop.f32.mrb[0].mxu0
      %5123 = vmatprep.mubr.bf16.mxu0 %v3388
      %5124 = vmatmul.mubr.bf16.gmra.mrb[0].mxu0 %v3379
      %v5125 = vpop.f32.mrb[0].mxu0
      %v5126 = vadd.f32 %v4965, %v5125
      %v5127 = vpop.f32.mrb[0].mxu0
      %v5128 = vpop.f32.mrb[0].mxu0
      %v5129 = vadd.f32 %v4968, %v5128
      %v5130 = vpop.f32.mrb[0].mxu0
      %5131 = vmatprep.mubr.bf16.mxu0 %v3469
      %5132 = vmatmul.mubr.bf16.gmra.mrb[0].mxu0 %v3460
      %v5133 = vpop.f32.mrb[0].mxu0
      %v5134 = vadd.f32 %v4973, %v5133
      %v5135 = vpop.f32.mrb[0].mxu0
      %v5136 = vpop.f32.mrb[0].mxu0
      %v5137 = vadd.f32 %v4976, %v5136
      %v5138 = vpop.f32.mrb[0].mxu0
      %5139 = vmatprep.mubr.bf16.mxu0 %v3550
      %5140 = vmatmul.mubr.bf16.gmra.mrb[0].mxu0 %v3541
      %v5141 = vpop.f32.mrb[0].mxu0
      %v5142 = vadd.f32 %v4981, %v5141
      %v5143 = vpop.f32.mrb[0].mxu0
      %v5144 = vpop.f32.mrb[0].mxu0
      %v5145 = vadd.f32 %v4984, %v5144
      %v5146 = vpop.f32.mrb[0].mxu0
      %5147 = vmatprep.mubr.bf16.mxu0 %v3631
      %5148 = vmatmul.mubr.bf16.gmra.mrb[0].mxu0 %v3622
      %v5149 = vpop.f32.mrb[0].mxu0
      %v5150 = vadd.f32 %v4989, %v5149
      %v5151 = vpop.f32.mrb[0].mxu0
      %v5152 = vpop.f32.mrb[0].mxu0
      %v5153 = vadd.f32 %v4992, %v5152
      %v5154 = vpop.f32.mrb[0].mxu0
      %5155 = vmatprep.mubr.bf16.mxu0 %v3712
      %5156 = vmatmul.mubr.bf16.gmra.mrb[0].mxu0 %v3703
      %v5157 = vpop.f32.mrb[0].mxu0
      %v5158 = vadd.f32 %v4997, %v5157
      %v5159 = vpop.f32.mrb[0].mxu0
      %v5160 = vpop.f32.mrb[0].mxu0
      %v5161 = vadd.f32 %v5000, %v5160
      %v5162 = vpop.f32.mrb[0].mxu0
      %5163 = vmatprep.mubr.bf16.mxu0 %v3793
      %5164 = vmatmul.mubr.bf16.gmra.mrb[0].mxu0 %v3784
      %v5165 = vpop.f32.mrb[0].mxu0
      %v5166 = vadd.f32 %v5005, %v5165
      %v5167 = vpop.f32.mrb[0].mxu0
      %v5168 = vpop.f32.mrb[0].mxu0
      %v5169 = vadd.f32 %v5008, %v5168
      %v5170 = vpop.f32.mrb[0].mxu0
      %5171 = vmatprep.mubr.bf16.mxu0 %v3874
      %5172 = vmatmul.mubr.bf16.gmra.mrb[0].mxu0 %v3865
      %v5173 = vpop.f32.mrb[0].mxu0
      %v5174 = vadd.f32 %v5013, %v5173
      %v5175 = vpop.f32.mrb[0].mxu0
      %v5176 = vpop.f32.mrb[0].mxu0
      %v5177 = vadd.f32 %v5016, %v5176
      %v5178 = vpop.f32.mrb[0].mxu0
      %5179 = vmatprep.mubr.bf16.mxu0 %v3955
      %5180 = vmatmul.mubr.bf16.gmra.mrb[0].mxu0 %v3946
      %v5181 = vpop.f32.mrb[0].mxu0
      %v5182 = vadd.f32 %v5021, %v5181
      %v5183 = vpop.f32.mrb[0].mxu0
      %v5184 = vpop.f32.mrb[0].mxu0
      %v5185 = vadd.f32 %v5024, %v5184
      %v5186 = vpop.f32.mrb[0].mxu0
      %5187 = vmatprep.mubr.bf16.mxu0 %v4036
      %5188 = vmatmul.mubr.bf16.gmra.mrb[0].mxu0 %v4027
      %v5189 = vpop.f32.mrb[0].mxu0
      %v5190 = vadd.f32 %v5029, %v5189
      %v5191 = vpop.f32.mrb[0].mxu0
      %v5192 = vpop.f32.mrb[0].mxu0
      %v5193 = vadd.f32 %v5032, %v5192
      %v5194 = vpop.f32.mrb[0].mxu0
      %5195 = vmatprep.mubr.bf16.mxu0 %v4117
      %5196 = vmatmul.mubr.bf16.gmra.mrb[0].mxu0 %v4108
      %v5197 = vpop.f32.mrb[0].mxu0
      %v5198 = vadd.f32 %v5037, %v5197
      %v5199 = vpop.f32.mrb[0].mxu0
      %v5200 = vpop.f32.mrb[0].mxu0
      %v5201 = vadd.f32 %v5040, %v5200
      %v5202 = vpop.f32.mrb[0].mxu0
      %5203 = vdwg.mxu0
      %5204 = vmatprep.subr.bf16.mxu0 0
      %5205 = vmatpush1.bf16.msra.mxu0 %v4625
      %5206 = vmatprep.subr.bf16.mxu0 0
      %5207 = vmatpush1.bf16.msra.mxu0 %v4626
      %5208 = vmatprep.subr.bf16.mxu0 0
      %5209 = vmatpush1.bf16.msra.mxu0 %v4627
      %5210 = vmatprep.subr.bf16.mxu0 0
      %5211 = vmatpush1.bf16.msra.mxu0 %v4628
      %5212 = vmatprep.subr.bf16.mxu0 0
      %5213 = vmatpush1.bf16.msra.mxu0 %v4629
      %5214 = vmatprep.subr.bf16.mxu0 0
      %5215 = vmatpush1.bf16.msra.mxu0 %v4630
      %5216 = vmatprep.subr.bf16.mxu0 0
      %5217 = vmatpush1.bf16.msra.mxu0 %v4631
      %5218 = vmatprep.subr.bf16.mxu0 0
      %5219 = vmatpush1.bf16.msra.mxu0 %v4632
      %5220 = vmatprep.subr.bf16.mxu0 0
      %5221 = vmatpush1.bf16.msra.mxu0 %v4633
      %5222 = vmatprep.subr.bf16.mxu0 0
      %5223 = vmatpush1.bf16.msra.mxu0 %v4634
      %5224 = vmatprep.subr.bf16.mxu0 0
      %5225 = vmatpush1.bf16.msra.mxu0 %v4635
      %5226 = vmatprep.subr.bf16.mxu0 0
      %5227 = vmatpush1.bf16.msra.mxu0 %v4636
      %5228 = vmatprep.subr.bf16.mxu0 0
      %5229 = vmatpush1.bf16.msra.mxu0 %v4637
      %5230 = vmatprep.subr.bf16.mxu0 0
      %5231 = vmatpush1.bf16.msra.mxu0 %v4638
      %5232 = vmatprep.subr.bf16.mxu0 0
      %5233 = vmatpush1.bf16.msra.mxu0 %v4639
      %5234 = vmatprep.subr.bf16.mxu0 0
      %5235 = vmatpush1.bf16.msra.mxu0 %v4640
      %5236 = vmatprep.mubr.bf16.mxu0 %v2912
      %5237 = vmatmul.mubr.bf16.gmra.mrb[0].mxu0 %v2895
      %v5238 = vpop.f32.mrb[0].mxu0
      %v5239 = vadd.f32 %v5078, %v5238
      %v5240 = vpop.f32.mrb[0].mxu0
      %v5241 = vpop.f32.mrb[0].mxu0
      %v5242 = vadd.f32 %v5081, %v5241
      %v5243 = vpop.f32.mrb[0].mxu0
      %5244 = vmatprep.mubr.bf16.mxu0 %v3001
      %5245 = vmatmul.mubr.bf16.gmra.mrb[0].mxu0 %v2992
      %v5246 = vpop.f32.mrb[0].mxu0
      %v5247 = vadd.f32 %v5086, %v5246
      %v5248 = vpop.f32.mrb[0].mxu0
      %v5249 = vpop.f32.mrb[0].mxu0
      %v5250 = vadd.f32 %v5089, %v5249
      %v5251 = vpop.f32.mrb[0].mxu0
      %5252 = vmatprep.mubr.bf16.mxu0 %v3082
      %5253 = vmatmul.mubr.bf16.gmra.mrb[0].mxu0 %v3073
      %v5254 = vpop.f32.mrb[0].mxu0
      %v5255 = vadd.f32 %v5094, %v5254
      %v5256 = vpop.f32.mrb[0].mxu0
      %v5257 = vpop.f32.mrb[0].mxu0
      %v5258 = vadd.f32 %v5097, %v5257
      %v5259 = vpop.f32.mrb[0].mxu0
      %5260 = vmatprep.mubr.bf16.mxu0 %v3163
      %5261 = vmatmul.mubr.bf16.gmra.mrb[0].mxu0 %v3154
      %v5262 = vpop.f32.mrb[0].mxu0
      %v5263 = vadd.f32 %v5102, %v5262
      %v5264 = vpop.f32.mrb[0].mxu0
      %v5265 = vpop.f32.mrb[0].mxu0
      %v5266 = vadd.f32 %v5105, %v5265
      %v5267 = vpop.f32.mrb[0].mxu0
      %5268 = vmatprep.mubr.bf16.mxu0 %v3244
      %5269 = vmatmul.mubr.bf16.gmra.mrb[0].mxu0 %v3235
      %v5270 = vpop.f32.mrb[0].mxu0
      %v5271 = vadd.f32 %v5110, %v5270
      %v5272 = vpop.f32.mrb[0].mxu0
      %v5273 = vpop.f32.mrb[0].mxu0
      %v5274 = vadd.f32 %v5113, %v5273
      %v5275 = vpop.f32.mrb[0].mxu0
      %5276 = vmatprep.mubr.bf16.mxu0 %v3325
      %5277 = vmatmul.mubr.bf16.gmra.mrb[0].mxu0 %v3316
      %v5278 = vpop.f32.mrb[0].mxu0
      %v5279 = vadd.f32 %v5118, %v5278
      %v5280 = vpop.f32.mrb[0].mxu0
      %v5281 = vpop.f32.mrb[0].mxu0
      %v5282 = vadd.f32 %v5121, %v5281
      %v5283 = vpop.f32.mrb[0].mxu0
      %5284 = vmatprep.mubr.bf16.mxu0 %v3406
      %5285 = vmatmul.mubr.bf16.gmra.mrb[0].mxu0 %v3397
      %v5286 = vpop.f32.mrb[0].mxu0
      %v5287 = vadd.f32 %v5126, %v5286
      %v5288 = vpop.f32.mrb[0].mxu0
      %v5289 = vpop.f32.mrb[0].mxu0
      %v5290 = vadd.f32 %v5129, %v5289
      %v5291 = vpop.f32.mrb[0].mxu0
      %5292 = vmatprep.mubr.bf16.mxu0 %v3487
      %5293 = vmatmul.mubr.bf16.gmra.mrb[0].mxu0 %v3478
      %v5294 = vpop.f32.mrb[0].mxu0
      %v5295 = vadd.f32 %v5134, %v5294
      %v5296 = vpop.f32.mrb[0].mxu0
      %v5297 = vpop.f32.mrb[0].mxu0
      %v5298 = vadd.f32 %v5137, %v5297
      %v5299 = vpop.f32.mrb[0].mxu0
      %5300 = vmatprep.mubr.bf16.mxu0 %v3568
      %5301 = vmatmul.mubr.bf16.gmra.mrb[0].mxu0 %v3559
      %v5302 = vpop.f32.mrb[0].mxu0
      %v5303 = vadd.f32 %v5142, %v5302
      %v5304 = vpop.f32.mrb[0].mxu0
      %v5305 = vpop.f32.mrb[0].mxu0
      %v5306 = vadd.f32 %v5145, %v5305
      %v5307 = vpop.f32.mrb[0].mxu0
      %5308 = vmatprep.mubr.bf16.mxu0 %v3649
      %5309 = vmatmul.mubr.bf16.gmra.mrb[0].mxu0 %v3640
      %v5310 = vpop.f32.mrb[0].mxu0
      %v5311 = vadd.f32 %v5150, %v5310
      %v5312 = vpop.f32.mrb[0].mxu0
      %v5313 = vpop.f32.mrb[0].mxu0
      %v5314 = vadd.f32 %v5153, %v5313
      %v5315 = vpop.f32.mrb[0].mxu0
      %5316 = vmatprep.mubr.bf16.mxu0 %v3730
      %5317 = vmatmul.mubr.bf16.gmra.mrb[0].mxu0 %v3721
      %v5318 = vpop.f32.mrb[0].mxu0
      %v5319 = vadd.f32 %v5158, %v5318
      %v5320 = vpop.f32.mrb[0].mxu0
      %v5321 = vpop.f32.mrb[0].mxu0
      %v5322 = vadd.f32 %v5161, %v5321
      %v5323 = vpop.f32.mrb[0].mxu0
      %5324 = vmatprep.mubr.bf16.mxu0 %v3811
      %5325 = vmatmul.mubr.bf16.gmra.mrb[0].mxu0 %v3802
      %v5326 = vpop.f32.mrb[0].mxu0
      %v5327 = vadd.f32 %v5166, %v5326
      %v5328 = vpop.f32.mrb[0].mxu0
      %v5329 = vpop.f32.mrb[0].mxu0
      %v5330 = vadd.f32 %v5169, %v5329
      %v5331 = vpop.f32.mrb[0].mxu0
      %5332 = vmatprep.mubr.bf16.mxu0 %v3892
      %5333 = vmatmul.mubr.bf16.gmra.mrb[0].mxu0 %v3883
      %v5334 = vpop.f32.mrb[0].mxu0
      %v5335 = vadd.f32 %v5174, %v5334
      %v5336 = vpop.f32.mrb[0].mxu0
      %v5337 = vpop.f32.mrb[0].mxu0
      %v5338 = vadd.f32 %v5177, %v5337
      %v5339 = vpop.f32.mrb[0].mxu0
      %5340 = vmatprep.mubr.bf16.mxu0 %v3973
      %5341 = vmatmul.mubr.bf16.gmra.mrb[0].mxu0 %v3964
      %v5342 = vpop.f32.mrb[0].mxu0
      %v5343 = vadd.f32 %v5182, %v5342
      %v5344 = vpop.f32.mrb[0].mxu0
      %v5345 = vpop.f32.mrb[0].mxu0
      %v5346 = vadd.f32 %v5185, %v5345
      %v5347 = vpop.f32.mrb[0].mxu0
      %5348 = vmatprep.mubr.bf16.mxu0 %v4054
      %5349 = vmatmul.mubr.bf16.gmra.mrb[0].mxu0 %v4045
      %v5350 = vpop.f32.mrb[0].mxu0
      %v5351 = vadd.f32 %v5190, %v5350
      %v5352 = vpop.f32.mrb[0].mxu0
      %v5353 = vpop.f32.mrb[0].mxu0
      %v5354 = vadd.f32 %v5193, %v5353
      %v5355 = vpop.f32.mrb[0].mxu0
      %5356 = vmatprep.mubr.bf16.mxu0 %v4135
      %5357 = vmatmul.mubr.bf16.gmra.mrb[0].mxu0 %v4126
      %v5358 = vpop.f32.mrb[0].mxu0
      %v5359 = vadd.f32 %v5198, %v5358
      %v5360 = vpop.f32.mrb[0].mxu0
      %v5361 = vpop.f32.mrb[0].mxu0
      %v5362 = vadd.f32 %v5201, %v5361
      %v5363 = vpop.f32.mrb[0].mxu0
      %5364 = vdwg.mxu0
      %5365 = vmatprep.subr.bf16.mxu0 0
      %5366 = vmatpush1.bf16.msra.mxu0 %v4641
      %5367 = vmatprep.subr.bf16.mxu0 0
      %5368 = vmatpush1.bf16.msra.mxu0 %v4642
      %5369 = vmatprep.subr.bf16.mxu0 0
      %5370 = vmatpush1.bf16.msra.mxu0 %v4643
      %5371 = vmatprep.subr.bf16.mxu0 0
      %5372 = vmatpush1.bf16.msra.mxu0 %v4644
      %5373 = vmatprep.subr.bf16.mxu0 0
      %5374 = vmatpush1.bf16.msra.mxu0 %v4645
      %5375 = vmatprep.subr.bf16.mxu0 0
      %5376 = vmatpush1.bf16.msra.mxu0 %v4646
      %5377 = vmatprep.subr.bf16.mxu0 0
      %5378 = vmatpush1.bf16.msra.mxu0 %v4647
      %5379 = vmatprep.subr.bf16.mxu0 0
      %5380 = vmatpush1.bf16.msra.mxu0 %v4648
      %5381 = vmatprep.subr.bf16.mxu0 0
      %5382 = vmatpush1.bf16.msra.mxu0 0
      %5383 = vmatprep.subr.bf16.mxu0 0
      %5384 = vmatpush1.bf16.msra.mxu0 0
      %5385 = vmatprep.subr.bf16.mxu0 0
      %5386 = vmatpush1.bf16.msra.mxu0 0
      %5387 = vmatprep.subr.bf16.mxu0 0
      %5388 = vmatpush1.bf16.msra.mxu0 0
      %5389 = vmatprep.subr.bf16.mxu0 0
      %5390 = vmatpush1.bf16.msra.mxu0 0
      %5391 = vmatprep.subr.bf16.mxu0 0
      %5392 = vmatpush1.bf16.msra.mxu0 0
      %5393 = vmatprep.subr.bf16.mxu0 0
      %5394 = vmatpush1.bf16.msra.mxu0 0
      %5395 = vmatprep.subr.bf16.mxu0 0
      %5396 = vmatpush1.bf16.msra.mxu0 0
      %5397 = vmatprep.mubr.bf16.mxu0 0
      %5398 = vmatmul.mubr.bf16.gmra.mrb[0].mxu0 %v2929
      %v5399 = vpop.f32.mrb[0].mxu0
      %v5400 = vadd.f32 %v5239, %v5399
      %v5401 = vpop.f32.mrb[0].mxu0
      %v5402 = vpop.f32.mrb[0].mxu0
      %v5403 = vadd.f32 %v5242, %v5402
      %v5404 = vpop.f32.mrb[0].mxu0
      %5405 = vmatprep.mubr.bf16.mxu0 0
      %5406 = vmatmul.mubr.bf16.gmra.mrb[0].mxu0 %v3010
      %v5407 = vpop.f32.mrb[0].mxu0
      %v5408 = vadd.f32 %v5247, %v5407
      %v5409 = vpop.f32.mrb[0].mxu0
      %v5410 = vpop.f32.mrb[0].mxu0
      %v5411 = vadd.f32 %v5250, %v5410
      %v5412 = vpop.f32.mrb[0].mxu0
      %5413 = vmatprep.mubr.bf16.mxu0 0
      %5414 = vmatmul.mubr.bf16.gmra.mrb[0].mxu0 %v3091
      %v5415 = vpop.f32.mrb[0].mxu0
      %v5416 = vadd.f32 %v5255, %v5415
      %v5417 = vpop.f32.mrb[0].mxu0
      %v5418 = vpop.f32.mrb[0].mxu0
      %v5419 = vadd.f32 %v5258, %v5418
      %v5420 = vpop.f32.mrb[0].mxu0
      %5421 = vmatprep.mubr.bf16.mxu0 0
      %5422 = vmatmul.mubr.bf16.gmra.mrb[0].mxu0 %v3172
      %v5423 = vpop.f32.mrb[0].mxu0
      %v5424 = vadd.f32 %v5263, %v5423
      %v5425 = vpop.f32.mrb[0].mxu0
      %v5426 = vpop.f32.mrb[0].mxu0
      %v5427 = vadd.f32 %v5266, %v5426
      %v5428 = vpop.f32.mrb[0].mxu0
      %5429 = vmatprep.mubr.bf16.mxu0 0
      %5430 = vmatmul.mubr.bf16.gmra.mrb[0].mxu0 %v3253
      %v5431 = vpop.f32.mrb[0].mxu0
      %v5432 = vadd.f32 %v5271, %v5431
      %v5433 = vpop.f32.mrb[0].mxu0
      %v5434 = vpop.f32.mrb[0].mxu0
      %v5435 = vadd.f32 %v5274, %v5434
      %v5436 = vpop.f32.mrb[0].mxu0
      %5437 = vmatprep.mubr.bf16.mxu0 0
      %5438 = vmatmul.mubr.bf16.gmra.mrb[0].mxu0 %v3334
      %v5439 = vpop.f32.mrb[0].mxu0
      %v5440 = vadd.f32 %v5279, %v5439
      %v5441 = vpop.f32.mrb[0].mxu0
      %v5442 = vpop.f32.mrb[0].mxu0
      %v5443 = vadd.f32 %v5282, %v5442
      %v5444 = vpop.f32.mrb[0].mxu0
      %5445 = vmatprep.mubr.bf16.mxu0 0
      %5446 = vmatmul.mubr.bf16.gmra.mrb[0].mxu0 %v3415
      %v5447 = vpop.f32.mrb[0].mxu0
      %v5448 = vadd.f32 %v5287, %v5447
      %v5449 = vpop.f32.mrb[0].mxu0
      %v5450 = vpop.f32.mrb[0].mxu0
      %v5451 = vadd.f32 %v5290, %v5450
      %v5452 = vpop.f32.mrb[0].mxu0
      %5453 = vmatprep.mubr.bf16.mxu0 0
      %5454 = vmatmul.mubr.bf16.gmra.mrb[0].mxu0 %v3496
      %v5455 = vpop.f32.mrb[0].mxu0
      %v5456 = vadd.f32 %v5295, %v5455
      %v5457 = vpop.f32.mrb[0].mxu0
      %v5458 = vpop.f32.mrb[0].mxu0
      %v5459 = vadd.f32 %v5298, %v5458
      %v5460 = vpop.f32.mrb[0].mxu0
      %5461 = vmatprep.mubr.bf16.mxu0 0
      %5462 = vmatmul.mubr.bf16.gmra.mrb[0].mxu0 %v3577
      %v5463 = vpop.f32.mrb[0].mxu0
      %v5464 = vadd.f32 %v5303, %v5463
      %v5465 = vpop.f32.mrb[0].mxu0
      %v5466 = vpop.f32.mrb[0].mxu0
      %v5467 = vadd.f32 %v5306, %v5466
      %v5468 = vpop.f32.mrb[0].mxu0
      %5469 = vmatprep.mubr.bf16.mxu0 0
      %5470 = vmatmul.mubr.bf16.gmra.mrb[0].mxu0 %v3658
      %v5471 = vpop.f32.mrb[0].mxu0
      %v5472 = vadd.f32 %v5311, %v5471
      %v5473 = vpop.f32.mrb[0].mxu0
      %v5474 = vpop.f32.mrb[0].mxu0
      %v5475 = vadd.f32 %v5314, %v5474
      %v5476 = vpop.f32.mrb[0].mxu0
      %5477 = vmatprep.mubr.bf16.mxu0 0
      %5478 = vmatmul.mubr.bf16.gmra.mrb[0].mxu0 %v3739
      %v5479 = vpop.f32.mrb[0].mxu0
      %v5480 = vadd.f32 %v5319, %v5479
      %v5481 = vpop.f32.mrb[0].mxu0
      %v5482 = vpop.f32.mrb[0].mxu0
      %v5483 = vadd.f32 %v5322, %v5482
      %v5484 = vpop.f32.mrb[0].mxu0
      %5485 = vmatprep.mubr.bf16.mxu0 0
      %5486 = vmatmul.mubr.bf16.gmra.mrb[0].mxu0 %v3820
      %v5487 = vpop.f32.mrb[0].mxu0
      %v5488 = vadd.f32 %v5327, %v5487
      %v5489 = vpop.f32.mrb[0].mxu0
      %v5490 = vpop.f32.mrb[0].mxu0
      %v5491 = vadd.f32 %v5330, %v5490
      %v5492 = vpop.f32.mrb[0].mxu0
      %5493 = vmatprep.mubr.bf16.mxu0 0
      %5494 = vmatmul.mubr.bf16.gmra.mrb[0].mxu0 %v3901
      %v5495 = vpop.f32.mrb[0].mxu0
      %v5496 = vadd.f32 %v5335, %v5495
      %v5497 = vpop.f32.mrb[0].mxu0
      %v5498 = vpop.f32.mrb[0].mxu0
      %v5499 = vadd.f32 %v5338, %v5498
      %v5500 = vpop.f32.mrb[0].mxu0
      %5501 = vmatprep.mubr.bf16.mxu0 0
      %5502 = vmatmul.mubr.bf16.gmra.mrb[0].mxu0 %v3982
      %v5503 = vpop.f32.mrb[0].mxu0
      %v5504 = vadd.f32 %v5343, %v5503
      %v5505 = vpop.f32.mrb[0].mxu0
      %v5506 = vpop.f32.mrb[0].mxu0
      %v5507 = vadd.f32 %v5346, %v5506
      %v5508 = vpop.f32.mrb[0].mxu0
      %5509 = vmatprep.mubr.bf16.mxu0 0
      %5510 = vmatmul.mubr.bf16.gmra.mrb[0].mxu0 %v4063
      %v5511 = vpop.f32.mrb[0].mxu0
      %v5512 = vadd.f32 %v5351, %v5511
      %v5513 = vpop.f32.mrb[0].mxu0
      %v5514 = vpop.f32.mrb[0].mxu0
      %v5515 = vadd.f32 %v5354, %v5514
      %v5516 = vpop.f32.mrb[0].mxu0
      %5517 = vmatprep.mubr.bf16.mxu0 0
      %5518 = vmatmul.mubr.bf16.gmra.mrb[0].mxu0 %v4144
      %v5519 = vpop.f32.mrb[0].mxu0
      %v5520 = vadd.f32 %v5359, %v5519
      %v5521 = vpop.f32.mrb[0].mxu0
      %v5522 = vpop.f32.mrb[0].mxu0
      %v5523 = vadd.f32 %v5362, %v5522
      %v5524 = vpop.f32.mrb[0].mxu0
      %5525 = vdwg.mxu0
      %vm5526 = vcmp.ge.f32.partialorder %v5400, 0.0
      %vm5527 = vcmp.ge.f32.partialorder %v5403, 0.0
      %vm5528 = vcmp.ge.f32.partialorder %v5408, 0.0
      %vm5529 = vcmp.ge.f32.partialorder %v5411, 0.0
      %vm5530 = vcmp.ge.f32.partialorder %v5416, 0.0
      %vm5531 = vcmp.ge.f32.partialorder %v5419, 0.0
      %vm5532 = vcmp.ge.f32.partialorder %v5424, 0.0
      %vm5533 = vcmp.ge.f32.partialorder %v5427, 0.0
      %vm5534 = vcmp.ge.f32.partialorder %v5432, 0.0
      %vm5535 = vcmp.ge.f32.partialorder %v5435, 0.0
      %vm5536 = vcmp.ge.f32.partialorder %v5440, 0.0
      %vm5537 = vcmp.ge.f32.partialorder %v5443, 0.0
      %vm5538 = vcmp.ge.f32.partialorder %v5448, 0.0
      %vm5539 = vcmp.ge.f32.partialorder %v5451, 0.0
      %vm5540 = vcmp.ge.f32.partialorder %v5456, 0.0
      %vm5541 = vcmp.ge.f32.partialorder %v5459, 0.0
      %vm5542 = vcmp.ge.f32.partialorder %v5464, 0.0
      %vm5543 = vcmp.ge.f32.partialorder %v5467, 0.0
      %vm5544 = vcmp.ge.f32.partialorder %v5472, 0.0
      %vm5545 = vcmp.ge.f32.partialorder %v5475, 0.0
      %vm5546 = vcmp.ge.f32.partialorder %v5480, 0.0
      %vm5547 = vcmp.ge.f32.partialorder %v5483, 0.0
      %vm5548 = vcmp.ge.f32.partialorder %v5488, 0.0
      %vm5549 = vcmp.ge.f32.partialorder %v5491, 0.0
      %vm5550 = vcmp.ge.f32.partialorder %v5496, 0.0
      %vm5551 = vcmp.ge.f32.partialorder %v5499, 0.0
      %vm5552 = vcmp.ge.f32.partialorder %v5504, 0.0
      %vm5553 = vcmp.ge.f32.partialorder %v5507, 0.0
      %vm5554 = vcmp.ge.f32.partialorder %v5512, 0.0
      %vm5555 = vcmp.ge.f32.partialorder %v5515, 0.0
      %vm5556 = vcmp.ge.f32.partialorder %v5520, 0.0
      %vm5557 = vcmp.ge.f32.partialorder %v5523, 0.0
      %v5558 = vmul.f32 %v5400, 0.2
      %v5559 = vmul.f32 %v5403, 0.2
      %v5560 = vmul.f32 %v5408, 0.2
      %v5561 = vmul.f32 %v5411, 0.2
      %v5562 = vmul.f32 %v5416, 0.2
      %v5563 = vmul.f32 %v5419, 0.2
      %v5564 = vmul.f32 %v5424, 0.2
      %v5565 = vmul.f32 %v5427, 0.2
      %v5566 = vmul.f32 %v5432, 0.2
      %v5567 = vmul.f32 %v5435, 0.2
      %v5568 = vmul.f32 %v5440, 0.2
      %v5569 = vmul.f32 %v5443, 0.2
      %v5570 = vmul.f32 %v5448, 0.2
      %v5571 = vmul.f32 %v5451, 0.2
      %v5572 = vmul.f32 %v5456, 0.2
      %v5573 = vmul.f32 %v5459, 0.2
      %v5574 = vmul.f32 %v5464, 0.2
      %v5575 = vmul.f32 %v5467, 0.2
      %v5576 = vmul.f32 %v5472, 0.2
      %v5577 = vmul.f32 %v5475, 0.2
      %v5578 = vmul.f32 %v5480, 0.2
      %v5579 = vmul.f32 %v5483, 0.2
      %v5580 = vmul.f32 %v5488, 0.2
      %v5581 = vmul.f32 %v5491, 0.2
      %v5582 = vmul.f32 %v5496, 0.2
      %v5583 = vmul.f32 %v5499, 0.2
      %v5584 = vmul.f32 %v5504, 0.2
      %v5585 = vmul.f32 %v5507, 0.2
      %v5586 = vmul.f32 %v5512, 0.2
      %v5587 = vmul.f32 %v5515, 0.2
      %v5588 = vmul.f32 %v5520, 0.2
      %v5589 = vmul.f32 %v5523, 0.2
      %v5590 = vsel %vm5526, %v5400, %v5558
      %v5591 = vsel %vm5527, %v5403, %v5559
      %v5592 = vsel %vm5528, %v5408, %v5560
      %v5593 = vsel %vm5529, %v5411, %v5561
      %v5594 = vsel %vm5530, %v5416, %v5562
      %v5595 = vsel %vm5531, %v5419, %v5563
      %v5596 = vsel %vm5532, %v5424, %v5564
      %v5597 = vsel %vm5533, %v5427, %v5565
      %v5598 = vsel %vm5534, %v5432, %v5566
      %v5599 = vsel %vm5535, %v5435, %v5567
      %v5600 = vsel %vm5536, %v5440, %v5568
      %v5601 = vsel %vm5537, %v5443, %v5569
      %v5602 = vsel %vm5538, %v5448, %v5570
      %v5603 = vsel %vm5539, %v5451, %v5571
      %v5604 = vsel %vm5540, %v5456, %v5572
      %v5605 = vsel %vm5541, %v5459, %v5573
      %v5606 = vsel %vm5542, %v5464, %v5574
      %v5607 = vsel %vm5543, %v5467, %v5575
      %v5608 = vsel %vm5544, %v5472, %v5576
      %v5609 = vsel %vm5545, %v5475, %v5577
      %v5610 = vsel %vm5546, %v5480, %v5578
      %v5611 = vsel %vm5547, %v5483, %v5579
      %v5612 = vsel %vm5548, %v5488, %v5580
      %v5613 = vsel %vm5549, %v5491, %v5581
      %v5614 = vsel %vm5550, %v5496, %v5582
      %v5615 = vsel %vm5551, %v5499, %v5583
      %v5616 = vsel %vm5552, %v5504, %v5584
      %v5617 = vsel %vm5553, %v5507, %v5585
      %v5618 = vsel %vm5554, %v5512, %v5586
      %v5619 = vsel %vm5555, %v5515, %v5587
      %v5620 = vsel %vm5556, %v5520, %v5588
      %v5621 = vsel %vm5557, %v5523, %v5589
      %v5622 = vpack.c.bf16 %v5591, %v5590
      %v5623 = vpack.c.bf16 %v5593, %v5592
      %v5624 = vpack.c.bf16 %v5595, %v5594
      %v5625 = vpack.c.bf16 %v5597, %v5596
      %v5626 = vpack.c.bf16 %v5599, %v5598
      %v5627 = vpack.c.bf16 %v5601, %v5600
      %v5628 = vpack.c.bf16 %v5603, %v5602
      %v5629 = vpack.c.bf16 %v5605, %v5604
      %v5630 = vpack.c.bf16 %v5607, %v5606
      %v5631 = vpack.c.bf16 %v5609, %v5608
      %v5632 = vpack.c.bf16 %v5611, %v5610
      %v5633 = vpack.c.bf16 %v5613, %v5612
      %v5634 = vpack.c.bf16 %v5615, %v5614
      %v5635 = vpack.c.bf16 %v5617, %v5616
      %v5636 = vpack.c.bf16 %v5619, %v5618
      %v5637 = vpack.c.bf16 %v5621, %v5620
      %5638 = vst [vmem:[#allocation3] sm:$0xff] 0
      %5639 = vst [vmem:[#allocation3 + $0x8] sm:$0xf] 0
      %5640 = vst [vmem:[#allocation3 + $0x88] sm:$0xf0] 0
      %5641 = vst [vmem:[#allocation3 + $0x90] sm:$0xff] 0
      %v5658 = vrot.slane %v5622, 4
      %v5659 = vrot.slane %v5623, 4
      %v5660 = vsel %vm594, %v5658, %v5659
      %v5661 = vrot.slane %v5624, 4
      %v5662 = vsel %vm594, %v5659, %v5661
      %v5663 = vrot.slane %v5625, 4
      %v5664 = vsel %vm594, %v5661, %v5663
      %v5665 = vrot.slane %v5626, 4
      %v5666 = vsel %vm594, %v5663, %v5665
      %v5667 = vrot.slane %v5627, 4
      %v5668 = vsel %vm594, %v5665, %v5667
      %v5669 = vrot.slane %v5628, 4
      %v5670 = vsel %vm594, %v5667, %v5669
      %v5671 = vrot.slane %v5629, 4
      %v5672 = vsel %vm594, %v5669, %v5671
      %v5673 = vrot.slane %v5630, 4
      %v5674 = vsel %vm594, %v5671, %v5673
      %v5675 = vrot.slane %v5631, 4
      %v5676 = vsel %vm594, %v5673, %v5675
      %v5677 = vrot.slane %v5632, 4
      %v5678 = vsel %vm594, %v5675, %v5677
      %v5679 = vrot.slane %v5633, 4
      %v5680 = vsel %vm594, %v5677, %v5679
      %v5681 = vrot.slane %v5634, 4
      %v5682 = vsel %vm594, %v5679, %v5681
      %v5683 = vrot.slane %v5635, 4
      %v5684 = vsel %vm594, %v5681, %v5683
      %v5685 = vrot.slane %v5636, 4
      %v5686 = vsel %vm594, %v5683, %v5685
      %v5687 = vrot.slane %v5637, 4
      %v5688 = vsel %vm594, %v5685, %v5687
      %5706 = vst [vmem:[#allocation3 + $0x8] sm:$0xf0] %v5658
      %5707 = vst [vmem:[#allocation3 + $0x10] sm:$0xff] %v5660
      %5708 = vst [vmem:[#allocation3 + $0x18] sm:$0xff] %v5662
      %5709 = vst [vmem:[#allocation3 + $0x20] sm:$0xff] %v5664
      %5710 = vst [vmem:[#allocation3 + $0x28] sm:$0xff] %v5666
      %5711 = vst [vmem:[#allocation3 + $0x30] sm:$0xff] %v5668
      %5712 = vst [vmem:[#allocation3 + $0x38] sm:$0xff] %v5670
      %5713 = vst [vmem:[#allocation3 + $0x40] sm:$0xff] %v5672
      %5714 = vst [vmem:[#allocation3 + $0x48] sm:$0xff] %v5674
      %5715 = vst [vmem:[#allocation3 + $0x50] sm:$0xff] %v5676
      %5716 = vst [vmem:[#allocation3 + $0x58] sm:$0xff] %v5678
      %5717 = vst [vmem:[#allocation3 + $0x60] sm:$0xff] %v5680
      %5718 = vst [vmem:[#allocation3 + $0x68] sm:$0xff] %v5682
      %5719 = vst [vmem:[#allocation3 + $0x70] sm:$0xff] %v5684
      %5720 = vst [vmem:[#allocation3 + $0x78] sm:$0xff] %v5686
      %5721 = vst [vmem:[#allocation3 + $0x80] sm:$0xff] %v5688
      %5722 = vst [vmem:[#allocation3 + $0x88] sm:$0xf] %v5687
      %v5723 = vld [vmem:[#allocation3] sm:$0xf8]
      %v5724 = vld [vmem:[#allocation3 + $0x8] sm:$0xff]
      %v5725 = vld [vmem:[#allocation3 + $0x10] sm:$0xff]
      %v5726 = vld [vmem:[#allocation3 + $0x18] sm:$0xff]
      %v5727 = vld [vmem:[#allocation3 + $0x20] sm:$0xff]
      %v5728 = vld [vmem:[#allocation3 + $0x28] sm:$0xff]
      %v5729 = vld [vmem:[#allocation3 + $0x30] sm:$0xff]
      %v5730 = vld [vmem:[#allocation3 + $0x38] sm:$0xff]
      %v5731 = vld [vmem:[#allocation3 + $0x40] sm:$0xff]
      %v5732 = vld [vmem:[#allocation3 + $0x48] sm:$0xff]
      %v5733 = vld [vmem:[#allocation3 + $0x50] sm:$0xff]
      %v5734 = vld [vmem:[#allocation3 + $0x58] sm:$0xff]
      %v5735 = vld [vmem:[#allocation3 + $0x60] sm:$0xff]
      %v5736 = vld [vmem:[#allocation3 + $0x68] sm:$0xff]
      %v5737 = vld [vmem:[#allocation3 + $0x70] sm:$0xff]
      %v5738 = vld [vmem:[#allocation3 + $0x78] sm:$0xff]
      %v5739 = vld [vmem:[#allocation3 + $0x80] sm:$0xf]
      %v5740 = vmul.bf16 %v5723, %v1149
      %v5741 = vmul.bf16 %v5724, %v1158
      %v5742 = vmul.bf16 %v5725, %v1167
      %v5743 = vmul.bf16 %v5726, %v1176
      %v5744 = vmul.bf16 %v5727, %v1185
      %v5745 = vmul.bf16 %v5728, %v1194
      %v5746 = vmul.bf16 %v5729, %v1203
      %v5747 = vmul.bf16 %v5730, %v1212
      %v5748 = vmul.bf16 %v5731, %v1221
      %v5749 = vmul.bf16 %v5732, %v1230
      %v5750 = vmul.bf16 %v5733, %v1239
      %v5751 = vmul.bf16 %v5734, %v1248
      %v5752 = vmul.bf16 %v5735, %v1257
      %v5753 = vmul.bf16 %v5736, %v1266
      %v5754 = vmul.bf16 %v5737, %v1275
      %v5755 = vmul.bf16 %v5738, %v1284
      %v5756 = vmul.bf16 %v5739, %v1283
      %v5757 = vld [vmem:[#allocation3] sm:$0xf0]
      %v5758 = vld [vmem:[#allocation3 + $0x80] sm:$0x1f]
      %v5759 = vmul.bf16 %v5757, %v1793
      %v5760 = vmul.bf16 %v5724, %v1802
      %v5761 = vmul.bf16 %v5725, %v1811
      %v5762 = vmul.bf16 %v5726, %v1820
      %v5763 = vmul.bf16 %v5727, %v1829
      %v5764 = vmul.bf16 %v5728, %v1838
      %v5765 = vmul.bf16 %v5729, %v1847
      %v5766 = vmul.bf16 %v5730, %v1856
      %v5767 = vmul.bf16 %v5731, %v1865
      %v5768 = vmul.bf16 %v5732, %v1874
      %v5769 = vmul.bf16 %v5733, %v1883
      %v5770 = vmul.bf16 %v5734, %v1892
      %v5771 = vmul.bf16 %v5735, %v1901
      %v5772 = vmul.bf16 %v5736, %v1910
      %v5773 = vmul.bf16 %v5737, %v1919
      %v5774 = vmul.bf16 %v5738, %v1928
      %v5775 = vmul.bf16 %v5758, %v1927
      %v5776 = vld [vmem:[#allocation3 + $0x8] sm:$0xf8]
      %v5777 = vld [vmem:[#allocation3 + $0x80] sm:$0xff]
      %v5778 = vld [vmem:[#allocation3 + $0x88] sm:$0xf]
      %v5779 = vmul.bf16 %v5776, %v1149
      %v5780 = vmul.bf16 %v5725, %v1158
      %v5781 = vmul.bf16 %v5726, %v1167
      %v5782 = vmul.bf16 %v5727, %v1176
      %v5783 = vmul.bf16 %v5728, %v1185
      %v5784 = vmul.bf16 %v5729, %v1194
      %v5785 = vmul.bf16 %v5730, %v1203
      %v5786 = vmul.bf16 %v5731, %v1212
      %v5787 = vmul.bf16 %v5732, %v1221
      %v5788 = vmul.bf16 %v5733, %v1230
      %v5789 = vmul.bf16 %v5734, %v1239
      %v5790 = vmul.bf16 %v5735, %v1248
      %v5791 = vmul.bf16 %v5736, %v1257
      %v5792 = vmul.bf16 %v5737, %v1266
      %v5793 = vmul.bf16 %v5738, %v1275
      %v5794 = vmul.bf16 %v5777, %v1284
      %v5795 = vmul.bf16 %v5778, %v1283
      %v5796 = vld [vmem:[#allocation3 + $0x8] sm:$0xf0]
      %v5797 = vld [vmem:[#allocation3 + $0x88] sm:$0x1f]
      %v5798 = vmul.bf16 %v5796, %v1793
      %v5799 = vmul.bf16 %v5725, %v1802
      %v5800 = vmul.bf16 %v5726, %v1811
      %v5801 = vmul.bf16 %v5727, %v1820
      %v5802 = vmul.bf16 %v5728, %v1829
      %v5803 = vmul.bf16 %v5729, %v1838
      %v5804 = vmul.bf16 %v5730, %v1847
      %v5805 = vmul.bf16 %v5731, %v1856
      %v5806 = vmul.bf16 %v5732, %v1865
      %v5807 = vmul.bf16 %v5733, %v1874
      %v5808 = vmul.bf16 %v5734, %v1883
      %v5809 = vmul.bf16 %v5735, %v1892
      %v5810 = vmul.bf16 %v5736, %v1901
      %v5811 = vmul.bf16 %v5737, %v1910
      %v5812 = vmul.bf16 %v5738, %v1919
      %v5813 = vmul.bf16 %v5777, %v1928
      %v5814 = vmul.bf16 %v5797, %v1927
      %v5815 = vld [vmem:[#allocation3 + $0x10] sm:$0xf8]
      %v5816 = vld [vmem:[#allocation3 + $0x18] sm:$0xff]
      %v5817 = vld [vmem:[#allocation3 + $0x20] sm:$0xff]
      %v5818 = vld [vmem:[#allocation3 + $0x28] sm:$0xff]
      %v5819 = vld [vmem:[#allocation3 + $0x30] sm:$0xff]
      %v5820 = vld [vmem:[#allocation3 + $0x38] sm:$0xff]
      %v5821 = vld [vmem:[#allocation3 + $0x40] sm:$0xff]
      %v5822 = vld [vmem:[#allocation3 + $0x48] sm:$0xff]
      %v5823 = vld [vmem:[#allocation3 + $0x50] sm:$0xff]
      %v5824 = vld [vmem:[#allocation3 + $0x58] sm:$0xff]
      %v5825 = vld [vmem:[#allocation3 + $0x60] sm:$0xff]
      %v5826 = vld [vmem:[#allocation3 + $0x68] sm:$0xff]
      %v5827 = vld [vmem:[#allocation3 + $0x70] sm:$0xff]
      %v5828 = vld [vmem:[#allocation3 + $0x78] sm:$0xff]
      %v5829 = vld [vmem:[#allocation3 + $0x80] sm:$0xff]
      %v5830 = vld [vmem:[#allocation3 + $0x88] sm:$0xff]
      %v5831 = vld [vmem:[#allocation3 + $0x90] sm:$0xf]
      %v5832 = vmul.bf16 %v5815, %v1149
      %v5833 = vmul.bf16 %v5816, %v1158
      %v5834 = vmul.bf16 %v5817, %v1167
      %v5835 = vmul.bf16 %v5818, %v1176
      %v5836 = vmul.bf16 %v5819, %v1185
      %v5837 = vmul.bf16 %v5820, %v1194
      %v5838 = vmul.bf16 %v5821, %v1203
      %v5839 = vmul.bf16 %v5822, %v1212
      %v5840 = vmul.bf16 %v5823, %v1221
      %v5841 = vmul.bf16 %v5824, %v1230
      %v5842 = vmul.bf16 %v5825, %v1239
      %v5843 = vmul.bf16 %v5826, %v1248
      %v5844 = vmul.bf16 %v5827, %v1257
      %v5845 = vmul.bf16 %v5828, %v1266
      %v5846 = vmul.bf16 %v5829, %v1275
      %v5847 = vmul.bf16 %v5830, %v1284
      %v5848 = vmul.bf16 %v5831, %v1283
      %v5849 = vld [vmem:[#allocation3 + $0x10] sm:$0xf0]
      %v5850 = vld [vmem:[#allocation3 + $0x90] sm:$0x1f]
      %v5851 = vmul.bf16 %v5849, %v1793
      %v5852 = vmul.bf16 %v5816, %v1802
      %v5853 = vmul.bf16 %v5817, %v1811
      %v5854 = vmul.bf16 %v5818, %v1820
      %v5855 = vmul.bf16 %v5819, %v1829
      %v5856 = vmul.bf16 %v5820, %v1838
      %v5857 = vmul.bf16 %v5821, %v1847
      %v5858 = vmul.bf16 %v5822, %v1856
      %v5859 = vmul.bf16 %v5823, %v1865
      %v5860 = vmul.bf16 %v5824, %v1874
      %v5861 = vmul.bf16 %v5825, %v1883
      %v5862 = vmul.bf16 %v5826, %v1892
      %v5863 = vmul.bf16 %v5827, %v1901
      %v5864 = vmul.bf16 %v5828, %v1910
      %v5865 = vmul.bf16 %v5829, %v1919
      %v5866 = vmul.bf16 %v5830, %v1928
      %v5867 = vmul.bf16 %v5850, %v1927
      %v5869 = vshrl.u32 %v5757, 16
      %v5871 = vshll.u32 %v5757, 16
      %v5873 = vrot.slane %v5871, 1
      %v5874 = vor.u32 %v5869, %v5873
      %v5876 = vshll.u32 %v5724, 16
      %v5878 = vrot.slane %v5876, 1
      %v5879 = vsel %vm2069, %v5874, %v5878
      %v5880 = vshrl.u32 %v5724, 16
      %v5882 = vor.u32 %v5880, %v5878
      %v5884 = vshll.u32 %v5725, 16
      %v5886 = vrot.slane %v5884, 1
      %v5887 = vsel %vm2069, %v5882, %v5886
      %v5888 = vshrl.u32 %v5725, 16
      %v5890 = vor.u32 %v5888, %v5886
      %v5892 = vshll.u32 %v5726, 16
      %v5894 = vrot.slane %v5892, 1
      %v5895 = vsel %vm2069, %v5890, %v5894
      %v5896 = vshrl.u32 %v5726, 16
      %v5898 = vor.u32 %v5896, %v5894
      %v5900 = vshll.u32 %v5727, 16
      %v5902 = vrot.slane %v5900, 1
      %v5903 = vsel %vm2069, %v5898, %v5902
      %v5904 = vshrl.u32 %v5727, 16
      %v5906 = vor.u32 %v5904, %v5902
      %v5908 = vshll.u32 %v5728, 16
      %v5910 = vrot.slane %v5908, 1
      %v5911 = vsel %vm2069, %v5906, %v5910
      %v5912 = vshrl.u32 %v5728, 16
      %v5914 = vor.u32 %v5912, %v5910
      %v5916 = vshll.u32 %v5729, 16
      %v5918 = vrot.slane %v5916, 1
      %v5919 = vsel %vm2069, %v5914, %v5918
      %v5920 = vshrl.u32 %v5729, 16
      %v5922 = vor.u32 %v5920, %v5918
      %v5924 = vshll.u32 %v5730, 16
      %v5926 = vrot.slane %v5924, 1
      %v5927 = vsel %vm2069, %v5922, %v5926
      %v5928 = vshrl.u32 %v5730, 16
      %v5930 = vor.u32 %v5928, %v5926
      %v5932 = vshll.u32 %v5731, 16
      %v5934 = vrot.slane %v5932, 1
      %v5935 = vsel %vm2069, %v5930, %v5934
      %v5936 = vshrl.u32 %v5731, 16
      %v5938 = vor.u32 %v5936, %v5934
      %v5940 = vshll.u32 %v5732, 16
      %v5942 = vrot.slane %v5940, 1
      %v5943 = vsel %vm2069, %v5938, %v5942
      %v5944 = vshrl.u32 %v5732, 16
      %v5946 = vor.u32 %v5944, %v5942
      %v5948 = vshll.u32 %v5733, 16
      %v5950 = vrot.slane %v5948, 1
      %v5951 = vsel %vm2069, %v5946, %v5950
      %v5952 = vshrl.u32 %v5733, 16
      %v5954 = vor.u32 %v5952, %v5950
      %v5956 = vshll.u32 %v5734, 16
      %v5958 = vrot.slane %v5956, 1
      %v5959 = vsel %vm2069, %v5954, %v5958
      %v5960 = vshrl.u32 %v5734, 16
      %v5962 = vor.u32 %v5960, %v5958
      %v5964 = vshll.u32 %v5735, 16
      %v5966 = vrot.slane %v5964, 1
      %v5967 = vsel %vm2069, %v5962, %v5966
      %v5968 = vshrl.u32 %v5735, 16
      %v5970 = vor.u32 %v5968, %v5966
      %v5972 = vshll.u32 %v5736, 16
      %v5974 = vrot.slane %v5972, 1
      %v5975 = vsel %vm2069, %v5970, %v5974
      %v5976 = vshrl.u32 %v5736, 16
      %v5978 = vor.u32 %v5976, %v5974
      %v5980 = vshll.u32 %v5737, 16
      %v5982 = vrot.slane %v5980, 1
      %v5983 = vsel %vm2069, %v5978, %v5982
      %v5984 = vshrl.u32 %v5737, 16
      %v5986 = vor.u32 %v5984, %v5982
      %v5988 = vshll.u32 %v5738, 16
      %v5990 = vrot.slane %v5988, 1
      %v5991 = vsel %vm2069, %v5986, %v5990
      %v5992 = vshrl.u32 %v5738, 16
      %v5994 = vor.u32 %v5992, %v5990
      %v5996 = vshll.u32 %v5739, 16
      %v5998 = vrot.slane %v5996, 1
      %v5999 = vsel %vm2069, %v5994, %v5998
      %v6000 = vshrl.u32 %v5739, 16
      %v6002 = vor.u32 %v6000, %v5998
      %v6020 = vrot.slane %v5759, 1
      %v6021 = vrot.slane %v5760, 1
      %v6022 = vsel %vm2222, %v6020, %v6021
      %v6023 = vrot.slane %v5761, 1
      %v6024 = vsel %vm2222, %v6021, %v6023
      %v6025 = vrot.slane %v5762, 1
      %v6026 = vsel %vm2222, %v6023, %v6025
      %v6027 = vrot.slane %v5763, 1
      %v6028 = vsel %vm2222, %v6025, %v6027
      %v6029 = vrot.slane %v5764, 1
      %v6030 = vsel %vm2222, %v6027, %v6029
      %v6031 = vrot.slane %v5765, 1
      %v6032 = vsel %vm2222, %v6029, %v6031
      %v6033 = vrot.slane %v5766, 1
      %v6034 = vsel %vm2222, %v6031, %v6033
      %v6035 = vrot.slane %v5767, 1
      %v6036 = vsel %vm2222, %v6033, %v6035
      %v6037 = vrot.slane %v5768, 1
      %v6038 = vsel %vm2222, %v6035, %v6037
      %v6039 = vrot.slane %v5769, 1
      %v6040 = vsel %vm2222, %v6037, %v6039
      %v6041 = vrot.slane %v5770, 1
      %v6042 = vsel %vm2222, %v6039, %v6041
      %v6043 = vrot.slane %v5771, 1
      %v6044 = vsel %vm2222, %v6041, %v6043
      %v6045 = vrot.slane %v5772, 1
      %v6046 = vsel %vm2222, %v6043, %v6045
      %v6047 = vrot.slane %v5773, 1
      %v6048 = vsel %vm2222, %v6045, %v6047
      %v6049 = vrot.slane %v5774, 1
      %v6050 = vsel %vm2222, %v6047, %v6049
      %v6051 = vrot.slane %v5775, 1
      %v6052 = vsel %vm2222, %v6049, %v6051
      %v6054 = vshrl.u32 %v5796, 16
      %v6056 = vshll.u32 %v5796, 16
      %v6058 = vrot.slane %v6056, 1
      %v6059 = vor.u32 %v6054, %v6058
      %v6060 = vsel %vm2069, %v6059, %v5886
      %v6062 = vshll.u32 %v5777, 16
      %v6064 = vrot.slane %v6062, 1
      %v6065 = vsel %vm2069, %v5994, %v6064
      %v6066 = vshrl.u32 %v5777, 16
      %v6068 = vor.u32 %v6066, %v6064
      %v6070 = vshll.u32 %v5778, 16
      %v6072 = vrot.slane %v6070, 1
      %v6073 = vsel %vm2069, %v6068, %v6072
      %v6074 = vshrl.u32 %v5778, 16
      %v6076 = vor.u32 %v6074, %v6072
      %v6094 = vrot.slane %v5798, 1
      %v6095 = vrot.slane %v5799, 1
      %v6096 = vsel %vm2222, %v6094, %v6095
      %v6097 = vrot.slane %v5800, 1
      %v6098 = vsel %vm2222, %v6095, %v6097
      %v6099 = vrot.slane %v5801, 1
      %v6100 = vsel %vm2222, %v6097, %v6099
      %v6101 = vrot.slane %v5802, 1
      %v6102 = vsel %vm2222, %v6099, %v6101
      %v6103 = vrot.slane %v5803, 1
      %v6104 = vsel %vm2222, %v6101, %v6103
      %v6105 = vrot.slane %v5804, 1
      %v6106 = vsel %vm2222, %v6103, %v6105
      %v6107 = vrot.slane %v5805, 1
      %v6108 = vsel %vm2222, %v6105, %v6107
      %v6109 = vrot.slane %v5806, 1
      %v6110 = vsel %vm2222, %v6107, %v6109
      %v6111 = vrot.slane %v5807, 1
      %v6112 = vsel %vm2222, %v6109, %v6111
      %v6113 = vrot.slane %v5808, 1
      %v6114 = vsel %vm2222, %v6111, %v6113
      %v6115 = vrot.slane %v5809, 1
      %v6116 = vsel %vm2222, %v6113, %v6115
      %v6117 = vrot.slane %v5810, 1
      %v6118 = vsel %vm2222, %v6115, %v6117
      %v6119 = vrot.slane %v5811, 1
      %v6120 = vsel %vm2222, %v6117, %v6119
      %v6121 = vrot.slane %v5812, 1
      %v6122 = vsel %vm2222, %v6119, %v6121
      %v6123 = vrot.slane %v5813, 1
      %v6124 = vsel %vm2222, %v6121, %v6123
      %v6125 = vrot.slane %v5814, 1
      %v6126 = vsel %vm2222, %v6123, %v6125
      %v6128 = vshrl.u32 %v5849, 16
      %v6130 = vshll.u32 %v5849, 16
      %v6132 = vrot.slane %v6130, 1
      %v6133 = vor.u32 %v6128, %v6132
      %v6135 = vshll.u32 %v5816, 16
      %v6137 = vrot.slane %v6135, 1
      %v6138 = vsel %vm2069, %v6133, %v6137
      %v6139 = vshrl.u32 %v5816, 16
      %v6141 = vor.u32 %v6139, %v6137
      %v6143 = vshll.u32 %v5817, 16
      %v6145 = vrot.slane %v6143, 1
      %v6146 = vsel %vm2069, %v6141, %v6145
      %v6147 = vshrl.u32 %v5817, 16
      %v6149 = vor.u32 %v6147, %v6145
      %v6151 = vshll.u32 %v5818, 16
      %v6153 = vrot.slane %v6151, 1
      %v6154 = vsel %vm2069, %v6149, %v6153
      %v6155 = vshrl.u32 %v5818, 16
      %v6157 = vor.u32 %v6155, %v6153
      %v6159 = vshll.u32 %v5819, 16
      %v6161 = vrot.slane %v6159, 1
      %v6162 = vsel %vm2069, %v6157, %v6161
      %v6163 = vshrl.u32 %v5819, 16
      %v6165 = vor.u32 %v6163, %v6161
      %v6167 = vshll.u32 %v5820, 16
      %v6169 = vrot.slane %v6167, 1
      %v6170 = vsel %vm2069, %v6165, %v6169
      %v6171 = vshrl.u32 %v5820, 16
      %v6173 = vor.u32 %v6171, %v6169
      %v6175 = vshll.u32 %v5821, 16
      %v6177 = vrot.slane %v6175, 1
      %v6178 = vsel %vm2069, %v6173, %v6177
      %v6179 = vshrl.u32 %v5821, 16
      %v6181 = vor.u32 %v6179, %v6177
      %v6183 = vshll.u32 %v5822, 16
      %v6185 = vrot.slane %v6183, 1
      %v6186 = vsel %vm2069, %v6181, %v6185
      %v6187 = vshrl.u32 %v5822, 16
      %v6189 = vor.u32 %v6187, %v6185
      %v6191 = vshll.u32 %v5823, 16
      %v6193 = vrot.slane %v6191, 1
      %v6194 = vsel %vm2069, %v6189, %v6193
      %v6195 = vshrl.u32 %v5823, 16
      %v6197 = vor.u32 %v6195, %v6193
      %v6199 = vshll.u32 %v5824, 16
      %v6201 = vrot.slane %v6199, 1
      %v6202 = vsel %vm2069, %v6197, %v6201
      %v6203 = vshrl.u32 %v5824, 16
      %v6205 = vor.u32 %v6203, %v6201
      %v6207 = vshll.u32 %v5825, 16
      %v6209 = vrot.slane %v6207, 1
      %v6210 = vsel %vm2069, %v6205, %v6209
      %v6211 = vshrl.u32 %v5825, 16
      %v6213 = vor.u32 %v6211, %v6209
      %v6215 = vshll.u32 %v5826, 16
      %v6217 = vrot.slane %v6215, 1
      %v6218 = vsel %vm2069, %v6213, %v6217
      %v6219 = vshrl.u32 %v5826, 16
      %v6221 = vor.u32 %v6219, %v6217
      %v6223 = vshll.u32 %v5827, 16
      %v6225 = vrot.slane %v6223, 1
      %v6226 = vsel %vm2069, %v6221, %v6225
      %v6227 = vshrl.u32 %v5827, 16
      %v6229 = vor.u32 %v6227, %v6225
      %v6231 = vshll.u32 %v5828, 16
      %v6233 = vrot.slane %v6231, 1
      %v6234 = vsel %vm2069, %v6229, %v6233
      %v6235 = vshrl.u32 %v5828, 16
      %v6237 = vor.u32 %v6235, %v6233
      %v6239 = vshll.u32 %v5829, 16
      %v6241 = vrot.slane %v6239, 1
      %v6242 = vsel %vm2069, %v6237, %v6241
      %v6243 = vshrl.u32 %v5829, 16
      %v6245 = vor.u32 %v6243, %v6241
      %v6247 = vshll.u32 %v5830, 16
      %v6249 = vrot.slane %v6247, 1
      %v6250 = vsel %vm2069, %v6245, %v6249
      %v6251 = vshrl.u32 %v5830, 16
      %v6253 = vor.u32 %v6251, %v6249
      %v6255 = vshll.u32 %v5831, 16
      %v6257 = vrot.slane %v6255, 1
      %v6258 = vsel %vm2069, %v6253, %v6257
      %v6259 = vshrl.u32 %v5831, 16
      %v6261 = vor.u32 %v6259, %v6257
      %v6279 = vrot.slane %v5851, 1
      %v6280 = vrot.slane %v5852, 1
      %v6281 = vsel %vm2222, %v6279, %v6280
      %v6282 = vrot.slane %v5853, 1
      %v6283 = vsel %vm2222, %v6280, %v6282
      %v6284 = vrot.slane %v5854, 1
      %v6285 = vsel %vm2222, %v6282, %v6284
      %v6286 = vrot.slane %v5855, 1
      %v6287 = vsel %vm2222, %v6284, %v6286
      %v6288 = vrot.slane %v5856, 1
      %v6289 = vsel %vm2222, %v6286, %v6288
      %v6290 = vrot.slane %v5857, 1
      %v6291 = vsel %vm2222, %v6288, %v6290
      %v6292 = vrot.slane %v5858, 1
      %v6293 = vsel %vm2222, %v6290, %v6292
      %v6294 = vrot.slane %v5859, 1
      %v6295 = vsel %vm2222, %v6292, %v6294
      %v6296 = vrot.slane %v5860, 1
      %v6297 = vsel %vm2222, %v6294, %v6296
      %v6298 = vrot.slane %v5861, 1
      %v6299 = vsel %vm2222, %v6296, %v6298
      %v6300 = vrot.slane %v5862, 1
      %v6301 = vsel %vm2222, %v6298, %v6300
      %v6302 = vrot.slane %v5863, 1
      %v6303 = vsel %vm2222, %v6300, %v6302
      %v6304 = vrot.slane %v5864, 1
      %v6305 = vsel %vm2222, %v6302, %v6304
      %v6306 = vrot.slane %v5865, 1
      %v6307 = vsel %vm2222, %v6304, %v6306
      %v6308 = vrot.slane %v5866, 1
      %v6309 = vsel %vm2222, %v6306, %v6308
      %v6310 = vrot.slane %v5867, 1
      %v6311 = vsel %vm2222, %v6308, %v6310
      %v6312 = vld [vmem:[%s5] sm:$0xf]
      %v6313 = vld [vmem:[%s5 + $0x4] sm:$0xf]
      %v6314 = vld [vmem:[%s5 + $0x8] sm:$0xf]
      %v6315 = vld [vmem:[%s5 + $0xc] sm:$0xf]
      %v6316 = vld [vmem:[%s5 + $0x10] sm:$0xf]
      %v6317 = vld [vmem:[%s5 + $0x14] sm:$0xf]
      %v6318 = vld [vmem:[%s5 + $0x18] sm:$0xf]
      %v6319 = vld [vmem:[%s5 + $0x1c] sm:$0xf]
      %v6320 = vld [vmem:[%s5 + $0x20] sm:$0xf]
      %v6321 = vld [vmem:[%s5 + $0x24] sm:$0xf]
      %v6322 = vld [vmem:[%s5 + $0x28] sm:$0xf]
      %v6323 = vld [vmem:[%s5 + $0x2c] sm:$0xf]
      %v6324 = vld [vmem:[%s5 + $0x30] sm:$0xf]
      %v6325 = vld [vmem:[%s5 + $0x34] sm:$0xf]
      %v6326 = vld [vmem:[%s5 + $0x38] sm:$0xf]
      %v6327 = vld [vmem:[%s5 + $0x3c] sm:$0xf]
      %v6328 = vld [vmem:[%s5 + $0x40] sm:$0xf]
      %v6329 = vld [vmem:[%s5 + $0x44] sm:$0xf]
      %v6330 = vld [vmem:[%s5 + $0x48] sm:$0xf]
      %v6331 = vld [vmem:[%s5 + $0x4c] sm:$0xf]
      %v6332 = vld [vmem:[%s5 + $0x50] sm:$0xf]
      %v6333 = vld [vmem:[%s5 + $0x54] sm:$0xf]
      %v6334 = vld [vmem:[%s5 + $0x58] sm:$0xf]
      %v6335 = vld [vmem:[%s5 + $0x5c] sm:$0xf]
      %v6336 = vld [vmem:[%s5 + $0x60] sm:$0xf]
      %v6337 = vld [vmem:[%s5 + $0x64] sm:$0xf]
      %v6338 = vld [vmem:[%s5 + $0x68] sm:$0xf]
      %v6339 = vld [vmem:[%s5 + $0x6c] sm:$0xf]
      %v6340 = vld [vmem:[%s5 + $0x70] sm:$0xf]
      %v6341 = vld [vmem:[%s5 + $0x74] sm:$0xf]
      %v6342 = vld [vmem:[%s5 + $0x78] sm:$0xf]
      %v6343 = vld [vmem:[%s5 + $0x7c] sm:$0xf]
      %v6344 = vld [vmem:[%s5 + $0x80] sm:$0xf]
      %v6345 = vld [vmem:[%s5 + $0x84] sm:$0xf]
      %v6346 = vld [vmem:[%s5 + $0x88] sm:$0xf]
      %v6347 = vld [vmem:[%s5 + $0x8c] sm:$0xf]
      %v6348 = vld [vmem:[%s5 + $0x90] sm:$0xf]
      %v6349 = vld [vmem:[%s5 + $0x94] sm:$0xf]
      %v6350 = vld [vmem:[%s5 + $0x98] sm:$0xf]
      %v6351 = vld [vmem:[%s5 + $0x9c] sm:$0xf]
      %v6352 = vld [vmem:[%s5 + $0xa0] sm:$0xf]
      %v6353 = vld [vmem:[%s5 + $0xa4] sm:$0xf]
      %v6354 = vld [vmem:[%s5 + $0xa8] sm:$0xf]
      %v6355 = vld [vmem:[%s5 + $0xac] sm:$0xf]
      %v6356 = vld [vmem:[%s5 + $0xb0] sm:$0xf]
      %v6357 = vld [vmem:[%s5 + $0xb4] sm:$0xf]
      %v6358 = vld [vmem:[%s5 + $0xb8] sm:$0xf]
      %v6359 = vld [vmem:[%s5 + $0xbc] sm:$0xf]
      %v6360 = vld [vmem:[%s5 + $0xc0] sm:$0xf]
      %v6361 = vld [vmem:[%s5 + $0xc4] sm:$0xf]
      %v6362 = vld [vmem:[%s5 + $0xc8] sm:$0xf]
      %v6363 = vld [vmem:[%s5 + $0xcc] sm:$0xf]
      %v6364 = vld [vmem:[%s5 + $0xd0] sm:$0xf]
      %v6365 = vld [vmem:[%s5 + $0xd4] sm:$0xf]
      %v6366 = vld [vmem:[%s5 + $0xd8] sm:$0xf]
      %v6367 = vld [vmem:[%s5 + $0xdc] sm:$0xf]
      %v6368 = vld [vmem:[%s5 + $0xe0] sm:$0xf]
      %v6369 = vld [vmem:[%s5 + $0xe4] sm:$0xf]
      %v6370 = vld [vmem:[%s5 + $0xe8] sm:$0xf]
      %v6371 = vld [vmem:[%s5 + $0xec] sm:$0xf]
      %v6372 = vld [vmem:[%s5 + $0xf0] sm:$0xf]
      %v6373 = vld [vmem:[%s5 + $0xf4] sm:$0xf]
      %v6374 = vld [vmem:[%s5 + $0xf8] sm:$0xf]
      %v6375 = vld [vmem:[%s5 + $0xfc] sm:$0xf]
      %v6376 = vld [vmem:[%s5 + $0x100] sm:$0xf]
      %v6377 = vld [vmem:[%s5 + $0x104] sm:$0xf]
      %v6378 = vld [vmem:[%s5 + $0x108] sm:$0xf]
      %v6379 = vld [vmem:[%s5 + $0x10c] sm:$0xf]
      %v6380 = vld [vmem:[%s5 + $0x110] sm:$0xf]
      %v6381 = vld [vmem:[%s5 + $0x114] sm:$0xf]
      %v6382 = vld [vmem:[%s5 + $0x118] sm:$0xf]
      %v6383 = vld [vmem:[%s5 + $0x11c] sm:$0xf]
      %v6384 = vld [vmem:[%s5 + $0x120] sm:$0xf]
      %v6385 = vld [vmem:[%s5 + $0x124] sm:$0xf]
      %v6386 = vld [vmem:[%s5 + $0x128] sm:$0xf]
      %v6387 = vld [vmem:[%s5 + $0x12c] sm:$0xf]
      %v6388 = vld [vmem:[%s5 + $0x130] sm:$0xf]
      %v6389 = vld [vmem:[%s5 + $0x134] sm:$0xf]
      %v6390 = vld [vmem:[%s5 + $0x138] sm:$0xf]
      %v6391 = vld [vmem:[%s5 + $0x13c] sm:$0xf]
      %v6392 = vld [vmem:[%s5 + $0x140] sm:$0xf]
      %v6393 = vld [vmem:[%s5 + $0x144] sm:$0xf]
      %v6394 = vld [vmem:[%s5 + $0x148] sm:$0xf]
      %v6395 = vld [vmem:[%s5 + $0x14c] sm:$0xf]
      %v6396 = vld [vmem:[%s5 + $0x150] sm:$0xf]
      %v6397 = vld [vmem:[%s5 + $0x154] sm:$0xf]
      %v6398 = vld [vmem:[%s5 + $0x158] sm:$0xf]
      %v6399 = vld [vmem:[%s5 + $0x15c] sm:$0xf]
      %v6400 = vld [vmem:[%s5 + $0x160] sm:$0xf]
      %v6401 = vld [vmem:[%s5 + $0x164] sm:$0xf]
      %v6402 = vld [vmem:[%s5 + $0x168] sm:$0xf]
      %v6403 = vld [vmem:[%s5 + $0x16c] sm:$0xf]
      %v6404 = vld [vmem:[%s5 + $0x170] sm:$0xf]
      %v6405 = vld [vmem:[%s5 + $0x174] sm:$0xf]
      %v6406 = vld [vmem:[%s5 + $0x178] sm:$0xf]
      %v6407 = vld [vmem:[%s5 + $0x17c] sm:$0xf]
      %v6408 = vld [vmem:[%s5 + $0x180] sm:$0xf]
      %v6409 = vld [vmem:[%s5 + $0x184] sm:$0xf]
      %v6410 = vld [vmem:[%s5 + $0x188] sm:$0xf]
      %v6411 = vld [vmem:[%s5 + $0x18c] sm:$0xf]
      %v6412 = vld [vmem:[%s5 + $0x190] sm:$0xf]
      %v6413 = vld [vmem:[%s5 + $0x194] sm:$0xf]
      %v6414 = vld [vmem:[%s5 + $0x198] sm:$0xf]
      %v6415 = vld [vmem:[%s5 + $0x19c] sm:$0xf]
      %v6416 = vld [vmem:[%s5 + $0x1a0] sm:$0xf]
      %v6417 = vld [vmem:[%s5 + $0x1a4] sm:$0xf]
      %v6418 = vld [vmem:[%s5 + $0x1a8] sm:$0xf]
      %v6419 = vld [vmem:[%s5 + $0x1ac] sm:$0xf]
      %v6420 = vld [vmem:[%s5 + $0x1b0] sm:$0xf]
      %v6421 = vld [vmem:[%s5 + $0x1b4] sm:$0xf]
      %v6422 = vld [vmem:[%s5 + $0x1b8] sm:$0xf]
      %v6423 = vld [vmem:[%s5 + $0x1bc] sm:$0xf]
      %v6424 = vld [vmem:[%s5 + $0x1c0] sm:$0xf]
      %v6425 = vld [vmem:[%s5 + $0x1c4] sm:$0xf]
      %v6426 = vld [vmem:[%s5 + $0x1c8] sm:$0xf]
      %v6427 = vld [vmem:[%s5 + $0x1cc] sm:$0xf]
      %v6428 = vld [vmem:[%s5 + $0x1d0] sm:$0xf]
      %v6429 = vld [vmem:[%s5 + $0x1d4] sm:$0xf]
      %v6430 = vld [vmem:[%s5 + $0x1d8] sm:$0xf]
      %v6431 = vld [vmem:[%s5 + $0x1dc] sm:$0xf]
      %v6432 = vld [vmem:[%s5 + $0x1e0] sm:$0xf]
      %v6433 = vld [vmem:[%s5 + $0x1e4] sm:$0xf]
      %v6434 = vld [vmem:[%s5 + $0x1e8] sm:$0xf]
      %v6435 = vld [vmem:[%s5 + $0x1ec] sm:$0xf]
      %v6436 = vld [vmem:[%s5 + $0x1f0] sm:$0xf]
      %v6437 = vld [vmem:[%s5 + $0x1f4] sm:$0xf]
      %v6438 = vld [vmem:[%s5 + $0x1f8] sm:$0xf]
      %v6439 = vld [vmem:[%s5 + $0x1fc] sm:$0xf]
      %v6440 = vld [vmem:[%s5 + $0x200] sm:$0xf]
      %v6441 = vld [vmem:[%s5 + $0x204] sm:$0xf]
      %v6442 = vld [vmem:[%s5 + $0x208] sm:$0xf]
      %v6443 = vld [vmem:[%s5 + $0x20c] sm:$0xf]
      %v6444 = vld [vmem:[%s5 + $0x210] sm:$0xf]
      %v6445 = vld [vmem:[%s5 + $0x214] sm:$0xf]
      %v6446 = vld [vmem:[%s5 + $0x218] sm:$0xf]
      %v6447 = vld [vmem:[%s5 + $0x21c] sm:$0xf]
      %v6448 = vld [vmem:[%s5 + $0x220] sm:$0xf]
      %v6449 = vld [vmem:[%s5 + $0x224] sm:$0xf]
      %v6450 = vld [vmem:[%s5 + $0x228] sm:$0xf]
      %v6451 = vld [vmem:[%s5 + $0x22c] sm:$0xf]
      %v6452 = vld [vmem:[%s5 + $0x230] sm:$0xf]
      %v6453 = vld [vmem:[%s5 + $0x234] sm:$0xf]
      %v6454 = vld [vmem:[%s5 + $0x238] sm:$0xf]
      %v6455 = vld [vmem:[%s5 + $0x23c] sm:$0xf]
      %v6456 = vld [vmem:[%s6] sm:$0x1]
      %v6458 = vlaneseq
      %v6459 = vshrl.u32 %v6458, 7
      %v6460 = vsub.s32 0, %v6459
      %v6461 = vrot.slane %v6456, %v6460
      %v6464 = vshrl.u32 %v5740, 16
      %v6466 = vrot.slane %v6464, 3
      %v6467 = vshll.u32 %v5740, 16
      %v6469 = vrot.slane %v6467, 4
      %v6470 = vor.u32 %v6466, %v6469
      %v6472 = vshrl.u32 %v5741, 16
      %v6474 = vrot.slane %v6472, 3
      %v6475 = vshll.u32 %v5741, 16
      %v6477 = vrot.slane %v6475, 4
      %v6478 = vor.u32 %v6474, %v6477
      %v6479 = vsel %vm1785, %v6470, %v6478
      %v6481 = vshrl.u32 %v5879, 16
      %v6483 = vrot.slane %v6481, 3
      %v6484 = vshll.u32 %v5879, 16
      %v6486 = vrot.slane %v6484, 4
      %v6487 = vor.u32 %v6483, %v6486
      %v6489 = vshrl.u32 %v5887, 16
      %v6491 = vrot.slane %v6489, 3
      %v6492 = vshll.u32 %v5887, 16
      %v6494 = vrot.slane %v6492, 4
      %v6495 = vor.u32 %v6491, %v6494
      %v6496 = vsel %vm1785, %v6487, %v6495
      %v6498 = vshrl.u32 %v6022, 16
      %v6500 = vrot.slane %v6498, 3
      %v6501 = vshll.u32 %v6022, 16
      %v6503 = vrot.slane %v6501, 4
      %v6504 = vor.u32 %v6500, %v6503
      %v6506 = vshrl.u32 %v6024, 16
      %v6508 = vrot.slane %v6506, 3
      %v6509 = vshll.u32 %v6024, 16
      %v6511 = vrot.slane %v6509, 4
      %v6512 = vor.u32 %v6508, %v6511
      %v6513 = vsel %vm1785, %v6504, %v6512
      %v6515 = vshrl.u32 %v5779, 16
      %v6517 = vrot.slane %v6515, 3
      %v6518 = vshll.u32 %v5779, 16
      %v6520 = vrot.slane %v6518, 4
      %v6521 = vor.u32 %v6517, %v6520
      %v6523 = vshrl.u32 %v5780, 16
      %v6525 = vrot.slane %v6523, 3
      %v6526 = vshll.u32 %v5780, 16
      %v6528 = vrot.slane %v6526, 4
      %v6529 = vor.u32 %v6525, %v6528
      %v6530 = vsel %vm1785, %v6521, %v6529
      %v6532 = vshrl.u32 %v6060, 16
      %v6534 = vrot.slane %v6532, 3
      %v6535 = vshll.u32 %v6060, 16
      %v6537 = vrot.slane %v6535, 4
      %v6538 = vor.u32 %v6534, %v6537
      %v6540 = vshrl.u32 %v5895, 16
      %v6542 = vrot.slane %v6540, 3
      %v6543 = vshll.u32 %v5895, 16
      %v6545 = vrot.slane %v6543, 4
      %v6546 = vor.u32 %v6542, %v6545
      %v6547 = vsel %vm1785, %v6538, %v6546
      %v6549 = vshrl.u32 %v6096, 16
      %v6551 = vrot.slane %v6549, 3
      %v6552 = vshll.u32 %v6096, 16
      %v6554 = vrot.slane %v6552, 4
      %v6555 = vor.u32 %v6551, %v6554
      %v6557 = vshrl.u32 %v6098, 16
      %v6559 = vrot.slane %v6557, 3
      %v6560 = vshll.u32 %v6098, 16
      %v6562 = vrot.slane %v6560, 4
      %v6563 = vor.u32 %v6559, %v6562
      %v6564 = vsel %vm1785, %v6555, %v6563
      %v6566 = vshrl.u32 %v5832, 16
      %v6568 = vrot.slane %v6566, 3
      %v6569 = vshll.u32 %v5832, 16
      %v6571 = vrot.slane %v6569, 4
      %v6572 = vor.u32 %v6568, %v6571
      %v6574 = vshrl.u32 %v5833, 16
      %v6576 = vrot.slane %v6574, 3
      %v6577 = vshll.u32 %v5833, 16
      %v6579 = vrot.slane %v6577, 4
      %v6580 = vor.u32 %v6576, %v6579
      %v6581 = vsel %vm1785, %v6572, %v6580
      %v6583 = vshrl.u32 %v6138, 16
      %v6585 = vrot.slane %v6583, 3
      %v6586 = vshll.u32 %v6138, 16
      %v6588 = vrot.slane %v6586, 4
      %v6589 = vor.u32 %v6585, %v6588
      %v6591 = vshrl.u32 %v6146, 16
      %v6593 = vrot.slane %v6591, 3
      %v6594 = vshll.u32 %v6146, 16
      %v6596 = vrot.slane %v6594, 4
      %v6597 = vor.u32 %v6593, %v6596
      %v6598 = vsel %vm1785, %v6589, %v6597
      %v6600 = vshrl.u32 %v6281, 16
      %v6602 = vrot.slane %v6600, 3
      %v6603 = vshll.u32 %v6281, 16
      %v6605 = vrot.slane %v6603, 4
      %v6606 = vor.u32 %v6602, %v6605
      %v6608 = vshrl.u32 %v6283, 16
      %v6610 = vrot.slane %v6608, 3
      %v6611 = vshll.u32 %v6283, 16
      %v6613 = vrot.slane %v6611, 4
      %v6614 = vor.u32 %v6610, %v6613
      %v6615 = vsel %vm1785, %v6606, %v6614
      %v6617 = vshrl.u32 %v5742, 16
      %v6619 = vrot.slane %v6617, 3
      %v6620 = vshll.u32 %v5742, 16
      %v6622 = vrot.slane %v6620, 4
      %v6623 = vor.u32 %v6619, %v6622
      %v6624 = vsel %vm1785, %v6478, %v6623
      %v6625 = vsel %vm1785, %v6495, %v6546
      %v6627 = vshrl.u32 %v6026, 16
      %v6629 = vrot.slane %v6627, 3
      %v6630 = vshll.u32 %v6026, 16
      %v6632 = vrot.slane %v6630, 4
      %v6633 = vor.u32 %v6629, %v6632
      %v6634 = vsel %vm1785, %v6512, %v6633
      %v6636 = vshrl.u32 %v5781, 16
      %v6638 = vrot.slane %v6636, 3
      %v6639 = vshll.u32 %v5781, 16
      %v6641 = vrot.slane %v6639, 4
      %v6642 = vor.u32 %v6638, %v6641
      %v6643 = vsel %vm1785, %v6529, %v6642
      %v6645 = vshrl.u32 %v5903, 16
      %v6647 = vrot.slane %v6645, 3
      %v6648 = vshll.u32 %v5903, 16
      %v6650 = vrot.slane %v6648, 4
      %v6651 = vor.u32 %v6647, %v6650
      %v6652 = vsel %vm1785, %v6546, %v6651
      %v6654 = vshrl.u32 %v6100, 16
      %v6656 = vrot.slane %v6654, 3
      %v6657 = vshll.u32 %v6100, 16
      %v6659 = vrot.slane %v6657, 4
      %v6660 = vor.u32 %v6656, %v6659
      %v6661 = vsel %vm1785, %v6563, %v6660
      %v6663 = vshrl.u32 %v5834, 16
      %v6665 = vrot.slane %v6663, 3
      %v6666 = vshll.u32 %v5834, 16
      %v6668 = vrot.slane %v6666, 4
      %v6669 = vor.u32 %v6665, %v6668
      %v6670 = vsel %vm1785, %v6580, %v6669
      %v6672 = vshrl.u32 %v6154, 16
      %v6674 = vrot.slane %v6672, 3
      %v6675 = vshll.u32 %v6154, 16
      %v6677 = vrot.slane %v6675, 4
      %v6678 = vor.u32 %v6674, %v6677
      %v6679 = vsel %vm1785, %v6597, %v6678
      %v6681 = vshrl.u32 %v6285, 16
      %v6683 = vrot.slane %v6681, 3
      %v6684 = vshll.u32 %v6285, 16
      %v6686 = vrot.slane %v6684, 4
      %v6687 = vor.u32 %v6683, %v6686
      %v6688 = vsel %vm1785, %v6614, %v6687
      %v6690 = vshrl.u32 %v5743, 16
      %v6692 = vrot.slane %v6690, 3
      %v6693 = vshll.u32 %v5743, 16
      %v6695 = vrot.slane %v6693, 4
      %v6696 = vor.u32 %v6692, %v6695
      %v6697 = vsel %vm1785, %v6623, %v6696
      %v6699 = vshrl.u32 %v6028, 16
      %v6701 = vrot.slane %v6699, 3
      %v6702 = vshll.u32 %v6028, 16
      %v6704 = vrot.slane %v6702, 4
      %v6705 = vor.u32 %v6701, %v6704
      %v6706 = vsel %vm1785, %v6633, %v6705
      %v6708 = vshrl.u32 %v5782, 16
      %v6710 = vrot.slane %v6708, 3
      %v6711 = vshll.u32 %v5782, 16
      %v6713 = vrot.slane %v6711, 4
      %v6714 = vor.u32 %v6710, %v6713
      %v6715 = vsel %vm1785, %v6642, %v6714
      %v6717 = vshrl.u32 %v5911, 16
      %v6719 = vrot.slane %v6717, 3
      %v6720 = vshll.u32 %v5911, 16
      %v6722 = vrot.slane %v6720, 4
      %v6723 = vor.u32 %v6719, %v6722
      %v6724 = vsel %vm1785, %v6651, %v6723
      %v6726 = vshrl.u32 %v6102, 16
      %v6728 = vrot.slane %v6726, 3
      %v6729 = vshll.u32 %v6102, 16
      %v6731 = vrot.slane %v6729, 4
      %v6732 = vor.u32 %v6728, %v6731
      %v6733 = vsel %vm1785, %v6660, %v6732
      %v6735 = vshrl.u32 %v5835, 16
      %v6737 = vrot.slane %v6735, 3
      %v6738 = vshll.u32 %v5835, 16
      %v6740 = vrot.slane %v6738, 4
      %v6741 = vor.u32 %v6737, %v6740
      %v6742 = vsel %vm1785, %v6669, %v6741
      %v6744 = vshrl.u32 %v6162, 16
      %v6746 = vrot.slane %v6744, 3
      %v6747 = vshll.u32 %v6162, 16
      %v6749 = vrot.slane %v6747, 4
      %v6750 = vor.u32 %v6746, %v6749
      %v6751 = vsel %vm1785, %v6678, %v6750
      %v6753 = vshrl.u32 %v6287, 16
      %v6755 = vrot.slane %v6753, 3
      %v6756 = vshll.u32 %v6287, 16
      %v6758 = vrot.slane %v6756, 4
      %v6759 = vor.u32 %v6755, %v6758
      %v6760 = vsel %vm1785, %v6687, %v6759
      %v6762 = vshrl.u32 %v5744, 16
      %v6764 = vrot.slane %v6762, 3
      %v6765 = vshll.u32 %v5744, 16
      %v6767 = vrot.slane %v6765, 4
      %v6768 = vor.u32 %v6764, %v6767
      %v6769 = vsel %vm1785, %v6696, %v6768
      %v6771 = vshrl.u32 %v6030, 16
      %v6773 = vrot.slane %v6771, 3
      %v6774 = vshll.u32 %v6030, 16
      %v6776 = vrot.slane %v6774, 4
      %v6777 = vor.u32 %v6773, %v6776
      %v6778 = vsel %vm1785, %v6705, %v6777
      %v6780 = vshrl.u32 %v5783, 16
      %v6782 = vrot.slane %v6780, 3
      %v6783 = vshll.u32 %v5783, 16
      %v6785 = vrot.slane %v6783, 4
      %v6786 = vor.u32 %v6782, %v6785
      %v6787 = vsel %vm1785, %v6714, %v6786
      %v6789 = vshrl.u32 %v5919, 16
      %v6791 = vrot.slane %v6789, 3
      %v6792 = vshll.u32 %v5919, 16
      %v6794 = vrot.slane %v6792, 4
      %v6795 = vor.u32 %v6791, %v6794
      %v6796 = vsel %vm1785, %v6723, %v6795
      %v6798 = vshrl.u32 %v6104, 16
      %v6800 = vrot.slane %v6798, 3
      %v6801 = vshll.u32 %v6104, 16
      %v6803 = vrot.slane %v6801, 4
      %v6804 = vor.u32 %v6800, %v6803
      %v6805 = vsel %vm1785, %v6732, %v6804
      %v6807 = vshrl.u32 %v5836, 16
      %v6809 = vrot.slane %v6807, 3
      %v6810 = vshll.u32 %v5836, 16
      %v6812 = vrot.slane %v6810, 4
      %v6813 = vor.u32 %v6809, %v6812
      %v6814 = vsel %vm1785, %v6741, %v6813
      %v6816 = vshrl.u32 %v6170, 16
      %v6818 = vrot.slane %v6816, 3
      %v6819 = vshll.u32 %v6170, 16
      %v6821 = vrot.slane %v6819, 4
      %v6822 = vor.u32 %v6818, %v6821
      %v6823 = vsel %vm1785, %v6750, %v6822
      %v6825 = vshrl.u32 %v6289, 16
      %v6827 = vrot.slane %v6825, 3
      %v6828 = vshll.u32 %v6289, 16
      %v6830 = vrot.slane %v6828, 4
      %v6831 = vor.u32 %v6827, %v6830
      %v6832 = vsel %vm1785, %v6759, %v6831
      %v6834 = vshrl.u32 %v5745, 16
      %v6836 = vrot.slane %v6834, 3
      %v6837 = vshll.u32 %v5745, 16
      %v6839 = vrot.slane %v6837, 4
      %v6840 = vor.u32 %v6836, %v6839
      %v6841 = vsel %vm1785, %v6768, %v6840
      %v6843 = vshrl.u32 %v6032, 16
      %v6845 = vrot.slane %v6843, 3
      %v6846 = vshll.u32 %v6032, 16
      %v6848 = vrot.slane %v6846, 4
      %v6849 = vor.u32 %v6845, %v6848
      %v6850 = vsel %vm1785, %v6777, %v6849
      %v6852 = vshrl.u32 %v5784, 16
      %v6854 = vrot.slane %v6852, 3
      %v6855 = vshll.u32 %v5784, 16
      %v6857 = vrot.slane %v6855, 4
      %v6858 = vor.u32 %v6854, %v6857
      %v6859 = vsel %vm1785, %v6786, %v6858
      %v6861 = vshrl.u32 %v5927, 16
      %v6863 = vrot.slane %v6861, 3
      %v6864 = vshll.u32 %v5927, 16
      %v6866 = vrot.slane %v6864, 4
      %v6867 = vor.u32 %v6863, %v6866
      %v6868 = vsel %vm1785, %v6795, %v6867
      %v6870 = vshrl.u32 %v6106, 16
      %v6872 = vrot.slane %v6870, 3
      %v6873 = vshll.u32 %v6106, 16
      %v6875 = vrot.slane %v6873, 4
      %v6876 = vor.u32 %v6872, %v6875
      %v6877 = vsel %vm1785, %v6804, %v6876
      %v6879 = vshrl.u32 %v5837, 16
      %v6881 = vrot.slane %v6879, 3
      %v6882 = vshll.u32 %v5837, 16
      %v6884 = vrot.slane %v6882, 4
      %v6885 = vor.u32 %v6881, %v6884
      %v6886 = vsel %vm1785, %v6813, %v6885
      %v6888 = vshrl.u32 %v6178, 16
      %v6890 = vrot.slane %v6888, 3
      %v6891 = vshll.u32 %v6178, 16
      %v6893 = vrot.slane %v6891, 4
      %v6894 = vor.u32 %v6890, %v6893
      %v6895 = vsel %vm1785, %v6822, %v6894
      %v6897 = vshrl.u32 %v6291, 16
      %v6899 = vrot.slane %v6897, 3
      %v6900 = vshll.u32 %v6291, 16
      %v6902 = vrot.slane %v6900, 4
      %v6903 = vor.u32 %v6899, %v6902
      %v6904 = vsel %vm1785, %v6831, %v6903
      %v6906 = vshrl.u32 %v5746, 16
      %v6908 = vrot.slane %v6906, 3
      %v6909 = vshll.u32 %v5746, 16
      %v6911 = vrot.slane %v6909, 4
      %v6912 = vor.u32 %v6908, %v6911
      %v6913 = vsel %vm1785, %v6840, %v6912
      %v6915 = vshrl.u32 %v6034, 16
      %v6917 = vrot.slane %v6915, 3
      %v6918 = vshll.u32 %v6034, 16
      %v6920 = vrot.slane %v6918, 4
      %v6921 = vor.u32 %v6917, %v6920
      %v6922 = vsel %vm1785, %v6849, %v6921
      %v6924 = vshrl.u32 %v5785, 16
      %v6926 = vrot.slane %v6924, 3
      %v6927 = vshll.u32 %v5785, 16
      %v6929 = vrot.slane %v6927, 4
      %v6930 = vor.u32 %v6926, %v6929
      %v6931 = vsel %vm1785, %v6858, %v6930
      %v6933 = vshrl.u32 %v5935, 16
      %v6935 = vrot.slane %v6933, 3
      %v6936 = vshll.u32 %v5935, 16
      %v6938 = vrot.slane %v6936, 4
      %v6939 = vor.u32 %v6935, %v6938
      %v6940 = vsel %vm1785, %v6867, %v6939
      %v6942 = vshrl.u32 %v6108, 16
      %v6944 = vrot.slane %v6942, 3
      %v6945 = vshll.u32 %v6108, 16
      %v6947 = vrot.slane %v6945, 4
      %v6948 = vor.u32 %v6944, %v6947
      %v6949 = vsel %vm1785, %v6876, %v6948
      %v6951 = vshrl.u32 %v5838, 16
      %v6953 = vrot.slane %v6951, 3
      %v6954 = vshll.u32 %v5838, 16
      %v6956 = vrot.slane %v6954, 4
      %v6957 = vor.u32 %v6953, %v6956
      %v6958 = vsel %vm1785, %v6885, %v6957
      %v6960 = vshrl.u32 %v6186, 16
      %v6962 = vrot.slane %v6960, 3
      %v6963 = vshll.u32 %v6186, 16
      %v6965 = vrot.slane %v6963, 4
      %v6966 = vor.u32 %v6962, %v6965
      %v6967 = vsel %vm1785, %v6894, %v6966
      %v6969 = vshrl.u32 %v6293, 16
      %v6971 = vrot.slane %v6969, 3
      %v6972 = vshll.u32 %v6293, 16
      %v6974 = vrot.slane %v6972, 4
      %v6975 = vor.u32 %v6971, %v6974
      %v6976 = vsel %vm1785, %v6903, %v6975
      %v6978 = vshrl.u32 %v5747, 16
      %v6980 = vrot.slane %v6978, 3
      %v6981 = vshll.u32 %v5747, 16
      %v6983 = vrot.slane %v6981, 4
      %v6984 = vor.u32 %v6980, %v6983
      %v6985 = vsel %vm1785, %v6912, %v6984
      %v6987 = vshrl.u32 %v6036, 16
      %v6989 = vrot.slane %v6987, 3
      %v6990 = vshll.u32 %v6036, 16
      %v6992 = vrot.slane %v6990, 4
      %v6993 = vor.u32 %v6989, %v6992
      %v6994 = vsel %vm1785, %v6921, %v6993
      %v6996 = vshrl.u32 %v5786, 16
      %v6998 = vrot.slane %v6996, 3
      %v6999 = vshll.u32 %v5786, 16
      %v7001 = vrot.slane %v6999, 4
      %v7002 = vor.u32 %v6998, %v7001
      %v7003 = vsel %vm1785, %v6930, %v7002
      %v7005 = vshrl.u32 %v5943, 16
      %v7007 = vrot.slane %v7005, 3
      %v7008 = vshll.u32 %v5943, 16
      %v7010 = vrot.slane %v7008, 4
      %v7011 = vor.u32 %v7007, %v7010
      %v7012 = vsel %vm1785, %v6939, %v7011
      %v7014 = vshrl.u32 %v6110, 16
      %v7016 = vrot.slane %v7014, 3
      %v7017 = vshll.u32 %v6110, 16
      %v7019 = vrot.slane %v7017, 4
      %v7020 = vor.u32 %v7016, %v7019
      %v7021 = vsel %vm1785, %v6948, %v7020
      %v7023 = vshrl.u32 %v5839, 16
      %v7025 = vrot.slane %v7023, 3
      %v7026 = vshll.u32 %v5839, 16
      %v7028 = vrot.slane %v7026, 4
      %v7029 = vor.u32 %v7025, %v7028
      %v7030 = vsel %vm1785, %v6957, %v7029
      %v7032 = vshrl.u32 %v6194, 16
      %v7034 = vrot.slane %v7032, 3
      %v7035 = vshll.u32 %v6194, 16
      %v7037 = vrot.slane %v7035, 4
      %v7038 = vor.u32 %v7034, %v7037
      %v7039 = vsel %vm1785, %v6966, %v7038
      %v7041 = vshrl.u32 %v6295, 16
      %v7043 = vrot.slane %v7041, 3
      %v7044 = vshll.u32 %v6295, 16
      %v7046 = vrot.slane %v7044, 4
      %v7047 = vor.u32 %v7043, %v7046
      %v7048 = vsel %vm1785, %v6975, %v7047
      %v7050 = vshrl.u32 %v5748, 16
      %v7052 = vrot.slane %v7050, 3
      %v7053 = vshll.u32 %v5748, 16
      %v7055 = vrot.slane %v7053, 4
      %v7056 = vor.u32 %v7052, %v7055
      %v7057 = vsel %vm1785, %v6984, %v7056
      %v7059 = vshrl.u32 %v6038, 16
      %v7061 = vrot.slane %v7059, 3
      %v7062 = vshll.u32 %v6038, 16
      %v7064 = vrot.slane %v7062, 4
      %v7065 = vor.u32 %v7061, %v7064
      %v7066 = vsel %vm1785, %v6993, %v7065
      %v7068 = vshrl.u32 %v5787, 16
      %v7070 = vrot.slane %v7068, 3
      %v7071 = vshll.u32 %v5787, 16
      %v7073 = vrot.slane %v7071, 4
      %v7074 = vor.u32 %v7070, %v7073
      %v7075 = vsel %vm1785, %v7002, %v7074
      %v7077 = vshrl.u32 %v5951, 16
      %v7079 = vrot.slane %v7077, 3
      %v7080 = vshll.u32 %v5951, 16
      %v7082 = vrot.slane %v7080, 4
      %v7083 = vor.u32 %v7079, %v7082
      %v7084 = vsel %vm1785, %v7011, %v7083
      %v7086 = vshrl.u32 %v6112, 16
      %v7088 = vrot.slane %v7086, 3
      %v7089 = vshll.u32 %v6112, 16
      %v7091 = vrot.slane %v7089, 4
      %v7092 = vor.u32 %v7088, %v7091
      %v7093 = vsel %vm1785, %v7020, %v7092
      %v7095 = vshrl.u32 %v5840, 16
      %v7097 = vrot.slane %v7095, 3
      %v7098 = vshll.u32 %v5840, 16
      %v7100 = vrot.slane %v7098, 4
      %v7101 = vor.u32 %v7097, %v7100
      %v7102 = vsel %vm1785, %v7029, %v7101
      %v7104 = vshrl.u32 %v6202, 16
      %v7106 = vrot.slane %v7104, 3
      %v7107 = vshll.u32 %v6202, 16
      %v7109 = vrot.slane %v7107, 4
      %v7110 = vor.u32 %v7106, %v7109
      %v7111 = vsel %vm1785, %v7038, %v7110
      %v7113 = vshrl.u32 %v6297, 16
      %v7115 = vrot.slane %v7113, 3
      %v7116 = vshll.u32 %v6297, 16
      %v7118 = vrot.slane %v7116, 4
      %v7119 = vor.u32 %v7115, %v7118
      %v7120 = vsel %vm1785, %v7047, %v7119
      %v7122 = vshrl.u32 %v5749, 16
      %v7124 = vrot.slane %v7122, 3
      %v7125 = vshll.u32 %v5749, 16
      %v7127 = vrot.slane %v7125, 4
      %v7128 = vor.u32 %v7124, %v7127
      %v7129 = vsel %vm1785, %v7056, %v7128
      %v7131 = vshrl.u32 %v6040, 16
      %v7133 = vrot.slane %v7131, 3
      %v7134 = vshll.u32 %v6040, 16
      %v7136 = vrot.slane %v7134, 4
      %v7137 = vor.u32 %v7133, %v7136
      %v7138 = vsel %vm1785, %v7065, %v7137
      %v7140 = vshrl.u32 %v5788, 16
      %v7142 = vrot.slane %v7140, 3
      %v7143 = vshll.u32 %v5788, 16
      %v7145 = vrot.slane %v7143, 4
      %v7146 = vor.u32 %v7142, %v7145
      %v7147 = vsel %vm1785, %v7074, %v7146
      %v7149 = vshrl.u32 %v5959, 16
      %v7151 = vrot.slane %v7149, 3
      %v7152 = vshll.u32 %v5959, 16
      %v7154 = vrot.slane %v7152, 4
      %v7155 = vor.u32 %v7151, %v7154
      %v7156 = vsel %vm1785, %v7083, %v7155
      %v7158 = vshrl.u32 %v6114, 16
      %v7160 = vrot.slane %v7158, 3
      %v7161 = vshll.u32 %v6114, 16
      %v7163 = vrot.slane %v7161, 4
      %v7164 = vor.u32 %v7160, %v7163
      %v7165 = vsel %vm1785, %v7092, %v7164
      %v7167 = vshrl.u32 %v5841, 16
      %v7169 = vrot.slane %v7167, 3
      %v7170 = vshll.u32 %v5841, 16
      %v7172 = vrot.slane %v7170, 4
      %v7173 = vor.u32 %v7169, %v7172
      %v7174 = vsel %vm1785, %v7101, %v7173
      %v7176 = vshrl.u32 %v6210, 16
      %v7178 = vrot.slane %v7176, 3
      %v7179 = vshll.u32 %v6210, 16
      %v7181 = vrot.slane %v7179, 4
      %v7182 = vor.u32 %v7178, %v7181
      %v7183 = vsel %vm1785, %v7110, %v7182
      %v7185 = vshrl.u32 %v6299, 16
      %v7187 = vrot.slane %v7185, 3
      %v7188 = vshll.u32 %v6299, 16
      %v7190 = vrot.slane %v7188, 4
      %v7191 = vor.u32 %v7187, %v7190
      %v7192 = vsel %vm1785, %v7119, %v7191
      %v7194 = vshrl.u32 %v5750, 16
      %v7196 = vrot.slane %v7194, 3
      %v7197 = vshll.u32 %v5750, 16
      %v7199 = vrot.slane %v7197, 4
      %v7200 = vor.u32 %v7196, %v7199
      %v7201 = vsel %vm1785, %v7128, %v7200
      %v7203 = vshrl.u32 %v6042, 16
      %v7205 = vrot.slane %v7203, 3
      %v7206 = vshll.u32 %v6042, 16
      %v7208 = vrot.slane %v7206, 4
      %v7209 = vor.u32 %v7205, %v7208
      %v7210 = vsel %vm1785, %v7137, %v7209
      %v7212 = vshrl.u32 %v5789, 16
      %v7214 = vrot.slane %v7212, 3
      %v7215 = vshll.u32 %v5789, 16
      %v7217 = vrot.slane %v7215, 4
      %v7218 = vor.u32 %v7214, %v7217
      %v7219 = vsel %vm1785, %v7146, %v7218
      %v7221 = vshrl.u32 %v5967, 16
      %v7223 = vrot.slane %v7221, 3
      %v7224 = vshll.u32 %v5967, 16
      %v7226 = vrot.slane %v7224, 4
      %v7227 = vor.u32 %v7223, %v7226
      %v7228 = vsel %vm1785, %v7155, %v7227
      %v7230 = vshrl.u32 %v6116, 16
      %v7232 = vrot.slane %v7230, 3
      %v7233 = vshll.u32 %v6116, 16
      %v7235 = vrot.slane %v7233, 4
      %v7236 = vor.u32 %v7232, %v7235
      %v7237 = vsel %vm1785, %v7164, %v7236
      %v7239 = vshrl.u32 %v5842, 16
      %v7241 = vrot.slane %v7239, 3
      %v7242 = vshll.u32 %v5842, 16
      %v7244 = vrot.slane %v7242, 4
      %v7245 = vor.u32 %v7241, %v7244
      %v7246 = vsel %vm1785, %v7173, %v7245
      %v7248 = vshrl.u32 %v6218, 16
      %v7250 = vrot.slane %v7248, 3
      %v7251 = vshll.u32 %v6218, 16
      %v7253 = vrot.slane %v7251, 4
      %v7254 = vor.u32 %v7250, %v7253
      %v7255 = vsel %vm1785, %v7182, %v7254
      %v7257 = vshrl.u32 %v6301, 16
      %v7259 = vrot.slane %v7257, 3
      %v7260 = vshll.u32 %v6301, 16
      %v7262 = vrot.slane %v7260, 4
      %v7263 = vor.u32 %v7259, %v7262
      %v7264 = vsel %vm1785, %v7191, %v7263
      %v7266 = vshrl.u32 %v5751, 16
      %v7268 = vrot.slane %v7266, 3
      %v7269 = vshll.u32 %v5751, 16
      %v7271 = vrot.slane %v7269, 4
      %v7272 = vor.u32 %v7268, %v7271
      %v7273 = vsel %vm1785, %v7200, %v7272
      %v7275 = vshrl.u32 %v6044, 16
      %v7277 = vrot.slane %v7275, 3
      %v7278 = vshll.u32 %v6044, 16
      %v7280 = vrot.slane %v7278, 4
      %v7281 = vor.u32 %v7277, %v7280
      %v7282 = vsel %vm1785, %v7209, %v7281
      %v7284 = vshrl.u32 %v5790, 16
      %v7286 = vrot.slane %v7284, 3
      %v7287 = vshll.u32 %v5790, 16
      %v7289 = vrot.slane %v7287, 4
      %v7290 = vor.u32 %v7286, %v7289
      %v7291 = vsel %vm1785, %v7218, %v7290
      %v7293 = vshrl.u32 %v5975, 16
      %v7295 = vrot.slane %v7293, 3
      %v7296 = vshll.u32 %v5975, 16
      %v7298 = vrot.slane %v7296, 4
      %v7299 = vor.u32 %v7295, %v7298
      %v7300 = vsel %vm1785, %v7227, %v7299
      %v7302 = vshrl.u32 %v6118, 16
      %v7304 = vrot.slane %v7302, 3
      %v7305 = vshll.u32 %v6118, 16
      %v7307 = vrot.slane %v7305, 4
      %v7308 = vor.u32 %v7304, %v7307
      %v7309 = vsel %vm1785, %v7236, %v7308
      %v7311 = vshrl.u32 %v5843, 16
      %v7313 = vrot.slane %v7311, 3
      %v7314 = vshll.u32 %v5843, 16
      %v7316 = vrot.slane %v7314, 4
      %v7317 = vor.u32 %v7313, %v7316
      %v7318 = vsel %vm1785, %v7245, %v7317
      %v7320 = vshrl.u32 %v6226, 16
      %v7322 = vrot.slane %v7320, 3
      %v7323 = vshll.u32 %v6226, 16
      %v7325 = vrot.slane %v7323, 4
      %v7326 = vor.u32 %v7322, %v7325
      %v7327 = vsel %vm1785, %v7254, %v7326
      %v7329 = vshrl.u32 %v6303, 16
      %v7331 = vrot.slane %v7329, 3
      %v7332 = vshll.u32 %v6303, 16
      %v7334 = vrot.slane %v7332, 4
      %v7335 = vor.u32 %v7331, %v7334
      %v7336 = vsel %vm1785, %v7263, %v7335
      %v7338 = vshrl.u32 %v5752, 16
      %v7340 = vrot.slane %v7338, 3
      %v7341 = vshll.u32 %v5752, 16
      %v7343 = vrot.slane %v7341, 4
      %v7344 = vor.u32 %v7340, %v7343
      %v7345 = vsel %vm1785, %v7272, %v7344
      %v7347 = vshrl.u32 %v6046, 16
      %v7349 = vrot.slane %v7347, 3
      %v7350 = vshll.u32 %v6046, 16
      %v7352 = vrot.slane %v7350, 4
      %v7353 = vor.u32 %v7349, %v7352
      %v7354 = vsel %vm1785, %v7281, %v7353
      %v7356 = vshrl.u32 %v5791, 16
      %v7358 = vrot.slane %v7356, 3
      %v7359 = vshll.u32 %v5791, 16
      %v7361 = vrot.slane %v7359, 4
      %v7362 = vor.u32 %v7358, %v7361
      %v7363 = vsel %vm1785, %v7290, %v7362
      %v7365 = vshrl.u32 %v5983, 16
      %v7367 = vrot.slane %v7365, 3
      %v7368 = vshll.u32 %v5983, 16
      %v7370 = vrot.slane %v7368, 4
      %v7371 = vor.u32 %v7367, %v7370
      %v7372 = vsel %vm1785, %v7299, %v7371
      %v7374 = vshrl.u32 %v6120, 16
      %v7376 = vrot.slane %v7374, 3
      %v7377 = vshll.u32 %v6120, 16
      %v7379 = vrot.slane %v7377, 4
      %v7380 = vor.u32 %v7376, %v7379
      %v7381 = vsel %vm1785, %v7308, %v7380
      %v7383 = vshrl.u32 %v5844, 16
      %v7385 = vrot.slane %v7383, 3
      %v7386 = vshll.u32 %v5844, 16
      %v7388 = vrot.slane %v7386, 4
      %v7389 = vor.u32 %v7385, %v7388
      %v7390 = vsel %vm1785, %v7317, %v7389
      %v7392 = vshrl.u32 %v6234, 16
      %v7394 = vrot.slane %v7392, 3
      %v7395 = vshll.u32 %v6234, 16
      %v7397 = vrot.slane %v7395, 4
      %v7398 = vor.u32 %v7394, %v7397
      %v7399 = vsel %vm1785, %v7326, %v7398
      %v7401 = vshrl.u32 %v6305, 16
      %v7403 = vrot.slane %v7401, 3
      %v7404 = vshll.u32 %v6305, 16
      %v7406 = vrot.slane %v7404, 4
      %v7407 = vor.u32 %v7403, %v7406
      %v7408 = vsel %vm1785, %v7335, %v7407
      %v7410 = vshrl.u32 %v5753, 16
      %v7412 = vrot.slane %v7410, 3
      %v7413 = vshll.u32 %v5753, 16
      %v7415 = vrot.slane %v7413, 4
      %v7416 = vor.u32 %v7412, %v7415
      %v7417 = vsel %vm1785, %v7344, %v7416
      %v7419 = vshrl.u32 %v6048, 16
      %v7421 = vrot.slane %v7419, 3
      %v7422 = vshll.u32 %v6048, 16
      %v7424 = vrot.slane %v7422, 4
      %v7425 = vor.u32 %v7421, %v7424
      %v7426 = vsel %vm1785, %v7353, %v7425
      %v7428 = vshrl.u32 %v5792, 16
      %v7430 = vrot.slane %v7428, 3
      %v7431 = vshll.u32 %v5792, 16
      %v7433 = vrot.slane %v7431, 4
      %v7434 = vor.u32 %v7430, %v7433
      %v7435 = vsel %vm1785, %v7362, %v7434
      %v7437 = vshrl.u32 %v5991, 16
      %v7439 = vrot.slane %v7437, 3
      %v7440 = vshll.u32 %v5991, 16
      %v7442 = vrot.slane %v7440, 4
      %v7443 = vor.u32 %v7439, %v7442
      %v7444 = vsel %vm1785, %v7371, %v7443
      %v7446 = vshrl.u32 %v6122, 16
      %v7448 = vrot.slane %v7446, 3
      %v7449 = vshll.u32 %v6122, 16
      %v7451 = vrot.slane %v7449, 4
      %v7452 = vor.u32 %v7448, %v7451
      %v7453 = vsel %vm1785, %v7380, %v7452
      %v7455 = vshrl.u32 %v5845, 16
      %v7457 = vrot.slane %v7455, 3
      %v7458 = vshll.u32 %v5845, 16
      %v7460 = vrot.slane %v7458, 4
      %v7461 = vor.u32 %v7457, %v7460
      %v7462 = vsel %vm1785, %v7389, %v7461
      %v7464 = vshrl.u32 %v6242, 16
      %v7466 = vrot.slane %v7464, 3
      %v7467 = vshll.u32 %v6242, 16
      %v7469 = vrot.slane %v7467, 4
      %v7470 = vor.u32 %v7466, %v7469
      %v7471 = vsel %vm1785, %v7398, %v7470
      %v7473 = vshrl.u32 %v6307, 16
      %v7475 = vrot.slane %v7473, 3
      %v7476 = vshll.u32 %v6307, 16
      %v7478 = vrot.slane %v7476, 4
      %v7479 = vor.u32 %v7475, %v7478
      %v7480 = vsel %vm1785, %v7407, %v7479
      %v7482 = vshrl.u32 %v5754, 16
      %v7484 = vrot.slane %v7482, 3
      %v7485 = vshll.u32 %v5754, 16
      %v7487 = vrot.slane %v7485, 4
      %v7488 = vor.u32 %v7484, %v7487
      %v7489 = vsel %vm1785, %v7416, %v7488
      %v7491 = vshrl.u32 %v6050, 16
      %v7493 = vrot.slane %v7491, 3
      %v7494 = vshll.u32 %v6050, 16
      %v7496 = vrot.slane %v7494, 4
      %v7497 = vor.u32 %v7493, %v7496
      %v7498 = vsel %vm1785, %v7425, %v7497
      %v7500 = vshrl.u32 %v5793, 16
      %v7502 = vrot.slane %v7500, 3
      %v7503 = vshll.u32 %v5793, 16
      %v7505 = vrot.slane %v7503, 4
      %v7506 = vor.u32 %v7502, %v7505
      %v7507 = vsel %vm1785, %v7434, %v7506
      %v7509 = vshrl.u32 %v6065, 16
      %v7511 = vrot.slane %v7509, 3
      %v7512 = vshll.u32 %v6065, 16
      %v7514 = vrot.slane %v7512, 4
      %v7515 = vor.u32 %v7511, %v7514
      %v7516 = vsel %vm1785, %v7443, %v7515
      %v7518 = vshrl.u32 %v6124, 16
      %v7520 = vrot.slane %v7518, 3
      %v7521 = vshll.u32 %v6124, 16
      %v7523 = vrot.slane %v7521, 4
      %v7524 = vor.u32 %v7520, %v7523
      %v7525 = vsel %vm1785, %v7452, %v7524
      %v7527 = vshrl.u32 %v5846, 16
      %v7529 = vrot.slane %v7527, 3
      %v7530 = vshll.u32 %v5846, 16
      %v7532 = vrot.slane %v7530, 4
      %v7533 = vor.u32 %v7529, %v7532
      %v7534 = vsel %vm1785, %v7461, %v7533
      %v7536 = vshrl.u32 %v6250, 16
      %v7538 = vrot.slane %v7536, 3
      %v7539 = vshll.u32 %v6250, 16
      %v7541 = vrot.slane %v7539, 4
      %v7542 = vor.u32 %v7538, %v7541
      %v7543 = vsel %vm1785, %v7470, %v7542
      %v7545 = vshrl.u32 %v6309, 16
      %v7547 = vrot.slane %v7545, 3
      %v7548 = vshll.u32 %v6309, 16
      %v7550 = vrot.slane %v7548, 4
      %v7551 = vor.u32 %v7547, %v7550
      %v7552 = vsel %vm1785, %v7479, %v7551
      %v7554 = vshrl.u32 %v5755, 16
      %v7556 = vrot.slane %v7554, 3
      %v7557 = vshll.u32 %v5755, 16
      %v7559 = vrot.slane %v7557, 4
      %v7560 = vor.u32 %v7556, %v7559
      %v7561 = vsel %vm1785, %v7488, %v7560
      %v7563 = vshrl.u32 %v5999, 16
      %v7565 = vrot.slane %v7563, 3
      %v7566 = vshll.u32 %v5999, 16
      %v7568 = vrot.slane %v7566, 4
      %v7569 = vor.u32 %v7565, %v7568
      %v7570 = vsel %vm1785, %v7443, %v7569
      %v7572 = vshrl.u32 %v6052, 16
      %v7574 = vrot.slane %v7572, 3
      %v7575 = vshll.u32 %v6052, 16
      %v7577 = vrot.slane %v7575, 4
      %v7578 = vor.u32 %v7574, %v7577
      %v7579 = vsel %vm1785, %v7497, %v7578
      %v7581 = vshrl.u32 %v5794, 16
      %v7583 = vrot.slane %v7581, 3
      %v7584 = vshll.u32 %v5794, 16
      %v7586 = vrot.slane %v7584, 4
      %v7587 = vor.u32 %v7583, %v7586
      %v7588 = vsel %vm1785, %v7506, %v7587
      %v7590 = vshrl.u32 %v6073, 16
      %v7592 = vrot.slane %v7590, 3
      %v7593 = vshll.u32 %v6073, 16
      %v7595 = vrot.slane %v7593, 4
      %v7596 = vor.u32 %v7592, %v7595
      %v7597 = vsel %vm1785, %v7515, %v7596
      %v7599 = vshrl.u32 %v6126, 16
      %v7601 = vrot.slane %v7599, 3
      %v7602 = vshll.u32 %v6126, 16
      %v7604 = vrot.slane %v7602, 4
      %v7605 = vor.u32 %v7601, %v7604
      %v7606 = vsel %vm1785, %v7524, %v7605
      %v7608 = vshrl.u32 %v5847, 16
      %v7610 = vrot.slane %v7608, 3
      %v7611 = vshll.u32 %v5847, 16
      %v7613 = vrot.slane %v7611, 4
      %v7614 = vor.u32 %v7610, %v7613
      %v7615 = vsel %vm1785, %v7533, %v7614
      %v7617 = vshrl.u32 %v6258, 16
      %v7619 = vrot.slane %v7617, 3
      %v7620 = vshll.u32 %v6258, 16
      %v7622 = vrot.slane %v7620, 4
      %v7623 = vor.u32 %v7619, %v7622
      %v7624 = vsel %vm1785, %v7542, %v7623
      %v7626 = vshrl.u32 %v6311, 16
      %v7628 = vrot.slane %v7626, 3
      %v7629 = vshll.u32 %v6311, 16
      %v7631 = vrot.slane %v7629, 4
      %v7632 = vor.u32 %v7628, %v7631
      %v7633 = vsel %vm1785, %v7551, %v7632
      %v7635 = vshrl.u32 %v5756, 16
      %v7637 = vrot.slane %v7635, 3
      %v7638 = vshll.u32 %v5756, 16
      %v7640 = vrot.slane %v7638, 4
      %v7641 = vor.u32 %v7637, %v7640
      %v7642 = vsel %vm1785, %v7560, %v7641
      %v7644 = vshrl.u32 %v6002, 16
      %v7646 = vrot.slane %v7644, 3
      %v7647 = vshll.u32 %v6002, 16
      %v7649 = vrot.slane %v7647, 4
      %v7650 = vor.u32 %v7646, %v7649
      %v7651 = vsel %vm1785, %v7569, %v7650
      %v7653 = vshrl.u32 %v6051, 16
      %v7655 = vrot.slane %v7653, 3
      %v7656 = vshll.u32 %v6051, 16
      %v7658 = vrot.slane %v7656, 4
      %v7659 = vor.u32 %v7655, %v7658
      %v7660 = vsel %vm1785, %v7578, %v7659
      %v7662 = vshrl.u32 %v5795, 16
      %v7664 = vrot.slane %v7662, 3
      %v7665 = vshll.u32 %v5795, 16
      %v7667 = vrot.slane %v7665, 4
      %v7668 = vor.u32 %v7664, %v7667
      %v7669 = vsel %vm1785, %v7587, %v7668
      %v7671 = vshrl.u32 %v6076, 16
      %v7673 = vrot.slane %v7671, 3
      %v7674 = vshll.u32 %v6076, 16
      %v7676 = vrot.slane %v7674, 4
      %v7677 = vor.u32 %v7673, %v7676
      %v7678 = vsel %vm1785, %v7596, %v7677
      %v7680 = vshrl.u32 %v6125, 16
      %v7682 = vrot.slane %v7680, 3
      %v7683 = vshll.u32 %v6125, 16
      %v7685 = vrot.slane %v7683, 4
      %v7686 = vor.u32 %v7682, %v7685
      %v7687 = vsel %vm1785, %v7605, %v7686
      %v7689 = vshrl.u32 %v5848, 16
      %v7691 = vrot.slane %v7689, 3
      %v7692 = vshll.u32 %v5848, 16
      %v7694 = vrot.slane %v7692, 4
      %v7695 = vor.u32 %v7691, %v7694
      %v7696 = vsel %vm1785, %v7614, %v7695
      %v7698 = vshrl.u32 %v6261, 16
      %v7700 = vrot.slane %v7698, 3
      %v7701 = vshll.u32 %v6261, 16
      %v7703 = vrot.slane %v7701, 4
      %v7704 = vor.u32 %v7700, %v7703
      %v7705 = vsel %vm1785, %v7623, %v7704
      %v7707 = vshrl.u32 %v6310, 16
      %v7709 = vrot.slane %v7707, 3
      %v7710 = vshll.u32 %v6310, 16
      %v7712 = vrot.slane %v7710, 4
      %v7713 = vor.u32 %v7709, %v7712
      %v7714 = vsel %vm1785, %v7632, %v7713
      %v7991 = vunpack.c.l.b16 %v6312
      %v7992 = vunpack.c.l.b16 %v6313
      %v7993 = vunpack.c.l.b16 %v6314
      %v7994 = vunpack.c.l.b16 %v6315
      %v7995 = vunpack.c.l.b16 %v6316
      %v7996 = vunpack.c.l.b16 %v6317
      %v7997 = vunpack.c.l.b16 %v6318
      %v7998 = vunpack.c.l.b16 %v6319
      %v7999 = vunpack.c.l.b16 %v6320
      %v8000 = vunpack.c.l.b16 %v6321
      %v8001 = vunpack.c.l.b16 %v6322
      %v8002 = vunpack.c.l.b16 %v6323
      %v8003 = vunpack.c.l.b16 %v6324
      %v8004 = vunpack.c.l.b16 %v6325
      %v8005 = vunpack.c.l.b16 %v6326
      %v8006 = vunpack.c.l.b16 %v6327
      %v8007 = vunpack.c.l.b16 %v6328
      %v8008 = vunpack.c.l.b16 %v6329
      %v8009 = vunpack.c.l.b16 %v6330
      %v8010 = vunpack.c.l.b16 %v6331
      %v8011 = vunpack.c.l.b16 %v6332
      %v8012 = vunpack.c.l.b16 %v6333
      %v8013 = vunpack.c.l.b16 %v6334
      %v8014 = vunpack.c.l.b16 %v6335
      %v8015 = vunpack.c.l.b16 %v6336
      %v8016 = vunpack.c.l.b16 %v6337
      %v8017 = vunpack.c.l.b16 %v6338
      %v8018 = vunpack.c.l.b16 %v6339
      %v8019 = vunpack.c.l.b16 %v6340
      %v8020 = vunpack.c.l.b16 %v6341
      %v8021 = vunpack.c.l.b16 %v6342
      %v8022 = vunpack.c.l.b16 %v6343
      %v8023 = vunpack.c.l.b16 %v6344
      %v8024 = vunpack.c.l.b16 %v6345
      %v8025 = vunpack.c.l.b16 %v6346
      %v8026 = vunpack.c.l.b16 %v6347
      %v8027 = vunpack.c.l.b16 %v6348
      %v8028 = vunpack.c.l.b16 %v6349
      %v8029 = vunpack.c.l.b16 %v6350
      %v8030 = vunpack.c.l.b16 %v6351
      %v8031 = vunpack.c.l.b16 %v6352
      %v8032 = vunpack.c.l.b16 %v6353
      %v8033 = vunpack.c.l.b16 %v6354
      %v8034 = vunpack.c.l.b16 %v6355
      %v8035 = vunpack.c.l.b16 %v6356
      %v8036 = vunpack.c.l.b16 %v6357
      %v8037 = vunpack.c.l.b16 %v6358
      %v8038 = vunpack.c.l.b16 %v6359
      %v8039 = vunpack.c.l.b16 %v6360
      %v8040 = vunpack.c.l.b16 %v6361
      %v8041 = vunpack.c.l.b16 %v6362
      %v8042 = vunpack.c.l.b16 %v6363
      %v8043 = vunpack.c.l.b16 %v6364
      %v8044 = vunpack.c.l.b16 %v6365
      %v8045 = vunpack.c.l.b16 %v6366
      %v8046 = vunpack.c.l.b16 %v6367
      %v8047 = vunpack.c.l.b16 %v6368
      %v8048 = vunpack.c.l.b16 %v6369
      %v8049 = vunpack.c.l.b16 %v6370
      %v8050 = vunpack.c.l.b16 %v6371
      %v8051 = vunpack.c.l.b16 %v6372
      %v8052 = vunpack.c.l.b16 %v6373
      %v8053 = vunpack.c.l.b16 %v6374
      %v8054 = vunpack.c.l.b16 %v6375
      %v8055 = vunpack.c.l.b16 %v6376
      %v8056 = vunpack.c.l.b16 %v6377
      %v8057 = vunpack.c.l.b16 %v6378
      %v8058 = vunpack.c.l.b16 %v6379
      %v8059 = vunpack.c.l.b16 %v6380
      %v8060 = vunpack.c.l.b16 %v6381
      %v8061 = vunpack.c.l.b16 %v6382
      %v8062 = vunpack.c.l.b16 %v6383
      %v8063 = vunpack.c.l.b16 %v6384
      %v8064 = vunpack.c.l.b16 %v6385
      %v8065 = vunpack.c.l.b16 %v6386
      %v8066 = vunpack.c.l.b16 %v6387
      %v8067 = vunpack.c.l.b16 %v6388
      %v8068 = vunpack.c.l.b16 %v6389
      %v8069 = vunpack.c.l.b16 %v6390
      %v8070 = vunpack.c.l.b16 %v6391
      %v8071 = vunpack.c.l.b16 %v6392
      %v8072 = vunpack.c.l.b16 %v6393
      %v8073 = vunpack.c.l.b16 %v6394
      %v8074 = vunpack.c.l.b16 %v6395
      %v8075 = vunpack.c.l.b16 %v6396
      %v8076 = vunpack.c.l.b16 %v6397
      %v8077 = vunpack.c.l.b16 %v6398
      %v8078 = vunpack.c.l.b16 %v6399
      %v8079 = vunpack.c.l.b16 %v6400
      %v8080 = vunpack.c.l.b16 %v6401
      %v8081 = vunpack.c.l.b16 %v6402
      %v8082 = vunpack.c.l.b16 %v6403
      %v8083 = vunpack.c.l.b16 %v6404
      %v8084 = vunpack.c.l.b16 %v6405
      %v8085 = vunpack.c.l.b16 %v6406
      %v8086 = vunpack.c.l.b16 %v6407
      %v8087 = vunpack.c.l.b16 %v6408
      %v8088 = vunpack.c.l.b16 %v6409
      %v8089 = vunpack.c.l.b16 %v6410
      %v8090 = vunpack.c.l.b16 %v6411
      %v8091 = vunpack.c.l.b16 %v6412
      %v8092 = vunpack.c.l.b16 %v6413
      %v8093 = vunpack.c.l.b16 %v6414
      %v8094 = vunpack.c.l.b16 %v6415
      %v8095 = vunpack.c.l.b16 %v6416
      %v8096 = vunpack.c.l.b16 %v6417
      %v8097 = vunpack.c.l.b16 %v6418
      %v8098 = vunpack.c.l.b16 %v6419
      %v8099 = vunpack.c.l.b16 %v6420
      %v8100 = vunpack.c.l.b16 %v6421
      %v8101 = vunpack.c.l.b16 %v6422
      %v8102 = vunpack.c.l.b16 %v6423
      %v8103 = vunpack.c.l.b16 %v6424
      %v8104 = vunpack.c.l.b16 %v6425
      %v8105 = vunpack.c.l.b16 %v6426
      %v8106 = vunpack.c.l.b16 %v6427
      %v8107 = vunpack.c.l.b16 %v6428
      %v8108 = vunpack.c.l.b16 %v6429
      %v8109 = vunpack.c.l.b16 %v6430
      %v8110 = vunpack.c.l.b16 %v6431
      %v8111 = vunpack.c.l.b16 %v6432
      %v8112 = vunpack.c.l.b16 %v6433
      %v8113 = vunpack.c.l.b16 %v6434
      %v8114 = vunpack.c.l.b16 %v6435
      %v8115 = vunpack.c.l.b16 %v6436
      %v8116 = vunpack.c.l.b16 %v6437
      %v8117 = vunpack.c.l.b16 %v6438
      %v8118 = vunpack.c.l.b16 %v6439
      %v8119 = vunpack.c.l.b16 %v6440
      %v8120 = vunpack.c.l.b16 %v6441
      %v8121 = vunpack.c.l.b16 %v6442
      %v8122 = vunpack.c.l.b16 %v6443
      %v8123 = vunpack.c.l.b16 %v6444
      %v8124 = vunpack.c.l.b16 %v6445
      %v8125 = vunpack.c.l.b16 %v6446
      %v8126 = vunpack.c.l.b16 %v6447
      %v8127 = vunpack.c.l.b16 %v6448
      %v8128 = vunpack.c.l.b16 %v6449
      %v8129 = vunpack.c.l.b16 %v6450
      %v8130 = vunpack.c.l.b16 %v6451
      %v8131 = vunpack.c.l.b16 %v6452
      %v8132 = vunpack.c.l.b16 %v6453
      %v8133 = vunpack.c.l.b16 %v6454
      %v8134 = vunpack.c.l.b16 %v6455
      %v8135 = vpack.c.b16 %v7992, %v7991
      %v8136 = vpack.c.b16 %v7994, %v7993
      %v8137 = vpack.c.b16 %v7996, %v7995
      %v8138 = vpack.c.b16 %v7998, %v7997
      %v8139 = vpack.c.b16 %v8000, %v7999
      %v8140 = vpack.c.b16 %v8002, %v8001
      %v8141 = vpack.c.b16 %v8004, %v8003
      %v8142 = vpack.c.b16 %v8006, %v8005
      %v8143 = vpack.c.b16 %v8008, %v8007
      %v8144 = vpack.c.b16 %v8010, %v8009
      %v8145 = vpack.c.b16 %v8012, %v8011
      %v8146 = vpack.c.b16 %v8014, %v8013
      %v8147 = vpack.c.b16 %v8016, %v8015
      %v8148 = vpack.c.b16 %v8018, %v8017
      %v8149 = vpack.c.b16 %v8020, %v8019
      %v8150 = vpack.c.b16 %v8022, %v8021
      %v8151 = vpack.c.b16 %v8024, %v8023
      %v8152 = vpack.c.b16 %v8026, %v8025
      %v8153 = vpack.c.b16 %v8028, %v8027
      %v8154 = vpack.c.b16 %v8030, %v8029
      %v8155 = vpack.c.b16 %v8032, %v8031
      %v8156 = vpack.c.b16 %v8034, %v8033
      %v8157 = vpack.c.b16 %v8036, %v8035
      %v8158 = vpack.c.b16 %v8038, %v8037
      %v8159 = vpack.c.b16 %v8040, %v8039
      %v8160 = vpack.c.b16 %v8042, %v8041
      %v8161 = vpack.c.b16 %v8044, %v8043
      %v8162 = vpack.c.b16 %v8046, %v8045
      %v8163 = vpack.c.b16 %v8048, %v8047
      %v8164 = vpack.c.b16 %v8050, %v8049
      %v8165 = vpack.c.b16 %v8052, %v8051
      %v8166 = vpack.c.b16 %v8054, %v8053
      %v8167 = vpack.c.b16 %v8056, %v8055
      %v8168 = vpack.c.b16 %v8058, %v8057
      %v8169 = vpack.c.b16 %v8060, %v8059
      %v8170 = vpack.c.b16 %v8062, %v8061
      %v8171 = vpack.c.b16 %v8064, %v8063
      %v8172 = vpack.c.b16 %v8066, %v8065
      %v8173 = vpack.c.b16 %v8068, %v8067
      %v8174 = vpack.c.b16 %v8070, %v8069
      %v8175 = vpack.c.b16 %v8072, %v8071
      %v8176 = vpack.c.b16 %v8074, %v8073
      %v8177 = vpack.c.b16 %v8076, %v8075
      %v8178 = vpack.c.b16 %v8078, %v8077
      %v8179 = vpack.c.b16 %v8080, %v8079
      %v8180 = vpack.c.b16 %v8082, %v8081
      %v8181 = vpack.c.b16 %v8084, %v8083
      %v8182 = vpack.c.b16 %v8086, %v8085
      %v8183 = vpack.c.b16 %v8088, %v8087
      %v8184 = vpack.c.b16 %v8090, %v8089
      %v8185 = vpack.c.b16 %v8092, %v8091
      %v8186 = vpack.c.b16 %v8094, %v8093
      %v8187 = vpack.c.b16 %v8096, %v8095
      %v8188 = vpack.c.b16 %v8098, %v8097
      %v8189 = vpack.c.b16 %v8100, %v8099
      %v8190 = vpack.c.b16 %v8102, %v8101
      %v8191 = vpack.c.b16 %v8104, %v8103
      %v8192 = vpack.c.b16 %v8106, %v8105
      %v8193 = vpack.c.b16 %v8108, %v8107
      %v8194 = vpack.c.b16 %v8110, %v8109
      %v8195 = vpack.c.b16 %v8112, %v8111
      %v8196 = vpack.c.b16 %v8114, %v8113
      %v8197 = vpack.c.b16 %v8116, %v8115
      %v8198 = vpack.c.b16 %v8118, %v8117
      %v8199 = vpack.c.b16 %v8120, %v8119
      %v8200 = vpack.c.b16 %v8122, %v8121
      %v8201 = vpack.c.b16 %v8124, %v8123
      %v8202 = vpack.c.b16 %v8126, %v8125
      %v8203 = vpack.c.b16 %v8128, %v8127
      %v8204 = vpack.c.b16 %v8130, %v8129
      %v8205 = vpack.c.b16 %v8132, %v8131
      %v8206 = vpack.c.b16 %v8134, %v8133
      %8279 = vmatprep.subr.bf16.mxu0 0
      %8280 = vmatpush1.bf16.msra.mxu0 %v8135
      %8281 = vmatprep.subr.bf16.mxu0 0
      %8282 = vmatpush1.bf16.msra.mxu0 %v8136
      %8283 = vmatprep.subr.bf16.mxu0 0
      %8284 = vmatpush1.bf16.msra.mxu0 %v8137
      %8285 = vmatprep.subr.bf16.mxu0 0
      %8286 = vmatpush1.bf16.msra.mxu0 %v8138
      %8287 = vmatprep.subr.bf16.mxu0 0
      %8288 = vmatpush1.bf16.msra.mxu0 %v8139
      %8289 = vmatprep.subr.bf16.mxu0 0
      %8290 = vmatpush1.bf16.msra.mxu0 %v8140
      %8291 = vmatprep.subr.bf16.mxu0 0
      %8292 = vmatpush1.bf16.msra.mxu0 %v8141
      %8293 = vmatprep.subr.bf16.mxu0 0
      %8294 = vmatpush1.bf16.msra.mxu0 %v8142
      %8295 = vmatprep.subr.bf16.mxu0 0
      %8296 = vmatpush1.bf16.msra.mxu0 %v8143
      %8297 = vmatprep.subr.bf16.mxu0 0
      %8298 = vmatpush1.bf16.msra.mxu0 %v8144
      %8299 = vmatprep.subr.bf16.mxu0 0
      %8300 = vmatpush1.bf16.msra.mxu0 %v8145
      %8301 = vmatprep.subr.bf16.mxu0 0
      %8302 = vmatpush1.bf16.msra.mxu0 %v8146
      %8303 = vmatprep.subr.bf16.mxu0 0
      %8304 = vmatpush1.bf16.msra.mxu0 %v8147
      %8305 = vmatprep.subr.bf16.mxu0 0
      %8306 = vmatpush1.bf16.msra.mxu0 %v8148
      %8307 = vmatprep.subr.bf16.mxu0 0
      %8308 = vmatpush1.bf16.msra.mxu0 %v8149
      %8309 = vmatprep.subr.bf16.mxu0 0
      %8310 = vmatpush1.bf16.msra.mxu0 %v8150
      %8311 = vmatprep.mubr.bf16.mxu0 %v6496
      %8312 = vmatmul.mubr.bf16.gmra.mrb[0].mxu0 %v6479
      %v8313 = vpop.f32.mrb[0].mxu0
      %v8314 = vadd.f32 %v6461, %v8313
      %v8315 = vpop.f32.mrb[0].mxu0
      %v8316 = vpop.f32.mrb[0].mxu0
      %v8317 = vadd.f32 %v6461, %v8316
      %v8318 = vpop.f32.mrb[0].mxu0
      %8319 = vmatprep.mubr.bf16.mxu0 %v6625
      %8320 = vmatmul.mubr.bf16.gmra.mrb[0].mxu0 %v6624
      %v8321 = vpop.f32.mrb[0].mxu0
      %v8322 = vadd.f32 %v6461, %v8321
      %v8323 = vpop.f32.mrb[0].mxu0
      %v8324 = vpop.f32.mrb[0].mxu0
      %v8325 = vadd.f32 %v6461, %v8324
      %v8326 = vpop.f32.mrb[0].mxu0
      %8327 = vmatprep.mubr.bf16.mxu0 %v6652
      %8328 = vmatmul.mubr.bf16.gmra.mrb[0].mxu0 %v6697
      %v8329 = vpop.f32.mrb[0].mxu0
      %v8330 = vadd.f32 %v6461, %v8329
      %v8331 = vpop.f32.mrb[0].mxu0
      %v8332 = vpop.f32.mrb[0].mxu0
      %v8333 = vadd.f32 %v6461, %v8332
      %v8334 = vpop.f32.mrb[0].mxu0
      %8335 = vmatprep.mubr.bf16.mxu0 %v6724
      %8336 = vmatmul.mubr.bf16.gmra.mrb[0].mxu0 %v6769
      %v8337 = vpop.f32.mrb[0].mxu0
      %v8338 = vadd.f32 %v6461, %v8337
      %v8339 = vpop.f32.mrb[0].mxu0
      %v8340 = vpop.f32.mrb[0].mxu0
      %v8341 = vadd.f32 %v6461, %v8340
      %v8342 = vpop.f32.mrb[0].mxu0
      %8343 = vmatprep.mubr.bf16.mxu0 %v6796
      %8344 = vmatmul.mubr.bf16.gmra.mrb[0].mxu0 %v6841
      %v8345 = vpop.f32.mrb[0].mxu0
      %v8346 = vadd.f32 %v6461, %v8345
      %v8347 = vpop.f32.mrb[0].mxu0
      %v8348 = vpop.f32.mrb[0].mxu0
      %v8349 = vadd.f32 %v6461, %v8348
      %v8350 = vpop.f32.mrb[0].mxu0
      %8351 = vmatprep.mubr.bf16.mxu0 %v6868
      %8352 = vmatmul.mubr.bf16.gmra.mrb[0].mxu0 %v6913
      %v8353 = vpop.f32.mrb[0].mxu0
      %v8354 = vadd.f32 %v6461, %v8353
      %v8355 = vpop.f32.mrb[0].mxu0
      %v8356 = vpop.f32.mrb[0].mxu0
      %v8357 = vadd.f32 %v6461, %v8356
      %v8358 = vpop.f32.mrb[0].mxu0
      %8359 = vmatprep.mubr.bf16.mxu0 %v6940
      %8360 = vmatmul.mubr.bf16.gmra.mrb[0].mxu0 %v6985
      %v8361 = vpop.f32.mrb[0].mxu0
      %v8362 = vadd.f32 %v6461, %v8361
      %v8363 = vpop.f32.mrb[0].mxu0
      %v8364 = vpop.f32.mrb[0].mxu0
      %v8365 = vadd.f32 %v6461, %v8364
      %v8366 = vpop.f32.mrb[0].mxu0
      %8367 = vmatprep.mubr.bf16.mxu0 %v7012
      %8368 = vmatmul.mubr.bf16.gmra.mrb[0].mxu0 %v7057
      %v8369 = vpop.f32.mrb[0].mxu0
      %v8370 = vadd.f32 %v6461, %v8369
      %v8371 = vpop.f32.mrb[0].mxu0
      %v8372 = vpop.f32.mrb[0].mxu0
      %v8373 = vadd.f32 %v6461, %v8372
      %v8374 = vpop.f32.mrb[0].mxu0
      %8375 = vmatprep.mubr.bf16.mxu0 %v7084
      %8376 = vmatmul.mubr.bf16.gmra.mrb[0].mxu0 %v7129
      %v8377 = vpop.f32.mrb[0].mxu0
      %v8378 = vadd.f32 %v6461, %v8377
      %v8379 = vpop.f32.mrb[0].mxu0
      %v8380 = vpop.f32.mrb[0].mxu0
      %v8381 = vadd.f32 %v6461, %v8380
      %v8382 = vpop.f32.mrb[0].mxu0
      %8383 = vmatprep.mubr.bf16.mxu0 %v7156
      %8384 = vmatmul.mubr.bf16.gmra.mrb[0].mxu0 %v7201
      %v8385 = vpop.f32.mrb[0].mxu0
      %v8386 = vadd.f32 %v6461, %v8385
      %v8387 = vpop.f32.mrb[0].mxu0
      %v8388 = vpop.f32.mrb[0].mxu0
      %v8389 = vadd.f32 %v6461, %v8388
      %v8390 = vpop.f32.mrb[0].mxu0
      %8391 = vmatprep.mubr.bf16.mxu0 %v7228
      %8392 = vmatmul.mubr.bf16.gmra.mrb[0].mxu0 %v7273
      %v8393 = vpop.f32.mrb[0].mxu0
      %v8394 = vadd.f32 %v6461, %v8393
      %v8395 = vpop.f32.mrb[0].mxu0
      %v8396 = vpop.f32.mrb[0].mxu0
      %v8397 = vadd.f32 %v6461, %v8396
      %v8398 = vpop.f32.mrb[0].mxu0
      %8399 = vmatprep.mubr.bf16.mxu0 %v7300
      %8400 = vmatmul.mubr.bf16.gmra.mrb[0].mxu0 %v7345
      %v8401 = vpop.f32.mrb[0].mxu0
      %v8402 = vadd.f32 %v6461, %v8401
      %v8403 = vpop.f32.mrb[0].mxu0
      %v8404 = vpop.f32.mrb[0].mxu0
      %v8405 = vadd.f32 %v6461, %v8404
      %v8406 = vpop.f32.mrb[0].mxu0
      %8407 = vmatprep.mubr.bf16.mxu0 %v7372
      %8408 = vmatmul.mubr.bf16.gmra.mrb[0].mxu0 %v7417
      %v8409 = vpop.f32.mrb[0].mxu0
      %v8410 = vadd.f32 %v6461, %v8409
      %v8411 = vpop.f32.mrb[0].mxu0
      %v8412 = vpop.f32.mrb[0].mxu0
      %v8413 = vadd.f32 %v6461, %v8412
      %v8414 = vpop.f32.mrb[0].mxu0
      %8415 = vmatprep.mubr.bf16.mxu0 %v7444
      %8416 = vmatmul.mubr.bf16.gmra.mrb[0].mxu0 %v7489
      %v8417 = vpop.f32.mrb[0].mxu0
      %v8418 = vadd.f32 %v6461, %v8417
      %v8419 = vpop.f32.mrb[0].mxu0
      %v8420 = vpop.f32.mrb[0].mxu0
      %v8421 = vadd.f32 %v6461, %v8420
      %v8422 = vpop.f32.mrb[0].mxu0
      %8423 = vmatprep.mubr.bf16.mxu0 %v7570
      %8424 = vmatmul.mubr.bf16.gmra.mrb[0].mxu0 %v7561
      %v8425 = vpop.f32.mrb[0].mxu0
      %v8426 = vadd.f32 %v6461, %v8425
      %v8427 = vpop.f32.mrb[0].mxu0
      %v8428 = vpop.f32.mrb[0].mxu0
      %v8429 = vadd.f32 %v6461, %v8428
      %v8430 = vpop.f32.mrb[0].mxu0
      %8431 = vmatprep.mubr.bf16.mxu0 %v7651
      %8432 = vmatmul.mubr.bf16.gmra.mrb[0].mxu0 %v7642
      %v8433 = vpop.f32.mrb[0].mxu0
      %v8434 = vadd.f32 %v6461, %v8433
      %v8435 = vpop.f32.mrb[0].mxu0
      %v8436 = vpop.f32.mrb[0].mxu0
      %v8437 = vadd.f32 %v6461, %v8436
      %v8438 = vpop.f32.mrb[0].mxu0
      %8439 = vdwg.mxu0
      %8440 = vmatprep.subr.bf16.mxu0 0
      %8441 = vmatpush1.bf16.msra.mxu0 %v8151
      %8442 = vmatprep.subr.bf16.mxu0 0
      %8443 = vmatpush1.bf16.msra.mxu0 %v8152
      %8444 = vmatprep.subr.bf16.mxu0 0
      %8445 = vmatpush1.bf16.msra.mxu0 %v8153
      %8446 = vmatprep.subr.bf16.mxu0 0
      %8447 = vmatpush1.bf16.msra.mxu0 %v8154
      %8448 = vmatprep.subr.bf16.mxu0 0
      %8449 = vmatpush1.bf16.msra.mxu0 %v8155
      %8450 = vmatprep.subr.bf16.mxu0 0
      %8451 = vmatpush1.bf16.msra.mxu0 %v8156
      %8452 = vmatprep.subr.bf16.mxu0 0
      %8453 = vmatpush1.bf16.msra.mxu0 %v8157
      %8454 = vmatprep.subr.bf16.mxu0 0
      %8455 = vmatpush1.bf16.msra.mxu0 %v8158
      %8456 = vmatprep.subr.bf16.mxu0 0
      %8457 = vmatpush1.bf16.msra.mxu0 %v8159
      %8458 = vmatprep.subr.bf16.mxu0 0
      %8459 = vmatpush1.bf16.msra.mxu0 %v8160
      %8460 = vmatprep.subr.bf16.mxu0 0
      %8461 = vmatpush1.bf16.msra.mxu0 %v8161
      %8462 = vmatprep.subr.bf16.mxu0 0
      %8463 = vmatpush1.bf16.msra.mxu0 %v8162
      %8464 = vmatprep.subr.bf16.mxu0 0
      %8465 = vmatpush1.bf16.msra.mxu0 %v8163
      %8466 = vmatprep.subr.bf16.mxu0 0
      %8467 = vmatpush1.bf16.msra.mxu0 %v8164
      %8468 = vmatprep.subr.bf16.mxu0 0
      %8469 = vmatpush1.bf16.msra.mxu0 %v8165
      %8470 = vmatprep.subr.bf16.mxu0 0
      %8471 = vmatpush1.bf16.msra.mxu0 %v8166
      %8472 = vmatprep.mubr.bf16.mxu0 %v6530
      %8473 = vmatmul.mubr.bf16.gmra.mrb[0].mxu0 %v6513
      %v8474 = vpop.f32.mrb[0].mxu0
      %v8475 = vadd.f32 %v8314, %v8474
      %v8476 = vpop.f32.mrb[0].mxu0
      %v8477 = vpop.f32.mrb[0].mxu0
      %v8478 = vadd.f32 %v8317, %v8477
      %v8479 = vpop.f32.mrb[0].mxu0
      %8480 = vmatprep.mubr.bf16.mxu0 %v6643
      %8481 = vmatmul.mubr.bf16.gmra.mrb[0].mxu0 %v6634
      %v8482 = vpop.f32.mrb[0].mxu0
      %v8483 = vadd.f32 %v8322, %v8482
      %v8484 = vpop.f32.mrb[0].mxu0
      %v8485 = vpop.f32.mrb[0].mxu0
      %v8486 = vadd.f32 %v8325, %v8485
      %v8487 = vpop.f32.mrb[0].mxu0
      %8488 = vmatprep.mubr.bf16.mxu0 %v6715
      %8489 = vmatmul.mubr.bf16.gmra.mrb[0].mxu0 %v6706
      %v8490 = vpop.f32.mrb[0].mxu0
      %v8491 = vadd.f32 %v8330, %v8490
      %v8492 = vpop.f32.mrb[0].mxu0
      %v8493 = vpop.f32.mrb[0].mxu0
      %v8494 = vadd.f32 %v8333, %v8493
      %v8495 = vpop.f32.mrb[0].mxu0
      %8496 = vmatprep.mubr.bf16.mxu0 %v6787
      %8497 = vmatmul.mubr.bf16.gmra.mrb[0].mxu0 %v6778
      %v8498 = vpop.f32.mrb[0].mxu0
      %v8499 = vadd.f32 %v8338, %v8498
      %v8500 = vpop.f32.mrb[0].mxu0
      %v8501 = vpop.f32.mrb[0].mxu0
      %v8502 = vadd.f32 %v8341, %v8501
      %v8503 = vpop.f32.mrb[0].mxu0
      %8504 = vmatprep.mubr.bf16.mxu0 %v6859
      %8505 = vmatmul.mubr.bf16.gmra.mrb[0].mxu0 %v6850
      %v8506 = vpop.f32.mrb[0].mxu0
      %v8507 = vadd.f32 %v8346, %v8506
      %v8508 = vpop.f32.mrb[0].mxu0
      %v8509 = vpop.f32.mrb[0].mxu0
      %v8510 = vadd.f32 %v8349, %v8509
      %v8511 = vpop.f32.mrb[0].mxu0
      %8512 = vmatprep.mubr.bf16.mxu0 %v6931
      %8513 = vmatmul.mubr.bf16.gmra.mrb[0].mxu0 %v6922
      %v8514 = vpop.f32.mrb[0].mxu0
      %v8515 = vadd.f32 %v8354, %v8514
      %v8516 = vpop.f32.mrb[0].mxu0
      %v8517 = vpop.f32.mrb[0].mxu0
      %v8518 = vadd.f32 %v8357, %v8517
      %v8519 = vpop.f32.mrb[0].mxu0
      %8520 = vmatprep.mubr.bf16.mxu0 %v7003
      %8521 = vmatmul.mubr.bf16.gmra.mrb[0].mxu0 %v6994
      %v8522 = vpop.f32.mrb[0].mxu0
      %v8523 = vadd.f32 %v8362, %v8522
      %v8524 = vpop.f32.mrb[0].mxu0
      %v8525 = vpop.f32.mrb[0].mxu0
      %v8526 = vadd.f32 %v8365, %v8525
      %v8527 = vpop.f32.mrb[0].mxu0
      %8528 = vmatprep.mubr.bf16.mxu0 %v7075
      %8529 = vmatmul.mubr.bf16.gmra.mrb[0].mxu0 %v7066
      %v8530 = vpop.f32.mrb[0].mxu0
      %v8531 = vadd.f32 %v8370, %v8530
      %v8532 = vpop.f32.mrb[0].mxu0
      %v8533 = vpop.f32.mrb[0].mxu0
      %v8534 = vadd.f32 %v8373, %v8533
      %v8535 = vpop.f32.mrb[0].mxu0
      %8536 = vmatprep.mubr.bf16.mxu0 %v7147
      %8537 = vmatmul.mubr.bf16.gmra.mrb[0].mxu0 %v7138
      %v8538 = vpop.f32.mrb[0].mxu0
      %v8539 = vadd.f32 %v8378, %v8538
      %v8540 = vpop.f32.mrb[0].mxu0
      %v8541 = vpop.f32.mrb[0].mxu0
      %v8542 = vadd.f32 %v8381, %v8541
      %v8543 = vpop.f32.mrb[0].mxu0
      %8544 = vmatprep.mubr.bf16.mxu0 %v7219
      %8545 = vmatmul.mubr.bf16.gmra.mrb[0].mxu0 %v7210
      %v8546 = vpop.f32.mrb[0].mxu0
      %v8547 = vadd.f32 %v8386, %v8546
      %v8548 = vpop.f32.mrb[0].mxu0
      %v8549 = vpop.f32.mrb[0].mxu0
      %v8550 = vadd.f32 %v8389, %v8549
      %v8551 = vpop.f32.mrb[0].mxu0
      %8552 = vmatprep.mubr.bf16.mxu0 %v7291
      %8553 = vmatmul.mubr.bf16.gmra.mrb[0].mxu0 %v7282
      %v8554 = vpop.f32.mrb[0].mxu0
      %v8555 = vadd.f32 %v8394, %v8554
      %v8556 = vpop.f32.mrb[0].mxu0
      %v8557 = vpop.f32.mrb[0].mxu0
      %v8558 = vadd.f32 %v8397, %v8557
      %v8559 = vpop.f32.mrb[0].mxu0
      %8560 = vmatprep.mubr.bf16.mxu0 %v7363
      %8561 = vmatmul.mubr.bf16.gmra.mrb[0].mxu0 %v7354
      %v8562 = vpop.f32.mrb[0].mxu0
      %v8563 = vadd.f32 %v8402, %v8562
      %v8564 = vpop.f32.mrb[0].mxu0
      %v8565 = vpop.f32.mrb[0].mxu0
      %v8566 = vadd.f32 %v8405, %v8565
      %v8567 = vpop.f32.mrb[0].mxu0
      %8568 = vmatprep.mubr.bf16.mxu0 %v7435
      %8569 = vmatmul.mubr.bf16.gmra.mrb[0].mxu0 %v7426
      %v8570 = vpop.f32.mrb[0].mxu0
      %v8571 = vadd.f32 %v8410, %v8570
      %v8572 = vpop.f32.mrb[0].mxu0
      %v8573 = vpop.f32.mrb[0].mxu0
      %v8574 = vadd.f32 %v8413, %v8573
      %v8575 = vpop.f32.mrb[0].mxu0
      %8576 = vmatprep.mubr.bf16.mxu0 %v7507
      %8577 = vmatmul.mubr.bf16.gmra.mrb[0].mxu0 %v7498
      %v8578 = vpop.f32.mrb[0].mxu0
      %v8579 = vadd.f32 %v8418, %v8578
      %v8580 = vpop.f32.mrb[0].mxu0
      %v8581 = vpop.f32.mrb[0].mxu0
      %v8582 = vadd.f32 %v8421, %v8581
      %v8583 = vpop.f32.mrb[0].mxu0
      %8584 = vmatprep.mubr.bf16.mxu0 %v7588
      %8585 = vmatmul.mubr.bf16.gmra.mrb[0].mxu0 %v7579
      %v8586 = vpop.f32.mrb[0].mxu0
      %v8587 = vadd.f32 %v8426, %v8586
      %v8588 = vpop.f32.mrb[0].mxu0
      %v8589 = vpop.f32.mrb[0].mxu0
      %v8590 = vadd.f32 %v8429, %v8589
      %v8591 = vpop.f32.mrb[0].mxu0
      %8592 = vmatprep.mubr.bf16.mxu0 %v7669
      %8593 = vmatmul.mubr.bf16.gmra.mrb[0].mxu0 %v7660
      %v8594 = vpop.f32.mrb[0].mxu0
      %v8595 = vadd.f32 %v8434, %v8594
      %v8596 = vpop.f32.mrb[0].mxu0
      %v8597 = vpop.f32.mrb[0].mxu0
      %v8598 = vadd.f32 %v8437, %v8597
      %v8599 = vpop.f32.mrb[0].mxu0
      %8600 = vdwg.mxu0
      %8601 = vmatprep.subr.bf16.mxu0 0
      %8602 = vmatpush1.bf16.msra.mxu0 %v8167
      %8603 = vmatprep.subr.bf16.mxu0 0
      %8604 = vmatpush1.bf16.msra.mxu0 %v8168
      %8605 = vmatprep.subr.bf16.mxu0 0
      %8606 = vmatpush1.bf16.msra.mxu0 %v8169
      %8607 = vmatprep.subr.bf16.mxu0 0
      %8608 = vmatpush1.bf16.msra.mxu0 %v8170
      %8609 = vmatprep.subr.bf16.mxu0 0
      %8610 = vmatpush1.bf16.msra.mxu0 %v8171
      %8611 = vmatprep.subr.bf16.mxu0 0
      %8612 = vmatpush1.bf16.msra.mxu0 %v8172
      %8613 = vmatprep.subr.bf16.mxu0 0
      %8614 = vmatpush1.bf16.msra.mxu0 %v8173
      %8615 = vmatprep.subr.bf16.mxu0 0
      %8616 = vmatpush1.bf16.msra.mxu0 %v8174
      %8617 = vmatprep.subr.bf16.mxu0 0
      %8618 = vmatpush1.bf16.msra.mxu0 %v8175
      %8619 = vmatprep.subr.bf16.mxu0 0
      %8620 = vmatpush1.bf16.msra.mxu0 %v8176
      %8621 = vmatprep.subr.bf16.mxu0 0
      %8622 = vmatpush1.bf16.msra.mxu0 %v8177
      %8623 = vmatprep.subr.bf16.mxu0 0
      %8624 = vmatpush1.bf16.msra.mxu0 %v8178
      %8625 = vmatprep.subr.bf16.mxu0 0
      %8626 = vmatpush1.bf16.msra.mxu0 %v8179
      %8627 = vmatprep.subr.bf16.mxu0 0
      %8628 = vmatpush1.bf16.msra.mxu0 %v8180
      %8629 = vmatprep.subr.bf16.mxu0 0
      %8630 = vmatpush1.bf16.msra.mxu0 %v8181
      %8631 = vmatprep.subr.bf16.mxu0 0
      %8632 = vmatpush1.bf16.msra.mxu0 %v8182
      %8633 = vmatprep.mubr.bf16.mxu0 %v6564
      %8634 = vmatmul.mubr.bf16.gmra.mrb[0].mxu0 %v6547
      %v8635 = vpop.f32.mrb[0].mxu0
      %v8636 = vadd.f32 %v8475, %v8635
      %v8637 = vpop.f32.mrb[0].mxu0
      %v8638 = vpop.f32.mrb[0].mxu0
      %v8639 = vadd.f32 %v8478, %v8638
      %v8640 = vpop.f32.mrb[0].mxu0
      %8641 = vmatprep.mubr.bf16.mxu0 %v6661
      %8642 = vmatmul.mubr.bf16.gmra.mrb[0].mxu0 %v6652
      %v8643 = vpop.f32.mrb[0].mxu0
      %v8644 = vadd.f32 %v8483, %v8643
      %v8645 = vpop.f32.mrb[0].mxu0
      %v8646 = vpop.f32.mrb[0].mxu0
      %v8647 = vadd.f32 %v8486, %v8646
      %v8648 = vpop.f32.mrb[0].mxu0
      %8649 = vmatprep.mubr.bf16.mxu0 %v6733
      %8650 = vmatmul.mubr.bf16.gmra.mrb[0].mxu0 %v6724
      %v8651 = vpop.f32.mrb[0].mxu0
      %v8652 = vadd.f32 %v8491, %v8651
      %v8653 = vpop.f32.mrb[0].mxu0
      %v8654 = vpop.f32.mrb[0].mxu0
      %v8655 = vadd.f32 %v8494, %v8654
      %v8656 = vpop.f32.mrb[0].mxu0
      %8657 = vmatprep.mubr.bf16.mxu0 %v6805
      %8658 = vmatmul.mubr.bf16.gmra.mrb[0].mxu0 %v6796
      %v8659 = vpop.f32.mrb[0].mxu0
      %v8660 = vadd.f32 %v8499, %v8659
      %v8661 = vpop.f32.mrb[0].mxu0
      %v8662 = vpop.f32.mrb[0].mxu0
      %v8663 = vadd.f32 %v8502, %v8662
      %v8664 = vpop.f32.mrb[0].mxu0
      %8665 = vmatprep.mubr.bf16.mxu0 %v6877
      %8666 = vmatmul.mubr.bf16.gmra.mrb[0].mxu0 %v6868
      %v8667 = vpop.f32.mrb[0].mxu0
      %v8668 = vadd.f32 %v8507, %v8667
      %v8669 = vpop.f32.mrb[0].mxu0
      %v8670 = vpop.f32.mrb[0].mxu0
      %v8671 = vadd.f32 %v8510, %v8670
      %v8672 = vpop.f32.mrb[0].mxu0
      %8673 = vmatprep.mubr.bf16.mxu0 %v6949
      %8674 = vmatmul.mubr.bf16.gmra.mrb[0].mxu0 %v6940
      %v8675 = vpop.f32.mrb[0].mxu0
      %v8676 = vadd.f32 %v8515, %v8675
      %v8677 = vpop.f32.mrb[0].mxu0
      %v8678 = vpop.f32.mrb[0].mxu0
      %v8679 = vadd.f32 %v8518, %v8678
      %v8680 = vpop.f32.mrb[0].mxu0
      %8681 = vmatprep.mubr.bf16.mxu0 %v7021
      %8682 = vmatmul.mubr.bf16.gmra.mrb[0].mxu0 %v7012
      %v8683 = vpop.f32.mrb[0].mxu0
      %v8684 = vadd.f32 %v8523, %v8683
      %v8685 = vpop.f32.mrb[0].mxu0
      %v8686 = vpop.f32.mrb[0].mxu0
      %v8687 = vadd.f32 %v8526, %v8686
      %v8688 = vpop.f32.mrb[0].mxu0
      %8689 = vmatprep.mubr.bf16.mxu0 %v7093
      %8690 = vmatmul.mubr.bf16.gmra.mrb[0].mxu0 %v7084
      %v8691 = vpop.f32.mrb[0].mxu0
      %v8692 = vadd.f32 %v8531, %v8691
      %v8693 = vpop.f32.mrb[0].mxu0
      %v8694 = vpop.f32.mrb[0].mxu0
      %v8695 = vadd.f32 %v8534, %v8694
      %v8696 = vpop.f32.mrb[0].mxu0
      %8697 = vmatprep.mubr.bf16.mxu0 %v7165
      %8698 = vmatmul.mubr.bf16.gmra.mrb[0].mxu0 %v7156
      %v8699 = vpop.f32.mrb[0].mxu0
      %v8700 = vadd.f32 %v8539, %v8699
      %v8701 = vpop.f32.mrb[0].mxu0
      %v8702 = vpop.f32.mrb[0].mxu0
      %v8703 = vadd.f32 %v8542, %v8702
      %v8704 = vpop.f32.mrb[0].mxu0
      %8705 = vmatprep.mubr.bf16.mxu0 %v7237
      %8706 = vmatmul.mubr.bf16.gmra.mrb[0].mxu0 %v7228
      %v8707 = vpop.f32.mrb[0].mxu0
      %v8708 = vadd.f32 %v8547, %v8707
      %v8709 = vpop.f32.mrb[0].mxu0
      %v8710 = vpop.f32.mrb[0].mxu0
      %v8711 = vadd.f32 %v8550, %v8710
      %v8712 = vpop.f32.mrb[0].mxu0
      %8713 = vmatprep.mubr.bf16.mxu0 %v7309
      %8714 = vmatmul.mubr.bf16.gmra.mrb[0].mxu0 %v7300
      %v8715 = vpop.f32.mrb[0].mxu0
      %v8716 = vadd.f32 %v8555, %v8715
      %v8717 = vpop.f32.mrb[0].mxu0
      %v8718 = vpop.f32.mrb[0].mxu0
      %v8719 = vadd.f32 %v8558, %v8718
      %v8720 = vpop.f32.mrb[0].mxu0
      %8721 = vmatprep.mubr.bf16.mxu0 %v7381
      %8722 = vmatmul.mubr.bf16.gmra.mrb[0].mxu0 %v7372
      %v8723 = vpop.f32.mrb[0].mxu0
      %v8724 = vadd.f32 %v8563, %v8723
      %v8725 = vpop.f32.mrb[0].mxu0
      %v8726 = vpop.f32.mrb[0].mxu0
      %v8727 = vadd.f32 %v8566, %v8726
      %v8728 = vpop.f32.mrb[0].mxu0
      %8729 = vmatprep.mubr.bf16.mxu0 %v7453
      %8730 = vmatmul.mubr.bf16.gmra.mrb[0].mxu0 %v7444
      %v8731 = vpop.f32.mrb[0].mxu0
      %v8732 = vadd.f32 %v8571, %v8731
      %v8733 = vpop.f32.mrb[0].mxu0
      %v8734 = vpop.f32.mrb[0].mxu0
      %v8735 = vadd.f32 %v8574, %v8734
      %v8736 = vpop.f32.mrb[0].mxu0
      %8737 = vmatprep.mubr.bf16.mxu0 %v7525
      %8738 = vmatmul.mubr.bf16.gmra.mrb[0].mxu0 %v7516
      %v8739 = vpop.f32.mrb[0].mxu0
      %v8740 = vadd.f32 %v8579, %v8739
      %v8741 = vpop.f32.mrb[0].mxu0
      %v8742 = vpop.f32.mrb[0].mxu0
      %v8743 = vadd.f32 %v8582, %v8742
      %v8744 = vpop.f32.mrb[0].mxu0
      %8745 = vmatprep.mubr.bf16.mxu0 %v7606
      %8746 = vmatmul.mubr.bf16.gmra.mrb[0].mxu0 %v7597
      %v8747 = vpop.f32.mrb[0].mxu0
      %v8748 = vadd.f32 %v8587, %v8747
      %v8749 = vpop.f32.mrb[0].mxu0
      %v8750 = vpop.f32.mrb[0].mxu0
      %v8751 = vadd.f32 %v8590, %v8750
      %v8752 = vpop.f32.mrb[0].mxu0
      %8753 = vmatprep.mubr.bf16.mxu0 %v7687
      %8754 = vmatmul.mubr.bf16.gmra.mrb[0].mxu0 %v7678
      %v8755 = vpop.f32.mrb[0].mxu0
      %v8756 = vadd.f32 %v8595, %v8755
      %v8757 = vpop.f32.mrb[0].mxu0
      %v8758 = vpop.f32.mrb[0].mxu0
      %v8759 = vadd.f32 %v8598, %v8758
      %v8760 = vpop.f32.mrb[0].mxu0
      %8761 = vdwg.mxu0
      %8762 = vmatprep.subr.bf16.mxu0 0
      %8763 = vmatpush1.bf16.msra.mxu0 %v8183
      %8764 = vmatprep.subr.bf16.mxu0 0
      %8765 = vmatpush1.bf16.msra.mxu0 %v8184
      %8766 = vmatprep.subr.bf16.mxu0 0
      %8767 = vmatpush1.bf16.msra.mxu0 %v8185
      %8768 = vmatprep.subr.bf16.mxu0 0
      %8769 = vmatpush1.bf16.msra.mxu0 %v8186
      %8770 = vmatprep.subr.bf16.mxu0 0
      %8771 = vmatpush1.bf16.msra.mxu0 %v8187
      %8772 = vmatprep.subr.bf16.mxu0 0
      %8773 = vmatpush1.bf16.msra.mxu0 %v8188
      %8774 = vmatprep.subr.bf16.mxu0 0
      %8775 = vmatpush1.bf16.msra.mxu0 %v8189
      %8776 = vmatprep.subr.bf16.mxu0 0
      %8777 = vmatpush1.bf16.msra.mxu0 %v8190
      %8778 = vmatprep.subr.bf16.mxu0 0
      %8779 = vmatpush1.bf16.msra.mxu0 %v8191
      %8780 = vmatprep.subr.bf16.mxu0 0
      %8781 = vmatpush1.bf16.msra.mxu0 %v8192
      %8782 = vmatprep.subr.bf16.mxu0 0
      %8783 = vmatpush1.bf16.msra.mxu0 %v8193
      %8784 = vmatprep.subr.bf16.mxu0 0
      %8785 = vmatpush1.bf16.msra.mxu0 %v8194
      %8786 = vmatprep.subr.bf16.mxu0 0
      %8787 = vmatpush1.bf16.msra.mxu0 %v8195
      %8788 = vmatprep.subr.bf16.mxu0 0
      %8789 = vmatpush1.bf16.msra.mxu0 %v8196
      %8790 = vmatprep.subr.bf16.mxu0 0
      %8791 = vmatpush1.bf16.msra.mxu0 %v8197
      %8792 = vmatprep.subr.bf16.mxu0 0
      %8793 = vmatpush1.bf16.msra.mxu0 %v8198
      %8794 = vmatprep.mubr.bf16.mxu0 %v6598
      %8795 = vmatmul.mubr.bf16.gmra.mrb[0].mxu0 %v6581
      %v8796 = vpop.f32.mrb[0].mxu0
      %v8797 = vadd.f32 %v8636, %v8796
      %v8798 = vpop.f32.mrb[0].mxu0
      %v8799 = vpop.f32.mrb[0].mxu0
      %v8800 = vadd.f32 %v8639, %v8799
      %v8801 = vpop.f32.mrb[0].mxu0
      %8802 = vmatprep.mubr.bf16.mxu0 %v6679
      %8803 = vmatmul.mubr.bf16.gmra.mrb[0].mxu0 %v6670
      %v8804 = vpop.f32.mrb[0].mxu0
      %v8805 = vadd.f32 %v8644, %v8804
      %v8806 = vpop.f32.mrb[0].mxu0
      %v8807 = vpop.f32.mrb[0].mxu0
      %v8808 = vadd.f32 %v8647, %v8807
      %v8809 = vpop.f32.mrb[0].mxu0
      %8810 = vmatprep.mubr.bf16.mxu0 %v6751
      %8811 = vmatmul.mubr.bf16.gmra.mrb[0].mxu0 %v6742
      %v8812 = vpop.f32.mrb[0].mxu0
      %v8813 = vadd.f32 %v8652, %v8812
      %v8814 = vpop.f32.mrb[0].mxu0
      %v8815 = vpop.f32.mrb[0].mxu0
      %v8816 = vadd.f32 %v8655, %v8815
      %v8817 = vpop.f32.mrb[0].mxu0
      %8818 = vmatprep.mubr.bf16.mxu0 %v6823
      %8819 = vmatmul.mubr.bf16.gmra.mrb[0].mxu0 %v6814
      %v8820 = vpop.f32.mrb[0].mxu0
      %v8821 = vadd.f32 %v8660, %v8820
      %v8822 = vpop.f32.mrb[0].mxu0
      %v8823 = vpop.f32.mrb[0].mxu0
      %v8824 = vadd.f32 %v8663, %v8823
      %v8825 = vpop.f32.mrb[0].mxu0
      %8826 = vmatprep.mubr.bf16.mxu0 %v6895
      %8827 = vmatmul.mubr.bf16.gmra.mrb[0].mxu0 %v6886
      %v8828 = vpop.f32.mrb[0].mxu0
      %v8829 = vadd.f32 %v8668, %v8828
      %v8830 = vpop.f32.mrb[0].mxu0
      %v8831 = vpop.f32.mrb[0].mxu0
      %v8832 = vadd.f32 %v8671, %v8831
      %v8833 = vpop.f32.mrb[0].mxu0
      %8834 = vmatprep.mubr.bf16.mxu0 %v6967
      %8835 = vmatmul.mubr.bf16.gmra.mrb[0].mxu0 %v6958
      %v8836 = vpop.f32.mrb[0].mxu0
      %v8837 = vadd.f32 %v8676, %v8836
      %v8838 = vpop.f32.mrb[0].mxu0
      %v8839 = vpop.f32.mrb[0].mxu0
      %v8840 = vadd.f32 %v8679, %v8839
      %v8841 = vpop.f32.mrb[0].mxu0
      %8842 = vmatprep.mubr.bf16.mxu0 %v7039
      %8843 = vmatmul.mubr.bf16.gmra.mrb[0].mxu0 %v7030
      %v8844 = vpop.f32.mrb[0].mxu0
      %v8845 = vadd.f32 %v8684, %v8844
      %v8846 = vpop.f32.mrb[0].mxu0
      %v8847 = vpop.f32.mrb[0].mxu0
      %v8848 = vadd.f32 %v8687, %v8847
      %v8849 = vpop.f32.mrb[0].mxu0
      %8850 = vmatprep.mubr.bf16.mxu0 %v7111
      %8851 = vmatmul.mubr.bf16.gmra.mrb[0].mxu0 %v7102
      %v8852 = vpop.f32.mrb[0].mxu0
      %v8853 = vadd.f32 %v8692, %v8852
      %v8854 = vpop.f32.mrb[0].mxu0
      %v8855 = vpop.f32.mrb[0].mxu0
      %v8856 = vadd.f32 %v8695, %v8855
      %v8857 = vpop.f32.mrb[0].mxu0
      %8858 = vmatprep.mubr.bf16.mxu0 %v7183
      %8859 = vmatmul.mubr.bf16.gmra.mrb[0].mxu0 %v7174
      %v8860 = vpop.f32.mrb[0].mxu0
      %v8861 = vadd.f32 %v8700, %v8860
      %v8862 = vpop.f32.mrb[0].mxu0
      %v8863 = vpop.f32.mrb[0].mxu0
      %v8864 = vadd.f32 %v8703, %v8863
      %v8865 = vpop.f32.mrb[0].mxu0
      %8866 = vmatprep.mubr.bf16.mxu0 %v7255
      %8867 = vmatmul.mubr.bf16.gmra.mrb[0].mxu0 %v7246
      %v8868 = vpop.f32.mrb[0].mxu0
      %v8869 = vadd.f32 %v8708, %v8868
      %v8870 = vpop.f32.mrb[0].mxu0
      %v8871 = vpop.f32.mrb[0].mxu0
      %v8872 = vadd.f32 %v8711, %v8871
      %v8873 = vpop.f32.mrb[0].mxu0
      %8874 = vmatprep.mubr.bf16.mxu0 %v7327
      %8875 = vmatmul.mubr.bf16.gmra.mrb[0].mxu0 %v7318
      %v8876 = vpop.f32.mrb[0].mxu0
      %v8877 = vadd.f32 %v8716, %v8876
      %v8878 = vpop.f32.mrb[0].mxu0
      %v8879 = vpop.f32.mrb[0].mxu0
      %v8880 = vadd.f32 %v8719, %v8879
      %v8881 = vpop.f32.mrb[0].mxu0
      %8882 = vmatprep.mubr.bf16.mxu0 %v7399
      %8883 = vmatmul.mubr.bf16.gmra.mrb[0].mxu0 %v7390
      %v8884 = vpop.f32.mrb[0].mxu0
      %v8885 = vadd.f32 %v8724, %v8884
      %v8886 = vpop.f32.mrb[0].mxu0
      %v8887 = vpop.f32.mrb[0].mxu0
      %v8888 = vadd.f32 %v8727, %v8887
      %v8889 = vpop.f32.mrb[0].mxu0
      %8890 = vmatprep.mubr.bf16.mxu0 %v7471
      %8891 = vmatmul.mubr.bf16.gmra.mrb[0].mxu0 %v7462
      %v8892 = vpop.f32.mrb[0].mxu0
      %v8893 = vadd.f32 %v8732, %v8892
      %v8894 = vpop.f32.mrb[0].mxu0
      %v8895 = vpop.f32.mrb[0].mxu0
      %v8896 = vadd.f32 %v8735, %v8895
      %v8897 = vpop.f32.mrb[0].mxu0
      %8898 = vmatprep.mubr.bf16.mxu0 %v7543
      %8899 = vmatmul.mubr.bf16.gmra.mrb[0].mxu0 %v7534
      %v8900 = vpop.f32.mrb[0].mxu0
      %v8901 = vadd.f32 %v8740, %v8900
      %v8902 = vpop.f32.mrb[0].mxu0
      %v8903 = vpop.f32.mrb[0].mxu0
      %v8904 = vadd.f32 %v8743, %v8903
      %v8905 = vpop.f32.mrb[0].mxu0
      %8906 = vmatprep.mubr.bf16.mxu0 %v7624
      %8907 = vmatmul.mubr.bf16.gmra.mrb[0].mxu0 %v7615
      %v8908 = vpop.f32.mrb[0].mxu0
      %v8909 = vadd.f32 %v8748, %v8908
      %v8910 = vpop.f32.mrb[0].mxu0
      %v8911 = vpop.f32.mrb[0].mxu0
      %v8912 = vadd.f32 %v8751, %v8911
      %v8913 = vpop.f32.mrb[0].mxu0
      %8914 = vmatprep.mubr.bf16.mxu0 %v7705
      %8915 = vmatmul.mubr.bf16.gmra.mrb[0].mxu0 %v7696
      %v8916 = vpop.f32.mrb[0].mxu0
      %v8917 = vadd.f32 %v8756, %v8916
      %v8918 = vpop.f32.mrb[0].mxu0
      %v8919 = vpop.f32.mrb[0].mxu0
      %v8920 = vadd.f32 %v8759, %v8919
      %v8921 = vpop.f32.mrb[0].mxu0
      %8922 = vdwg.mxu0
      %8923 = vmatprep.subr.bf16.mxu0 0
      %8924 = vmatpush1.bf16.msra.mxu0 %v8199
      %8925 = vmatprep.subr.bf16.mxu0 0
      %8926 = vmatpush1.bf16.msra.mxu0 %v8200
      %8927 = vmatprep.subr.bf16.mxu0 0
      %8928 = vmatpush1.bf16.msra.mxu0 %v8201
      %8929 = vmatprep.subr.bf16.mxu0 0
      %8930 = vmatpush1.bf16.msra.mxu0 %v8202
      %8931 = vmatprep.subr.bf16.mxu0 0
      %8932 = vmatpush1.bf16.msra.mxu0 %v8203
      %8933 = vmatprep.subr.bf16.mxu0 0
      %8934 = vmatpush1.bf16.msra.mxu0 %v8204
      %8935 = vmatprep.subr.bf16.mxu0 0
      %8936 = vmatpush1.bf16.msra.mxu0 %v8205
      %8937 = vmatprep.subr.bf16.mxu0 0
      %8938 = vmatpush1.bf16.msra.mxu0 %v8206
      %8939 = vmatprep.subr.bf16.mxu0 0
      %8940 = vmatpush1.bf16.msra.mxu0 0
      %8941 = vmatprep.subr.bf16.mxu0 0
      %8942 = vmatpush1.bf16.msra.mxu0 0
      %8943 = vmatprep.subr.bf16.mxu0 0
      %8944 = vmatpush1.bf16.msra.mxu0 0
      %8945 = vmatprep.subr.bf16.mxu0 0
      %8946 = vmatpush1.bf16.msra.mxu0 0
      %8947 = vmatprep.subr.bf16.mxu0 0
      %8948 = vmatpush1.bf16.msra.mxu0 0
      %8949 = vmatprep.subr.bf16.mxu0 0
      %8950 = vmatpush1.bf16.msra.mxu0 0
      %8951 = vmatprep.subr.bf16.mxu0 0
      %8952 = vmatpush1.bf16.msra.mxu0 0
      %8953 = vmatprep.subr.bf16.mxu0 0
      %8954 = vmatpush1.bf16.msra.mxu0 0
      %8955 = vmatprep.mubr.bf16.mxu0 0
      %8956 = vmatmul.mubr.bf16.gmra.mrb[0].mxu0 %v6615
      %v8957 = vpop.f32.mrb[0].mxu0
      %v8958 = vadd.f32 %v8797, %v8957
      %v8959 = vpop.f32.mrb[0].mxu0
      %v8960 = vpop.f32.mrb[0].mxu0
      %v8961 = vadd.f32 %v8800, %v8960
      %v8962 = vpop.f32.mrb[0].mxu0
      %8963 = vmatprep.mubr.bf16.mxu0 0
      %8964 = vmatmul.mubr.bf16.gmra.mrb[0].mxu0 %v6688
      %v8965 = vpop.f32.mrb[0].mxu0
      %v8966 = vadd.f32 %v8805, %v8965
      %v8967 = vpop.f32.mrb[0].mxu0
      %v8968 = vpop.f32.mrb[0].mxu0
      %v8969 = vadd.f32 %v8808, %v8968
      %v8970 = vpop.f32.mrb[0].mxu0
      %8971 = vmatprep.mubr.bf16.mxu0 0
      %8972 = vmatmul.mubr.bf16.gmra.mrb[0].mxu0 %v6760
      %v8973 = vpop.f32.mrb[0].mxu0
      %v8974 = vadd.f32 %v8813, %v8973
      %v8975 = vpop.f32.mrb[0].mxu0
      %v8976 = vpop.f32.mrb[0].mxu0
      %v8977 = vadd.f32 %v8816, %v8976
      %v8978 = vpop.f32.mrb[0].mxu0
      %8979 = vmatprep.mubr.bf16.mxu0 0
      %8980 = vmatmul.mubr.bf16.gmra.mrb[0].mxu0 %v6832
      %v8981 = vpop.f32.mrb[0].mxu0
      %v8982 = vadd.f32 %v8821, %v8981
      %v8983 = vpop.f32.mrb[0].mxu0
      %v8984 = vpop.f32.mrb[0].mxu0
      %v8985 = vadd.f32 %v8824, %v8984
      %v8986 = vpop.f32.mrb[0].mxu0
      %8987 = vmatprep.mubr.bf16.mxu0 0
      %8988 = vmatmul.mubr.bf16.gmra.mrb[0].mxu0 %v6904
      %v8989 = vpop.f32.mrb[0].mxu0
      %v8990 = vadd.f32 %v8829, %v8989
      %v8991 = vpop.f32.mrb[0].mxu0
      %v8992 = vpop.f32.mrb[0].mxu0
      %v8993 = vadd.f32 %v8832, %v8992
      %v8994 = vpop.f32.mrb[0].mxu0
      %8995 = vmatprep.mubr.bf16.mxu0 0
      %8996 = vmatmul.mubr.bf16.gmra.mrb[0].mxu0 %v6976
      %v8997 = vpop.f32.mrb[0].mxu0
      %v8998 = vadd.f32 %v8837, %v8997
      %v8999 = vpop.f32.mrb[0].mxu0
      %v9000 = vpop.f32.mrb[0].mxu0
      %v9001 = vadd.f32 %v8840, %v9000
      %v9002 = vpop.f32.mrb[0].mxu0
      %9003 = vmatprep.mubr.bf16.mxu0 0
      %9004 = vmatmul.mubr.bf16.gmra.mrb[0].mxu0 %v7048
      %v9005 = vpop.f32.mrb[0].mxu0
      %v9006 = vadd.f32 %v8845, %v9005
      %v9007 = vpop.f32.mrb[0].mxu0
      %v9008 = vpop.f32.mrb[0].mxu0
      %v9009 = vadd.f32 %v8848, %v9008
      %v9010 = vpop.f32.mrb[0].mxu0
      %9011 = vmatprep.mubr.bf16.mxu0 0
      %9012 = vmatmul.mubr.bf16.gmra.mrb[0].mxu0 %v7120
      %v9013 = vpop.f32.mrb[0].mxu0
      %v9014 = vadd.f32 %v8853, %v9013
      %v9015 = vpop.f32.mrb[0].mxu0
      %v9016 = vpop.f32.mrb[0].mxu0
      %v9017 = vadd.f32 %v8856, %v9016
      %v9018 = vpop.f32.mrb[0].mxu0
      %9019 = vmatprep.mubr.bf16.mxu0 0
      %9020 = vmatmul.mubr.bf16.gmra.mrb[0].mxu0 %v7192
      %v9021 = vpop.f32.mrb[0].mxu0
      %v9022 = vadd.f32 %v8861, %v9021
      %v9023 = vpop.f32.mrb[0].mxu0
      %v9024 = vpop.f32.mrb[0].mxu0
      %v9025 = vadd.f32 %v8864, %v9024
      %v9026 = vpop.f32.mrb[0].mxu0
      %9027 = vmatprep.mubr.bf16.mxu0 0
      %9028 = vmatmul.mubr.bf16.gmra.mrb[0].mxu0 %v7264
      %v9029 = vpop.f32.mrb[0].mxu0
      %v9030 = vadd.f32 %v8869, %v9029
      %v9031 = vpop.f32.mrb[0].mxu0
      %v9032 = vpop.f32.mrb[0].mxu0
      %v9033 = vadd.f32 %v8872, %v9032
      %v9034 = vpop.f32.mrb[0].mxu0
      %9035 = vmatprep.mubr.bf16.mxu0 0
      %9036 = vmatmul.mubr.bf16.gmra.mrb[0].mxu0 %v7336
      %v9037 = vpop.f32.mrb[0].mxu0
      %v9038 = vadd.f32 %v8877, %v9037
      %v9039 = vpop.f32.mrb[0].mxu0
      %v9040 = vpop.f32.mrb[0].mxu0
      %v9041 = vadd.f32 %v8880, %v9040
      %v9042 = vpop.f32.mrb[0].mxu0
      %9043 = vmatprep.mubr.bf16.mxu0 0
      %9044 = vmatmul.mubr.bf16.gmra.mrb[0].mxu0 %v7408
      %v9045 = vpop.f32.mrb[0].mxu0
      %v9046 = vadd.f32 %v8885, %v9045
      %v9047 = vpop.f32.mrb[0].mxu0
      %v9048 = vpop.f32.mrb[0].mxu0
      %v9049 = vadd.f32 %v8888, %v9048
      %v9050 = vpop.f32.mrb[0].mxu0
      %9051 = vmatprep.mubr.bf16.mxu0 0
      %9052 = vmatmul.mubr.bf16.gmra.mrb[0].mxu0 %v7480
      %v9053 = vpop.f32.mrb[0].mxu0
      %v9054 = vadd.f32 %v8893, %v9053
      %v9055 = vpop.f32.mrb[0].mxu0
      %v9056 = vpop.f32.mrb[0].mxu0
      %v9057 = vadd.f32 %v8896, %v9056
      %v9058 = vpop.f32.mrb[0].mxu0
      %9059 = vmatprep.mubr.bf16.mxu0 0
      %9060 = vmatmul.mubr.bf16.gmra.mrb[0].mxu0 %v7552
      %v9061 = vpop.f32.mrb[0].mxu0
      %v9062 = vadd.f32 %v8901, %v9061
      %v9063 = vpop.f32.mrb[0].mxu0
      %v9064 = vpop.f32.mrb[0].mxu0
      %v9065 = vadd.f32 %v8904, %v9064
      %v9066 = vpop.f32.mrb[0].mxu0
      %9067 = vmatprep.mubr.bf16.mxu0 0
      %9068 = vmatmul.mubr.bf16.gmra.mrb[0].mxu0 %v7633
      %v9069 = vpop.f32.mrb[0].mxu0
      %v9070 = vadd.f32 %v8909, %v9069
      %v9071 = vpop.f32.mrb[0].mxu0
      %v9072 = vpop.f32.mrb[0].mxu0
      %v9073 = vadd.f32 %v8912, %v9072
      %v9074 = vpop.f32.mrb[0].mxu0
      %9075 = vmatprep.mubr.bf16.mxu0 0
      %9076 = vmatmul.mubr.bf16.gmra.mrb[0].mxu0 %v7714
      %v9077 = vpop.f32.mrb[0].mxu0
      %v9078 = vadd.f32 %v8917, %v9077
      %v9079 = vpop.f32.mrb[0].mxu0
      %v9080 = vpop.f32.mrb[0].mxu0
      %v9081 = vadd.f32 %v8920, %v9080
      %v9082 = vpop.f32.mrb[0].mxu0
      %9083 = vdwg.mxu0
      %v9084 = vld [vmem:[%s7] sm:$0xf]
      %v9085 = vld [vmem:[%s7 + $0x4] sm:$0xf]
      %v9086 = vld [vmem:[%s7 + $0x8] sm:$0xf]
      %v9087 = vld [vmem:[%s7 + $0xc] sm:$0xf]
      %v9088 = vld [vmem:[%s7 + $0x10] sm:$0xf]
      %v9089 = vld [vmem:[%s7 + $0x14] sm:$0xf]
      %v9090 = vld [vmem:[%s7 + $0x18] sm:$0xf]
      %v9091 = vld [vmem:[%s7 + $0x1c] sm:$0xf]
      %v9092 = vld [vmem:[%s7 + $0x20] sm:$0xf]
      %v9093 = vld [vmem:[%s7 + $0x24] sm:$0xf]
      %v9094 = vld [vmem:[%s7 + $0x28] sm:$0xf]
      %v9095 = vld [vmem:[%s7 + $0x2c] sm:$0xf]
      %v9096 = vld [vmem:[%s7 + $0x30] sm:$0xf]
      %v9097 = vld [vmem:[%s7 + $0x34] sm:$0xf]
      %v9098 = vld [vmem:[%s7 + $0x38] sm:$0xf]
      %v9099 = vld [vmem:[%s7 + $0x3c] sm:$0xf]
      %v9100 = vld [vmem:[%s8] sm:$0x1]
      %v9102 = vlaneseq
      %v9103 = vshrl.u32 %v9102, 7
      %v9104 = vsub.s32 0, %v9103
      %v9105 = vrot.slane %v9100, %v9104
      %v9123 = vunpack.c.l.b16 %v9084
      %v9124 = vunpack.c.l.b16 %v9085
      %v9125 = vunpack.c.l.b16 %v9086
      %v9126 = vunpack.c.l.b16 %v9087
      %v9127 = vunpack.c.l.b16 %v9088
      %v9128 = vunpack.c.l.b16 %v9089
      %v9129 = vunpack.c.l.b16 %v9090
      %v9130 = vunpack.c.l.b16 %v9091
      %v9131 = vunpack.c.l.b16 %v9092
      %v9132 = vunpack.c.l.b16 %v9093
      %v9133 = vunpack.c.l.b16 %v9094
      %v9134 = vunpack.c.l.b16 %v9095
      %v9135 = vunpack.c.l.b16 %v9096
      %v9136 = vunpack.c.l.b16 %v9097
      %v9137 = vunpack.c.l.b16 %v9098
      %v9138 = vunpack.c.l.b16 %v9099
      %v9139 = vpack.c.b16 %v9124, %v9123
      %v9140 = vpack.c.b16 %v9126, %v9125
      %v9141 = vpack.c.b16 %v9128, %v9127
      %v9142 = vpack.c.b16 %v9130, %v9129
      %v9143 = vpack.c.b16 %v9132, %v9131
      %v9144 = vpack.c.b16 %v9134, %v9133
      %v9145 = vpack.c.b16 %v9136, %v9135
      %v9146 = vpack.c.b16 %v9138, %v9137
      %9155 = vmatprep.subr.bf16.mxu0 0
      %9156 = vmatpush1.bf16.msra.mxu0 %v9139
      %9157 = vmatprep.subr.bf16.mxu0 0
      %9158 = vmatpush1.bf16.msra.mxu0 %v9140
      %9159 = vmatprep.subr.bf16.mxu0 0
      %9160 = vmatpush1.bf16.msra.mxu0 %v9141
      %9161 = vmatprep.subr.bf16.mxu0 0
      %9162 = vmatpush1.bf16.msra.mxu0 %v9142
      %9163 = vmatprep.subr.bf16.mxu0 0
      %9164 = vmatpush1.bf16.msra.mxu0 %v9143
      %9165 = vmatprep.subr.bf16.mxu0 0
      %9166 = vmatpush1.bf16.msra.mxu0 %v9144
      %9167 = vmatprep.subr.bf16.mxu0 0
      %9168 = vmatpush1.bf16.msra.mxu0 %v9145
      %9169 = vmatprep.subr.bf16.mxu0 0
      %9170 = vmatpush1.bf16.msra.mxu0 %v9146
      %9171 = vmatprep.subr.bf16.mxu0 0
      %9172 = vmatpush1.bf16.msra.mxu0 0
      %9173 = vmatprep.subr.bf16.mxu0 0
      %9174 = vmatpush1.bf16.msra.mxu0 0
      %9175 = vmatprep.subr.bf16.mxu0 0
      %9176 = vmatpush1.bf16.msra.mxu0 0
      %9177 = vmatprep.subr.bf16.mxu0 0
      %9178 = vmatpush1.bf16.msra.mxu0 0
      %9179 = vmatprep.subr.bf16.mxu0 0
      %9180 = vmatpush1.bf16.msra.mxu0 0
      %9181 = vmatprep.subr.bf16.mxu0 0
      %9182 = vmatpush1.bf16.msra.mxu0 0
      %9183 = vmatprep.subr.bf16.mxu0 0
      %9184 = vmatpush1.bf16.msra.mxu0 0
      %9185 = vmatprep.subr.bf16.mxu0 0
      %9186 = vmatpush1.bf16.msra.mxu0 0
      %9187 = vmatprep.mubr.bf16.mxu0 0
      %9188 = vmatmul.mubr.bf16.gmra.mrb[0].mxu0 %v494
      %v9189 = vpop.f32.mrb[0].mxu0
      %v9190 = vadd.f32 %v9105, %v9189
      %v9191 = vpop.f32.mrb[0].mxu0
      %v9192 = vpop.f32.mrb[0].mxu0
      %v9193 = vadd.f32 %v9105, %v9192
      %v9194 = vpop.f32.mrb[0].mxu0
      %9195 = vmatprep.mubr.bf16.mxu0 0
      %9196 = vmatmul.mubr.bf16.gmra.mrb[0].mxu0 %v495
      %v9197 = vpop.f32.mrb[0].mxu0
      %v9198 = vadd.f32 %v9105, %v9197
      %v9199 = vpop.f32.mrb[0].mxu0
      %v9200 = vpop.f32.mrb[0].mxu0
      %v9201 = vadd.f32 %v9105, %v9200
      %v9202 = vpop.f32.mrb[0].mxu0
      %9203 = vmatprep.mubr.bf16.mxu0 0
      %9204 = vmatmul.mubr.bf16.gmra.mrb[0].mxu0 %v496
      %v9205 = vpop.f32.mrb[0].mxu0
      %v9206 = vadd.f32 %v9105, %v9205
      %v9207 = vpop.f32.mrb[0].mxu0
      %v9208 = vpop.f32.mrb[0].mxu0
      %v9209 = vadd.f32 %v9105, %v9208
      %v9210 = vpop.f32.mrb[0].mxu0
      %9211 = vmatprep.mubr.bf16.mxu0 0
      %9212 = vmatmul.mubr.bf16.gmra.mrb[0].mxu0 %v497
      %v9213 = vpop.f32.mrb[0].mxu0
      %v9214 = vadd.f32 %v9105, %v9213
      %v9215 = vpop.f32.mrb[0].mxu0
      %v9216 = vpop.f32.mrb[0].mxu0
      %v9217 = vadd.f32 %v9105, %v9216
      %v9218 = vpop.f32.mrb[0].mxu0
      %9219 = vmatprep.mubr.bf16.mxu0 0
      %9220 = vmatmul.mubr.bf16.gmra.mrb[0].mxu0 %v498
      %v9221 = vpop.f32.mrb[0].mxu0
      %v9222 = vadd.f32 %v9105, %v9221
      %v9223 = vpop.f32.mrb[0].mxu0
      %v9224 = vpop.f32.mrb[0].mxu0
      %v9225 = vadd.f32 %v9105, %v9224
      %v9226 = vpop.f32.mrb[0].mxu0
      %9227 = vmatprep.mubr.bf16.mxu0 0
      %9228 = vmatmul.mubr.bf16.gmra.mrb[0].mxu0 %v499
      %v9229 = vpop.f32.mrb[0].mxu0
      %v9230 = vadd.f32 %v9105, %v9229
      %v9231 = vpop.f32.mrb[0].mxu0
      %v9232 = vpop.f32.mrb[0].mxu0
      %v9233 = vadd.f32 %v9105, %v9232
      %v9234 = vpop.f32.mrb[0].mxu0
      %9235 = vmatprep.mubr.bf16.mxu0 0
      %9236 = vmatmul.mubr.bf16.gmra.mrb[0].mxu0 %v500
      %v9237 = vpop.f32.mrb[0].mxu0
      %v9238 = vadd.f32 %v9105, %v9237
      %v9239 = vpop.f32.mrb[0].mxu0
      %v9240 = vpop.f32.mrb[0].mxu0
      %v9241 = vadd.f32 %v9105, %v9240
      %v9242 = vpop.f32.mrb[0].mxu0
      %9243 = vmatprep.mubr.bf16.mxu0 0
      %9244 = vmatmul.mubr.bf16.gmra.mrb[0].mxu0 %v501
      %v9245 = vpop.f32.mrb[0].mxu0
      %v9246 = vadd.f32 %v9105, %v9245
      %v9247 = vpop.f32.mrb[0].mxu0
      %v9248 = vpop.f32.mrb[0].mxu0
      %v9249 = vadd.f32 %v9105, %v9248
      %v9250 = vpop.f32.mrb[0].mxu0
      %9251 = vmatprep.mubr.bf16.mxu0 0
      %9252 = vmatmul.mubr.bf16.gmra.mrb[0].mxu0 %v502
      %v9253 = vpop.f32.mrb[0].mxu0
      %v9254 = vadd.f32 %v9105, %v9253
      %v9255 = vpop.f32.mrb[0].mxu0
      %v9256 = vpop.f32.mrb[0].mxu0
      %v9257 = vadd.f32 %v9105, %v9256
      %v9258 = vpop.f32.mrb[0].mxu0
      %9259 = vmatprep.mubr.bf16.mxu0 0
      %9260 = vmatmul.mubr.bf16.gmra.mrb[0].mxu0 %v503
      %v9261 = vpop.f32.mrb[0].mxu0
      %v9262 = vadd.f32 %v9105, %v9261
      %v9263 = vpop.f32.mrb[0].mxu0
      %v9264 = vpop.f32.mrb[0].mxu0
      %v9265 = vadd.f32 %v9105, %v9264
      %v9266 = vpop.f32.mrb[0].mxu0
      %9267 = vmatprep.mubr.bf16.mxu0 0
      %9268 = vmatmul.mubr.bf16.gmra.mrb[0].mxu0 %v504
      %v9269 = vpop.f32.mrb[0].mxu0
      %v9270 = vadd.f32 %v9105, %v9269
      %v9271 = vpop.f32.mrb[0].mxu0
      %v9272 = vpop.f32.mrb[0].mxu0
      %v9273 = vadd.f32 %v9105, %v9272
      %v9274 = vpop.f32.mrb[0].mxu0
      %9275 = vmatprep.mubr.bf16.mxu0 0
      %9276 = vmatmul.mubr.bf16.gmra.mrb[0].mxu0 %v505
      %v9277 = vpop.f32.mrb[0].mxu0
      %v9278 = vadd.f32 %v9105, %v9277
      %v9279 = vpop.f32.mrb[0].mxu0
      %v9280 = vpop.f32.mrb[0].mxu0
      %v9281 = vadd.f32 %v9105, %v9280
      %v9282 = vpop.f32.mrb[0].mxu0
      %9283 = vmatprep.mubr.bf16.mxu0 0
      %9284 = vmatmul.mubr.bf16.gmra.mrb[0].mxu0 %v506
      %v9285 = vpop.f32.mrb[0].mxu0
      %v9286 = vadd.f32 %v9105, %v9285
      %v9287 = vpop.f32.mrb[0].mxu0
      %v9288 = vpop.f32.mrb[0].mxu0
      %v9289 = vadd.f32 %v9105, %v9288
      %v9290 = vpop.f32.mrb[0].mxu0
      %9291 = vmatprep.mubr.bf16.mxu0 0
      %9292 = vmatmul.mubr.bf16.gmra.mrb[0].mxu0 %v507
      %v9293 = vpop.f32.mrb[0].mxu0
      %v9294 = vadd.f32 %v9105, %v9293
      %v9295 = vpop.f32.mrb[0].mxu0
      %v9296 = vpop.f32.mrb[0].mxu0
      %v9297 = vadd.f32 %v9105, %v9296
      %v9298 = vpop.f32.mrb[0].mxu0
      %9299 = vmatprep.mubr.bf16.mxu0 0
      %9300 = vmatmul.mubr.bf16.gmra.mrb[0].mxu0 %v508
      %v9301 = vpop.f32.mrb[0].mxu0
      %v9302 = vadd.f32 %v9105, %v9301
      %v9303 = vpop.f32.mrb[0].mxu0
      %v9304 = vpop.f32.mrb[0].mxu0
      %v9305 = vadd.f32 %v9105, %v9304
      %v9306 = vpop.f32.mrb[0].mxu0
      %9307 = vmatprep.mubr.bf16.mxu0 0
      %9308 = vmatmul.mubr.bf16.gmra.mrb[0].mxu0 %v509
      %v9309 = vpop.f32.mrb[0].mxu0
      %v9310 = vadd.f32 %v9105, %v9309
      %v9311 = vpop.f32.mrb[0].mxu0
      %v9312 = vpop.f32.mrb[0].mxu0
      %v9313 = vadd.f32 %v9105, %v9312
      %v9314 = vpop.f32.mrb[0].mxu0
      %9315 = vdwg.mxu0
      %v9316 = vadd.f32 %v8958, %v9190
      %v9317 = vadd.f32 %v8961, %v9193
      %v9318 = vadd.f32 %v8966, %v9198
      %v9319 = vadd.f32 %v8969, %v9201
      %v9320 = vadd.f32 %v8974, %v9206
      %v9321 = vadd.f32 %v8977, %v9209
      %v9322 = vadd.f32 %v8982, %v9214
      %v9323 = vadd.f32 %v8985, %v9217
      %v9324 = vadd.f32 %v8990, %v9222
      %v9325 = vadd.f32 %v8993, %v9225
      %v9326 = vadd.f32 %v8998, %v9230
      %v9327 = vadd.f32 %v9001, %v9233
      %v9328 = vadd.f32 %v9006, %v9238
      %v9329 = vadd.f32 %v9009, %v9241
      %v9330 = vadd.f32 %v9014, %v9246
      %v9331 = vadd.f32 %v9017, %v9249
      %v9332 = vadd.f32 %v9022, %v9254
      %v9333 = vadd.f32 %v9025, %v9257
      %v9334 = vadd.f32 %v9030, %v9262
      %v9335 = vadd.f32 %v9033, %v9265
      %v9336 = vadd.f32 %v9038, %v9270
      %v9337 = vadd.f32 %v9041, %v9273
      %v9338 = vadd.f32 %v9046, %v9278
      %v9339 = vadd.f32 %v9049, %v9281
      %v9340 = vadd.f32 %v9054, %v9286
      %v9341 = vadd.f32 %v9057, %v9289
      %v9342 = vadd.f32 %v9062, %v9294
      %v9343 = vadd.f32 %v9065, %v9297
      %v9344 = vadd.f32 %v9070, %v9302
      %v9345 = vadd.f32 %v9073, %v9305
      %v9346 = vadd.f32 %v9078, %v9310
      %v9347 = vadd.f32 %v9081, %v9313
      %9348 = vst [vmem:[#allocation4] sm:$0xff] %v9316
      %9349 = vst [vmem:[#allocation4 + $0x8] sm:$0xff] %v9317
      %9350 = vst [vmem:[#allocation4 + $0x10] sm:$0xff] %v9318
      %9351 = vst [vmem:[#allocation4 + $0x18] sm:$0xff] %v9319
      %9352 = vst [vmem:[#allocation4 + $0x20] sm:$0xff] %v9320
      %9353 = vst [vmem:[#allocation4 + $0x28] sm:$0xff] %v9321
      %9354 = vst [vmem:[#allocation4 + $0x30] sm:$0xff] %v9322
      %9355 = vst [vmem:[#allocation4 + $0x38] sm:$0xff] %v9323
      %9356 = vst [vmem:[#allocation4 + $0x40] sm:$0xff] %v9324
      %9357 = vst [vmem:[#allocation4 + $0x48] sm:$0xff] %v9325
      %9358 = vst [vmem:[#allocation4 + $0x50] sm:$0xff] %v9326
      %9359 = vst [vmem:[#allocation4 + $0x58] sm:$0xff] %v9327
      %9360 = vst [vmem:[#allocation4 + $0x60] sm:$0xff] %v9328
      %9361 = vst [vmem:[#allocation4 + $0x68] sm:$0xff] %v9329
      %9362 = vst [vmem:[#allocation4 + $0x70] sm:$0xff] %v9330
      %9363 = vst [vmem:[#allocation4 + $0x78] sm:$0xff] %v9331
      %9364 = vst [vmem:[#allocation4 + $0x80] sm:$0xff] %v9332
      %9365 = vst [vmem:[#allocation4 + $0x88] sm:$0xff] %v9333
      %9366 = vst [vmem:[#allocation4 + $0x90] sm:$0xff] %v9334
      %9367 = vst [vmem:[#allocation4 + $0x98] sm:$0xff] %v9335
      %9368 = vst [vmem:[#allocation4 + $0xa0] sm:$0xff] %v9336
      %9369 = vst [vmem:[#allocation4 + $0xa8] sm:$0xff] %v9337
      %9370 = vst [vmem:[#allocation4 + $0xb0] sm:$0xff] %v9338
      %9371 = vst [vmem:[#allocation4 + $0xb8] sm:$0xff] %v9339
      %9372 = vst [vmem:[#allocation4 + $0xc0] sm:$0xff] %v9340
      %9373 = vst [vmem:[#allocation4 + $0xc8] sm:$0xff] %v9341
      %9374 = vst [vmem:[#allocation4 + $0xd0] sm:$0xff] %v9342
      %9375 = vst [vmem:[#allocation4 + $0xd8] sm:$0xff] %v9343
      %9376 = vst [vmem:[#allocation4 + $0xe0] sm:$0xff] %v9344
      %9377 = vst [vmem:[#allocation4 + $0xe8] sm:$0xff] %v9345
      %9378 = vst [vmem:[#allocation4 + $0xf0] sm:$0xff] %v9346
      %9379 = vst [vmem:[#allocation4 + $0xf8] sm:$0xff] %v9347
      %v9380 = vld [vmem:[#allocation4] ss:$2 sm:$0xff]
      %s9381 = scalar_lea.vmem [#allocation4], 1
      %v9382 = vld [vmem:[%s9381] ss:$2 sm:$0xff]
      %v9383 = vadd.f32 %v9380, %v9382
      %s9384 = scalar_lea.vmem [#allocation4], 16
      %v9385 = vld [vmem:[%s9384] ss:$2 sm:$0xff]
      %v9386 = vadd.f32 %v9383, %v9385
      %s9387 = scalar_lea.vmem [#allocation4], 17
      %v9388 = vld [vmem:[%s9387] ss:$2 sm:$0xff]
      %v9389 = vadd.f32 %v9386, %v9388
      %v9390 = vmul.f32 %v9389, 0.25
      %9391 = vst [vmem:[%s332] sm:$0xff] %v9390
      %s9392 = scalar_lea.vmem [#allocation4], 32
      %v9393 = vld [vmem:[%s9392] ss:$2 sm:$0xff]
      %s9394 = scalar_lea.vmem [#allocation4], 33
      %v9395 = vld [vmem:[%s9394] ss:$2 sm:$0xff]
      %v9396 = vadd.f32 %v9393, %v9395
      %s9397 = scalar_lea.vmem [#allocation4], 48
      %v9398 = vld [vmem:[%s9397] ss:$2 sm:$0xff]
      %v9399 = vadd.f32 %v9396, %v9398
      %s9400 = scalar_lea.vmem [#allocation4], 49
      %v9401 = vld [vmem:[%s9400] ss:$2 sm:$0xff]
      %v9402 = vadd.f32 %v9399, %v9401
      %v9403 = vmul.f32 %v9402, 0.25
      %9404 = vst [vmem:[%s332 + $0x8] sm:$0xff] %v9403
      %s9405 = scalar_lea.vmem [#allocation4], 64
      %v9406 = vld [vmem:[%s9405] ss:$2 sm:$0xff]
      %s9407 = scalar_lea.vmem [#allocation4], 65
      %v9408 = vld [vmem:[%s9407] ss:$2 sm:$0xff]
      %v9409 = vadd.f32 %v9406, %v9408
      %s9410 = scalar_lea.vmem [#allocation4], 80
      %v9411 = vld [vmem:[%s9410] ss:$2 sm:$0xff]
      %v9412 = vadd.f32 %v9409, %v9411
      %s9413 = scalar_lea.vmem [#allocation4], 81
      %v9414 = vld [vmem:[%s9413] ss:$2 sm:$0xff]
      %v9415 = vadd.f32 %v9412, %v9414
      %v9416 = vmul.f32 %v9415, 0.25
      %9417 = vst [vmem:[%s332 + $0x10] sm:$0xff] %v9416
      %s9418 = scalar_lea.vmem [#allocation4], 96
      %v9419 = vld [vmem:[%s9418] ss:$2 sm:$0xff]
      %s9420 = scalar_lea.vmem [#allocation4], 97
      %v9421 = vld [vmem:[%s9420] ss:$2 sm:$0xff]
      %v9422 = vadd.f32 %v9419, %v9421
      %s9423 = scalar_lea.vmem [#allocation4], 112
      %v9424 = vld [vmem:[%s9423] ss:$2 sm:$0xff]
      %v9425 = vadd.f32 %v9422, %v9424
      %s9426 = scalar_lea.vmem [#allocation4], 113
      %v9427 = vld [vmem:[%s9426] ss:$2 sm:$0xff]
      %v9428 = vadd.f32 %v9425, %v9427
      %v9429 = vmul.f32 %v9428, 0.25
      %9430 = vst [vmem:[%s332 + $0x18] sm:$0xff] %v9429
      %s9431 = scalar_lea.vmem [#allocation4], 128
      %v9432 = vld [vmem:[%s9431] ss:$2 sm:$0xff]
      %s9433 = scalar_lea.vmem [#allocation4], 129
      %v9434 = vld [vmem:[%s9433] ss:$2 sm:$0xff]
      %v9435 = vadd.f32 %v9432, %v9434
      %s9436 = scalar_lea.vmem [#allocation4], 144
      %v9437 = vld [vmem:[%s9436] ss:$2 sm:$0xff]
      %v9438 = vadd.f32 %v9435, %v9437
      %s9439 = scalar_lea.vmem [#allocation4], 145
      %v9440 = vld [vmem:[%s9439] ss:$2 sm:$0xff]
      %v9441 = vadd.f32 %v9438, %v9440
      %v9442 = vmul.f32 %v9441, 0.25
      %9443 = vst [vmem:[%s332 + $0x20] sm:$0xff] %v9442
      %s9444 = scalar_lea.vmem [#allocation4], 160
      %v9445 = vld [vmem:[%s9444] ss:$2 sm:$0xff]
      %s9446 = scalar_lea.vmem [#allocation4], 161
      %v9447 = vld [vmem:[%s9446] ss:$2 sm:$0xff]
      %v9448 = vadd.f32 %v9445, %v9447
      %s9449 = scalar_lea.vmem [#allocation4], 176
      %v9450 = vld [vmem:[%s9449] ss:$2 sm:$0xff]
      %v9451 = vadd.f32 %v9448, %v9450
      %s9452 = scalar_lea.vmem [#allocation4], 177
      %v9453 = vld [vmem:[%s9452] ss:$2 sm:$0xff]
      %v9454 = vadd.f32 %v9451, %v9453
      %v9455 = vmul.f32 %v9454, 0.25
      %9456 = vst [vmem:[%s332 + $0x28] sm:$0xff] %v9455
      %s9457 = scalar_lea.vmem [#allocation4], 192
      %v9458 = vld [vmem:[%s9457] ss:$2 sm:$0xff]
      %s9459 = scalar_lea.vmem [#allocation4], 193
      %v9460 = vld [vmem:[%s9459] ss:$2 sm:$0xff]
      %v9461 = vadd.f32 %v9458, %v9460
      %s9462 = scalar_lea.vmem [#allocation4], 208
      %v9463 = vld [vmem:[%s9462] ss:$2 sm:$0xff]
      %v9464 = vadd.f32 %v9461, %v9463
      %s9465 = scalar_lea.vmem [#allocation4], 209
      %v9466 = vld [vmem:[%s9465] ss:$2 sm:$0xff]
      %v9467 = vadd.f32 %v9464, %v9466
      %v9468 = vmul.f32 %v9467, 0.25
      %9469 = vst [vmem:[%s332 + $0x30] sm:$0xff] %v9468
      %s9470 = scalar_lea.vmem [#allocation4], 224
      %v9471 = vld [vmem:[%s9470] ss:$2 sm:$0xff]
      %s9472 = scalar_lea.vmem [#allocation4], 225
      %v9473 = vld [vmem:[%s9472] ss:$2 sm:$0xff]
      %v9474 = vadd.f32 %v9471, %v9473
      %s9475 = scalar_lea.vmem [#allocation4], 240
      %v9476 = vld [vmem:[%s9475] ss:$2 sm:$0xff]
      %v9477 = vadd.f32 %v9474, %v9476
      %s9478 = scalar_lea.vmem [#allocation4], 241
      %v9479 = vld [vmem:[%s9478] ss:$2 sm:$0xff]
      %v9480 = vadd.f32 %v9477, %v9479
      %v9481 = vmul.f32 %v9480, 0.25
      %9482 = vst [vmem:[%s332 + $0x38] sm:$0xff] %v9481
      %p9483 = scmp.lt.s32.totalorder %s20, 1
      %s9484 = scalar_select %p9483, %s20, 1
      %s9485 = smul.addr %s9484, 8
      %s9486 = smul.addr %s9485, 8
      %s9487 = scalar_lea.vmem %s9, %s9486
      // Predicated region
      $region57: #{_residual_block_d_impl.1} parent=55 // pred_check
        %p9488 = pneg %p232
      $region58: #{_residual_block_d_impl.1} parent=55 // pred_check_branch
        %9490 = sbr.rel (%p9488) target = $region60
      $region59: #{_residual_block_d_impl.1} parent=55 // pred_region
        _
      $region60: #{_residual_block_d_impl.1} parent=55 // pred_fallthru
        _
    $region56: #{_residual_block_d_impl.1} parent=5 // pred_fallthru
      _
    %p9491 = scmp.le.s32.totalorder 2, %s15
    // Predicated region
    $region61: #{_residual_block_d_impl.1} parent=5 // pred_check
      %p9492 = pneg %p9491
    $region62: #{_residual_block_d_impl.1} parent=5 // pred_check_branch
      %9494 = sbr.rel (%p9492) target = $region64
    $region63: #{_residual_block_d_impl.1} parent=5 // pred_region
      %s9495 = ssub.s32 %s15, 2
      // Predicated region
      $region65: #{_residual_block_d_impl.1} parent=63 // pred_check
        %p9496 = pneg %p238
      $region66: #{_residual_block_d_impl.1} parent=63 // pred_check_branch
        %9498 = sbr.rel (%p9496) target = $region68
      $region67: #{_residual_block_d_impl.1} parent=63 // pred_region
        %p9499 = scmp.lt.s32.totalorder %s21, 1
        %s9500 = scalar_select %p9499, %s21, 1
        %s9501 = smul.addr %s9500, 8
        %s9502 = smul.addr %s9501, 8
        %s9503 = scalar_lea.vmem %s9, %s9502
      $region68: #{_residual_block_d_impl.1} parent=63 // pred_fallthru
        _
    $region64: #{_residual_block_d_impl.1} parent=5 // pred_fallthru
      _
  $region6: #{_residual_block_d_impl.1} parent=0 // loop_footer
    %s19 = sadd.s32 1, %s15
  $region7: #{_residual_block_d_impl.1} parent=0 // loop_footer_branch
    %14 = sbr.rel target = $region3
  $region8: #{_residual_block_d_impl.1} parent=0 // loop_exit
    _

</llo_original>
